<compile_context>
chip_gen: v7x
topology: tpu7x:2x2x1
jax: 0.10.0
libtpu: 0.0.40
codegen_flags: <defaults>
</compile_context>

<pallas_src>
import functools

import jax
import jax.numpy as jnp
from jax import lax
from jax.experimental import pallas as pl
from jax.experimental.pallas import tpu as pltpu

LN_EPS = 1e-5                     # torch nn.LayerNorm default
PARAM_DTYPE = jnp.bfloat16        # MXU operand dtype (weights + activation casts); f32 accumulate

# Canonical ordering of the stacked weight arrays passed to the kernel.
#  ctx_*  arrays have leading dim 2*n_layers, laid out [layer0:tower0, layer0:tower1, layer1:tower0, ...]
#  main_* arrays have leading dim n_layers.
W_KEYS = (
    "ctx_wqkv", "ctx_wo", "ctx_mha_g", "ctx_mha_b",
    "ctx_w1", "ctx_b1", "ctx_w2", "ctx_b2", "ctx_ff_g", "ctx_ff_b",
    "ctx_lw", "ctx_lb",
    "main_wqkv_c1", "main_wqkv_m", "main_wqkv_c2", "main_wo",
    "main_mha_g", "main_mha_b",
    "main_w1", "main_b1", "main_w2", "main_b2", "main_ff_g", "main_ff_b",
)


# ------------------------------ fused kernel --------------------------------
def _encoder_kernel(*refs, n_layers, n_head, d_model, d_context, batch, seq):
    c1_ref, c2_ref, m_ref = refs[:3]
    w = dict(zip(W_KEYS, refs[3:3 + len(W_KEYS)]))
    o_ref = refs[3 + len(W_KEYS)]
    c1_s, c2_s, m_s, c1m_s, c2m_s = refs[3 + len(W_KEYS) + 1:]

    step = pl.program_id(0)
    cdt = PARAM_DTYPE

    def f32dot(a, b):
        # bf16 x bf16 -> f32 accumulate on the MXU.
        return jnp.dot(a, b, preferred_element_type=jnp.float32)

    def layer_norm(y, g, b):
        mu = jnp.mean(y, axis=-1, keepdims=True)
        var = jnp.mean((y - mu) ** 2, axis=-1, keepdims=True)   # biased, like torch
        return (y - mu) * lax.rsqrt(var + LN_EPS) * g + b

    def attention(parts_bf16, qkv_w, wo_w, residual, g, b):
        """Multi-head self-attention over B*L folded rows.

        parts_bf16: list of (N, d_p) bf16 feature groups of the attention input
                    (the sum over groups of x_p @ W_p equals cat(x) @ W).
        qkv_w(p, s, h): (d_p, d_qkv) bf16 weight; s in {0:q, 1:k, 2:v}.
        wo_w(h):        (d_qkv, D_out) bf16 output-projection weight.
        residual:       (N, D_out) f32 (the full attention input).
        """
        out = jnp.zeros_like(residual)
        for h in range(n_head):
            def proj(s):
                acc = f32dot(parts_bf16[0], qkv_w(0, s, h))
                for p in range(1, len(parts_bf16)):
                    acc = acc + f32dot(parts_bf16[p], qkv_w(p, s, h))
                return acc
            q, k, v = proj(0), proj(1), proj(2)       # (N, d_qkv) f32; 1/sqrt(d_qkv) folded into Wq
            a_rows = []
            for bi in range(batch):                   # attention never mixes batch rows
                lo, hi = bi * seq, (bi + 1) * seq
                qb = q[lo:hi].astype(cdt)
                kb = k[lo:hi].astype(cdt)
                vb = v[lo:hi].astype(cdt)
                # q @ k^T as an NT dot_general: contract the d_qkv axes, no transpose materialized.
                s_ = lax.dot_general(qb, kb, (((1,), (1,)), ((), ())),
                                     preferred_element_type=jnp.float32)   # (L, L)
                s_ = s_ - jnp.max(s_, axis=-1, keepdims=True)
                p_ = jnp.exp(s_)
                p_ = p_ * pl.reciprocal(jnp.sum(p_, axis=-1, keepdims=True), approx=True)
                # TODO(synk): F.dropout on attention probabilities skipped (inference).
                a_rows.append(f32dot(p_.astype(cdt), vb))                  # (L, d_qkv)
            a = jnp.concatenate(a_rows, axis=0)                            # (N, d_qkv), sublane-aligned
            out = out + f32dot(a.astype(cdt), wo_w(h))                     # (N, D_out)
        # TODO(synk): F.dropout on the projected output skipped (inference).
        return layer_norm(residual + out, g, b)

    def ffn(x, res, w1, b1, w2, b2, g, b):
        h1 = jnp.maximum(f32dot(x.astype(cdt), w1) + b1, 0.0)
        y = f32dot(h1.astype(cdt), w2) + b2
        # TODO(synk): FF dropout skipped (inference).
        return layer_norm(y + res, g, b)

    # --- step 0: load folded activations into persistent VMEM scratch ----------
    @pl.when(step == 0)
    def _load_inputs():
        c1_s[...] = c1_ref[...].astype(jnp.float32)
        c2_s[...] = c2_ref[...].astype(jnp.float32)
        m_s[...] = m_ref[...].astype(jnp.float32)

    # --- steps 1..n_layers: main block with layer (step-1) weights --------------
    @pl.when(step > 0)
    def _main_block():
        c1m = c1m_s[...]
        c2m = c2m_s[...]
        m = m_s[...]
        # Only concat kept: the residual / LayerNorm path (width d_model + 2*d_context).
        residual = jnp.concatenate([c1m, m, c2m], axis=-1)
        parts = [c1m.astype(cdt), m.astype(cdt), c2m.astype(cdt)]
        qkv_refs = (w["main_wqkv_c1"], w["main_wqkv_m"], w["main_wqkv_c2"])
        a = attention(
            parts,
            lambda p, s, h: qkv_refs[p][0, s * n_head + h],
            lambda h: w["main_wo"][0, h],
            residual, w["main_mha_g"][0], w["main_mha_b"][0])
        # TODO(synk): shape-inconsistent reference; use the middle d_model slice as FF residual.
        res = a[:, d_context:d_context + d_model]
        m_s[...] = ffn(a, res, w["main_w1"][0], w["main_b1"][0],
                       w["main_w2"][0], w["main_b2"][0],
                       w["main_ff_g"][0], w["main_ff_b"][0])

    # --- steps 0..n_layers-1: both context towers with layer (step) weights -----
    @pl.when(step < n_layers)
    def _ctx_blocks():
        for t, (c_s, cm_s) in enumerate(((c1_s, c1m_s), (c2_s, c2m_s))):
            c = c_s[...]
            a = attention(
                [c.astype(cdt)],
                lambda p, s, h, t=t: w["ctx_wqkv"][t, s * n_head + h],
                lambda h, t=t: w["ctx_wo"][t, h],
                c, w["ctx_mha_g"][t], w["ctx_mha_b"][t])
            c_new = ffn(a, a, w["ctx_w1"][t], w["ctx_b1"][t],
                        w["ctx_w2"][t], w["ctx_b2"][t],
                        w["ctx_ff_g"][t], w["ctx_ff_b"][t])
            cm = f32dot(c_new.astype(cdt), w["ctx_lw"][t]) + w["ctx_lb"][t]
            c_s[...] = c_new
            cm_s[...] = cm

    # --- final step: write output ------------------------------------------------
    @pl.when(step == n_layers)
    def _write_output():
        o_ref[...] = m_s[...].astype(o_ref.dtype)


# ------------------------------ wrapper --------------------------------------
def _encoder_forward_impl(params, c1, c2, m, *, n_layers, n_head, d_qkv,
                          d_model, d_context):
    del d_qkv  # scale is folded into the Q weights at init time
    B, L, _ = m.shape
    N = B * L
    weights = [params[k] for k in W_KEYS]
    last_layer = n_layers - 1

    kernel = functools.partial(
        _encoder_kernel, n_layers=n_layers, n_head=n_head,
        d_model=d_model, d_context=d_context, batch=B, seq=L)

    def act_spec(d):
        # Whole folded activation, constant index -> single DMA, stays VMEM-resident.
        return pl.BlockSpec((N, d), lambda i: (0, 0))

    def ctx_spec(arr):
        nd = arr.ndim
        block = (2,) + arr.shape[1:]        # both towers of one layer
        return pl.BlockSpec(
            block, lambda i, _n=nd: (jnp.minimum(i, last_layer),) + (0,) * (_n - 1))

    def main_spec(arr):
        nd = arr.ndim
        block = (1,) + arr.shape[1:]        # one layer
        return pl.BlockSpec(
            block, lambda i, _n=nd: (jnp.maximum(i - 1, 0),) + (0,) * (_n - 1))

    def w_spec(key, arr):
        return ctx_spec(arr) if key.startswith("ctx_") else main_spec(arr)

    # Generation-aware VMEM limit (~80% of capacity, clamped).
    try:
        info = pltpu.get_tpu_info()
        vmem_cap = int(getattr(info, "vmem_capacity_bytes", 64 * 1024 * 1024))
    except Exception:
        vmem_cap = 64 * 1024 * 1024
    vmem_limit = max(32 * 1024 * 1024, min(int(vmem_cap * 0.8), 112 * 1024 * 1024))

    out2d = pl.pallas_call(
        kernel,
        out_shape=jax.ShapeDtypeStruct((N, d_model), jnp.float32),
        grid=(n_layers + 1,),
        in_specs=[act_spec(d_model)] * 3
                 + [w_spec(k, wt) for k, wt in zip(W_KEYS, weights)],
        out_specs=act_spec(d_model),
        scratch_shapes=[
            pltpu.VMEM((N, d_model), jnp.float32),    # c1
            pltpu.VMEM((N, d_model), jnp.float32),    # c2
            pltpu.VMEM((N, d_model), jnp.float32),    # m
            pltpu.VMEM((N, d_context), jnp.float32),  # c1_m
            pltpu.VMEM((N, d_context), jnp.float32),  # c2_m
        ],
        compiler_params=pltpu.CompilerParams(
            dimension_semantics=("arbitrary",),       # sequential layer streaming
            vmem_limit_bytes=vmem_limit,
        ),
    )(c1.reshape(N, d_model), c2.reshape(N, d_model), m.reshape(N, d_model), *weights)
    return out2d.reshape(B, L, d_model)


encoder_forward = jax.jit(
    _encoder_forward_impl,
    static_argnames=("n_layers", "n_head", "d_qkv", "d_model", "d_context"))


# ------------------------------ Parameter init ------------------------------
def _xavier_normal(key, shape):
    receptive = 1
    for s in shape[2:]:
        receptive *= s
    fan_out = shape[0] * receptive
    fan_in = (shape[1] * receptive) if len(shape) > 1 else shape[0]
    std = (2.0 / (fan_in + fan_out)) ** 0.5
    return std * jax.random.normal(key, shape, dtype=jnp.float32)


def init_encoder(key, d_model, d_ff, d_context, n_layers, n_head, d_qkv,
                 param_dtype=PARAM_DTYPE):
    d_cat = d_model + 2 * d_context
    scale = 1.0 / (d_qkv ** 0.5)

    def mha_p(k, d_in):
        k1, k2, k3, k4 = jax.random.split(k, 4)
        wq = _xavier_normal(k1, (n_head, d_in, d_qkv)) * scale  # fold 1/sqrt(d_qkv) into Wq
        wk = _xavier_normal(k2, (n_head, d_in, d_qkv))
        wv = _xavier_normal(k3, (n_head, d_in, d_qkv))
        wo = _xavier_normal(k4, (n_head, d_qkv, d_in))
        wqkv = jnp.stack([wq, wk, wv]).reshape(3 * n_head, d_in, d_qkv)
        return dict(wqkv=wqkv, wo=wo,
                    g=jnp.ones((1, d_in), jnp.float32),
                    b=jnp.zeros((1, d_in), jnp.float32))

    def pff_p(k, d_in):
        k1, k2, k3, k4 = jax.random.split(k, 4)
        return dict(
            w1=_xavier_normal(k1, (d_in, d_ff)),
            b1=0.01 * jax.random.normal(k2, (1, d_ff), jnp.float32),
            w2=_xavier_normal(k3, (d_ff, d_model)),
            b2=0.01 * jax.random.normal(k4, (1, d_model), jnp.float32),
            g=jnp.ones((1, d_model), jnp.float32),
            b=jnp.zeros((1, d_model), jnp.float32))

    def lin_p(k):
        k1, k2 = jax.random.split(k)
        return dict(w=_xavier_normal(k1, (d_model, d_context)),
                    b=0.01 * jax.random.normal(k2, (1, d_context), jnp.float32))

    ctx_layers = [[], []]                              # [tower][layer] -> (mha, pff, lin)
    for t in range(2):
        for _ in range(n_layers):
            key, k1, k2, k3 = jax.random.split(key, 4)
            ctx_layers[t].append((mha_p(k1, d_model), pff_p(k2, d_model), lin_p(k3)))
    main_layers = []                                   # [layer] -> (mha, pff)
    for _ in range(n_layers):
        key, k1, k2 = jax.random.split(key, 3)
        main_layers.append((mha_p(k1, d_cat), pff_p(k2, d_cat)))

    def stack_ctx(fn):
        # Layout: [layer0:tower0, layer0:tower1, layer1:tower0, ...] -> leading dim 2*n_layers.
        per_layer = [jnp.stack([fn(ctx_layers[t][l]) for t in range(2)])
                     for l in range(n_layers)]
        arr = jnp.stack(per_layer)
        return arr.reshape((2 * n_layers,) + arr.shape[2:])

    def stack_main(fn):
        return jnp.stack([fn(l) for l in main_layers])

    wd = param_dtype
    dc = d_context
    return {
        "ctx_wqkv": stack_ctx(lambda l: l[0]["wqkv"]).astype(wd),   # (2NL, 3H, D, Q)
        "ctx_wo": stack_ctx(lambda l: l[0]["wo"]).astype(wd),        # (2NL, H, Q, D)
        "ctx_mha_g": stack_ctx(lambda l: l[0]["g"]),
        "ctx_mha_b": stack_ctx(lambda l: l[0]["b"]),
        "ctx_w1": stack_ctx(lambda l: l[1]["w1"]).astype(wd),
        "ctx_b1": stack_ctx(lambda l: l[1]["b1"]),
        "ctx_w2": stack_ctx(lambda l: l[1]["w2"]).astype(wd),
        "ctx_b2": stack_ctx(lambda l: l[1]["b2"]),
        "ctx_ff_g": stack_ctx(lambda l: l[1]["g"]),
        "ctx_ff_b": stack_ctx(lambda l: l[1]["b"]),
        "ctx_lw": stack_ctx(lambda l: l[2]["w"]).astype(wd),
        "ctx_lb": stack_ctx(lambda l: l[2]["b"]),
        # main-path QKV split host-side into the cat(c1_m, m, c2_m) row blocks
        "main_wqkv_c1": stack_main(lambda l: l[0]["wqkv"][:, :dc, :]).astype(wd),
        "main_wqkv_m": stack_main(lambda l: l[0]["wqkv"][:, dc:dc + d_model, :]).astype(wd),
        "main_wqkv_c2": stack_main(lambda l: l[0]["wqkv"][:, dc + d_model:, :]).astype(wd),
        "main_wo": stack_main(lambda l: l[0]["wo"]).astype(wd),      # (NL, H, Q, d_cat)
        "main_mha_g": stack_main(lambda l: l[0]["g"]),
        "main_mha_b": stack_main(lambda l: l[0]["b"]),
        "main_w1": stack_main(lambda l: l[1]["w1"]).astype(wd),
        "main_b1": stack_main(lambda l: l[1]["b1"]),
        "main_w2": stack_main(lambda l: l[1]["w2"]).astype(wd),
        "main_b2": stack_main(lambda l: l[1]["b2"]),
        "main_ff_g": stack_main(lambda l: l[1]["g"]),
        "main_ff_b": stack_main(lambda l: l[1]["b"]),
    }


if __name__ == "__main__":
    # Small config consistent with the module's constructor arguments.
    D_MODEL, D_FF, D_CONTEXT, N_LAYERS, N_HEAD, D_QKV = 64, 128, 16, 2, 2, 16
    B, L = 2, 8

    root = jax.random.PRNGKey(0)
    kp, k1, k2, k3 = jax.random.split(root, 4)
    params = init_encoder(kp, D_MODEL, D_FF, D_CONTEXT, N_LAYERS, N_HEAD, D_QKV)

    c1 = jax.random.normal(k1, (B, L, D_MODEL), jnp.float32)
    c2 = jax.random.normal(k2, (B, L, D_MODEL), jnp.float32)
    m = jax.random.normal(k3, (B, L, D_MODEL), jnp.float32)

    out = encoder_forward(params, c1, c2, m,
                          n_layers=N_LAYERS, n_head=N_HEAD, d_qkv=D_QKV,
                          d_model=D_MODEL, d_context=D_CONTEXT)
    out = jax.block_until_ready(out)
    assert out.shape == (B, L, D_MODEL), out.shape
    assert bool(jnp.all(jnp.isfinite(out)))
    print("KERNEL_OK")
</pallas_src>

<mosaic_0001>
module attributes {stable_mosaic.version = 11 : i64} {
  func.func @_encoder_kernel(%arg0: i32, %arg1: memref<16x64xf32, #tpu.memory_space<vmem>>, %arg2: memref<16x64xf32, #tpu.memory_space<vmem>>, %arg3: memref<16x64xf32, #tpu.memory_space<vmem>>, %arg4: memref<2x6x64x16xbf16, #tpu.memory_space<vmem>>, %arg5: memref<2x2x16x64xbf16, #tpu.memory_space<vmem>>, %arg6: memref<2x1x64xf32, #tpu.memory_space<vmem>>, %arg7: memref<2x1x64xf32, #tpu.memory_space<vmem>>, %arg8: memref<2x64x128xbf16, #tpu.memory_space<vmem>>, %arg9: memref<2x1x128xf32, #tpu.memory_space<vmem>>, %arg10: memref<2x128x64xbf16, #tpu.memory_space<vmem>>, %arg11: memref<2x1x64xf32, #tpu.memory_space<vmem>>, %arg12: memref<2x1x64xf32, #tpu.memory_space<vmem>>, %arg13: memref<2x1x64xf32, #tpu.memory_space<vmem>>, %arg14: memref<2x64x16xbf16, #tpu.memory_space<vmem>>, %arg15: memref<2x1x16xf32, #tpu.memory_space<vmem>>, %arg16: memref<1x6x16x16xbf16, #tpu.memory_space<vmem>>, %arg17: memref<1x6x64x16xbf16, #tpu.memory_space<vmem>>, %arg18: memref<1x6x16x16xbf16, #tpu.memory_space<vmem>>, %arg19: memref<1x2x16x96xbf16, #tpu.memory_space<vmem>>, %arg20: memref<1x1x96xf32, #tpu.memory_space<vmem>>, %arg21: memref<1x1x96xf32, #tpu.memory_space<vmem>>, %arg22: memref<1x96x128xbf16, #tpu.memory_space<vmem>>, %arg23: memref<1x1x128xf32, #tpu.memory_space<vmem>>, %arg24: memref<1x128x64xbf16, #tpu.memory_space<vmem>>, %arg25: memref<1x1x64xf32, #tpu.memory_space<vmem>>, %arg26: memref<1x1x64xf32, #tpu.memory_space<vmem>>, %arg27: memref<1x1x64xf32, #tpu.memory_space<vmem>>, %arg28: memref<16x64xf32, #tpu.memory_space<vmem>>, %arg29: memref<16x64xf32, #tpu.memory_space<vmem>>, %arg30: memref<16x64xf32, #tpu.memory_space<vmem>>, %arg31: memref<16x64xf32, #tpu.memory_space<vmem>>, %arg32: memref<16x16xf32, #tpu.memory_space<vmem>>, %arg33: memref<16x16xf32, #tpu.memory_space<vmem>>) attributes {dimension_semantics = [#tpu.dimension_semantics<arbitrary>], iteration_bounds = array<i64: 3>, scalar_prefetch = 0 : i64, scratch_operands = 5 : i64, tpu.core_type = #tpu.core_type<tc>, window_params = [{pipeline_mode = #tpu.pipeline_mode<synchronous>, transform_indices = @transform_0, window_bounds = array<i64: 16, 64>}, {pipeline_mode = #tpu.pipeline_mode<synchronous>, transform_indices = @transform_1, window_bounds = array<i64: 16, 64>}, {pipeline_mode = #tpu.pipeline_mode<synchronous>, transform_indices = @transform_2, window_bounds = array<i64: 16, 64>}, {transform_indices = @transform_3, window_bounds = array<i64: 2, 6, 64, 16>}, {transform_indices = @transform_4, window_bounds = array<i64: 2, 2, 16, 64>}, {transform_indices = @transform_5, window_bounds = array<i64: 2, 1, 64>}, {transform_indices = @transform_6, window_bounds = array<i64: 2, 1, 64>}, {transform_indices = @transform_7, window_bounds = array<i64: 2, 64, 128>}, {transform_indices = @transform_8, window_bounds = array<i64: 2, 1, 128>}, {transform_indices = @transform_9, window_bounds = array<i64: 2, 128, 64>}, {transform_indices = @transform_10, window_bounds = array<i64: 2, 1, 64>}, {transform_indices = @transform_11, window_bounds = array<i64: 2, 1, 64>}, {transform_indices = @transform_12, window_bounds = array<i64: 2, 1, 64>}, {transform_indices = @transform_13, window_bounds = array<i64: 2, 64, 16>}, {transform_indices = @transform_14, window_bounds = array<i64: 2, 1, 16>}, {transform_indices = @transform_15, window_bounds = array<i64: 1, 6, 16, 16>}, {transform_indices = @transform_16, window_bounds = array<i64: 1, 6, 64, 16>}, {transform_indices = @transform_17, window_bounds = array<i64: 1, 6, 16, 16>}, {transform_indices = @transform_18, window_bounds = array<i64: 1, 2, 16, 96>}, {transform_indices = @transform_19, window_bounds = array<i64: 1, 1, 96>}, {transform_indices = @transform_20, window_bounds = array<i64: 1, 1, 96>}, {transform_indices = @transform_21, window_bounds = array<i64: 1, 96, 128>}, {transform_indices = @transform_22, window_bounds = array<i64: 1, 1, 128>}, {transform_indices = @transform_23, window_bounds = array<i64: 1, 128, 64>}, {transform_indices = @transform_24, window_bounds = array<i64: 1, 1, 64>}, {transform_indices = @transform_25, window_bounds = array<i64: 1, 1, 64>}, {transform_indices = @transform_26, window_bounds = array<i64: 1, 1, 64>}, {pipeline_mode = #tpu.pipeline_mode<synchronous>, transform_indices = @transform_27, window_bounds = array<i64: 16, 64>}]} {
    %c0_i32 = arith.constant 0 : i32
    %0 = arith.cmpi eq, %arg0, %c0_i32 : i32
    %1 = arith.extui %0 : i1 to i32
    %c0_i32_0 = arith.constant 0 : i32
    %2 = arith.cmpi ne, %1, %c0_i32_0 : i32
    scf.if %2 {
      %c0 = arith.constant 0 : index
      %c0_6 = arith.constant 0 : index
      %12 = vector.load %arg1[%c0, %c0_6] : memref<16x64xf32, #tpu.memory_space<vmem>>, vector<16x64xf32>
      %c0_7 = arith.constant 0 : index
      %c0_8 = arith.constant 0 : index
      %13 = vector.load %arg29[%c0_7, %c0_8] : memref<16x64xf32, #tpu.memory_space<vmem>>, vector<16x64xf32>
      tpu.vector_store %arg29[%c0_7, %c0_8], %12 {strides = array<i32>} : memref<16x64xf32, #tpu.memory_space<vmem>>, vector<16x64xf32>,
      %c0_9 = arith.constant 0 : index
      %c0_10 = arith.constant 0 : index
      %14 = vector.load %arg2[%c0_9, %c0_10] : memref<16x64xf32, #tpu.memory_space<vmem>>, vector<16x64xf32>
      %c0_11 = arith.constant 0 : index
      %c0_12 = arith.constant 0 : index
      %15 = vector.load %arg30[%c0_11, %c0_12] : memref<16x64xf32, #tpu.memory_space<vmem>>, vector<16x64xf32>
      tpu.vector_store %arg30[%c0_11, %c0_12], %14 {strides = array<i32>} : memref<16x64xf32, #tpu.memory_space<vmem>>, vector<16x64xf32>,
      %c0_13 = arith.constant 0 : index
      %c0_14 = arith.constant 0 : index
      %16 = vector.load %arg3[%c0_13, %c0_14] : memref<16x64xf32, #tpu.memory_space<vmem>>, vector<16x64xf32>
      %c0_15 = arith.constant 0 : index
      %c0_16 = arith.constant 0 : index
      %17 = vector.load %arg31[%c0_15, %c0_16] : memref<16x64xf32, #tpu.memory_space<vmem>>, vector<16x64xf32>
      tpu.vector_store %arg31[%c0_15, %c0_16], %16 {strides = array<i32>} : memref<16x64xf32, #tpu.memory_space<vmem>>, vector<16x64xf32>,
    } else {
    }
    %c0_i32_1 = arith.constant 0 : i32
    %3 = arith.cmpi sgt, %arg0, %c0_i32_1 : i32
    %4 = arith.extui %3 : i1 to i32
    %c0_i32_2 = arith.constant 0 : i32
    %5 = arith.cmpi ne, %4, %c0_i32_2 : i32
    scf.if %5 {
      %c0 = arith.constant 0 : index
      %c0_6 = arith.constant 0 : index
      %12 = vector.load %arg32[%c0, %c0_6] : memref<16x16xf32, #tpu.memory_space<vmem>>, vector<16x16xf32>
      %c0_7 = arith.constant 0 : index
      %c0_8 = arith.constant 0 : index
      %13 = vector.load %arg33[%c0_7, %c0_8] : memref<16x16xf32, #tpu.memory_space<vmem>>, vector<16x16xf32>
      %c0_9 = arith.constant 0 : index
      %c0_10 = arith.constant 0 : index
      %14 = vector.load %arg31[%c0_9, %c0_10] : memref<16x64xf32, #tpu.memory_space<vmem>>, vector<16x64xf32>
      %15 = tpu.concatenate %12, %14, %13 in 1 : vector<16x16xf32>, vector<16x64xf32>, vector<16x16xf32> -> vector<16x96xf32>
      %16 = arith.truncf %12 : vector<16x16xf32> to vector<16x16xbf16>
      %17 = arith.truncf %14 : vector<16x64xf32> to vector<16x64xbf16>
      %18 = arith.truncf %13 : vector<16x16xf32> to vector<16x16xbf16>
      %c0_11 = arith.constant 0 : index
      %c0_12 = arith.constant 0 : index
      %c0_13 = arith.constant 0 : index
      %19 = vector.load %arg20[%c0_11, %c0_12, %c0_13] : memref<1x1x96xf32, #tpu.memory_space<vmem>>, vector<1x1x96xf32>
      %20 = vector.shape_cast %19 : vector<1x1x96xf32> to vector<1x96xf32>
      %c0_14 = arith.constant 0 : index
      %c0_15 = arith.constant 0 : index
      %c0_16 = arith.constant 0 : index
      %21 = vector.load %arg21[%c0_14, %c0_15, %c0_16] : memref<1x1x96xf32, #tpu.memory_space<vmem>>, vector<1x1x96xf32>
      %22 = vector.shape_cast %21 : vector<1x1x96xf32> to vector<1x96xf32>
      %cst = arith.constant 0.000000e+00 : f32
      %23 = vector.broadcast %cst : f32 to vector<16x96xf32>
      %c0_17 = arith.constant 0 : index
      %c0_18 = arith.constant 0 : index
      %c0_19 = arith.constant 0 : index
      %c0_20 = arith.constant 0 : index
      %24 = vector.load %arg16[%c0_17, %c0_18, %c0_19, %c0_20] : memref<1x6x16x16xbf16, #tpu.memory_space<vmem>>, vector<1x1x16x16xbf16>
      %25 = vector.shape_cast %24 : vector<1x1x16x16xbf16> to vector<16x16xbf16>
      %cst_21 = arith.constant dense<0.000000e+00> : vector<16x16xf32>
      %26 = tpu.matmul %16, %25, %cst_21 {dimension_numbers = #tpu.dot_dimension_numbers<[1], [0], [0], [1], [0, 0, 1, 1], [], []>} : vector<16x16xbf16>, vector<16x16xbf16>, vector<16x16xf32> -> vector<16x16xf32>
      %c0_22 = arith.constant 0 : index
      %c0_23 = arith.constant 0 : index
      %c0_24 = arith.constant 0 : index
      %c0_25 = arith.constant 0 : index
      %27 = vector.load %arg17[%c0_22, %c0_23, %c0_24, %c0_25] : memref<1x6x64x16xbf16, #tpu.memory_space<vmem>>, vector<1x1x64x16xbf16>
      %28 = vector.shape_cast %27 : vector<1x1x64x16xbf16> to vector<64x16xbf16>
      %cst_26 = arith.constant dense<0.000000e+00> : vector<16x16xf32>
      %29 = tpu.matmul %17, %28, %cst_26 {dimension_numbers = #tpu.dot_dimension_numbers<[1], [0], [0], [1], [0, 0, 1, 1], [], []>} : vector<16x64xbf16>, vector<64x16xbf16>, vector<16x16xf32> -> vector<16x16xf32>
      %30 = arith.addf %26, %29 : vector<16x16xf32>
      %c0_27 = arith.constant 0 : index
      %c0_28 = arith.constant 0 : index
      %c0_29 = arith.constant 0 : index
      %c0_30 = arith.constant 0 : index
      %31 = vector.load %arg18[%c0_27, %c0_28, %c0_29, %c0_30] : memref<1x6x16x16xbf16, #tpu.memory_space<vmem>>, vector<1x1x16x16xbf16>
      %32 = vector.shape_cast %31 : vector<1x1x16x16xbf16> to vector<16x16xbf16>
      %cst_31 = arith.constant dense<0.000000e+00> : vector<16x16xf32>
      %33 = tpu.matmul %18, %32, %cst_31 {dimension_numbers = #tpu.dot_dimension_numbers<[1], [0], [0], [1], [0, 0, 1, 1], [], []>} : vector<16x16xbf16>, vector<16x16xbf16>, vector<16x16xf32> -> vector<16x16xf32>
      %34 = arith.addf %30, %33 : vector<16x16xf32>
      %c0_32 = arith.constant 0 : index
      %c2 = arith.constant 2 : index
      %c0_33 = arith.constant 0 : index
      %c0_34 = arith.constant 0 : index
      %35 = vector.load %arg16[%c0_32, %c2, %c0_33, %c0_34] : memref<1x6x16x16xbf16, #tpu.memory_space<vmem>>, vector<1x1x16x16xbf16>
      %36 = vector.shape_cast %35 : vector<1x1x16x16xbf16> to vector<16x16xbf16>
      %cst_35 = arith.constant dense<0.000000e+00> : vector<16x16xf32>
      %37 = tpu.matmul %16, %36, %cst_35 {dimension_numbers = #tpu.dot_dimension_numbers<[1], [0], [0], [1], [0, 0, 1, 1], [], []>} : vector<16x16xbf16>, vector<16x16xbf16>, vector<16x16xf32> -> vector<16x16xf32>
      %c0_36 = arith.constant 0 : index
      %c2_37 = arith.constant 2 : index
      %c0_38 = arith.constant 0 : index
      %c0_39 = arith.constant 0 : index
      %38 = vector.load %arg17[%c0_36, %c2_37, %c0_38, %c0_39] : memref<1x6x64x16xbf16, #tpu.memory_space<vmem>>, vector<1x1x64x16xbf16>
      %39 = vector.shape_cast %38 : vector<1x1x64x16xbf16> to vector<64x16xbf16>
      %cst_40 = arith.constant dense<0.000000e+00> : vector<16x16xf32>
      %40 = tpu.matmul %17, %39, %cst_40 {dimension_numbers = #tpu.dot_dimension_numbers<[1], [0], [0], [1], [0, 0, 1, 1], [], []>} : vector<16x64xbf16>, vector<64x16xbf16>, vector<16x16xf32> -> vector<16x16xf32>
      %41 = arith.addf %37, %40 : vector<16x16xf32>
      %c0_41 = arith.constant 0 : index
      %c2_42 = arith.constant 2 : index
      %c0_43 = arith.constant 0 : index
      %c0_44 = arith.constant 0 : index
      %42 = vector.load %arg18[%c0_41, %c2_42, %c0_43, %c0_44] : memref<1x6x16x16xbf16, #tpu.memory_space<vmem>>, vector<1x1x16x16xbf16>
      %43 = vector.shape_cast %42 : vector<1x1x16x16xbf16> to vector<16x16xbf16>
      %cst_45 = arith.constant dense<0.000000e+00> : vector<16x16xf32>
      %44 = tpu.matmul %18, %43, %cst_45 {dimension_numbers = #tpu.dot_dimension_numbers<[1], [0], [0], [1], [0, 0, 1, 1], [], []>} : vector<16x16xbf16>, vector<16x16xbf16>, vector<16x16xf32> -> vector<16x16xf32>
      %45 = arith.addf %41, %44 : vector<16x16xf32>
      %c0_46 = arith.constant 0 : index
      %c4 = arith.constant 4 : index
      %c0_47 = arith.constant 0 : index
      %c0_48 = arith.constant 0 : index
      %46 = vector.load %arg16[%c0_46, %c4, %c0_47, %c0_48] : memref<1x6x16x16xbf16, #tpu.memory_space<vmem>>, vector<1x1x16x16xbf16>
      %47 = vector.shape_cast %46 : vector<1x1x16x16xbf16> to vector<16x16xbf16>
      %cst_49 = arith.constant dense<0.000000e+00> : vector<16x16xf32>
      %48 = tpu.matmul %16, %47, %cst_49 {dimension_numbers = #tpu.dot_dimension_numbers<[1], [0], [0], [1], [0, 0, 1, 1], [], []>} : vector<16x16xbf16>, vector<16x16xbf16>, vector<16x16xf32> -> vector<16x16xf32>
      %c0_50 = arith.constant 0 : index
      %c4_51 = arith.constant 4 : index
      %c0_52 = arith.constant 0 : index
      %c0_53 = arith.constant 0 : index
      %49 = vector.load %arg17[%c0_50, %c4_51, %c0_52, %c0_53] : memref<1x6x64x16xbf16, #tpu.memory_space<vmem>>, vector<1x1x64x16xbf16>
      %50 = vector.shape_cast %49 : vector<1x1x64x16xbf16> to vector<64x16xbf16>
      %cst_54 = arith.constant dense<0.000000e+00> : vector<16x16xf32>
      %51 = tpu.matmul %17, %50, %cst_54 {dimension_numbers = #tpu.dot_dimension_numbers<[1], [0], [0], [1], [0, 0, 1, 1], [], []>} : vector<16x64xbf16>, vector<64x16xbf16>, vector<16x16xf32> -> vector<16x16xf32>
      %52 = arith.addf %48, %51 : vector<16x16xf32>
      %c0_55 = arith.constant 0 : index
      %c4_56 = arith.constant 4 : index
      %c0_57 = arith.constant 0 : index
      %c0_58 = arith.constant 0 : index
      %53 = vector.load %arg18[%c0_55, %c4_56, %c0_57, %c0_58] : memref<1x6x16x16xbf16, #tpu.memory_space<vmem>>, vector<1x1x16x16xbf16>
      %54 = vector.shape_cast %53 : vector<1x1x16x16xbf16> to vector<16x16xbf16>
      %cst_59 = arith.constant dense<0.000000e+00> : vector<16x16xf32>
      %55 = tpu.matmul %18, %54, %cst_59 {dimension_numbers = #tpu.dot_dimension_numbers<[1], [0], [0], [1], [0, 0, 1, 1], [], []>} : vector<16x16xbf16>, vector<16x16xbf16>, vector<16x16xf32> -> vector<16x16xf32>
      %56 = arith.addf %52, %55 : vector<16x16xf32>
      %57 = vector.extract_strided_slice %34 {offsets = [0, 0], sizes = [8, 16], strides = [1, 1]} : vector<16x16xf32> to vector<8x16xf32>
      %58 = arith.truncf %57 : vector<8x16xf32> to vector<8x16xbf16>
      %59 = vector.extract_strided_slice %45 {offsets = [0, 0], sizes = [8, 16], strides = [1, 1]} : vector<16x16xf32> to vector<8x16xf32>
      %60 = arith.truncf %59 : vector<8x16xf32> to vector<8x16xbf16>
      %61 = vector.extract_strided_slice %56 {offsets = [0, 0], sizes = [8, 16], strides = [1, 1]} : vector<16x16xf32> to vector<8x16xf32>
      %62 = arith.truncf %61 : vector<8x16xf32> to vector<8x16xbf16>
      %cst_60 = arith.constant dense<0.000000e+00> : vector<8x8xf32>
      %63 = tpu.matmul %58, %60, %cst_60 {dimension_numbers = #tpu.dot_dimension_numbers<[1], [1], [0], [0], [0, 0, 1, 0], [], []>} : vector<8x16xbf16>, vector<8x16xbf16>, vector<8x8xf32> -> vector<8x8xf32>
      %cst_61 = arith.constant dense<0xFF800000> : vector<8xf32>
      %64 = vector.multi_reduction <maximumf>, %63, %cst_61 [1] : vector<8x8xf32> to vector<8xf32>
      %65 = vector.shape_cast %64 : vector<8xf32> to vector<8x1xf32>
      %66 = vector.broadcast %65 : vector<8x1xf32> to vector<8x8xf32>
      %67 = arith.subf %63, %66 : vector<8x8xf32>
      %68 = math.exp %67 : vector<8x8xf32>
      %cst_62 = arith.constant dense<0.000000e+00> : vector<8xf32>
      %69 = vector.multi_reduction <add>, %68, %cst_62 [1] : vector<8x8xf32> to vector<8xf32>
      %70 = vector.shape_cast %69 : vector<8xf32> to vector<8x1xf32>
      %71 = tpu.reciprocal %70 {approx = true} : vector<8x1xf32> -> vector<8x1xf32>
      %72 = vector.broadcast %71 : vector<8x1xf32> to vector<8x8xf32>
      %73 = arith.mulf %68, %72 : vector<8x8xf32>
      %74 = arith.truncf %73 : vector<8x8xf32> to vector<8x8xbf16>
      %cst_63 = arith.constant dense<0.000000e+00> : vector<8x16xf32>
      %75 = tpu.matmul %74, %62, %cst_63 {dimension_numbers = #tpu.dot_dimension_numbers<[1], [0], [0], [1], [0, 0, 1, 1], [], []>} : vector<8x8xbf16>, vector<8x16xbf16>, vector<8x16xf32> -> vector<8x16xf32>
      %76 = vector.extract_strided_slice %34 {offsets = [8, 0], sizes = [8, 16], strides = [1, 1]} : vector<16x16xf32> to vector<8x16xf32>
      %77 = arith.truncf %76 : vector<8x16xf32> to vector<8x16xbf16>
      %78 = vector.extract_strided_slice %45 {offsets = [8, 0], sizes = [8, 16], strides = [1, 1]} : vector<16x16xf32> to vector<8x16xf32>
      %79 = arith.truncf %78 : vector<8x16xf32> to vector<8x16xbf16>
      %80 = vector.extract_strided_slice %56 {offsets = [8, 0], sizes = [8, 16], strides = [1, 1]} : vector<16x16xf32> to vector<8x16xf32>
      %81 = arith.truncf %80 : vector<8x16xf32> to vector<8x16xbf16>
      %cst_64 = arith.constant dense<0.000000e+00> : vector<8x8xf32>
      %82 = tpu.matmul %77, %79, %cst_64 {dimension_numbers = #tpu.dot_dimension_numbers<[1], [1], [0], [0], [0, 0, 1, 0], [], []>} : vector<8x16xbf16>, vector<8x16xbf16>, vector<8x8xf32> -> vector<8x8xf32>
      %cst_65 = arith.constant dense<0xFF800000> : vector<8xf32>
      %83 = vector.multi_reduction <maximumf>, %82, %cst_65 [1] : vector<8x8xf32> to vector<8xf32>
      %84 = vector.shape_cast %83 : vector<8xf32> to vector<8x1xf32>
      %85 = vector.broadcast %84 : vector<8x1xf32> to vector<8x8xf32>
      %86 = arith.subf %82, %85 : vector<8x8xf32>
      %87 = math.exp %86 : vector<8x8xf32>
      %cst_66 = arith.constant dense<0.000000e+00> : vector<8xf32>
      %88 = vector.multi_reduction <add>, %87, %cst_66 [1] : vector<8x8xf32> to vector<8xf32>
      %89 = vector.shape_cast %88 : vector<8xf32> to vector<8x1xf32>
      %90 = tpu.reciprocal %89 {approx = true} : vector<8x1xf32> -> vector<8x1xf32>
      %91 = vector.broadcast %90 : vector<8x1xf32> to vector<8x8xf32>
      %92 = arith.mulf %87, %91 : vector<8x8xf32>
      %93 = arith.truncf %92 : vector<8x8xf32> to vector<8x8xbf16>
      %cst_67 = arith.constant dense<0.000000e+00> : vector<8x16xf32>
      %94 = tpu.matmul %93, %81, %cst_67 {dimension_numbers = #tpu.dot_dimension_numbers<[1], [0], [0], [1], [0, 0, 1, 1], [], []>} : vector<8x8xbf16>, vector<8x16xbf16>, vector<8x16xf32> -> vector<8x16xf32>
      %95 = tpu.concatenate %75, %94 in 0 : vector<8x16xf32>, vector<8x16xf32> -> vector<16x16xf32>
      %96 = arith.truncf %95 : vector<16x16xf32> to vector<16x16xbf16>
      %c0_68 = arith.constant 0 : index
      %c0_69 = arith.constant 0 : index
      %c0_70 = arith.constant 0 : index
      %c0_71 = arith.constant 0 : index
      %97 = vector.load %arg19[%c0_68, %c0_69, %c0_70, %c0_71] : memref<1x2x16x96xbf16, #tpu.memory_space<vmem>>, vector<1x1x16x96xbf16>
      %98 = vector.shape_cast %97 : vector<1x1x16x96xbf16> to vector<16x96xbf16>
      %cst_72 = arith.constant dense<0.000000e+00> : vector<16x96xf32>
      %99 = tpu.matmul %96, %98, %cst_72 {dimension_numbers = #tpu.dot_dimension_numbers<[1], [0], [0], [1], [0, 0, 1, 1], [], []>} : vector<16x16xbf16>, vector<16x96xbf16>, vector<16x96xf32> -> vector<16x96xf32>
      %100 = arith.addf %23, %99 : vector<16x96xf32>
      %c0_73 = arith.constant 0 : index
      %c1 = arith.constant 1 : index
      %c0_74 = arith.constant 0 : index
      %c0_75 = arith.constant 0 : index
      %101 = vector.load %arg16[%c0_73, %c1, %c0_74, %c0_75] : memref<1x6x16x16xbf16, #tpu.memory_space<vmem>>, vector<1x1x16x16xbf16>
      %102 = vector.shape_cast %101 : vector<1x1x16x16xbf16> to vector<16x16xbf16>
      %cst_76 = arith.constant dense<0.000000e+00> : vector<16x16xf32>
      %103 = tpu.matmul %16, %102, %cst_76 {dimension_numbers = #tpu.dot_dimension_numbers<[1], [0], [0], [1], [0, 0, 1, 1], [], []>} : vector<16x16xbf16>, vector<16x16xbf16>, vector<16x16xf32> -> vector<16x16xf32>
      %c0_77 = arith.constant 0 : index
      %c1_78 = arith.constant 1 : index
      %c0_79 = arith.constant 0 : index
      %c0_80 = arith.constant 0 : index
      %104 = vector.load %arg17[%c0_77, %c1_78, %c0_79, %c0_80] : memref<1x6x64x16xbf16, #tpu.memory_space<vmem>>, vector<1x1x64x16xbf16>
      %105 = vector.shape_cast %104 : vector<1x1x64x16xbf16> to vector<64x16xbf16>
      %cst_81 = arith.constant dense<0.000000e+00> : vector<16x16xf32>
      %106 = tpu.matmul %17, %105, %cst_81 {dimension_numbers = #tpu.dot_dimension_numbers<[1], [0], [0], [1], [0, 0, 1, 1], [], []>} : vector<16x64xbf16>, vector<64x16xbf16>, vector<16x16xf32> -> vector<16x16xf32>
      %107 = arith.addf %103, %106 : vector<16x16xf32>
      %c0_82 = arith.constant 0 : index
      %c1_83 = arith.constant 1 : index
      %c0_84 = arith.constant 0 : index
      %c0_85 = arith.constant 0 : index
      %108 = vector.load %arg18[%c0_82, %c1_83, %c0_84, %c0_85] : memref<1x6x16x16xbf16, #tpu.memory_space<vmem>>, vector<1x1x16x16xbf16>
      %109 = vector.shape_cast %108 : vector<1x1x16x16xbf16> to vector<16x16xbf16>
      %cst_86 = arith.constant dense<0.000000e+00> : vector<16x16xf32>
      %110 = tpu.matmul %18, %109, %cst_86 {dimension_numbers = #tpu.dot_dimension_numbers<[1], [0], [0], [1], [0, 0, 1, 1], [], []>} : vector<16x16xbf16>, vector<16x16xbf16>, vector<16x16xf32> -> vector<16x16xf32>
      %111 = arith.addf %107, %110 : vector<16x16xf32>
      %c0_87 = arith.constant 0 : index
      %c3 = arith.constant 3 : index
      %c0_88 = arith.constant 0 : index
      %c0_89 = arith.constant 0 : index
      %112 = vector.load %arg16[%c0_87, %c3, %c0_88, %c0_89] : memref<1x6x16x16xbf16, #tpu.memory_space<vmem>>, vector<1x1x16x16xbf16>
      %113 = vector.shape_cast %112 : vector<1x1x16x16xbf16> to vector<16x16xbf16>
      %cst_90 = arith.constant dense<0.000000e+00> : vector<16x16xf32>
      %114 = tpu.matmul %16, %113, %cst_90 {dimension_numbers = #tpu.dot_dimension_numbers<[1], [0], [0], [1], [0, 0, 1, 1], [], []>} : vector<16x16xbf16>, vector<16x16xbf16>, vector<16x16xf32> -> vector<16x16xf32>
      %c0_91 = arith.constant 0 : index
      %c3_92 = arith.constant 3 : index
      %c0_93 = arith.constant 0 : index
      %c0_94 = arith.constant 0 : index
      %115 = vector.load %arg17[%c0_91, %c3_92, %c0_93, %c0_94] : memref<1x6x64x16xbf16, #tpu.memory_space<vmem>>, vector<1x1x64x16xbf16>
      %116 = vector.shape_cast %115 : vector<1x1x64x16xbf16> to vector<64x16xbf16>
      %cst_95 = arith.constant dense<0.000000e+00> : vector<16x16xf32>
      %117 = tpu.matmul %17, %116, %cst_95 {dimension_numbers = #tpu.dot_dimension_numbers<[1], [0], [0], [1], [0, 0, 1, 1], [], []>} : vector<16x64xbf16>, vector<64x16xbf16>, vector<16x16xf32> -> vector<16x16xf32>
      %118 = arith.addf %114, %117 : vector<16x16xf32>
      %c0_96 = arith.constant 0 : index
      %c3_97 = arith.constant 3 : index
      %c0_98 = arith.constant 0 : index
      %c0_99 = arith.constant 0 : index
      %119 = vector.load %arg18[%c0_96, %c3_97, %c0_98, %c0_99] : memref<1x6x16x16xbf16, #tpu.memory_space<vmem>>, vector<1x1x16x16xbf16>
      %120 = vector.shape_cast %119 : vector<1x1x16x16xbf16> to vector<16x16xbf16>
      %cst_100 = arith.constant dense<0.000000e+00> : vector<16x16xf32>
      %121 = tpu.matmul %18, %120, %cst_100 {dimension_numbers = #tpu.dot_dimension_numbers<[1], [0], [0], [1], [0, 0, 1, 1], [], []>} : vector<16x16xbf16>, vector<16x16xbf16>, vector<16x16xf32> -> vector<16x16xf32>
      %122 = arith.addf %118, %121 : vector<16x16xf32>
      %c0_101 = arith.constant 0 : index
      %c5 = arith.constant 5 : index
      %c0_102 = arith.constant 0 : index
      %c0_103 = arith.constant 0 : index
      %123 = vector.load %arg16[%c0_101, %c5, %c0_102, %c0_103] : memref<1x6x16x16xbf16, #tpu.memory_space<vmem>>, vector<1x1x16x16xbf16>
      %124 = vector.shape_cast %123 : vector<1x1x16x16xbf16> to vector<16x16xbf16>
      %cst_104 = arith.constant dense<0.000000e+00> : vector<16x16xf32>
      %125 = tpu.matmul %16, %124, %cst_104 {dimension_numbers = #tpu.dot_dimension_numbers<[1], [0], [0], [1], [0, 0, 1, 1], [], []>} : vector<16x16xbf16>, vector<16x16xbf16>, vector<16x16xf32> -> vector<16x16xf32>
      %c0_105 = arith.constant 0 : index
      %c5_106 = arith.constant 5 : index
      %c0_107 = arith.constant 0 : index
      %c0_108 = arith.constant 0 : index
      %126 = vector.load %arg17[%c0_105, %c5_106, %c0_107, %c0_108] : memref<1x6x64x16xbf16, #tpu.memory_space<vmem>>, vector<1x1x64x16xbf16>
      %127 = vector.shape_cast %126 : vector<1x1x64x16xbf16> to vector<64x16xbf16>
      %cst_109 = arith.constant dense<0.000000e+00> : vector<16x16xf32>
      %128 = tpu.matmul %17, %127, %cst_109 {dimension_numbers = #tpu.dot_dimension_numbers<[1], [0], [0], [1], [0, 0, 1, 1], [], []>} : vector<16x64xbf16>, vector<64x16xbf16>, vector<16x16xf32> -> vector<16x16xf32>
      %129 = arith.addf %125, %128 : vector<16x16xf32>
      %c0_110 = arith.constant 0 : index
      %c5_111 = arith.constant 5 : index
      %c0_112 = arith.constant 0 : index
      %c0_113 = arith.constant 0 : index
      %130 = vector.load %arg18[%c0_110, %c5_111, %c0_112, %c0_113] : memref<1x6x16x16xbf16, #tpu.memory_space<vmem>>, vector<1x1x16x16xbf16>
      %131 = vector.shape_cast %130 : vector<1x1x16x16xbf16> to vector<16x16xbf16>
      %cst_114 = arith.constant dense<0.000000e+00> : vector<16x16xf32>
      %132 = tpu.matmul %18, %131, %cst_114 {dimension_numbers = #tpu.dot_dimension_numbers<[1], [0], [0], [1], [0, 0, 1, 1], [], []>} : vector<16x16xbf16>, vector<16x16xbf16>, vector<16x16xf32> -> vector<16x16xf32>
      %133 = arith.addf %129, %132 : vector<16x16xf32>
      %134 = vector.extract_strided_slice %111 {offsets = [0, 0], sizes = [8, 16], strides = [1, 1]} : vector<16x16xf32> to vector<8x16xf32>
      %135 = arith.truncf %134 : vector<8x16xf32> to vector<8x16xbf16>
      %136 = vector.extract_strided_slice %122 {offsets = [0, 0], sizes = [8, 16], strides = [1, 1]} : vector<16x16xf32> to vector<8x16xf32>
      %137 = arith.truncf %136 : vector<8x16xf32> to vector<8x16xbf16>
      %138 = vector.extract_strided_slice %133 {offsets = [0, 0], sizes = [8, 16], strides = [1, 1]} : vector<16x16xf32> to vector<8x16xf32>
      %139 = arith.truncf %138 : vector<8x16xf32> to vector<8x16xbf16>
      %cst_115 = arith.constant dense<0.000000e+00> : vector<8x8xf32>
      %140 = tpu.matmul %135, %137, %cst_115 {dimension_numbers = #tpu.dot_dimension_numbers<[1], [1], [0], [0], [0, 0, 1, 0], [], []>} : vector<8x16xbf16>, vector<8x16xbf16>, vector<8x8xf32> -> vector<8x8xf32>
      %cst_116 = arith.constant dense<0xFF800000> : vector<8xf32>
      %141 = vector.multi_reduction <maximumf>, %140, %cst_116 [1] : vector<8x8xf32> to vector<8xf32>
      %142 = vector.shape_cast %141 : vector<8xf32> to vector<8x1xf32>
      %143 = vector.broadcast %142 : vector<8x1xf32> to vector<8x8xf32>
      %144 = arith.subf %140, %143 : vector<8x8xf32>
      %145 = math.exp %144 : vector<8x8xf32>
      %cst_117 = arith.constant dense<0.000000e+00> : vector<8xf32>
      %146 = vector.multi_reduction <add>, %145, %cst_117 [1] : vector<8x8xf32> to vector<8xf32>
      %147 = vector.shape_cast %146 : vector<8xf32> to vector<8x1xf32>
      %148 = tpu.reciprocal %147 {approx = true} : vector<8x1xf32> -> vector<8x1xf32>
      %149 = vector.broadcast %148 : vector<8x1xf32> to vector<8x8xf32>
      %150 = arith.mulf %145, %149 : vector<8x8xf32>
      %151 = arith.truncf %150 : vector<8x8xf32> to vector<8x8xbf16>
      %cst_118 = arith.constant dense<0.000000e+00> : vector<8x16xf32>
      %152 = tpu.matmul %151, %139, %cst_118 {dimension_numbers = #tpu.dot_dimension_numbers<[1], [0], [0], [1], [0, 0, 1, 1], [], []>} : vector<8x8xbf16>, vector<8x16xbf16>, vector<8x16xf32> -> vector<8x16xf32>
      %153 = vector.extract_strided_slice %111 {offsets = [8, 0], sizes = [8, 16], strides = [1, 1]} : vector<16x16xf32> to vector<8x16xf32>
      %154 = arith.truncf %153 : vector<8x16xf32> to vector<8x16xbf16>
      %155 = vector.extract_strided_slice %122 {offsets = [8, 0], sizes = [8, 16], strides = [1, 1]} : vector<16x16xf32> to vector<8x16xf32>
      %156 = arith.truncf %155 : vector<8x16xf32> to vector<8x16xbf16>
      %157 = vector.extract_strided_slice %133 {offsets = [8, 0], sizes = [8, 16], strides = [1, 1]} : vector<16x16xf32> to vector<8x16xf32>
      %158 = arith.truncf %157 : vector<8x16xf32> to vector<8x16xbf16>
      %cst_119 = arith.constant dense<0.000000e+00> : vector<8x8xf32>
      %159 = tpu.matmul %154, %156, %cst_119 {dimension_numbers = #tpu.dot_dimension_numbers<[1], [1], [0], [0], [0, 0, 1, 0], [], []>} : vector<8x16xbf16>, vector<8x16xbf16>, vector<8x8xf32> -> vector<8x8xf32>
      %cst_120 = arith.constant dense<0xFF800000> : vector<8xf32>
      %160 = vector.multi_reduction <maximumf>, %159, %cst_120 [1] : vector<8x8xf32> to vector<8xf32>
      %161 = vector.shape_cast %160 : vector<8xf32> to vector<8x1xf32>
      %162 = vector.broadcast %161 : vector<8x1xf32> to vector<8x8xf32>
      %163 = arith.subf %159, %162 : vector<8x8xf32>
      %164 = math.exp %163 : vector<8x8xf32>
      %cst_121 = arith.constant dense<0.000000e+00> : vector<8xf32>
      %165 = vector.multi_reduction <add>, %164, %cst_121 [1] : vector<8x8xf32> to vector<8xf32>
      %166 = vector.shape_cast %165 : vector<8xf32> to vector<8x1xf32>
      %167 = tpu.reciprocal %166 {approx = true} : vector<8x1xf32> -> vector<8x1xf32>
      %168 = vector.broadcast %167 : vector<8x1xf32> to vector<8x8xf32>
      %169 = arith.mulf %164, %168 : vector<8x8xf32>
      %170 = arith.truncf %169 : vector<8x8xf32> to vector<8x8xbf16>
      %cst_122 = arith.constant dense<0.000000e+00> : vector<8x16xf32>
      %171 = tpu.matmul %170, %158, %cst_122 {dimension_numbers = #tpu.dot_dimension_numbers<[1], [0], [0], [1], [0, 0, 1, 1], [], []>} : vector<8x8xbf16>, vector<8x16xbf16>, vector<8x16xf32> -> vector<8x16xf32>
      %172 = tpu.concatenate %152, %171 in 0 : vector<8x16xf32>, vector<8x16xf32> -> vector<16x16xf32>
      %173 = arith.truncf %172 : vector<16x16xf32> to vector<16x16xbf16>
      %c0_123 = arith.constant 0 : index
      %c1_124 = arith.constant 1 : index
      %c0_125 = arith.constant 0 : index
      %c0_126 = arith.constant 0 : index
      %174 = vector.load %arg19[%c0_123, %c1_124, %c0_125, %c0_126] : memref<1x2x16x96xbf16, #tpu.memory_space<vmem>>, vector<1x1x16x96xbf16>
      %175 = vector.shape_cast %174 : vector<1x1x16x96xbf16> to vector<16x96xbf16>
      %cst_127 = arith.constant dense<0.000000e+00> : vector<16x96xf32>
      %176 = tpu.matmul %173, %175, %cst_127 {dimension_numbers = #tpu.dot_dimension_numbers<[1], [0], [0], [1], [0, 0, 1, 1], [], []>} : vector<16x16xbf16>, vector<16x96xbf16>, vector<16x96xf32> -> vector<16x96xf32>
      %177 = arith.addf %100, %176 : vector<16x96xf32>
      %178 = arith.addf %15, %177 : vector<16x96xf32>
      %cst_128 = arith.constant dense<0.000000e+00> : vector<16xf32>
      %179 = vector.multi_reduction <add>, %178, %cst_128 [1] : vector<16x96xf32> to vector<16xf32>
      %180 = vector.shape_cast %179 : vector<16xf32> to vector<16x1xf32>
      %cst_129 = arith.constant 9.600000e+01 : f32
      %181 = vector.broadcast %cst_129 : f32 to vector<16x1xf32>
      %182 = arith.divf %180, %181 : vector<16x1xf32>
      %183 = vector.broadcast %182 : vector<16x1xf32> to vector<16x96xf32>
      %184 = arith.subf %178, %183 : vector<16x96xf32>
      %185 = arith.mulf %184, %184 : vector<16x96xf32>
      %cst_130 = arith.constant dense<0.000000e+00> : vector<16xf32>
      %186 = vector.multi_reduction <add>, %185, %cst_130 [1] : vector<16x96xf32> to vector<16xf32>
      %187 = vector.shape_cast %186 : vector<16xf32> to vector<16x1xf32>
      %cst_131 = arith.constant 9.600000e+01 : f32
      %188 = vector.broadcast %cst_131 : f32 to vector<16x1xf32>
      %189 = arith.divf %187, %188 : vector<16x1xf32>
      %190 = vector.broadcast %182 : vector<16x1xf32> to vector<16x96xf32>
      %191 = arith.subf %178, %190 : vector<16x96xf32>
      %cst_132 = arith.constant 9.99999974E-6 : f32
      %192 = vector.broadcast %cst_132 : f32 to vector<16x1xf32>
      %193 = arith.addf %189, %192 : vector<16x1xf32>
      %194 = math.rsqrt %193 : vector<16x1xf32>
      %195 = vector.broadcast %194 : vector<16x1xf32> to vector<16x96xf32>
      %196 = arith.mulf %191, %195 : vector<16x96xf32>
      %197 = vector.broadcast %20 : vector<1x96xf32> to vector<16x96xf32>
      %198 = arith.mulf %196, %197 : vector<16x96xf32>
      %199 = vector.broadcast %22 : vector<1x96xf32> to vector<16x96xf32>
      %200 = arith.addf %198, %199 : vector<16x96xf32>
      %201 = vector.extract_strided_slice %200 {offsets = [0, 16], sizes = [16, 64], strides = [1, 1]} : vector<16x96xf32> to vector<16x64xf32>
      %c0_133 = arith.constant 0 : index
      %c0_134 = arith.constant 0 : index
      %c0_135 = arith.constant 0 : index
      %202 = vector.load %arg22[%c0_133, %c0_134, %c0_135] : memref<1x96x128xbf16, #tpu.memory_space<vmem>>, vector<1x96x128xbf16>
      %203 = vector.shape_cast %202 : vector<1x96x128xbf16> to vector<96x128xbf16>
      %c0_136 = arith.constant 0 : index
      %c0_137 = arith.constant 0 : index
      %c0_138 = arith.constant 0 : index
      %204 = vector.load %arg23[%c0_136, %c0_137, %c0_138] : memref<1x1x128xf32, #tpu.memory_space<vmem>>, vector<1x1x128xf32>
      %205 = vector.shape_cast %204 : vector<1x1x128xf32> to vector<1x128xf32>
      %c0_139 = arith.constant 0 : index
      %c0_140 = arith.constant 0 : index
      %c0_141 = arith.constant 0 : index
      %206 = vector.load %arg24[%c0_139, %c0_140, %c0_141] : memref<1x128x64xbf16, #tpu.memory_space<vmem>>, vector<1x128x64xbf16>
      %207 = vector.shape_cast %206 : vector<1x128x64xbf16> to vector<128x64xbf16>
      %c0_142 = arith.constant 0 : index
      %c0_143 = arith.constant 0 : index
      %c0_144 = arith.constant 0 : index
      %208 = vector.load %arg25[%c0_142, %c0_143, %c0_144] : memref<1x1x64xf32, #tpu.memory_space<vmem>>, vector<1x1x64xf32>
      %209 = vector.shape_cast %208 : vector<1x1x64xf32> to vector<1x64xf32>
      %c0_145 = arith.constant 0 : index
      %c0_146 = arith.constant 0 : index
      %c0_147 = arith.constant 0 : index
      %210 = vector.load %arg26[%c0_145, %c0_146, %c0_147] : memref<1x1x64xf32, #tpu.memory_space<vmem>>, vector<1x1x64xf32>
      %211 = vector.shape_cast %210 : vector<1x1x64xf32> to vector<1x64xf32>
      %c0_148 = arith.constant 0 : index
      %c0_149 = arith.constant 0 : index
      %c0_150 = arith.constant 0 : index
      %212 = vector.load %arg27[%c0_148, %c0_149, %c0_150] : memref<1x1x64xf32, #tpu.memory_space<vmem>>, vector<1x1x64xf32>
      %213 = vector.shape_cast %212 : vector<1x1x64xf32> to vector<1x64xf32>
      %214 = arith.truncf %200 : vector<16x96xf32> to vector<16x96xbf16>
      %cst_151 = arith.constant dense<0.000000e+00> : vector<16x128xf32>
      %215 = tpu.matmul %214, %203, %cst_151 {dimension_numbers = #tpu.dot_dimension_numbers<[1], [0], [0], [1], [0, 0, 1, 1], [], []>} : vector<16x96xbf16>, vector<96x128xbf16>, vector<16x128xf32> -> vector<16x128xf32>
      %216 = vector.broadcast %205 : vector<1x128xf32> to vector<16x128xf32>
      %217 = arith.addf %215, %216 : vector<16x128xf32>
      %cst_152 = arith.constant 0.000000e+00 : f32
      %218 = vector.broadcast %cst_152 : f32 to vector<16x128xf32>
      %219 = arith.maximumf %217, %218 : vector<16x128xf32>
      %220 = arith.truncf %219 : vector<16x128xf32> to vector<16x128xbf16>
      %cst_153 = arith.constant dense<0.000000e+00> : vector<16x64xf32>
      %221 = tpu.matmul %220, %207, %cst_153 {dimension_numbers = #tpu.dot_dimension_numbers<[1], [0], [0], [1], [0, 0, 1, 1], [], []>} : vector<16x128xbf16>, vector<128x64xbf16>, vector<16x64xf32> -> vector<16x64xf32>
      %222 = vector.broadcast %209 : vector<1x64xf32> to vector<16x64xf32>
      %223 = arith.addf %221, %222 : vector<16x64xf32>
      %224 = arith.addf %223, %201 : vector<16x64xf32>
      %cst_154 = arith.constant dense<0.000000e+00> : vector<16xf32>
      %225 = vector.multi_reduction <add>, %224, %cst_154 [1] : vector<16x64xf32> to vector<16xf32>
      %226 = vector.shape_cast %225 : vector<16xf32> to vector<16x1xf32>
      %cst_155 = arith.constant 6.400000e+01 : f32
      %227 = vector.broadcast %cst_155 : f32 to vector<16x1xf32>
      %228 = arith.divf %226, %227 : vector<16x1xf32>
      %229 = vector.broadcast %228 : vector<16x1xf32> to vector<16x64xf32>
      %230 = arith.subf %224, %229 : vector<16x64xf32>
      %231 = arith.mulf %230, %230 : vector<16x64xf32>
      %cst_156 = arith.constant dense<0.000000e+00> : vector<16xf32>
      %232 = vector.multi_reduction <add>, %231, %cst_156 [1] : vector<16x64xf32> to vector<16xf32>
      %233 = vector.shape_cast %232 : vector<16xf32> to vector<16x1xf32>
      %cst_157 = arith.constant 6.400000e+01 : f32
      %234 = vector.broadcast %cst_157 : f32 to vector<16x1xf32>
      %235 = arith.divf %233, %234 : vector<16x1xf32>
      %236 = vector.broadcast %228 : vector<16x1xf32> to vector<16x64xf32>
      %237 = arith.subf %224, %236 : vector<16x64xf32>
      %cst_158 = arith.constant 9.99999974E-6 : f32
      %238 = vector.broadcast %cst_158 : f32 to vector<16x1xf32>
      %239 = arith.addf %235, %238 : vector<16x1xf32>
      %240 = math.rsqrt %239 : vector<16x1xf32>
      %241 = vector.broadcast %240 : vector<16x1xf32> to vector<16x64xf32>
      %242 = arith.mulf %237, %241 : vector<16x64xf32>
      %243 = vector.broadcast %211 : vector<1x64xf32> to vector<16x64xf32>
      %244 = arith.mulf %242, %243 : vector<16x64xf32>
      %245 = vector.broadcast %213 : vector<1x64xf32> to vector<16x64xf32>
      %246 = arith.addf %244, %245 : vector<16x64xf32>
      %c0_159 = arith.constant 0 : index
      %c0_160 = arith.constant 0 : index
      %247 = vector.load %arg31[%c0_159, %c0_160] : memref<16x64xf32, #tpu.memory_space<vmem>>, vector<16x64xf32>
      tpu.vector_store %arg31[%c0_159, %c0_160], %246 {strides = array<i32>} : memref<16x64xf32, #tpu.memory_space<vmem>>, vector<16x64xf32>,
    } else {
    }
    %c2_i32 = arith.constant 2 : i32
    %6 = arith.cmpi slt, %arg0, %c2_i32 : i32
    %7 = arith.extui %6 : i1 to i32
    %c0_i32_3 = arith.constant 0 : i32
    %8 = arith.cmpi ne, %7, %c0_i32_3 : i32
    scf.if %8 {
      %c0 = arith.constant 0 : index
      %c0_6 = arith.constant 0 : index
      %12 = vector.load %arg29[%c0, %c0_6] : memref<16x64xf32, #tpu.memory_space<vmem>>, vector<16x64xf32>
      %13 = arith.truncf %12 : vector<16x64xf32> to vector<16x64xbf16>
      %c0_7 = arith.constant 0 : index
      %c0_8 = arith.constant 0 : index
      %c0_9 = arith.constant 0 : index
      %14 = vector.load %arg6[%c0_7, %c0_8, %c0_9] : memref<2x1x64xf32, #tpu.memory_space<vmem>>, vector<1x1x64xf32>
      %15 = vector.shape_cast %14 : vector<1x1x64xf32> to vector<1x64xf32>
      %c0_10 = arith.constant 0 : index
      %c0_11 = arith.constant 0 : index
      %c0_12 = arith.constant 0 : index
      %16 = vector.load %arg7[%c0_10, %c0_11, %c0_12] : memref<2x1x64xf32, #tpu.memory_space<vmem>>, vector<1x1x64xf32>
      %17 = vector.shape_cast %16 : vector<1x1x64xf32> to vector<1x64xf32>
      %cst = arith.constant 0.000000e+00 : f32
      %18 = vector.broadcast %cst : f32 to vector<16x64xf32>
      %c0_13 = arith.constant 0 : index
      %c0_14 = arith.constant 0 : index
      %c0_15 = arith.constant 0 : index
      %c0_16 = arith.constant 0 : index
      %19 = vector.load %arg4[%c0_13, %c0_14, %c0_15, %c0_16] : memref<2x6x64x16xbf16, #tpu.memory_space<vmem>>, vector<1x1x64x16xbf16>
      %20 = vector.shape_cast %19 : vector<1x1x64x16xbf16> to vector<64x16xbf16>
      %cst_17 = arith.constant dense<0.000000e+00> : vector<16x16xf32>
      %21 = tpu.matmul %13, %20, %cst_17 {dimension_numbers = #tpu.dot_dimension_numbers<[1], [0], [0], [1], [0, 0, 1, 1], [], []>} : vector<16x64xbf16>, vector<64x16xbf16>, vector<16x16xf32> -> vector<16x16xf32>
      %c0_18 = arith.constant 0 : index
      %c2 = arith.constant 2 : index
      %c0_19 = arith.constant 0 : index
      %c0_20 = arith.constant 0 : index
      %22 = vector.load %arg4[%c0_18, %c2, %c0_19, %c0_20] : memref<2x6x64x16xbf16, #tpu.memory_space<vmem>>, vector<1x1x64x16xbf16>
      %23 = vector.shape_cast %22 : vector<1x1x64x16xbf16> to vector<64x16xbf16>
      %cst_21 = arith.constant dense<0.000000e+00> : vector<16x16xf32>
      %24 = tpu.matmul %13, %23, %cst_21 {dimension_numbers = #tpu.dot_dimension_numbers<[1], [0], [0], [1], [0, 0, 1, 1], [], []>} : vector<16x64xbf16>, vector<64x16xbf16>, vector<16x16xf32> -> vector<16x16xf32>
      %c0_22 = arith.constant 0 : index
      %c4 = arith.constant 4 : index
      %c0_23 = arith.constant 0 : index
      %c0_24 = arith.constant 0 : index
      %25 = vector.load %arg4[%c0_22, %c4, %c0_23, %c0_24] : memref<2x6x64x16xbf16, #tpu.memory_space<vmem>>, vector<1x1x64x16xbf16>
      %26 = vector.shape_cast %25 : vector<1x1x64x16xbf16> to vector<64x16xbf16>
      %cst_25 = arith.constant dense<0.000000e+00> : vector<16x16xf32>
      %27 = tpu.matmul %13, %26, %cst_25 {dimension_numbers = #tpu.dot_dimension_numbers<[1], [0], [0], [1], [0, 0, 1, 1], [], []>} : vector<16x64xbf16>, vector<64x16xbf16>, vector<16x16xf32> -> vector<16x16xf32>
      %28 = vector.extract_strided_slice %21 {offsets = [0, 0], sizes = [8, 16], strides = [1, 1]} : vector<16x16xf32> to vector<8x16xf32>
      %29 = arith.truncf %28 : vector<8x16xf32> to vector<8x16xbf16>
      %30 = vector.extract_strided_slice %24 {offsets = [0, 0], sizes = [8, 16], strides = [1, 1]} : vector<16x16xf32> to vector<8x16xf32>
      %31 = arith.truncf %30 : vector<8x16xf32> to vector<8x16xbf16>
      %32 = vector.extract_strided_slice %27 {offsets = [0, 0], sizes = [8, 16], strides = [1, 1]} : vector<16x16xf32> to vector<8x16xf32>
      %33 = arith.truncf %32 : vector<8x16xf32> to vector<8x16xbf16>
      %cst_26 = arith.constant dense<0.000000e+00> : vector<8x8xf32>
      %34 = tpu.matmul %29, %31, %cst_26 {dimension_numbers = #tpu.dot_dimension_numbers<[1], [1], [0], [0], [0, 0, 1, 0], [], []>} : vector<8x16xbf16>, vector<8x16xbf16>, vector<8x8xf32> -> vector<8x8xf32>
      %cst_27 = arith.constant dense<0xFF800000> : vector<8xf32>
      %35 = vector.multi_reduction <maximumf>, %34, %cst_27 [1] : vector<8x8xf32> to vector<8xf32>
      %36 = vector.shape_cast %35 : vector<8xf32> to vector<8x1xf32>
      %37 = vector.broadcast %36 : vector<8x1xf32> to vector<8x8xf32>
      %38 = arith.subf %34, %37 : vector<8x8xf32>
      %39 = math.exp %38 : vector<8x8xf32>
      %cst_28 = arith.constant dense<0.000000e+00> : vector<8xf32>
      %40 = vector.multi_reduction <add>, %39, %cst_28 [1] : vector<8x8xf32> to vector<8xf32>
      %41 = vector.shape_cast %40 : vector<8xf32> to vector<8x1xf32>
      %42 = tpu.reciprocal %41 {approx = true} : vector<8x1xf32> -> vector<8x1xf32>
      %43 = vector.broadcast %42 : vector<8x1xf32> to vector<8x8xf32>
      %44 = arith.mulf %39, %43 : vector<8x8xf32>
      %45 = arith.truncf %44 : vector<8x8xf32> to vector<8x8xbf16>
      %cst_29 = arith.constant dense<0.000000e+00> : vector<8x16xf32>
      %46 = tpu.matmul %45, %33, %cst_29 {dimension_numbers = #tpu.dot_dimension_numbers<[1], [0], [0], [1], [0, 0, 1, 1], [], []>} : vector<8x8xbf16>, vector<8x16xbf16>, vector<8x16xf32> -> vector<8x16xf32>
      %47 = vector.extract_strided_slice %21 {offsets = [8, 0], sizes = [8, 16], strides = [1, 1]} : vector<16x16xf32> to vector<8x16xf32>
      %48 = arith.truncf %47 : vector<8x16xf32> to vector<8x16xbf16>
      %49 = vector.extract_strided_slice %24 {offsets = [8, 0], sizes = [8, 16], strides = [1, 1]} : vector<16x16xf32> to vector<8x16xf32>
      %50 = arith.truncf %49 : vector<8x16xf32> to vector<8x16xbf16>
      %51 = vector.extract_strided_slice %27 {offsets = [8, 0], sizes = [8, 16], strides = [1, 1]} : vector<16x16xf32> to vector<8x16xf32>
      %52 = arith.truncf %51 : vector<8x16xf32> to vector<8x16xbf16>
      %cst_30 = arith.constant dense<0.000000e+00> : vector<8x8xf32>
      %53 = tpu.matmul %48, %50, %cst_30 {dimension_numbers = #tpu.dot_dimension_numbers<[1], [1], [0], [0], [0, 0, 1, 0], [], []>} : vector<8x16xbf16>, vector<8x16xbf16>, vector<8x8xf32> -> vector<8x8xf32>
      %cst_31 = arith.constant dense<0xFF800000> : vector<8xf32>
      %54 = vector.multi_reduction <maximumf>, %53, %cst_31 [1] : vector<8x8xf32> to vector<8xf32>
      %55 = vector.shape_cast %54 : vector<8xf32> to vector<8x1xf32>
      %56 = vector.broadcast %55 : vector<8x1xf32> to vector<8x8xf32>
      %57 = arith.subf %53, %56 : vector<8x8xf32>
      %58 = math.exp %57 : vector<8x8xf32>
      %cst_32 = arith.constant dense<0.000000e+00> : vector<8xf32>
      %59 = vector.multi_reduction <add>, %58, %cst_32 [1] : vector<8x8xf32> to vector<8xf32>
      %60 = vector.shape_cast %59 : vector<8xf32> to vector<8x1xf32>
      %61 = tpu.reciprocal %60 {approx = true} : vector<8x1xf32> -> vector<8x1xf32>
      %62 = vector.broadcast %61 : vector<8x1xf32> to vector<8x8xf32>
      %63 = arith.mulf %58, %62 : vector<8x8xf32>
      %64 = arith.truncf %63 : vector<8x8xf32> to vector<8x8xbf16>
      %cst_33 = arith.constant dense<0.000000e+00> : vector<8x16xf32>
      %65 = tpu.matmul %64, %52, %cst_33 {dimension_numbers = #tpu.dot_dimension_numbers<[1], [0], [0], [1], [0, 0, 1, 1], [], []>} : vector<8x8xbf16>, vector<8x16xbf16>, vector<8x16xf32> -> vector<8x16xf32>
      %66 = tpu.concatenate %46, %65 in 0 : vector<8x16xf32>, vector<8x16xf32> -> vector<16x16xf32>
      %67 = arith.truncf %66 : vector<16x16xf32> to vector<16x16xbf16>
      %c0_34 = arith.constant 0 : index
      %c0_35 = arith.constant 0 : index
      %c0_36 = arith.constant 0 : index
      %c0_37 = arith.constant 0 : index
      %68 = vector.load %arg5[%c0_34, %c0_35, %c0_36, %c0_37] : memref<2x2x16x64xbf16, #tpu.memory_space<vmem>>, vector<1x1x16x64xbf16>
      %69 = vector.shape_cast %68 : vector<1x1x16x64xbf16> to vector<16x64xbf16>
      %cst_38 = arith.constant dense<0.000000e+00> : vector<16x64xf32>
      %70 = tpu.matmul %67, %69, %cst_38 {dimension_numbers = #tpu.dot_dimension_numbers<[1], [0], [0], [1], [0, 0, 1, 1], [], []>} : vector<16x16xbf16>, vector<16x64xbf16>, vector<16x64xf32> -> vector<16x64xf32>
      %71 = arith.addf %18, %70 : vector<16x64xf32>
      %c0_39 = arith.constant 0 : index
      %c1 = arith.constant 1 : index
      %c0_40 = arith.constant 0 : index
      %c0_41 = arith.constant 0 : index
      %72 = vector.load %arg4[%c0_39, %c1, %c0_40, %c0_41] : memref<2x6x64x16xbf16, #tpu.memory_space<vmem>>, vector<1x1x64x16xbf16>
      %73 = vector.shape_cast %72 : vector<1x1x64x16xbf16> to vector<64x16xbf16>
      %cst_42 = arith.constant dense<0.000000e+00> : vector<16x16xf32>
      %74 = tpu.matmul %13, %73, %cst_42 {dimension_numbers = #tpu.dot_dimension_numbers<[1], [0], [0], [1], [0, 0, 1, 1], [], []>} : vector<16x64xbf16>, vector<64x16xbf16>, vector<16x16xf32> -> vector<16x16xf32>
      %c0_43 = arith.constant 0 : index
      %c3 = arith.constant 3 : index
      %c0_44 = arith.constant 0 : index
      %c0_45 = arith.constant 0 : index
      %75 = vector.load %arg4[%c0_43, %c3, %c0_44, %c0_45] : memref<2x6x64x16xbf16, #tpu.memory_space<vmem>>, vector<1x1x64x16xbf16>
      %76 = vector.shape_cast %75 : vector<1x1x64x16xbf16> to vector<64x16xbf16>
      %cst_46 = arith.constant dense<0.000000e+00> : vector<16x16xf32>
      %77 = tpu.matmul %13, %76, %cst_46 {dimension_numbers = #tpu.dot_dimension_numbers<[1], [0], [0], [1], [0, 0, 1, 1], [], []>} : vector<16x64xbf16>, vector<64x16xbf16>, vector<16x16xf32> -> vector<16x16xf32>
      %c0_47 = arith.constant 0 : index
      %c5 = arith.constant 5 : index
      %c0_48 = arith.constant 0 : index
      %c0_49 = arith.constant 0 : index
      %78 = vector.load %arg4[%c0_47, %c5, %c0_48, %c0_49] : memref<2x6x64x16xbf16, #tpu.memory_space<vmem>>, vector<1x1x64x16xbf16>
      %79 = vector.shape_cast %78 : vector<1x1x64x16xbf16> to vector<64x16xbf16>
      %cst_50 = arith.constant dense<0.000000e+00> : vector<16x16xf32>
      %80 = tpu.matmul %13, %79, %cst_50 {dimension_numbers = #tpu.dot_dimension_numbers<[1], [0], [0], [1], [0, 0, 1, 1], [], []>} : vector<16x64xbf16>, vector<64x16xbf16>, vector<16x16xf32> -> vector<16x16xf32>
      %81 = vector.extract_strided_slice %74 {offsets = [0, 0], sizes = [8, 16], strides = [1, 1]} : vector<16x16xf32> to vector<8x16xf32>
      %82 = arith.truncf %81 : vector<8x16xf32> to vector<8x16xbf16>
      %83 = vector.extract_strided_slice %77 {offsets = [0, 0], sizes = [8, 16], strides = [1, 1]} : vector<16x16xf32> to vector<8x16xf32>
      %84 = arith.truncf %83 : vector<8x16xf32> to vector<8x16xbf16>
      %85 = vector.extract_strided_slice %80 {offsets = [0, 0], sizes = [8, 16], strides = [1, 1]} : vector<16x16xf32> to vector<8x16xf32>
      %86 = arith.truncf %85 : vector<8x16xf32> to vector<8x16xbf16>
      %cst_51 = arith.constant dense<0.000000e+00> : vector<8x8xf32>
      %87 = tpu.matmul %82, %84, %cst_51 {dimension_numbers = #tpu.dot_dimension_numbers<[1], [1], [0], [0], [0, 0, 1, 0], [], []>} : vector<8x16xbf16>, vector<8x16xbf16>, vector<8x8xf32> -> vector<8x8xf32>
      %cst_52 = arith.constant dense<0xFF800000> : vector<8xf32>
      %88 = vector.multi_reduction <maximumf>, %87, %cst_52 [1] : vector<8x8xf32> to vector<8xf32>
      %89 = vector.shape_cast %88 : vector<8xf32> to vector<8x1xf32>
      %90 = vector.broadcast %89 : vector<8x1xf32> to vector<8x8xf32>
      %91 = arith.subf %87, %90 : vector<8x8xf32>
      %92 = math.exp %91 : vector<8x8xf32>
      %cst_53 = arith.constant dense<0.000000e+00> : vector<8xf32>
      %93 = vector.multi_reduction <add>, %92, %cst_53 [1] : vector<8x8xf32> to vector<8xf32>
      %94 = vector.shape_cast %93 : vector<8xf32> to vector<8x1xf32>
      %95 = tpu.reciprocal %94 {approx = true} : vector<8x1xf32> -> vector<8x1xf32>
      %96 = vector.broadcast %95 : vector<8x1xf32> to vector<8x8xf32>
      %97 = arith.mulf %92, %96 : vector<8x8xf32>
      %98 = arith.truncf %97 : vector<8x8xf32> to vector<8x8xbf16>
      %cst_54 = arith.constant dense<0.000000e+00> : vector<8x16xf32>
      %99 = tpu.matmul %98, %86, %cst_54 {dimension_numbers = #tpu.dot_dimension_numbers<[1], [0], [0], [1], [0, 0, 1, 1], [], []>} : vector<8x8xbf16>, vector<8x16xbf16>, vector<8x16xf32> -> vector<8x16xf32>
      %100 = vector.extract_strided_slice %74 {offsets = [8, 0], sizes = [8, 16], strides = [1, 1]} : vector<16x16xf32> to vector<8x16xf32>
      %101 = arith.truncf %100 : vector<8x16xf32> to vector<8x16xbf16>
      %102 = vector.extract_strided_slice %77 {offsets = [8, 0], sizes = [8, 16], strides = [1, 1]} : vector<16x16xf32> to vector<8x16xf32>
      %103 = arith.truncf %102 : vector<8x16xf32> to vector<8x16xbf16>
      %104 = vector.extract_strided_slice %80 {offsets = [8, 0], sizes = [8, 16], strides = [1, 1]} : vector<16x16xf32> to vector<8x16xf32>
      %105 = arith.truncf %104 : vector<8x16xf32> to vector<8x16xbf16>
      %cst_55 = arith.constant dense<0.000000e+00> : vector<8x8xf32>
      %106 = tpu.matmul %101, %103, %cst_55 {dimension_numbers = #tpu.dot_dimension_numbers<[1], [1], [0], [0], [0, 0, 1, 0], [], []>} : vector<8x16xbf16>, vector<8x16xbf16>, vector<8x8xf32> -> vector<8x8xf32>
      %cst_56 = arith.constant dense<0xFF800000> : vector<8xf32>
      %107 = vector.multi_reduction <maximumf>, %106, %cst_56 [1] : vector<8x8xf32> to vector<8xf32>
      %108 = vector.shape_cast %107 : vector<8xf32> to vector<8x1xf32>
      %109 = vector.broadcast %108 : vector<8x1xf32> to vector<8x8xf32>
      %110 = arith.subf %106, %109 : vector<8x8xf32>
      %111 = math.exp %110 : vector<8x8xf32>
      %cst_57 = arith.constant dense<0.000000e+00> : vector<8xf32>
      %112 = vector.multi_reduction <add>, %111, %cst_57 [1] : vector<8x8xf32> to vector<8xf32>
      %113 = vector.shape_cast %112 : vector<8xf32> to vector<8x1xf32>
      %114 = tpu.reciprocal %113 {approx = true} : vector<8x1xf32> -> vector<8x1xf32>
      %115 = vector.broadcast %114 : vector<8x1xf32> to vector<8x8xf32>
      %116 = arith.mulf %111, %115 : vector<8x8xf32>
      %117 = arith.truncf %116 : vector<8x8xf32> to vector<8x8xbf16>
      %cst_58 = arith.constant dense<0.000000e+00> : vector<8x16xf32>
      %118 = tpu.matmul %117, %105, %cst_58 {dimension_numbers = #tpu.dot_dimension_numbers<[1], [0], [0], [1], [0, 0, 1, 1], [], []>} : vector<8x8xbf16>, vector<8x16xbf16>, vector<8x16xf32> -> vector<8x16xf32>
      %119 = tpu.concatenate %99, %118 in 0 : vector<8x16xf32>, vector<8x16xf32> -> vector<16x16xf32>
      %120 = arith.truncf %119 : vector<16x16xf32> to vector<16x16xbf16>
      %c0_59 = arith.constant 0 : index
      %c1_60 = arith.constant 1 : index
      %c0_61 = arith.constant 0 : index
      %c0_62 = arith.constant 0 : index
      %121 = vector.load %arg5[%c0_59, %c1_60, %c0_61, %c0_62] : memref<2x2x16x64xbf16, #tpu.memory_space<vmem>>, vector<1x1x16x64xbf16>
      %122 = vector.shape_cast %121 : vector<1x1x16x64xbf16> to vector<16x64xbf16>
      %cst_63 = arith.constant dense<0.000000e+00> : vector<16x64xf32>
      %123 = tpu.matmul %120, %122, %cst_63 {dimension_numbers = #tpu.dot_dimension_numbers<[1], [0], [0], [1], [0, 0, 1, 1], [], []>} : vector<16x16xbf16>, vector<16x64xbf16>, vector<16x64xf32> -> vector<16x64xf32>
      %124 = arith.addf %71, %123 : vector<16x64xf32>
      %125 = arith.addf %12, %124 : vector<16x64xf32>
      %cst_64 = arith.constant dense<0.000000e+00> : vector<16xf32>
      %126 = vector.multi_reduction <add>, %125, %cst_64 [1] : vector<16x64xf32> to vector<16xf32>
      %127 = vector.shape_cast %126 : vector<16xf32> to vector<16x1xf32>
      %cst_65 = arith.constant 6.400000e+01 : f32
      %128 = vector.broadcast %cst_65 : f32 to vector<16x1xf32>
      %129 = arith.divf %127, %128 : vector<16x1xf32>
      %130 = vector.broadcast %129 : vector<16x1xf32> to vector<16x64xf32>
      %131 = arith.subf %125, %130 : vector<16x64xf32>
      %132 = arith.mulf %131, %131 : vector<16x64xf32>
      %cst_66 = arith.constant dense<0.000000e+00> : vector<16xf32>
      %133 = vector.multi_reduction <add>, %132, %cst_66 [1] : vector<16x64xf32> to vector<16xf32>
      %134 = vector.shape_cast %133 : vector<16xf32> to vector<16x1xf32>
      %cst_67 = arith.constant 6.400000e+01 : f32
      %135 = vector.broadcast %cst_67 : f32 to vector<16x1xf32>
      %136 = arith.divf %134, %135 : vector<16x1xf32>
      %137 = vector.broadcast %129 : vector<16x1xf32> to vector<16x64xf32>
      %138 = arith.subf %125, %137 : vector<16x64xf32>
      %cst_68 = arith.constant 9.99999974E-6 : f32
      %139 = vector.broadcast %cst_68 : f32 to vector<16x1xf32>
      %140 = arith.addf %136, %139 : vector<16x1xf32>
      %141 = math.rsqrt %140 : vector<16x1xf32>
      %142 = vector.broadcast %141 : vector<16x1xf32> to vector<16x64xf32>
      %143 = arith.mulf %138, %142 : vector<16x64xf32>
      %144 = vector.broadcast %15 : vector<1x64xf32> to vector<16x64xf32>
      %145 = arith.mulf %143, %144 : vector<16x64xf32>
      %146 = vector.broadcast %17 : vector<1x64xf32> to vector<16x64xf32>
      %147 = arith.addf %145, %146 : vector<16x64xf32>
      %c0_69 = arith.constant 0 : index
      %c0_70 = arith.constant 0 : index
      %c0_71 = arith.constant 0 : index
      %148 = vector.load %arg8[%c0_69, %c0_70, %c0_71] : memref<2x64x128xbf16, #tpu.memory_space<vmem>>, vector<1x64x128xbf16>
      %149 = vector.shape_cast %148 : vector<1x64x128xbf16> to vector<64x128xbf16>
      %c0_72 = arith.constant 0 : index
      %c0_73 = arith.constant 0 : index
      %c0_74 = arith.constant 0 : index
      %150 = vector.load %arg9[%c0_72, %c0_73, %c0_74] : memref<2x1x128xf32, #tpu.memory_space<vmem>>, vector<1x1x128xf32>
      %151 = vector.shape_cast %150 : vector<1x1x128xf32> to vector<1x128xf32>
      %c0_75 = arith.constant 0 : index
      %c0_76 = arith.constant 0 : index
      %c0_77 = arith.constant 0 : index
      %152 = vector.load %arg10[%c0_75, %c0_76, %c0_77] : memref<2x128x64xbf16, #tpu.memory_space<vmem>>, vector<1x128x64xbf16>
      %153 = vector.shape_cast %152 : vector<1x128x64xbf16> to vector<128x64xbf16>
      %c0_78 = arith.constant 0 : index
      %c0_79 = arith.constant 0 : index
      %c0_80 = arith.constant 0 : index
      %154 = vector.load %arg11[%c0_78, %c0_79, %c0_80] : memref<2x1x64xf32, #tpu.memory_space<vmem>>, vector<1x1x64xf32>
      %155 = vector.shape_cast %154 : vector<1x1x64xf32> to vector<1x64xf32>
      %c0_81 = arith.constant 0 : index
      %c0_82 = arith.constant 0 : index
      %c0_83 = arith.constant 0 : index
      %156 = vector.load %arg12[%c0_81, %c0_82, %c0_83] : memref<2x1x64xf32, #tpu.memory_space<vmem>>, vector<1x1x64xf32>
      %157 = vector.shape_cast %156 : vector<1x1x64xf32> to vector<1x64xf32>
      %c0_84 = arith.constant 0 : index
      %c0_85 = arith.constant 0 : index
      %c0_86 = arith.constant 0 : index
      %158 = vector.load %arg13[%c0_84, %c0_85, %c0_86] : memref<2x1x64xf32, #tpu.memory_space<vmem>>, vector<1x1x64xf32>
      %159 = vector.shape_cast %158 : vector<1x1x64xf32> to vector<1x64xf32>
      %160 = arith.truncf %147 : vector<16x64xf32> to vector<16x64xbf16>
      %cst_87 = arith.constant dense<0.000000e+00> : vector<16x128xf32>
      %161 = tpu.matmul %160, %149, %cst_87 {dimension_numbers = #tpu.dot_dimension_numbers<[1], [0], [0], [1], [0, 0, 1, 1], [], []>} : vector<16x64xbf16>, vector<64x128xbf16>, vector<16x128xf32> -> vector<16x128xf32>
      %162 = vector.broadcast %151 : vector<1x128xf32> to vector<16x128xf32>
      %163 = arith.addf %161, %162 : vector<16x128xf32>
      %cst_88 = arith.constant 0.000000e+00 : f32
      %164 = vector.broadcast %cst_88 : f32 to vector<16x128xf32>
      %165 = arith.maximumf %163, %164 : vector<16x128xf32>
      %166 = arith.truncf %165 : vector<16x128xf32> to vector<16x128xbf16>
      %cst_89 = arith.constant dense<0.000000e+00> : vector<16x64xf32>
      %167 = tpu.matmul %166, %153, %cst_89 {dimension_numbers = #tpu.dot_dimension_numbers<[1], [0], [0], [1], [0, 0, 1, 1], [], []>} : vector<16x128xbf16>, vector<128x64xbf16>, vector<16x64xf32> -> vector<16x64xf32>
      %168 = vector.broadcast %155 : vector<1x64xf32> to vector<16x64xf32>
      %169 = arith.addf %167, %168 : vector<16x64xf32>
      %170 = arith.addf %169, %147 : vector<16x64xf32>
      %cst_90 = arith.constant dense<0.000000e+00> : vector<16xf32>
      %171 = vector.multi_reduction <add>, %170, %cst_90 [1] : vector<16x64xf32> to vector<16xf32>
      %172 = vector.shape_cast %171 : vector<16xf32> to vector<16x1xf32>
      %cst_91 = arith.constant 6.400000e+01 : f32
      %173 = vector.broadcast %cst_91 : f32 to vector<16x1xf32>
      %174 = arith.divf %172, %173 : vector<16x1xf32>
      %175 = vector.broadcast %174 : vector<16x1xf32> to vector<16x64xf32>
      %176 = arith.subf %170, %175 : vector<16x64xf32>
      %177 = arith.mulf %176, %176 : vector<16x64xf32>
      %cst_92 = arith.constant dense<0.000000e+00> : vector<16xf32>
      %178 = vector.multi_reduction <add>, %177, %cst_92 [1] : vector<16x64xf32> to vector<16xf32>
      %179 = vector.shape_cast %178 : vector<16xf32> to vector<16x1xf32>
      %cst_93 = arith.constant 6.400000e+01 : f32
      %180 = vector.broadcast %cst_93 : f32 to vector<16x1xf32>
      %181 = arith.divf %179, %180 : vector<16x1xf32>
      %182 = vector.broadcast %174 : vector<16x1xf32> to vector<16x64xf32>
      %183 = arith.subf %170, %182 : vector<16x64xf32>
      %cst_94 = arith.constant 9.99999974E-6 : f32
      %184 = vector.broadcast %cst_94 : f32 to vector<16x1xf32>
      %185 = arith.addf %181, %184 : vector<16x1xf32>
      %186 = math.rsqrt %185 : vector<16x1xf32>
      %187 = vector.broadcast %186 : vector<16x1xf32> to vector<16x64xf32>
      %188 = arith.mulf %183, %187 : vector<16x64xf32>
      %189 = vector.broadcast %157 : vector<1x64xf32> to vector<16x64xf32>
      %190 = arith.mulf %188, %189 : vector<16x64xf32>
      %191 = vector.broadcast %159 : vector<1x64xf32> to vector<16x64xf32>
      %192 = arith.addf %190, %191 : vector<16x64xf32>
      %193 = arith.truncf %192 : vector<16x64xf32> to vector<16x64xbf16>
      %c0_95 = arith.constant 0 : index
      %c0_96 = arith.constant 0 : index
      %c0_97 = arith.constant 0 : index
      %194 = vector.load %arg14[%c0_95, %c0_96, %c0_97] : memref<2x64x16xbf16, #tpu.memory_space<vmem>>, vector<1x64x16xbf16>
      %195 = vector.shape_cast %194 : vector<1x64x16xbf16> to vector<64x16xbf16>
      %cst_98 = arith.constant dense<0.000000e+00> : vector<16x16xf32>
      %196 = tpu.matmul %193, %195, %cst_98 {dimension_numbers = #tpu.dot_dimension_numbers<[1], [0], [0], [1], [0, 0, 1, 1], [], []>} : vector<16x64xbf16>, vector<64x16xbf16>, vector<16x16xf32> -> vector<16x16xf32>
      %c0_99 = arith.constant 0 : index
      %c0_100 = arith.constant 0 : index
      %c0_101 = arith.constant 0 : index
      %197 = vector.load %arg15[%c0_99, %c0_100, %c0_101] : memref<2x1x16xf32, #tpu.memory_space<vmem>>, vector<1x1x16xf32>
      %198 = vector.shape_cast %197 : vector<1x1x16xf32> to vector<1x16xf32>
      %199 = vector.broadcast %198 : vector<1x16xf32> to vector<16x16xf32>
      %200 = arith.addf %196, %199 : vector<16x16xf32>
      %c0_102 = arith.constant 0 : index
      %c0_103 = arith.constant 0 : index
      %201 = vector.load %arg29[%c0_102, %c0_103] : memref<16x64xf32, #tpu.memory_space<vmem>>, vector<16x64xf32>
      tpu.vector_store %arg29[%c0_102, %c0_103], %192 {strides = array<i32>} : memref<16x64xf32, #tpu.memory_space<vmem>>, vector<16x64xf32>,
      %c0_104 = arith.constant 0 : index
      %c0_105 = arith.constant 0 : index
      %202 = vector.load %arg32[%c0_104, %c0_105] : memref<16x16xf32, #tpu.memory_space<vmem>>, vector<16x16xf32>
      tpu.vector_store %arg32[%c0_104, %c0_105], %200 {strides = array<i32>} : memref<16x16xf32, #tpu.memory_space<vmem>>, vector<16x16xf32>,
      %c0_106 = arith.constant 0 : index
      %c0_107 = arith.constant 0 : index
      %203 = vector.load %arg30[%c0_106, %c0_107] : memref<16x64xf32, #tpu.memory_space<vmem>>, vector<16x64xf32>
      %204 = arith.truncf %203 : vector<16x64xf32> to vector<16x64xbf16>
      %c1_108 = arith.constant 1 : index
      %c0_109 = arith.constant 0 : index
      %c0_110 = arith.constant 0 : index
      %205 = vector.load %arg6[%c1_108, %c0_109, %c0_110] : memref<2x1x64xf32, #tpu.memory_space<vmem>>, vector<1x1x64xf32>
      %206 = vector.shape_cast %205 : vector<1x1x64xf32> to vector<1x64xf32>
      %c1_111 = arith.constant 1 : index
      %c0_112 = arith.constant 0 : index
      %c0_113 = arith.constant 0 : index
      %207 = vector.load %arg7[%c1_111, %c0_112, %c0_113] : memref<2x1x64xf32, #tpu.memory_space<vmem>>, vector<1x1x64xf32>
      %208 = vector.shape_cast %207 : vector<1x1x64xf32> to vector<1x64xf32>
      %cst_114 = arith.constant 0.000000e+00 : f32
      %209 = vector.broadcast %cst_114 : f32 to vector<16x64xf32>
      %c1_115 = arith.constant 1 : index
      %c0_116 = arith.constant 0 : index
      %c0_117 = arith.constant 0 : index
      %c0_118 = arith.constant 0 : index
      %210 = vector.load %arg4[%c1_115, %c0_116, %c0_117, %c0_118] : memref<2x6x64x16xbf16, #tpu.memory_space<vmem>>, vector<1x1x64x16xbf16>
      %211 = vector.shape_cast %210 : vector<1x1x64x16xbf16> to vector<64x16xbf16>
      %cst_119 = arith.constant dense<0.000000e+00> : vector<16x16xf32>
      %212 = tpu.matmul %204, %211, %cst_119 {dimension_numbers = #tpu.dot_dimension_numbers<[1], [0], [0], [1], [0, 0, 1, 1], [], []>} : vector<16x64xbf16>, vector<64x16xbf16>, vector<16x16xf32> -> vector<16x16xf32>
      %c1_120 = arith.constant 1 : index
      %c2_121 = arith.constant 2 : index
      %c0_122 = arith.constant 0 : index
      %c0_123 = arith.constant 0 : index
      %213 = vector.load %arg4[%c1_120, %c2_121, %c0_122, %c0_123] : memref<2x6x64x16xbf16, #tpu.memory_space<vmem>>, vector<1x1x64x16xbf16>
      %214 = vector.shape_cast %213 : vector<1x1x64x16xbf16> to vector<64x16xbf16>
      %cst_124 = arith.constant dense<0.000000e+00> : vector<16x16xf32>
      %215 = tpu.matmul %204, %214, %cst_124 {dimension_numbers = #tpu.dot_dimension_numbers<[1], [0], [0], [1], [0, 0, 1, 1], [], []>} : vector<16x64xbf16>, vector<64x16xbf16>, vector<16x16xf32> -> vector<16x16xf32>
      %c1_125 = arith.constant 1 : index
      %c4_126 = arith.constant 4 : index
      %c0_127 = arith.constant 0 : index
      %c0_128 = arith.constant 0 : index
      %216 = vector.load %arg4[%c1_125, %c4_126, %c0_127, %c0_128] : memref<2x6x64x16xbf16, #tpu.memory_space<vmem>>, vector<1x1x64x16xbf16>
      %217 = vector.shape_cast %216 : vector<1x1x64x16xbf16> to vector<64x16xbf16>
      %cst_129 = arith.constant dense<0.000000e+00> : vector<16x16xf32>
      %218 = tpu.matmul %204, %217, %cst_129 {dimension_numbers = #tpu.dot_dimension_numbers<[1], [0], [0], [1], [0, 0, 1, 1], [], []>} : vector<16x64xbf16>, vector<64x16xbf16>, vector<16x16xf32> -> vector<16x16xf32>
      %219 = vector.extract_strided_slice %212 {offsets = [0, 0], sizes = [8, 16], strides = [1, 1]} : vector<16x16xf32> to vector<8x16xf32>
      %220 = arith.truncf %219 : vector<8x16xf32> to vector<8x16xbf16>
      %221 = vector.extract_strided_slice %215 {offsets = [0, 0], sizes = [8, 16], strides = [1, 1]} : vector<16x16xf32> to vector<8x16xf32>
      %222 = arith.truncf %221 : vector<8x16xf32> to vector<8x16xbf16>
      %223 = vector.extract_strided_slice %218 {offsets = [0, 0], sizes = [8, 16], strides = [1, 1]} : vector<16x16xf32> to vector<8x16xf32>
      %224 = arith.truncf %223 : vector<8x16xf32> to vector<8x16xbf16>
      %cst_130 = arith.constant dense<0.000000e+00> : vector<8x8xf32>
      %225 = tpu.matmul %220, %222, %cst_130 {dimension_numbers = #tpu.dot_dimension_numbers<[1], [1], [0], [0], [0, 0, 1, 0], [], []>} : vector<8x16xbf16>, vector<8x16xbf16>, vector<8x8xf32> -> vector<8x8xf32>
      %cst_131 = arith.constant dense<0xFF800000> : vector<8xf32>
      %226 = vector.multi_reduction <maximumf>, %225, %cst_131 [1] : vector<8x8xf32> to vector<8xf32>
      %227 = vector.shape_cast %226 : vector<8xf32> to vector<8x1xf32>
      %228 = vector.broadcast %227 : vector<8x1xf32> to vector<8x8xf32>
      %229 = arith.subf %225, %228 : vector<8x8xf32>
      %230 = math.exp %229 : vector<8x8xf32>
      %cst_132 = arith.constant dense<0.000000e+00> : vector<8xf32>
      %231 = vector.multi_reduction <add>, %230, %cst_132 [1] : vector<8x8xf32> to vector<8xf32>
      %232 = vector.shape_cast %231 : vector<8xf32> to vector<8x1xf32>
      %233 = tpu.reciprocal %232 {approx = true} : vector<8x1xf32> -> vector<8x1xf32>
      %234 = vector.broadcast %233 : vector<8x1xf32> to vector<8x8xf32>
      %235 = arith.mulf %230, %234 : vector<8x8xf32>
      %236 = arith.truncf %235 : vector<8x8xf32> to vector<8x8xbf16>
      %cst_133 = arith.constant dense<0.000000e+00> : vector<8x16xf32>
      %237 = tpu.matmul %236, %224, %cst_133 {dimension_numbers = #tpu.dot_dimension_numbers<[1], [0], [0], [1], [0, 0, 1, 1], [], []>} : vector<8x8xbf16>, vector<8x16xbf16>, vector<8x16xf32> -> vector<8x16xf32>
      %238 = vector.extract_strided_slice %212 {offsets = [8, 0], sizes = [8, 16], strides = [1, 1]} : vector<16x16xf32> to vector<8x16xf32>
      %239 = arith.truncf %238 : vector<8x16xf32> to vector<8x16xbf16>
      %240 = vector.extract_strided_slice %215 {offsets = [8, 0], sizes = [8, 16], strides = [1, 1]} : vector<16x16xf32> to vector<8x16xf32>
      %241 = arith.truncf %240 : vector<8x16xf32> to vector<8x16xbf16>
      %242 = vector.extract_strided_slice %218 {offsets = [8, 0], sizes = [8, 16], strides = [1, 1]} : vector<16x16xf32> to vector<8x16xf32>
      %243 = arith.truncf %242 : vector<8x16xf32> to vector<8x16xbf16>
      %cst_134 = arith.constant dense<0.000000e+00> : vector<8x8xf32>
      %244 = tpu.matmul %239, %241, %cst_134 {dimension_numbers = #tpu.dot_dimension_numbers<[1], [1], [0], [0], [0, 0, 1, 0], [], []>} : vector<8x16xbf16>, vector<8x16xbf16>, vector<8x8xf32> -> vector<8x8xf32>
      %cst_135 = arith.constant dense<0xFF800000> : vector<8xf32>
      %245 = vector.multi_reduction <maximumf>, %244, %cst_135 [1] : vector<8x8xf32> to vector<8xf32>
      %246 = vector.shape_cast %245 : vector<8xf32> to vector<8x1xf32>
      %247 = vector.broadcast %246 : vector<8x1xf32> to vector<8x8xf32>
      %248 = arith.subf %244, %247 : vector<8x8xf32>
      %249 = math.exp %248 : vector<8x8xf32>
      %cst_136 = arith.constant dense<0.000000e+00> : vector<8xf32>
      %250 = vector.multi_reduction <add>, %249, %cst_136 [1] : vector<8x8xf32> to vector<8xf32>
      %251 = vector.shape_cast %250 : vector<8xf32> to vector<8x1xf32>
      %252 = tpu.reciprocal %251 {approx = true} : vector<8x1xf32> -> vector<8x1xf32>
      %253 = vector.broadcast %252 : vector<8x1xf32> to vector<8x8xf32>
      %254 = arith.mulf %249, %253 : vector<8x8xf32>
      %255 = arith.truncf %254 : vector<8x8xf32> to vector<8x8xbf16>
      %cst_137 = arith.constant dense<0.000000e+00> : vector<8x16xf32>
      %256 = tpu.matmul %255, %243, %cst_137 {dimension_numbers = #tpu.dot_dimension_numbers<[1], [0], [0], [1], [0, 0, 1, 1], [], []>} : vector<8x8xbf16>, vector<8x16xbf16>, vector<8x16xf32> -> vector<8x16xf32>
      %257 = tpu.concatenate %237, %256 in 0 : vector<8x16xf32>, vector<8x16xf32> -> vector<16x16xf32>
      %258 = arith.truncf %257 : vector<16x16xf32> to vector<16x16xbf16>
      %c1_138 = arith.constant 1 : index
      %c0_139 = arith.constant 0 : index
      %c0_140 = arith.constant 0 : index
      %c0_141 = arith.constant 0 : index
      %259 = vector.load %arg5[%c1_138, %c0_139, %c0_140, %c0_141] : memref<2x2x16x64xbf16, #tpu.memory_space<vmem>>, vector<1x1x16x64xbf16>
      %260 = vector.shape_cast %259 : vector<1x1x16x64xbf16> to vector<16x64xbf16>
      %cst_142 = arith.constant dense<0.000000e+00> : vector<16x64xf32>
      %261 = tpu.matmul %258, %260, %cst_142 {dimension_numbers = #tpu.dot_dimension_numbers<[1], [0], [0], [1], [0, 0, 1, 1], [], []>} : vector<16x16xbf16>, vector<16x64xbf16>, vector<16x64xf32> -> vector<16x64xf32>
      %262 = arith.addf %209, %261 : vector<16x64xf32>
      %c1_143 = arith.constant 1 : index
      %c1_144 = arith.constant 1 : index
      %c0_145 = arith.constant 0 : index
      %c0_146 = arith.constant 0 : index
      %263 = vector.load %arg4[%c1_143, %c1_144, %c0_145, %c0_146] : memref<2x6x64x16xbf16, #tpu.memory_space<vmem>>, vector<1x1x64x16xbf16>
      %264 = vector.shape_cast %263 : vector<1x1x64x16xbf16> to vector<64x16xbf16>
      %cst_147 = arith.constant dense<0.000000e+00> : vector<16x16xf32>
      %265 = tpu.matmul %204, %264, %cst_147 {dimension_numbers = #tpu.dot_dimension_numbers<[1], [0], [0], [1], [0, 0, 1, 1], [], []>} : vector<16x64xbf16>, vector<64x16xbf16>, vector<16x16xf32> -> vector<16x16xf32>
      %c1_148 = arith.constant 1 : index
      %c3_149 = arith.constant 3 : index
      %c0_150 = arith.constant 0 : index
      %c0_151 = arith.constant 0 : index
      %266 = vector.load %arg4[%c1_148, %c3_149, %c0_150, %c0_151] : memref<2x6x64x16xbf16, #tpu.memory_space<vmem>>, vector<1x1x64x16xbf16>
      %267 = vector.shape_cast %266 : vector<1x1x64x16xbf16> to vector<64x16xbf16>
      %cst_152 = arith.constant dense<0.000000e+00> : vector<16x16xf32>
      %268 = tpu.matmul %204, %267, %cst_152 {dimension_numbers = #tpu.dot_dimension_numbers<[1], [0], [0], [1], [0, 0, 1, 1], [], []>} : vector<16x64xbf16>, vector<64x16xbf16>, vector<16x16xf32> -> vector<16x16xf32>
      %c1_153 = arith.constant 1 : index
      %c5_154 = arith.constant 5 : index
      %c0_155 = arith.constant 0 : index
      %c0_156 = arith.constant 0 : index
      %269 = vector.load %arg4[%c1_153, %c5_154, %c0_155, %c0_156] : memref<2x6x64x16xbf16, #tpu.memory_space<vmem>>, vector<1x1x64x16xbf16>
      %270 = vector.shape_cast %269 : vector<1x1x64x16xbf16> to vector<64x16xbf16>
      %cst_157 = arith.constant dense<0.000000e+00> : vector<16x16xf32>
      %271 = tpu.matmul %204, %270, %cst_157 {dimension_numbers = #tpu.dot_dimension_numbers<[1], [0], [0], [1], [0, 0, 1, 1], [], []>} : vector<16x64xbf16>, vector<64x16xbf16>, vector<16x16xf32> -> vector<16x16xf32>
      %272 = vector.extract_strided_slice %265 {offsets = [0, 0], sizes = [8, 16], strides = [1, 1]} : vector<16x16xf32> to vector<8x16xf32>
      %273 = arith.truncf %272 : vector<8x16xf32> to vector<8x16xbf16>
      %274 = vector.extract_strided_slice %268 {offsets = [0, 0], sizes = [8, 16], strides = [1, 1]} : vector<16x16xf32> to vector<8x16xf32>
      %275 = arith.truncf %274 : vector<8x16xf32> to vector<8x16xbf16>
      %276 = vector.extract_strided_slice %271 {offsets = [0, 0], sizes = [8, 16], strides = [1, 1]} : vector<16x16xf32> to vector<8x16xf32>
      %277 = arith.truncf %276 : vector<8x16xf32> to vector<8x16xbf16>
      %cst_158 = arith.constant dense<0.000000e+00> : vector<8x8xf32>
      %278 = tpu.matmul %273, %275, %cst_158 {dimension_numbers = #tpu.dot_dimension_numbers<[1], [1], [0], [0], [0, 0, 1, 0], [], []>} : vector<8x16xbf16>, vector<8x16xbf16>, vector<8x8xf32> -> vector<8x8xf32>
      %cst_159 = arith.constant dense<0xFF800000> : vector<8xf32>
      %279 = vector.multi_reduction <maximumf>, %278, %cst_159 [1] : vector<8x8xf32> to vector<8xf32>
      %280 = vector.shape_cast %279 : vector<8xf32> to vector<8x1xf32>
      %281 = vector.broadcast %280 : vector<8x1xf32> to vector<8x8xf32>
      %282 = arith.subf %278, %281 : vector<8x8xf32>
      %283 = math.exp %282 : vector<8x8xf32>
      %cst_160 = arith.constant dense<0.000000e+00> : vector<8xf32>
      %284 = vector.multi_reduction <add>, %283, %cst_160 [1] : vector<8x8xf32> to vector<8xf32>
      %285 = vector.shape_cast %284 : vector<8xf32> to vector<8x1xf32>
      %286 = tpu.reciprocal %285 {approx = true} : vector<8x1xf32> -> vector<8x1xf32>
      %287 = vector.broadcast %286 : vector<8x1xf32> to vector<8x8xf32>
      %288 = arith.mulf %283, %287 : vector<8x8xf32>
      %289 = arith.truncf %288 : vector<8x8xf32> to vector<8x8xbf16>
      %cst_161 = arith.constant dense<0.000000e+00> : vector<8x16xf32>
      %290 = tpu.matmul %289, %277, %cst_161 {dimension_numbers = #tpu.dot_dimension_numbers<[1], [0], [0], [1], [0, 0, 1, 1], [], []>} : vector<8x8xbf16>, vector<8x16xbf16>, vector<8x16xf32> -> vector<8x16xf32>
      %291 = vector.extract_strided_slice %265 {offsets = [8, 0], sizes = [8, 16], strides = [1, 1]} : vector<16x16xf32> to vector<8x16xf32>
      %292 = arith.truncf %291 : vector<8x16xf32> to vector<8x16xbf16>
      %293 = vector.extract_strided_slice %268 {offsets = [8, 0], sizes = [8, 16], strides = [1, 1]} : vector<16x16xf32> to vector<8x16xf32>
      %294 = arith.truncf %293 : vector<8x16xf32> to vector<8x16xbf16>
      %295 = vector.extract_strided_slice %271 {offsets = [8, 0], sizes = [8, 16], strides = [1, 1]} : vector<16x16xf32> to vector<8x16xf32>
      %296 = arith.truncf %295 : vector<8x16xf32> to vector<8x16xbf16>
      %cst_162 = arith.constant dense<0.000000e+00> : vector<8x8xf32>
      %297 = tpu.matmul %292, %294, %cst_162 {dimension_numbers = #tpu.dot_dimension_numbers<[1], [1], [0], [0], [0, 0, 1, 0], [], []>} : vector<8x16xbf16>, vector<8x16xbf16>, vector<8x8xf32> -> vector<8x8xf32>
      %cst_163 = arith.constant dense<0xFF800000> : vector<8xf32>
      %298 = vector.multi_reduction <maximumf>, %297, %cst_163 [1] : vector<8x8xf32> to vector<8xf32>
      %299 = vector.shape_cast %298 : vector<8xf32> to vector<8x1xf32>
      %300 = vector.broadcast %299 : vector<8x1xf32> to vector<8x8xf32>
      %301 = arith.subf %297, %300 : vector<8x8xf32>
      %302 = math.exp %301 : vector<8x8xf32>
      %cst_164 = arith.constant dense<0.000000e+00> : vector<8xf32>
      %303 = vector.multi_reduction <add>, %302, %cst_164 [1] : vector<8x8xf32> to vector<8xf32>
      %304 = vector.shape_cast %303 : vector<8xf32> to vector<8x1xf32>
      %305 = tpu.reciprocal %304 {approx = true} : vector<8x1xf32> -> vector<8x1xf32>
      %306 = vector.broadcast %305 : vector<8x1xf32> to vector<8x8xf32>
      %307 = arith.mulf %302, %306 : vector<8x8xf32>
      %308 = arith.truncf %307 : vector<8x8xf32> to vector<8x8xbf16>
      %cst_165 = arith.constant dense<0.000000e+00> : vector<8x16xf32>
      %309 = tpu.matmul %308, %296, %cst_165 {dimension_numbers = #tpu.dot_dimension_numbers<[1], [0], [0], [1], [0, 0, 1, 1], [], []>} : vector<8x8xbf16>, vector<8x16xbf16>, vector<8x16xf32> -> vector<8x16xf32>
      %310 = tpu.concatenate %290, %309 in 0 : vector<8x16xf32>, vector<8x16xf32> -> vector<16x16xf32>
      %311 = arith.truncf %310 : vector<16x16xf32> to vector<16x16xbf16>
      %c1_166 = arith.constant 1 : index
      %c1_167 = arith.constant 1 : index
      %c0_168 = arith.constant 0 : index
      %c0_169 = arith.constant 0 : index
      %312 = vector.load %arg5[%c1_166, %c1_167, %c0_168, %c0_169] : memref<2x2x16x64xbf16, #tpu.memory_space<vmem>>, vector<1x1x16x64xbf16>
      %313 = vector.shape_cast %312 : vector<1x1x16x64xbf16> to vector<16x64xbf16>
      %cst_170 = arith.constant dense<0.000000e+00> : vector<16x64xf32>
      %314 = tpu.matmul %311, %313, %cst_170 {dimension_numbers = #tpu.dot_dimension_numbers<[1], [0], [0], [1], [0, 0, 1, 1], [], []>} : vector<16x16xbf16>, vector<16x64xbf16>, vector<16x64xf32> -> vector<16x64xf32>
      %315 = arith.addf %262, %314 : vector<16x64xf32>
      %316 = arith.addf %203, %315 : vector<16x64xf32>
      %cst_171 = arith.constant dense<0.000000e+00> : vector<16xf32>
      %317 = vector.multi_reduction <add>, %316, %cst_171 [1] : vector<16x64xf32> to vector<16xf32>
      %318 = vector.shape_cast %317 : vector<16xf32> to vector<16x1xf32>
      %cst_172 = arith.constant 6.400000e+01 : f32
      %319 = vector.broadcast %cst_172 : f32 to vector<16x1xf32>
      %320 = arith.divf %318, %319 : vector<16x1xf32>
      %321 = vector.broadcast %320 : vector<16x1xf32> to vector<16x64xf32>
      %322 = arith.subf %316, %321 : vector<16x64xf32>
      %323 = arith.mulf %322, %322 : vector<16x64xf32>
      %cst_173 = arith.constant dense<0.000000e+00> : vector<16xf32>
      %324 = vector.multi_reduction <add>, %323, %cst_173 [1] : vector<16x64xf32> to vector<16xf32>
      %325 = vector.shape_cast %324 : vector<16xf32> to vector<16x1xf32>
      %cst_174 = arith.constant 6.400000e+01 : f32
      %326 = vector.broadcast %cst_174 : f32 to vector<16x1xf32>
      %327 = arith.divf %325, %326 : vector<16x1xf32>
      %328 = vector.broadcast %320 : vector<16x1xf32> to vector<16x64xf32>
      %329 = arith.subf %316, %328 : vector<16x64xf32>
      %cst_175 = arith.constant 9.99999974E-6 : f32
      %330 = vector.broadcast %cst_175 : f32 to vector<16x1xf32>
      %331 = arith.addf %327, %330 : vector<16x1xf32>
      %332 = math.rsqrt %331 : vector<16x1xf32>
      %333 = vector.broadcast %332 : vector<16x1xf32> to vector<16x64xf32>
      %334 = arith.mulf %329, %333 : vector<16x64xf32>
      %335 = vector.broadcast %206 : vector<1x64xf32> to vector<16x64xf32>
      %336 = arith.mulf %334, %335 : vector<16x64xf32>
      %337 = vector.broadcast %208 : vector<1x64xf32> to vector<16x64xf32>
      %338 = arith.addf %336, %337 : vector<16x64xf32>
      %c1_176 = arith.constant 1 : index
      %c0_177 = arith.constant 0 : index
      %c0_178 = arith.constant 0 : index
      %339 = vector.load %arg8[%c1_176, %c0_177, %c0_178] : memref<2x64x128xbf16, #tpu.memory_space<vmem>>, vector<1x64x128xbf16>
      %340 = vector.shape_cast %339 : vector<1x64x128xbf16> to vector<64x128xbf16>
      %c1_179 = arith.constant 1 : index
      %c0_180 = arith.constant 0 : index
      %c0_181 = arith.constant 0 : index
      %341 = vector.load %arg9[%c1_179, %c0_180, %c0_181] : memref<2x1x128xf32, #tpu.memory_space<vmem>>, vector<1x1x128xf32>
      %342 = vector.shape_cast %341 : vector<1x1x128xf32> to vector<1x128xf32>
      %c1_182 = arith.constant 1 : index
      %c0_183 = arith.constant 0 : index
      %c0_184 = arith.constant 0 : index
      %343 = vector.load %arg10[%c1_182, %c0_183, %c0_184] : memref<2x128x64xbf16, #tpu.memory_space<vmem>>, vector<1x128x64xbf16>
      %344 = vector.shape_cast %343 : vector<1x128x64xbf16> to vector<128x64xbf16>
      %c1_185 = arith.constant 1 : index
      %c0_186 = arith.constant 0 : index
      %c0_187 = arith.constant 0 : index
      %345 = vector.load %arg11[%c1_185, %c0_186, %c0_187] : memref<2x1x64xf32, #tpu.memory_space<vmem>>, vector<1x1x64xf32>
      %346 = vector.shape_cast %345 : vector<1x1x64xf32> to vector<1x64xf32>
      %c1_188 = arith.constant 1 : index
      %c0_189 = arith.constant 0 : index
      %c0_190 = arith.constant 0 : index
      %347 = vector.load %arg12[%c1_188, %c0_189, %c0_190] : memref<2x1x64xf32, #tpu.memory_space<vmem>>, vector<1x1x64xf32>
      %348 = vector.shape_cast %347 : vector<1x1x64xf32> to vector<1x64xf32>
      %c1_191 = arith.constant 1 : index
      %c0_192 = arith.constant 0 : index
      %c0_193 = arith.constant 0 : index
      %349 = vector.load %arg13[%c1_191, %c0_192, %c0_193] : memref<2x1x64xf32, #tpu.memory_space<vmem>>, vector<1x1x64xf32>
      %350 = vector.shape_cast %349 : vector<1x1x64xf32> to vector<1x64xf32>
      %351 = arith.truncf %338 : vector<16x64xf32> to vector<16x64xbf16>
      %cst_194 = arith.constant dense<0.000000e+00> : vector<16x128xf32>
      %352 = tpu.matmul %351, %340, %cst_194 {dimension_numbers = #tpu.dot_dimension_numbers<[1], [0], [0], [1], [0, 0, 1, 1], [], []>} : vector<16x64xbf16>, vector<64x128xbf16>, vector<16x128xf32> -> vector<16x128xf32>
      %353 = vector.broadcast %342 : vector<1x128xf32> to vector<16x128xf32>
      %354 = arith.addf %352, %353 : vector<16x128xf32>
      %cst_195 = arith.constant 0.000000e+00 : f32
      %355 = vector.broadcast %cst_195 : f32 to vector<16x128xf32>
      %356 = arith.maximumf %354, %355 : vector<16x128xf32>
      %357 = arith.truncf %356 : vector<16x128xf32> to vector<16x128xbf16>
      %cst_196 = arith.constant dense<0.000000e+00> : vector<16x64xf32>
      %358 = tpu.matmul %357, %344, %cst_196 {dimension_numbers = #tpu.dot_dimension_numbers<[1], [0], [0], [1], [0, 0, 1, 1], [], []>} : vector<16x128xbf16>, vector<128x64xbf16>, vector<16x64xf32> -> vector<16x64xf32>
      %359 = vector.broadcast %346 : vector<1x64xf32> to vector<16x64xf32>
      %360 = arith.addf %358, %359 : vector<16x64xf32>
      %361 = arith.addf %360, %338 : vector<16x64xf32>
      %cst_197 = arith.constant dense<0.000000e+00> : vector<16xf32>
      %362 = vector.multi_reduction <add>, %361, %cst_197 [1] : vector<16x64xf32> to vector<16xf32>
      %363 = vector.shape_cast %362 : vector<16xf32> to vector<16x1xf32>
      %cst_198 = arith.constant 6.400000e+01 : f32
      %364 = vector.broadcast %cst_198 : f32 to vector<16x1xf32>
      %365 = arith.divf %363, %364 : vector<16x1xf32>
      %366 = vector.broadcast %365 : vector<16x1xf32> to vector<16x64xf32>
      %367 = arith.subf %361, %366 : vector<16x64xf32>
      %368 = arith.mulf %367, %367 : vector<16x64xf32>
      %cst_199 = arith.constant dense<0.000000e+00> : vector<16xf32>
      %369 = vector.multi_reduction <add>, %368, %cst_199 [1] : vector<16x64xf32> to vector<16xf32>
      %370 = vector.shape_cast %369 : vector<16xf32> to vector<16x1xf32>
      %cst_200 = arith.constant 6.400000e+01 : f32
      %371 = vector.broadcast %cst_200 : f32 to vector<16x1xf32>
      %372 = arith.divf %370, %371 : vector<16x1xf32>
      %373 = vector.broadcast %365 : vector<16x1xf32> to vector<16x64xf32>
      %374 = arith.subf %361, %373 : vector<16x64xf32>
      %cst_201 = arith.constant 9.99999974E-6 : f32
      %375 = vector.broadcast %cst_201 : f32 to vector<16x1xf32>
      %376 = arith.addf %372, %375 : vector<16x1xf32>
      %377 = math.rsqrt %376 : vector<16x1xf32>
      %378 = vector.broadcast %377 : vector<16x1xf32> to vector<16x64xf32>
      %379 = arith.mulf %374, %378 : vector<16x64xf32>
      %380 = vector.broadcast %348 : vector<1x64xf32> to vector<16x64xf32>
      %381 = arith.mulf %379, %380 : vector<16x64xf32>
      %382 = vector.broadcast %350 : vector<1x64xf32> to vector<16x64xf32>
      %383 = arith.addf %381, %382 : vector<16x64xf32>
      %384 = arith.truncf %383 : vector<16x64xf32> to vector<16x64xbf16>
      %c1_202 = arith.constant 1 : index
      %c0_203 = arith.constant 0 : index
      %c0_204 = arith.constant 0 : index
      %385 = vector.load %arg14[%c1_202, %c0_203, %c0_204] : memref<2x64x16xbf16, #tpu.memory_space<vmem>>, vector<1x64x16xbf16>
      %386 = vector.shape_cast %385 : vector<1x64x16xbf16> to vector<64x16xbf16>
      %cst_205 = arith.constant dense<0.000000e+00> : vector<16x16xf32>
      %387 = tpu.matmul %384, %386, %cst_205 {dimension_numbers = #tpu.dot_dimension_numbers<[1], [0], [0], [1], [0, 0, 1, 1], [], []>} : vector<16x64xbf16>, vector<64x16xbf16>, vector<16x16xf32> -> vector<16x16xf32>
      %c1_206 = arith.constant 1 : index
      %c0_207 = arith.constant 0 : index
      %c0_208 = arith.constant 0 : index
      %388 = vector.load %arg15[%c1_206, %c0_207, %c0_208] : memref<2x1x16xf32, #tpu.memory_space<vmem>>, vector<1x1x16xf32>
      %389 = vector.shape_cast %388 : vector<1x1x16xf32> to vector<1x16xf32>
      %390 = vector.broadcast %389 : vector<1x16xf32> to vector<16x16xf32>
      %391 = arith.addf %387, %390 : vector<16x16xf32>
      %c0_209 = arith.constant 0 : index
      %c0_210 = arith.constant 0 : index
      %392 = vector.load %arg30[%c0_209, %c0_210] : memref<16x64xf32, #tpu.memory_space<vmem>>, vector<16x64xf32>
      tpu.vector_store %arg30[%c0_209, %c0_210], %383 {strides = array<i32>} : memref<16x64xf32, #tpu.memory_space<vmem>>, vector<16x64xf32>,
      %c0_211 = arith.constant 0 : index
      %c0_212 = arith.constant 0 : index
      %393 = vector.load %arg33[%c0_211, %c0_212] : memref<16x16xf32, #tpu.memory_space<vmem>>, vector<16x16xf32>
      tpu.vector_store %arg33[%c0_211, %c0_212], %391 {strides = array<i32>} : memref<16x16xf32, #tpu.memory_space<vmem>>, vector<16x16xf32>,
    } else {
    }
    %c2_i32_4 = arith.constant 2 : i32
    %9 = arith.cmpi eq, %arg0, %c2_i32_4 : i32
    %10 = arith.extui %9 : i1 to i32
    %c0_i32_5 = arith.constant 0 : i32
    %11 = arith.cmpi ne, %10, %c0_i32_5 : i32
    scf.if %11 {
      %c0 = arith.constant 0 : index
      %c0_6 = arith.constant 0 : index
      %12 = vector.load %arg31[%c0, %c0_6] : memref<16x64xf32, #tpu.memory_space<vmem>>, vector<16x64xf32>
      %c0_7 = arith.constant 0 : index
      %c0_8 = arith.constant 0 : index
      %13 = vector.load %arg28[%c0_7, %c0_8] : memref<16x64xf32, #tpu.memory_space<vmem>>, vector<16x64xf32>
      tpu.vector_store %arg28[%c0_7, %c0_8], %12 {strides = array<i32>} : memref<16x64xf32, #tpu.memory_space<vmem>>, vector<16x64xf32>,
    } else {
    }
    return
  }
  func.func @transform_0(%arg0: i32) -> (i32, i32) {
    %c0_i32 = arith.constant 0 : i32
    %c0_i32_0 = arith.constant 0 : i32
    %c0_i32_1 = arith.constant 0 : i32
    return %c0_i32, %c0_i32_0 : i32, i32
  }
  func.func @transform_1(%arg0: i32) -> (i32, i32) {
    %c0_i32 = arith.constant 0 : i32
    %c0_i32_0 = arith.constant 0 : i32
    %c0_i32_1 = arith.constant 0 : i32
    return %c0_i32, %c0_i32_0 : i32, i32
  }
  func.func @transform_2(%arg0: i32) -> (i32, i32) {
    %c0_i32 = arith.constant 0 : i32
    %c0_i32_0 = arith.constant 0 : i32
    %c0_i32_1 = arith.constant 0 : i32
    return %c0_i32, %c0_i32_0 : i32, i32
  }
  func.func @transform_3(%arg0: i32) -> (i32, i32, i32, i32) {
    %c1_i32 = arith.constant 1 : i32
    %0 = arith.minsi %arg0, %c1_i32 : i32
    %c0_i32 = arith.constant 0 : i32
    %c0_i32_0 = arith.constant 0 : i32
    %c0_i32_1 = arith.constant 0 : i32
    %c0_i32_2 = arith.constant 0 : i32
    return %0, %c0_i32, %c0_i32_0, %c0_i32_1 : i32, i32, i32, i32
  }
  func.func @transform_4(%arg0: i32) -> (i32, i32, i32, i32) {
    %c1_i32 = arith.constant 1 : i32
    %0 = arith.minsi %arg0, %c1_i32 : i32
    %c0_i32 = arith.constant 0 : i32
    %c0_i32_0 = arith.constant 0 : i32
    %c0_i32_1 = arith.constant 0 : i32
    %c0_i32_2 = arith.constant 0 : i32
    return %0, %c0_i32, %c0_i32_0, %c0_i32_1 : i32, i32, i32, i32
  }
  func.func @transform_5(%arg0: i32) -> (i32, i32, i32) {
    %c1_i32 = arith.constant 1 : i32
    %0 = arith.minsi %arg0, %c1_i32 : i32
    %c0_i32 = arith.constant 0 : i32
    %c0_i32_0 = arith.constant 0 : i32
    %c0_i32_1 = arith.constant 0 : i32
    return %0, %c0_i32, %c0_i32_0 : i32, i32, i32
  }
  func.func @transform_6(%arg0: i32) -> (i32, i32, i32) {
    %c1_i32 = arith.constant 1 : i32
    %0 = arith.minsi %arg0, %c1_i32 : i32
    %c0_i32 = arith.constant 0 : i32
    %c0_i32_0 = arith.constant 0 : i32
    %c0_i32_1 = arith.constant 0 : i32
    return %0, %c0_i32, %c0_i32_0 : i32, i32, i32
  }
  func.func @transform_7(%arg0: i32) -> (i32, i32, i32) {
    %c1_i32 = arith.constant 1 : i32
    %0 = arith.minsi %arg0, %c1_i32 : i32
    %c0_i32 = arith.constant 0 : i32
    %c0_i32_0 = arith.constant 0 : i32
    %c0_i32_1 = arith.constant 0 : i32
    return %0, %c0_i32, %c0_i32_0 : i32, i32, i32
  }
  func.func @transform_8(%arg0: i32) -> (i32, i32, i32) {
    %c1_i32 = arith.constant 1 : i32
    %0 = arith.minsi %arg0, %c1_i32 : i32
    %c0_i32 = arith.constant 0 : i32
    %c0_i32_0 = arith.constant 0 : i32
    %c0_i32_1 = arith.constant 0 : i32
    return %0, %c0_i32, %c0_i32_0 : i32, i32, i32
  }
  func.func @transform_9(%arg0: i32) -> (i32, i32, i32) {
    %c1_i32 = arith.constant 1 : i32
    %0 = arith.minsi %arg0, %c1_i32 : i32
    %c0_i32 = arith.constant 0 : i32
    %c0_i32_0 = arith.constant 0 : i32
    %c0_i32_1 = arith.constant 0 : i32
    return %0, %c0_i32, %c0_i32_0 : i32, i32, i32
  }
  func.func @transform_10(%arg0: i32) -> (i32, i32, i32) {
    %c1_i32 = arith.constant 1 : i32
    %0 = arith.minsi %arg0, %c1_i32 : i32
    %c0_i32 = arith.constant 0 : i32
    %c0_i32_0 = arith.constant 0 : i32
    %c0_i32_1 = arith.constant 0 : i32
    return %0, %c0_i32, %c0_i32_0 : i32, i32, i32
  }
  func.func @transform_11(%arg0: i32) -> (i32, i32, i32) {
    %c1_i32 = arith.constant 1 : i32
    %0 = arith.minsi %arg0, %c1_i32 : i32
    %c0_i32 = arith.constant 0 : i32
    %c0_i32_0 = arith.constant 0 : i32
    %c0_i32_1 = arith.constant 0 : i32
    return %0, %c0_i32, %c0_i32_0 : i32, i32, i32
  }
  func.func @transform_12(%arg0: i32) -> (i32, i32, i32) {
    %c1_i32 = arith.constant 1 : i32
    %0 = arith.minsi %arg0, %c1_i32 : i32
    %c0_i32 = arith.constant 0 : i32
    %c0_i32_0 = arith.constant 0 : i32
    %c0_i32_1 = arith.constant 0 : i32
    return %0, %c0_i32, %c0_i32_0 : i32, i32, i32
  }
  func.func @transform_13(%arg0: i32) -> (i32, i32, i32) {
    %c1_i32 = arith.constant 1 : i32
    %0 = arith.minsi %arg0, %c1_i32 : i32
    %c0_i32 = arith.constant 0 : i32
    %c0_i32_0 = arith.constant 0 : i32
    %c0_i32_1 = arith.constant 0 : i32
    return %0, %c0_i32, %c0_i32_0 : i32, i32, i32
  }
  func.func @transform_14(%arg0: i32) -> (i32, i32, i32) {
    %c1_i32 = arith.constant 1 : i32
    %0 = arith.minsi %arg0, %c1_i32 : i32
    %c0_i32 = arith.constant 0 : i32
    %c0_i32_0 = arith.constant 0 : i32
    %c0_i32_1 = arith.constant 0 : i32
    return %0, %c0_i32, %c0_i32_0 : i32, i32, i32
  }
  func.func @transform_15(%arg0: i32) -> (i32, i32, i32, i32) {
    %c1_i32 = arith.constant 1 : i32
    %0 = arith.subi %arg0, %c1_i32 : i32
    %c0_i32 = arith.constant 0 : i32
    %1 = arith.maxsi %0, %c0_i32 : i32
    %c0_i32_0 = arith.constant 0 : i32
    %c0_i32_1 = arith.constant 0 : i32
    %c0_i32_2 = arith.constant 0 : i32
    %c0_i32_3 = arith.constant 0 : i32
    return %1, %c0_i32_0, %c0_i32_1, %c0_i32_2 : i32, i32, i32, i32
  }
  func.func @transform_16(%arg0: i32) -> (i32, i32, i32, i32) {
    %c1_i32 = arith.constant 1 : i32
    %0 = arith.subi %arg0, %c1_i32 : i32
    %c0_i32 = arith.constant 0 : i32
    %1 = arith.maxsi %0, %c0_i32 : i32
    %c0_i32_0 = arith.constant 0 : i32
    %c0_i32_1 = arith.constant 0 : i32
    %c0_i32_2 = arith.constant 0 : i32
    %c0_i32_3 = arith.constant 0 : i32
    return %1, %c0_i32_0, %c0_i32_1, %c0_i32_2 : i32, i32, i32, i32
  }
  func.func @transform_17(%arg0: i32) -> (i32, i32, i32, i32) {
    %c1_i32 = arith.constant 1 : i32
    %0 = arith.subi %arg0, %c1_i32 : i32
    %c0_i32 = arith.constant 0 : i32
    %1 = arith.maxsi %0, %c0_i32 : i32
    %c0_i32_0 = arith.constant 0 : i32
    %c0_i32_1 = arith.constant 0 : i32
    %c0_i32_2 = arith.constant 0 : i32
    %c0_i32_3 = arith.constant 0 : i32
    return %1, %c0_i32_0, %c0_i32_1, %c0_i32_2 : i32, i32, i32, i32
  }
  func.func @transform_18(%arg0: i32) -> (i32, i32, i32, i32) {
    %c1_i32 = arith.constant 1 : i32
    %0 = arith.subi %arg0, %c1_i32 : i32
    %c0_i32 = arith.constant 0 : i32
    %1 = arith.maxsi %0, %c0_i32 : i32
    %c0_i32_0 = arith.constant 0 : i32
    %c0_i32_1 = arith.constant 0 : i32
    %c0_i32_2 = arith.constant 0 : i32
    %c0_i32_3 = arith.constant 0 : i32
    return %1, %c0_i32_0, %c0_i32_1, %c0_i32_2 : i32, i32, i32, i32
  }
  func.func @transform_19(%arg0: i32) -> (i32, i32, i32) {
    %c1_i32 = arith.constant 1 : i32
    %0 = arith.subi %arg0, %c1_i32 : i32
    %c0_i32 = arith.constant 0 : i32
    %1 = arith.maxsi %0, %c0_i32 : i32
    %c0_i32_0 = arith.constant 0 : i32
    %c0_i32_1 = arith.constant 0 : i32
    %c0_i32_2 = arith.constant 0 : i32
    return %1, %c0_i32_0, %c0_i32_1 : i32, i32, i32
  }
  func.func @transform_20(%arg0: i32) -> (i32, i32, i32) {
    %c1_i32 = arith.constant 1 : i32
    %0 = arith.subi %arg0, %c1_i32 : i32
    %c0_i32 = arith.constant 0 : i32
    %1 = arith.maxsi %0, %c0_i32 : i32
    %c0_i32_0 = arith.constant 0 : i32
    %c0_i32_1 = arith.constant 0 : i32
    %c0_i32_2 = arith.constant 0 : i32
    return %1, %c0_i32_0, %c0_i32_1 : i32, i32, i32
  }
  func.func @transform_21(%arg0: i32) -> (i32, i32, i32) {
    %c1_i32 = arith.constant 1 : i32
    %0 = arith.subi %arg0, %c1_i32 : i32
    %c0_i32 = arith.constant 0 : i32
    %1 = arith.maxsi %0, %c0_i32 : i32
    %c0_i32_0 = arith.constant 0 : i32
    %c0_i32_1 = arith.constant 0 : i32
    %c0_i32_2 = arith.constant 0 : i32
    return %1, %c0_i32_0, %c0_i32_1 : i32, i32, i32
  }
  func.func @transform_22(%arg0: i32) -> (i32, i32, i32) {
    %c1_i32 = arith.constant 1 : i32
    %0 = arith.subi %arg0, %c1_i32 : i32
    %c0_i32 = arith.constant 0 : i32
    %1 = arith.maxsi %0, %c0_i32 : i32
    %c0_i32_0 = arith.constant 0 : i32
    %c0_i32_1 = arith.constant 0 : i32
    %c0_i32_2 = arith.constant 0 : i32
    return %1, %c0_i32_0, %c0_i32_1 : i32, i32, i32
  }
  func.func @transform_23(%arg0: i32) -> (i32, i32, i32) {
    %c1_i32 = arith.constant 1 : i32
    %0 = arith.subi %arg0, %c1_i32 : i32
    %c0_i32 = arith.constant 0 : i32
    %1 = arith.maxsi %0, %c0_i32 : i32
    %c0_i32_0 = arith.constant 0 : i32
    %c0_i32_1 = arith.constant 0 : i32
    %c0_i32_2 = arith.constant 0 : i32
    return %1, %c0_i32_0, %c0_i32_1 : i32, i32, i32
  }
  func.func @transform_24(%arg0: i32) -> (i32, i32, i32) {
    %c1_i32 = arith.constant 1 : i32
    %0 = arith.subi %arg0, %c1_i32 : i32
    %c0_i32 = arith.constant 0 : i32
    %1 = arith.maxsi %0, %c0_i32 : i32
    %c0_i32_0 = arith.constant 0 : i32
    %c0_i32_1 = arith.constant 0 : i32
    %c0_i32_2 = arith.constant 0 : i32
    return %1, %c0_i32_0, %c0_i32_1 : i32, i32, i32
  }
  func.func @transform_25(%arg0: i32) -> (i32, i32, i32) {
    %c1_i32 = arith.constant 1 : i32
    %0 = arith.subi %arg0, %c1_i32 : i32
    %c0_i32 = arith.constant 0 : i32
    %1 = arith.maxsi %0, %c0_i32 : i32
    %c0_i32_0 = arith.constant 0 : i32
    %c0_i32_1 = arith.constant 0 : i32
    %c0_i32_2 = arith.constant 0 : i32
    return %1, %c0_i32_0, %c0_i32_1 : i32, i32, i32
  }
  func.func @transform_26(%arg0: i32) -> (i32, i32, i32) {
    %c1_i32 = arith.constant 1 : i32
    %0 = arith.subi %arg0, %c1_i32 : i32
    %c0_i32 = arith.constant 0 : i32
    %1 = arith.maxsi %0, %c0_i32 : i32
    %c0_i32_0 = arith.constant 0 : i32
    %c0_i32_1 = arith.constant 0 : i32
    %c0_i32_2 = arith.constant 0 : i32
    return %1, %c0_i32_0, %c0_i32_1 : i32, i32, i32
  }
  func.func @transform_27(%arg0: i32) -> (i32, i32) {
    %c0_i32 = arith.constant 0 : i32
    %c0_i32_0 = arith.constant 0 : i32
    %c0_i32_1 = arith.constant 0 : i32
    return %c0_i32, %c0_i32_0 : i32, i32
  }
}

</mosaic_0001>

<llo_original>
// kernel: _encoder_forward_impl.1
$region0: #{_encoder_forward_impl.1}
  #allocation0 [shape = 'u32[]', space=smem, size = 0x4, offset = 0x4, fixed_abs, tag = 'smem constant byte address 0x4 - core index']
  #allocation1 [shape = 'u32[144,128]{1,0:T(1,128)}', space=vmem, size = 0x12000, scoped, tag = 'internal scratch']
  #allocation2 [shape = 'f32[16,64]{1,0:T(8,128)}', space=vmem, size = 0x2000, scoped, tag = 'scratch operand']
  #allocation3 [shape = 'f32[16,64]{1,0:T(8,128)}', space=vmem, size = 0x2000, scoped, tag = 'scratch operand']
  #allocation4 [shape = 'f32[16,64]{1,0:T(8,128)}', space=vmem, size = 0x2000, scoped, tag = 'scratch operand']
  #allocation5 [shape = 'f32[16,16]{1,0:T(8,128)}', space=vmem, size = 0x2000, scoped, tag = 'scratch operand']
  #allocation6 [shape = 'f32[16,16]{1,0:T(8,128)}', space=vmem, size = 0x2000, scoped, tag = 'scratch operand']
  %s0 = inlined_call_operand.vmem [shape: f32[16,64], index: 0, kind: input, shape index: {}]
  %s1 = inlined_call_operand.vmem [shape: f32[16,64], index: 1, kind: input, shape index: {}]
  %s2 = inlined_call_operand.vmem [shape: f32[16,64], index: 2, kind: input, shape index: {}]
  %s3 = inlined_call_operand.vmem [shape: bf16[4,6,64,16], index: 3, kind: input, shape index: {}]
  %s4 = inlined_call_operand.vmem [shape: bf16[4,2,16,64], index: 4, kind: input, shape index: {}]
  %s5 = inlined_call_operand.vmem [shape: f32[4,1,64], index: 5, kind: input, shape index: {}]
  %s6 = inlined_call_operand.vmem [shape: f32[4,1,64], index: 6, kind: input, shape index: {}]
  %s7 = inlined_call_operand.vmem [shape: bf16[4,64,128], index: 7, kind: input, shape index: {}]
  %s8 = inlined_call_operand.vmem [shape: f32[4,1,128], index: 8, kind: input, shape index: {}]
  %s9 = inlined_call_operand.vmem [shape: bf16[4,128,64], index: 9, kind: input, shape index: {}]
  %s10 = inlined_call_operand.vmem [shape: f32[4,1,64], index: 10, kind: input, shape index: {}]
  %s11 = inlined_call_operand.vmem [shape: f32[4,1,64], index: 11, kind: input, shape index: {}]
  %s12 = inlined_call_operand.vmem [shape: f32[4,1,64], index: 12, kind: input, shape index: {}]
  %s13 = inlined_call_operand.vmem [shape: bf16[4,64,16], index: 13, kind: input, shape index: {}]
  %s14 = inlined_call_operand.vmem [shape: f32[4,1,16], index: 14, kind: input, shape index: {}]
  %s15 = inlined_call_operand.vmem [shape: bf16[2,6,16,16], index: 15, kind: input, shape index: {}]
  %s16 = inlined_call_operand.vmem [shape: bf16[2,6,64,16], index: 16, kind: input, shape index: {}]
  %s17 = inlined_call_operand.vmem [shape: bf16[2,6,16,16], index: 17, kind: input, shape index: {}]
  %s18 = inlined_call_operand.vmem [shape: bf16[2,2,16,96], index: 18, kind: input, shape index: {}]
  %s19 = inlined_call_operand.vmem [shape: f32[2,1,96], index: 19, kind: input, shape index: {}]
  %s20 = inlined_call_operand.vmem [shape: f32[2,1,96], index: 20, kind: input, shape index: {}]
  %s21 = inlined_call_operand.vmem [shape: bf16[2,96,128], index: 21, kind: input, shape index: {}]
  %s22 = inlined_call_operand.vmem [shape: f32[2,1,128], index: 22, kind: input, shape index: {}]
  %s23 = inlined_call_operand.vmem [shape: bf16[2,128,64], index: 23, kind: input, shape index: {}]
  %s24 = inlined_call_operand.vmem [shape: f32[2,1,64], index: 24, kind: input, shape index: {}]
  %s25 = inlined_call_operand.vmem [shape: f32[2,1,64], index: 25, kind: input, shape index: {}]
  %s26 = inlined_call_operand.vmem [shape: f32[2,1,64], index: 26, kind: input, shape index: {}]
  %s27 = inlined_call_operand.hbm [shape: f32[16,64], index: 27, kind: output, shape index: {}]
  %s28 = sld [smem:[#allocation0]]
  $region157: #{_encoder_forward_impl.1} parent=0
    _
  %s30 = ssub.s32 1, %s28
  %s31 = scalar_select 0, %s30, %s28
  $region1: #{_encoder_forward_impl.1} parent=0
    #allocation7 [shape = 'u8[8192]{0}', space=vmem, size = 0x2000, scoped, tag = 'output window, operand 0, single buffered']
    #allocation8 [shape = 's32[2]{0}', space=sflag, size = 0x8, scoped, tag = 'scoped memory for _encoder_forward_impl.1']
    %32 = vsyncpa [#allocation8], 0
    loop: start=0, step=1, limit=5
    $region2: #{_encoder_forward_impl.1} parent=1 // loop_pre_header
      _
    $region3: #{_encoder_forward_impl.1} parent=1 // loop_header
      %s34 = sphi 0, %s38
      %p35 = scmp.ge.s32.totalorder %s34, 5
      %s42 = sphi 0, %s42
      %s44 = sphi 0, %s42
      %s45 = sphi 0, %s44
      %s59 = sphi 0, %s45
      %s63 = sphi 0, %s63
      %s65 = sphi 0, %s63
      %s66 = sphi 0, %s65
      %s80 = sphi 0, %s66
      %s84 = sphi 0, %s84
      %s86 = sphi 0, %s84
      %s87 = sphi 0, %s86
      %s101 = sphi 0, %s87
      %s111 = sphi 0, %s113
      %s114 = sphi 0, %s111
      %s115 = sphi 0, %s114
      %s131 = sphi 0, %s115
      %s141 = sphi 0, %s143
      %s144 = sphi 0, %s141
      %s145 = sphi 0, %s144
      %s161 = sphi 0, %s145
      %s171 = sphi 0, %s173
      %s174 = sphi 0, %s171
      %s175 = sphi 0, %s174
      %s191 = sphi 0, %s175
      %s201 = sphi 0, %s203
      %s204 = sphi 0, %s201
      %s205 = sphi 0, %s204
      %s221 = sphi 0, %s205
      %s231 = sphi 0, %s233
      %s234 = sphi 0, %s231
      %s235 = sphi 0, %s234
      %s251 = sphi 0, %s235
      %s261 = sphi 0, %s263
      %s264 = sphi 0, %s261
      %s265 = sphi 0, %s264
      %s281 = sphi 0, %s265
      %s291 = sphi 0, %s293
      %s294 = sphi 0, %s291
      %s295 = sphi 0, %s294
      %s311 = sphi 0, %s295
      %s321 = sphi 0, %s323
      %s324 = sphi 0, %s321
      %s325 = sphi 0, %s324
      %s341 = sphi 0, %s325
      %s351 = sphi 0, %s353
      %s354 = sphi 0, %s351
      %s355 = sphi 0, %s354
      %s371 = sphi 0, %s355
      %s381 = sphi 0, %s383
      %s384 = sphi 0, %s381
      %s385 = sphi 0, %s384
      %s401 = sphi 0, %s385
      %s411 = sphi 0, %s413
      %s414 = sphi 0, %s411
      %s415 = sphi 0, %s414
      %s431 = sphi 0, %s415
      %s441 = sphi 0, %s443
      %s444 = sphi 0, %s441
      %s445 = sphi 0, %s444
      %s461 = sphi 0, %s445
      %s473 = sphi 0, %s475
      %s476 = sphi 0, %s473
      %s477 = sphi 0, %s476
      %s493 = sphi 0, %s477
      %s505 = sphi 0, %s507
      %s508 = sphi 0, %s505
      %s509 = sphi 0, %s508
      %s525 = sphi 0, %s509
      %s537 = sphi 0, %s539
      %s540 = sphi 0, %s537
      %s541 = sphi 0, %s540
      %s557 = sphi 0, %s541
      %s569 = sphi 0, %s571
      %s572 = sphi 0, %s569
      %s573 = sphi 0, %s572
      %s589 = sphi 0, %s573
      %s601 = sphi 0, %s603
      %s604 = sphi 0, %s601
      %s605 = sphi 0, %s604
      %s621 = sphi 0, %s605
      %s633 = sphi 0, %s635
      %s636 = sphi 0, %s633
      %s637 = sphi 0, %s636
      %s653 = sphi 0, %s637
      %s665 = sphi 0, %s667
      %s668 = sphi 0, %s665
      %s669 = sphi 0, %s668
      %s685 = sphi 0, %s669
      %s697 = sphi 0, %s699
      %s700 = sphi 0, %s697
      %s701 = sphi 0, %s700
      %s717 = sphi 0, %s701
      %s729 = sphi 0, %s731
      %s732 = sphi 0, %s729
      %s733 = sphi 0, %s732
      %s749 = sphi 0, %s733
      %s761 = sphi 0, %s763
      %s764 = sphi 0, %s761
      %s765 = sphi 0, %s764
      %s781 = sphi 0, %s765
      %s793 = sphi 0, %s795
      %s796 = sphi 0, %s793
      %s797 = sphi 0, %s796
      %s813 = sphi 0, %s797
      %s825 = sphi 0, %s827
      %s828 = sphi 0, %s825
      %s829 = sphi 0, %s828
      %s845 = sphi 0, %s829
      %s849 = sphi 0, %s849
      %s851 = sphi 0, %s849
      %s852 = sphi 0, %s851
      %s866 = sphi 0, %s852
    $region4: #{_encoder_forward_impl.1} parent=1 // loop_header_branch
      %37 = sbr.rel (%p35) target = $region8
    $region5: #{_encoder_forward_impl.1} parent=1 // loop_body
      %s39 = ssub.s32 %s34, 1
      %s40 = ssub.s32 %s34, 2
      %s41 = sadd.s32 %s34, 1
      %s43 = sadd.s32 %s42, 1
      %p46 = scmp.eq.s32.totalorder %s34, 2
      %p47 = scmp.ne.s32.totalorder %s42, %s44
      %p48 = scmp.eq.s32.totalorder %s34, 0
      %p49 = por %p47, %p48
      %p50 = scmp.ne.s32.totalorder %s42, %s44
      %p51 = scmp.eq.s32.totalorder %s39, 2
      %p52 = por %p50, %p51
      %p53 = scmp.ne.s32.totalorder %s44, %s45
      %p54 = scmp.eq.s32.totalorder %s39, 0
      %p55 = por %p53, %p54
      %p56 = scmp.ne.s32.totalorder %s44, %s45
      %p57 = scmp.eq.s32.totalorder %s40, 2
      %p58 = por %p56, %p57
      %p60 = scmp.ne.s32.totalorder %s45, %s59
      %p61 = scmp.eq.s32.totalorder %s40, 0
      %p62 = por %p60, %p61
      %s64 = sadd.s32 %s63, 1
      %p67 = scmp.eq.s32.totalorder %s34, 2
      %p68 = scmp.ne.s32.totalorder %s63, %s65
      %p69 = scmp.eq.s32.totalorder %s34, 0
      %p70 = por %p68, %p69
      %p71 = scmp.ne.s32.totalorder %s63, %s65
      %p72 = scmp.eq.s32.totalorder %s39, 2
      %p73 = por %p71, %p72
      %p74 = scmp.ne.s32.totalorder %s65, %s66
      %p75 = scmp.eq.s32.totalorder %s39, 0
      %p76 = por %p74, %p75
      %p77 = scmp.ne.s32.totalorder %s65, %s66
      %p78 = scmp.eq.s32.totalorder %s40, 2
      %p79 = por %p77, %p78
      %p81 = scmp.ne.s32.totalorder %s66, %s80
      %p82 = scmp.eq.s32.totalorder %s40, 0
      %p83 = por %p81, %p82
      %s85 = sadd.s32 %s84, 1
      %p88 = scmp.eq.s32.totalorder %s34, 2
      %p89 = scmp.ne.s32.totalorder %s84, %s86
      %p90 = scmp.eq.s32.totalorder %s34, 0
      %p91 = por %p89, %p90
      %p92 = scmp.ne.s32.totalorder %s84, %s86
      %p93 = scmp.eq.s32.totalorder %s39, 2
      %p94 = por %p92, %p93
      %p95 = scmp.ne.s32.totalorder %s86, %s87
      %p96 = scmp.eq.s32.totalorder %s39, 0
      %p97 = por %p95, %p96
      %p98 = scmp.ne.s32.totalorder %s86, %s87
      %p99 = scmp.eq.s32.totalorder %s40, 2
      %p100 = por %p98, %p99
      %p102 = scmp.ne.s32.totalorder %s87, %s101
      %p103 = scmp.eq.s32.totalorder %s40, 0
      %p104 = por %p102, %p103
      %p105 = scmp.lt.s32.totalorder %s34, 1
      %s106 = scalar_select %p105, %s34, 1
      %p107 = scmp.lt.s32.totalorder %s41, 1
      %s108 = scalar_select %p107, %s41, 1
      %s109 = ssub.s32 %s106, %s108
      %p110 = scmp.eq.s32.totalorder %s109, 0
      %s112 = sadd.s32 %s111, 1
      %s113 = scalar_select %p110, %s111, %s112
      %p116 = pneg %p110
      %p117 = scmp.eq.s32.totalorder %s34, 2
      %p118 = por %p116, %p117
      %p119 = scmp.ne.s32.totalorder %s111, %s114
      %p120 = scmp.eq.s32.totalorder %s34, 0
      %p121 = por %p119, %p120
      %p122 = scmp.ne.s32.totalorder %s111, %s114
      %p123 = scmp.eq.s32.totalorder %s39, 2
      %p124 = por %p122, %p123
      %p125 = scmp.ne.s32.totalorder %s114, %s115
      %p126 = scmp.eq.s32.totalorder %s39, 0
      %p127 = por %p125, %p126
      %p128 = scmp.ne.s32.totalorder %s114, %s115
      %p129 = scmp.eq.s32.totalorder %s40, 2
      %p130 = por %p128, %p129
      %p132 = scmp.ne.s32.totalorder %s115, %s131
      %p133 = scmp.eq.s32.totalorder %s40, 0
      %p134 = por %p132, %p133
      %p135 = scmp.lt.s32.totalorder %s34, 1
      %s136 = scalar_select %p135, %s34, 1
      %p137 = scmp.lt.s32.totalorder %s41, 1
      %s138 = scalar_select %p137, %s41, 1
      %s139 = ssub.s32 %s136, %s138
      %p140 = scmp.eq.s32.totalorder %s139, 0
      %s142 = sadd.s32 %s141, 1
      %s143 = scalar_select %p140, %s141, %s142
      %p146 = pneg %p140
      %p147 = scmp.eq.s32.totalorder %s34, 2
      %p148 = por %p146, %p147
      %p149 = scmp.ne.s32.totalorder %s141, %s144
      %p150 = scmp.eq.s32.totalorder %s34, 0
      %p151 = por %p149, %p150
      %p152 = scmp.ne.s32.totalorder %s141, %s144
      %p153 = scmp.eq.s32.totalorder %s39, 2
      %p154 = por %p152, %p153
      %p155 = scmp.ne.s32.totalorder %s144, %s145
      %p156 = scmp.eq.s32.totalorder %s39, 0
      %p157 = por %p155, %p156
      %p158 = scmp.ne.s32.totalorder %s144, %s145
      %p159 = scmp.eq.s32.totalorder %s40, 2
      %p160 = por %p158, %p159
      %p162 = scmp.ne.s32.totalorder %s145, %s161
      %p163 = scmp.eq.s32.totalorder %s40, 0
      %p164 = por %p162, %p163
      %p165 = scmp.lt.s32.totalorder %s34, 1
      %s166 = scalar_select %p165, %s34, 1
      %p167 = scmp.lt.s32.totalorder %s41, 1
      %s168 = scalar_select %p167, %s41, 1
      %s169 = ssub.s32 %s166, %s168
      %p170 = scmp.eq.s32.totalorder %s169, 0
      %s172 = sadd.s32 %s171, 1
      %s173 = scalar_select %p170, %s171, %s172
      %p176 = pneg %p170
      %p177 = scmp.eq.s32.totalorder %s34, 2
      %p178 = por %p176, %p177
      %p179 = scmp.ne.s32.totalorder %s171, %s174
      %p180 = scmp.eq.s32.totalorder %s34, 0
      %p181 = por %p179, %p180
      %p182 = scmp.ne.s32.totalorder %s171, %s174
      %p183 = scmp.eq.s32.totalorder %s39, 2
      %p184 = por %p182, %p183
      %p185 = scmp.ne.s32.totalorder %s174, %s175
      %p186 = scmp.eq.s32.totalorder %s39, 0
      %p187 = por %p185, %p186
      %p188 = scmp.ne.s32.totalorder %s174, %s175
      %p189 = scmp.eq.s32.totalorder %s40, 2
      %p190 = por %p188, %p189
      %p192 = scmp.ne.s32.totalorder %s175, %s191
      %p193 = scmp.eq.s32.totalorder %s40, 0
      %p194 = por %p192, %p193
      %p195 = scmp.lt.s32.totalorder %s34, 1
      %s196 = scalar_select %p195, %s34, 1
      %p197 = scmp.lt.s32.totalorder %s41, 1
      %s198 = scalar_select %p197, %s41, 1
      %s199 = ssub.s32 %s196, %s198
      %p200 = scmp.eq.s32.totalorder %s199, 0
      %s202 = sadd.s32 %s201, 1
      %s203 = scalar_select %p200, %s201, %s202
      %p206 = pneg %p200
      %p207 = scmp.eq.s32.totalorder %s34, 2
      %p208 = por %p206, %p207
      %p209 = scmp.ne.s32.totalorder %s201, %s204
      %p210 = scmp.eq.s32.totalorder %s34, 0
      %p211 = por %p209, %p210
      %p212 = scmp.ne.s32.totalorder %s201, %s204
      %p213 = scmp.eq.s32.totalorder %s39, 2
      %p214 = por %p212, %p213
      %p215 = scmp.ne.s32.totalorder %s204, %s205
      %p216 = scmp.eq.s32.totalorder %s39, 0
      %p217 = por %p215, %p216
      %p218 = scmp.ne.s32.totalorder %s204, %s205
      %p219 = scmp.eq.s32.totalorder %s40, 2
      %p220 = por %p218, %p219
      %p222 = scmp.ne.s32.totalorder %s205, %s221
      %p223 = scmp.eq.s32.totalorder %s40, 0
      %p224 = por %p222, %p223
      %p225 = scmp.lt.s32.totalorder %s34, 1
      %s226 = scalar_select %p225, %s34, 1
      %p227 = scmp.lt.s32.totalorder %s41, 1
      %s228 = scalar_select %p227, %s41, 1
      %s229 = ssub.s32 %s226, %s228
      %p230 = scmp.eq.s32.totalorder %s229, 0
      %s232 = sadd.s32 %s231, 1
      %s233 = scalar_select %p230, %s231, %s232
      %p236 = pneg %p230
      %p237 = scmp.eq.s32.totalorder %s34, 2
      %p238 = por %p236, %p237
      %p239 = scmp.ne.s32.totalorder %s231, %s234
      %p240 = scmp.eq.s32.totalorder %s34, 0
      %p241 = por %p239, %p240
      %p242 = scmp.ne.s32.totalorder %s231, %s234
      %p243 = scmp.eq.s32.totalorder %s39, 2
      %p244 = por %p242, %p243
      %p245 = scmp.ne.s32.totalorder %s234, %s235
      %p246 = scmp.eq.s32.totalorder %s39, 0
      %p247 = por %p245, %p246
      %p248 = scmp.ne.s32.totalorder %s234, %s235
      %p249 = scmp.eq.s32.totalorder %s40, 2
      %p250 = por %p248, %p249
      %p252 = scmp.ne.s32.totalorder %s235, %s251
      %p253 = scmp.eq.s32.totalorder %s40, 0
      %p254 = por %p252, %p253
      %p255 = scmp.lt.s32.totalorder %s34, 1
      %s256 = scalar_select %p255, %s34, 1
      %p257 = scmp.lt.s32.totalorder %s41, 1
      %s258 = scalar_select %p257, %s41, 1
      %s259 = ssub.s32 %s256, %s258
      %p260 = scmp.eq.s32.totalorder %s259, 0
      %s262 = sadd.s32 %s261, 1
      %s263 = scalar_select %p260, %s261, %s262
      %p266 = pneg %p260
      %p267 = scmp.eq.s32.totalorder %s34, 2
      %p268 = por %p266, %p267
      %p269 = scmp.ne.s32.totalorder %s261, %s264
      %p270 = scmp.eq.s32.totalorder %s34, 0
      %p271 = por %p269, %p270
      %p272 = scmp.ne.s32.totalorder %s261, %s264
      %p273 = scmp.eq.s32.totalorder %s39, 2
      %p274 = por %p272, %p273
      %p275 = scmp.ne.s32.totalorder %s264, %s265
      %p276 = scmp.eq.s32.totalorder %s39, 0
      %p277 = por %p275, %p276
      %p278 = scmp.ne.s32.totalorder %s264, %s265
      %p279 = scmp.eq.s32.totalorder %s40, 2
      %p280 = por %p278, %p279
      %p282 = scmp.ne.s32.totalorder %s265, %s281
      %p283 = scmp.eq.s32.totalorder %s40, 0
      %p284 = por %p282, %p283
      %p285 = scmp.lt.s32.totalorder %s34, 1
      %s286 = scalar_select %p285, %s34, 1
      %p287 = scmp.lt.s32.totalorder %s41, 1
      %s288 = scalar_select %p287, %s41, 1
      %s289 = ssub.s32 %s286, %s288
      %p290 = scmp.eq.s32.totalorder %s289, 0
      %s292 = sadd.s32 %s291, 1
      %s293 = scalar_select %p290, %s291, %s292
      %p296 = pneg %p290
      %p297 = scmp.eq.s32.totalorder %s34, 2
      %p298 = por %p296, %p297
      %p299 = scmp.ne.s32.totalorder %s291, %s294
      %p300 = scmp.eq.s32.totalorder %s34, 0
      %p301 = por %p299, %p300
      %p302 = scmp.ne.s32.totalorder %s291, %s294
      %p303 = scmp.eq.s32.totalorder %s39, 2
      %p304 = por %p302, %p303
      %p305 = scmp.ne.s32.totalorder %s294, %s295
      %p306 = scmp.eq.s32.totalorder %s39, 0
      %p307 = por %p305, %p306
      %p308 = scmp.ne.s32.totalorder %s294, %s295
      %p309 = scmp.eq.s32.totalorder %s40, 2
      %p310 = por %p308, %p309
      %p312 = scmp.ne.s32.totalorder %s295, %s311
      %p313 = scmp.eq.s32.totalorder %s40, 0
      %p314 = por %p312, %p313
      %p315 = scmp.lt.s32.totalorder %s34, 1
      %s316 = scalar_select %p315, %s34, 1
      %p317 = scmp.lt.s32.totalorder %s41, 1
      %s318 = scalar_select %p317, %s41, 1
      %s319 = ssub.s32 %s316, %s318
      %p320 = scmp.eq.s32.totalorder %s319, 0
      %s322 = sadd.s32 %s321, 1
      %s323 = scalar_select %p320, %s321, %s322
      %p326 = pneg %p320
      %p327 = scmp.eq.s32.totalorder %s34, 2
      %p328 = por %p326, %p327
      %p329 = scmp.ne.s32.totalorder %s321, %s324
      %p330 = scmp.eq.s32.totalorder %s34, 0
      %p331 = por %p329, %p330
      %p332 = scmp.ne.s32.totalorder %s321, %s324
      %p333 = scmp.eq.s32.totalorder %s39, 2
      %p334 = por %p332, %p333
      %p335 = scmp.ne.s32.totalorder %s324, %s325
      %p336 = scmp.eq.s32.totalorder %s39, 0
      %p337 = por %p335, %p336
      %p338 = scmp.ne.s32.totalorder %s324, %s325
      %p339 = scmp.eq.s32.totalorder %s40, 2
      %p340 = por %p338, %p339
      %p342 = scmp.ne.s32.totalorder %s325, %s341
      %p343 = scmp.eq.s32.totalorder %s40, 0
      %p344 = por %p342, %p343
      %p345 = scmp.lt.s32.totalorder %s34, 1
      %s346 = scalar_select %p345, %s34, 1
      %p347 = scmp.lt.s32.totalorder %s41, 1
      %s348 = scalar_select %p347, %s41, 1
      %s349 = ssub.s32 %s346, %s348
      %p350 = scmp.eq.s32.totalorder %s349, 0
      %s352 = sadd.s32 %s351, 1
      %s353 = scalar_select %p350, %s351, %s352
      %p356 = pneg %p350
      %p357 = scmp.eq.s32.totalorder %s34, 2
      %p358 = por %p356, %p357
      %p359 = scmp.ne.s32.totalorder %s351, %s354
      %p360 = scmp.eq.s32.totalorder %s34, 0
      %p361 = por %p359, %p360
      %p362 = scmp.ne.s32.totalorder %s351, %s354
      %p363 = scmp.eq.s32.totalorder %s39, 2
      %p364 = por %p362, %p363
      %p365 = scmp.ne.s32.totalorder %s354, %s355
      %p366 = scmp.eq.s32.totalorder %s39, 0
      %p367 = por %p365, %p366
      %p368 = scmp.ne.s32.totalorder %s354, %s355
      %p369 = scmp.eq.s32.totalorder %s40, 2
      %p370 = por %p368, %p369
      %p372 = scmp.ne.s32.totalorder %s355, %s371
      %p373 = scmp.eq.s32.totalorder %s40, 0
      %p374 = por %p372, %p373
      %p375 = scmp.lt.s32.totalorder %s34, 1
      %s376 = scalar_select %p375, %s34, 1
      %p377 = scmp.lt.s32.totalorder %s41, 1
      %s378 = scalar_select %p377, %s41, 1
      %s379 = ssub.s32 %s376, %s378
      %p380 = scmp.eq.s32.totalorder %s379, 0
      %s382 = sadd.s32 %s381, 1
      %s383 = scalar_select %p380, %s381, %s382
      %p386 = pneg %p380
      %p387 = scmp.eq.s32.totalorder %s34, 2
      %p388 = por %p386, %p387
      %p389 = scmp.ne.s32.totalorder %s381, %s384
      %p390 = scmp.eq.s32.totalorder %s34, 0
      %p391 = por %p389, %p390
      %p392 = scmp.ne.s32.totalorder %s381, %s384
      %p393 = scmp.eq.s32.totalorder %s39, 2
      %p394 = por %p392, %p393
      %p395 = scmp.ne.s32.totalorder %s384, %s385
      %p396 = scmp.eq.s32.totalorder %s39, 0
      %p397 = por %p395, %p396
      %p398 = scmp.ne.s32.totalorder %s384, %s385
      %p399 = scmp.eq.s32.totalorder %s40, 2
      %p400 = por %p398, %p399
      %p402 = scmp.ne.s32.totalorder %s385, %s401
      %p403 = scmp.eq.s32.totalorder %s40, 0
      %p404 = por %p402, %p403
      %p405 = scmp.lt.s32.totalorder %s34, 1
      %s406 = scalar_select %p405, %s34, 1
      %p407 = scmp.lt.s32.totalorder %s41, 1
      %s408 = scalar_select %p407, %s41, 1
      %s409 = ssub.s32 %s406, %s408
      %p410 = scmp.eq.s32.totalorder %s409, 0
      %s412 = sadd.s32 %s411, 1
      %s413 = scalar_select %p410, %s411, %s412
      %p416 = pneg %p410
      %p417 = scmp.eq.s32.totalorder %s34, 2
      %p418 = por %p416, %p417
      %p419 = scmp.ne.s32.totalorder %s411, %s414
      %p420 = scmp.eq.s32.totalorder %s34, 0
      %p421 = por %p419, %p420
      %p422 = scmp.ne.s32.totalorder %s411, %s414
      %p423 = scmp.eq.s32.totalorder %s39, 2
      %p424 = por %p422, %p423
      %p425 = scmp.ne.s32.totalorder %s414, %s415
      %p426 = scmp.eq.s32.totalorder %s39, 0
      %p427 = por %p425, %p426
      %p428 = scmp.ne.s32.totalorder %s414, %s415
      %p429 = scmp.eq.s32.totalorder %s40, 2
      %p430 = por %p428, %p429
      %p432 = scmp.ne.s32.totalorder %s415, %s431
      %p433 = scmp.eq.s32.totalorder %s40, 0
      %p434 = por %p432, %p433
      %p435 = scmp.lt.s32.totalorder %s34, 1
      %s436 = scalar_select %p435, %s34, 1
      %p437 = scmp.lt.s32.totalorder %s41, 1
      %s438 = scalar_select %p437, %s41, 1
      %s439 = ssub.s32 %s436, %s438
      %p440 = scmp.eq.s32.totalorder %s439, 0
      %s442 = sadd.s32 %s441, 1
      %s443 = scalar_select %p440, %s441, %s442
      %p446 = pneg %p440
      %p447 = scmp.eq.s32.totalorder %s34, 2
      %p448 = por %p446, %p447
      %p449 = scmp.ne.s32.totalorder %s441, %s444
      %p450 = scmp.eq.s32.totalorder %s34, 0
      %p451 = por %p449, %p450
      %p452 = scmp.ne.s32.totalorder %s441, %s444
      %p453 = scmp.eq.s32.totalorder %s39, 2
      %p454 = por %p452, %p453
      %p455 = scmp.ne.s32.totalorder %s444, %s445
      %p456 = scmp.eq.s32.totalorder %s39, 0
      %p457 = por %p455, %p456
      %p458 = scmp.ne.s32.totalorder %s444, %s445
      %p459 = scmp.eq.s32.totalorder %s40, 2
      %p460 = por %p458, %p459
      %p462 = scmp.ne.s32.totalorder %s445, %s461
      %p463 = scmp.eq.s32.totalorder %s40, 0
      %p464 = por %p462, %p463
      %s465 = ssub.s32 %s34, 1
      %p466 = scmp.gt.s32.totalorder %s465, 0
      %s467 = scalar_select %p466, %s465, 0
      %s468 = ssub.s32 %s41, 1
      %p469 = scmp.gt.s32.totalorder %s468, 0
      %s470 = scalar_select %p469, %s468, 0
      %s471 = ssub.s32 %s467, %s470
      %p472 = scmp.eq.s32.totalorder %s471, 0
      %s474 = sadd.s32 %s473, 1
      %s475 = scalar_select %p472, %s473, %s474
      %p478 = pneg %p472
      %p479 = scmp.eq.s32.totalorder %s34, 2
      %p480 = por %p478, %p479
      %p481 = scmp.ne.s32.totalorder %s473, %s476
      %p482 = scmp.eq.s32.totalorder %s34, 0
      %p483 = por %p481, %p482
      %p484 = scmp.ne.s32.totalorder %s473, %s476
      %p485 = scmp.eq.s32.totalorder %s39, 2
      %p486 = por %p484, %p485
      %p487 = scmp.ne.s32.totalorder %s476, %s477
      %p488 = scmp.eq.s32.totalorder %s39, 0
      %p489 = por %p487, %p488
      %p490 = scmp.ne.s32.totalorder %s476, %s477
      %p491 = scmp.eq.s32.totalorder %s40, 2
      %p492 = por %p490, %p491
      %p494 = scmp.ne.s32.totalorder %s477, %s493
      %p495 = scmp.eq.s32.totalorder %s40, 0
      %p496 = por %p494, %p495
      %s497 = ssub.s32 %s34, 1
      %p498 = scmp.gt.s32.totalorder %s497, 0
      %s499 = scalar_select %p498, %s497, 0
      %s500 = ssub.s32 %s41, 1
      %p501 = scmp.gt.s32.totalorder %s500, 0
      %s502 = scalar_select %p501, %s500, 0
      %s503 = ssub.s32 %s499, %s502
      %p504 = scmp.eq.s32.totalorder %s503, 0
      %s506 = sadd.s32 %s505, 1
      %s507 = scalar_select %p504, %s505, %s506
      %p510 = pneg %p504
      %p511 = scmp.eq.s32.totalorder %s34, 2
      %p512 = por %p510, %p511
      %p513 = scmp.ne.s32.totalorder %s505, %s508
      %p514 = scmp.eq.s32.totalorder %s34, 0
      %p515 = por %p513, %p514
      %p516 = scmp.ne.s32.totalorder %s505, %s508
      %p517 = scmp.eq.s32.totalorder %s39, 2
      %p518 = por %p516, %p517
      %p519 = scmp.ne.s32.totalorder %s508, %s509
      %p520 = scmp.eq.s32.totalorder %s39, 0
      %p521 = por %p519, %p520
      %p522 = scmp.ne.s32.totalorder %s508, %s509
      %p523 = scmp.eq.s32.totalorder %s40, 2
      %p524 = por %p522, %p523
      %p526 = scmp.ne.s32.totalorder %s509, %s525
      %p527 = scmp.eq.s32.totalorder %s40, 0
      %p528 = por %p526, %p527
      %s529 = ssub.s32 %s34, 1
      %p530 = scmp.gt.s32.totalorder %s529, 0
      %s531 = scalar_select %p530, %s529, 0
      %s532 = ssub.s32 %s41, 1
      %p533 = scmp.gt.s32.totalorder %s532, 0
      %s534 = scalar_select %p533, %s532, 0
      %s535 = ssub.s32 %s531, %s534
      %p536 = scmp.eq.s32.totalorder %s535, 0
      %s538 = sadd.s32 %s537, 1
      %s539 = scalar_select %p536, %s537, %s538
      %p542 = pneg %p536
      %p543 = scmp.eq.s32.totalorder %s34, 2
      %p544 = por %p542, %p543
      %p545 = scmp.ne.s32.totalorder %s537, %s540
      %p546 = scmp.eq.s32.totalorder %s34, 0
      %p547 = por %p545, %p546
      %p548 = scmp.ne.s32.totalorder %s537, %s540
      %p549 = scmp.eq.s32.totalorder %s39, 2
      %p550 = por %p548, %p549
      %p551 = scmp.ne.s32.totalorder %s540, %s541
      %p552 = scmp.eq.s32.totalorder %s39, 0
      %p553 = por %p551, %p552
      %p554 = scmp.ne.s32.totalorder %s540, %s541
      %p555 = scmp.eq.s32.totalorder %s40, 2
      %p556 = por %p554, %p555
      %p558 = scmp.ne.s32.totalorder %s541, %s557
      %p559 = scmp.eq.s32.totalorder %s40, 0
      %p560 = por %p558, %p559
      %s561 = ssub.s32 %s34, 1
      %p562 = scmp.gt.s32.totalorder %s561, 0
      %s563 = scalar_select %p562, %s561, 0
      %s564 = ssub.s32 %s41, 1
      %p565 = scmp.gt.s32.totalorder %s564, 0
      %s566 = scalar_select %p565, %s564, 0
      %s567 = ssub.s32 %s563, %s566
      %p568 = scmp.eq.s32.totalorder %s567, 0
      %s570 = sadd.s32 %s569, 1
      %s571 = scalar_select %p568, %s569, %s570
      %p574 = pneg %p568
      %p575 = scmp.eq.s32.totalorder %s34, 2
      %p576 = por %p574, %p575
      %p577 = scmp.ne.s32.totalorder %s569, %s572
      %p578 = scmp.eq.s32.totalorder %s34, 0
      %p579 = por %p577, %p578
      %p580 = scmp.ne.s32.totalorder %s569, %s572
      %p581 = scmp.eq.s32.totalorder %s39, 2
      %p582 = por %p580, %p581
      %p583 = scmp.ne.s32.totalorder %s572, %s573
      %p584 = scmp.eq.s32.totalorder %s39, 0
      %p585 = por %p583, %p584
      %p586 = scmp.ne.s32.totalorder %s572, %s573
      %p587 = scmp.eq.s32.totalorder %s40, 2
      %p588 = por %p586, %p587
      %p590 = scmp.ne.s32.totalorder %s573, %s589
      %p591 = scmp.eq.s32.totalorder %s40, 0
      %p592 = por %p590, %p591
      %s593 = ssub.s32 %s34, 1
      %p594 = scmp.gt.s32.totalorder %s593, 0
      %s595 = scalar_select %p594, %s593, 0
      %s596 = ssub.s32 %s41, 1
      %p597 = scmp.gt.s32.totalorder %s596, 0
      %s598 = scalar_select %p597, %s596, 0
      %s599 = ssub.s32 %s595, %s598
      %p600 = scmp.eq.s32.totalorder %s599, 0
      %s602 = sadd.s32 %s601, 1
      %s603 = scalar_select %p600, %s601, %s602
      %p606 = pneg %p600
      %p607 = scmp.eq.s32.totalorder %s34, 2
      %p608 = por %p606, %p607
      %p609 = scmp.ne.s32.totalorder %s601, %s604
      %p610 = scmp.eq.s32.totalorder %s34, 0
      %p611 = por %p609, %p610
      %p612 = scmp.ne.s32.totalorder %s601, %s604
      %p613 = scmp.eq.s32.totalorder %s39, 2
      %p614 = por %p612, %p613
      %p615 = scmp.ne.s32.totalorder %s604, %s605
      %p616 = scmp.eq.s32.totalorder %s39, 0
      %p617 = por %p615, %p616
      %p618 = scmp.ne.s32.totalorder %s604, %s605
      %p619 = scmp.eq.s32.totalorder %s40, 2
      %p620 = por %p618, %p619
      %p622 = scmp.ne.s32.totalorder %s605, %s621
      %p623 = scmp.eq.s32.totalorder %s40, 0
      %p624 = por %p622, %p623
      %s625 = ssub.s32 %s34, 1
      %p626 = scmp.gt.s32.totalorder %s625, 0
      %s627 = scalar_select %p626, %s625, 0
      %s628 = ssub.s32 %s41, 1
      %p629 = scmp.gt.s32.totalorder %s628, 0
      %s630 = scalar_select %p629, %s628, 0
      %s631 = ssub.s32 %s627, %s630
      %p632 = scmp.eq.s32.totalorder %s631, 0
      %s634 = sadd.s32 %s633, 1
      %s635 = scalar_select %p632, %s633, %s634
      %p638 = pneg %p632
      %p639 = scmp.eq.s32.totalorder %s34, 2
      %p640 = por %p638, %p639
      %p641 = scmp.ne.s32.totalorder %s633, %s636
      %p642 = scmp.eq.s32.totalorder %s34, 0
      %p643 = por %p641, %p642
      %p644 = scmp.ne.s32.totalorder %s633, %s636
      %p645 = scmp.eq.s32.totalorder %s39, 2
      %p646 = por %p644, %p645
      %p647 = scmp.ne.s32.totalorder %s636, %s637
      %p648 = scmp.eq.s32.totalorder %s39, 0
      %p649 = por %p647, %p648
      %p650 = scmp.ne.s32.totalorder %s636, %s637
      %p651 = scmp.eq.s32.totalorder %s40, 2
      %p652 = por %p650, %p651
      %p654 = scmp.ne.s32.totalorder %s637, %s653
      %p655 = scmp.eq.s32.totalorder %s40, 0
      %p656 = por %p654, %p655
      %s657 = ssub.s32 %s34, 1
      %p658 = scmp.gt.s32.totalorder %s657, 0
      %s659 = scalar_select %p658, %s657, 0
      %s660 = ssub.s32 %s41, 1
      %p661 = scmp.gt.s32.totalorder %s660, 0
      %s662 = scalar_select %p661, %s660, 0
      %s663 = ssub.s32 %s659, %s662
      %p664 = scmp.eq.s32.totalorder %s663, 0
      %s666 = sadd.s32 %s665, 1
      %s667 = scalar_select %p664, %s665, %s666
      %p670 = pneg %p664
      %p671 = scmp.eq.s32.totalorder %s34, 2
      %p672 = por %p670, %p671
      %p673 = scmp.ne.s32.totalorder %s665, %s668
      %p674 = scmp.eq.s32.totalorder %s34, 0
      %p675 = por %p673, %p674
      %p676 = scmp.ne.s32.totalorder %s665, %s668
      %p677 = scmp.eq.s32.totalorder %s39, 2
      %p678 = por %p676, %p677
      %p679 = scmp.ne.s32.totalorder %s668, %s669
      %p680 = scmp.eq.s32.totalorder %s39, 0
      %p681 = por %p679, %p680
      %p682 = scmp.ne.s32.totalorder %s668, %s669
      %p683 = scmp.eq.s32.totalorder %s40, 2
      %p684 = por %p682, %p683
      %p686 = scmp.ne.s32.totalorder %s669, %s685
      %p687 = scmp.eq.s32.totalorder %s40, 0
      %p688 = por %p686, %p687
      %s689 = ssub.s32 %s34, 1
      %p690 = scmp.gt.s32.totalorder %s689, 0
      %s691 = scalar_select %p690, %s689, 0
      %s692 = ssub.s32 %s41, 1
      %p693 = scmp.gt.s32.totalorder %s692, 0
      %s694 = scalar_select %p693, %s692, 0
      %s695 = ssub.s32 %s691, %s694
      %p696 = scmp.eq.s32.totalorder %s695, 0
      %s698 = sadd.s32 %s697, 1
      %s699 = scalar_select %p696, %s697, %s698
      %p702 = pneg %p696
      %p703 = scmp.eq.s32.totalorder %s34, 2
      %p704 = por %p702, %p703
      %p705 = scmp.ne.s32.totalorder %s697, %s700
      %p706 = scmp.eq.s32.totalorder %s34, 0
      %p707 = por %p705, %p706
      %p708 = scmp.ne.s32.totalorder %s697, %s700
      %p709 = scmp.eq.s32.totalorder %s39, 2
      %p710 = por %p708, %p709
      %p711 = scmp.ne.s32.totalorder %s700, %s701
      %p712 = scmp.eq.s32.totalorder %s39, 0
      %p713 = por %p711, %p712
      %p714 = scmp.ne.s32.totalorder %s700, %s701
      %p715 = scmp.eq.s32.totalorder %s40, 2
      %p716 = por %p714, %p715
      %p718 = scmp.ne.s32.totalorder %s701, %s717
      %p719 = scmp.eq.s32.totalorder %s40, 0
      %p720 = por %p718, %p719
      %s721 = ssub.s32 %s34, 1
      %p722 = scmp.gt.s32.totalorder %s721, 0
      %s723 = scalar_select %p722, %s721, 0
      %s724 = ssub.s32 %s41, 1
      %p725 = scmp.gt.s32.totalorder %s724, 0
      %s726 = scalar_select %p725, %s724, 0
      %s727 = ssub.s32 %s723, %s726
      %p728 = scmp.eq.s32.totalorder %s727, 0
      %s730 = sadd.s32 %s729, 1
      %s731 = scalar_select %p728, %s729, %s730
      %p734 = pneg %p728
      %p735 = scmp.eq.s32.totalorder %s34, 2
      %p736 = por %p734, %p735
      %p737 = scmp.ne.s32.totalorder %s729, %s732
      %p738 = scmp.eq.s32.totalorder %s34, 0
      %p739 = por %p737, %p738
      %p740 = scmp.ne.s32.totalorder %s729, %s732
      %p741 = scmp.eq.s32.totalorder %s39, 2
      %p742 = por %p740, %p741
      %p743 = scmp.ne.s32.totalorder %s732, %s733
      %p744 = scmp.eq.s32.totalorder %s39, 0
      %p745 = por %p743, %p744
      %p746 = scmp.ne.s32.totalorder %s732, %s733
      %p747 = scmp.eq.s32.totalorder %s40, 2
      %p748 = por %p746, %p747
      %p750 = scmp.ne.s32.totalorder %s733, %s749
      %p751 = scmp.eq.s32.totalorder %s40, 0
      %p752 = por %p750, %p751
      %s753 = ssub.s32 %s34, 1
      %p754 = scmp.gt.s32.totalorder %s753, 0
      %s755 = scalar_select %p754, %s753, 0
      %s756 = ssub.s32 %s41, 1
      %p757 = scmp.gt.s32.totalorder %s756, 0
      %s758 = scalar_select %p757, %s756, 0
      %s759 = ssub.s32 %s755, %s758
      %p760 = scmp.eq.s32.totalorder %s759, 0
      %s762 = sadd.s32 %s761, 1
      %s763 = scalar_select %p760, %s761, %s762
      %p766 = pneg %p760
      %p767 = scmp.eq.s32.totalorder %s34, 2
      %p768 = por %p766, %p767
      %p769 = scmp.ne.s32.totalorder %s761, %s764
      %p770 = scmp.eq.s32.totalorder %s34, 0
      %p771 = por %p769, %p770
      %p772 = scmp.ne.s32.totalorder %s761, %s764
      %p773 = scmp.eq.s32.totalorder %s39, 2
      %p774 = por %p772, %p773
      %p775 = scmp.ne.s32.totalorder %s764, %s765
      %p776 = scmp.eq.s32.totalorder %s39, 0
      %p777 = por %p775, %p776
      %p778 = scmp.ne.s32.totalorder %s764, %s765
      %p779 = scmp.eq.s32.totalorder %s40, 2
      %p780 = por %p778, %p779
      %p782 = scmp.ne.s32.totalorder %s765, %s781
      %p783 = scmp.eq.s32.totalorder %s40, 0
      %p784 = por %p782, %p783
      %s785 = ssub.s32 %s34, 1
      %p786 = scmp.gt.s32.totalorder %s785, 0
      %s787 = scalar_select %p786, %s785, 0
      %s788 = ssub.s32 %s41, 1
      %p789 = scmp.gt.s32.totalorder %s788, 0
      %s790 = scalar_select %p789, %s788, 0
      %s791 = ssub.s32 %s787, %s790
      %p792 = scmp.eq.s32.totalorder %s791, 0
      %s794 = sadd.s32 %s793, 1
      %s795 = scalar_select %p792, %s793, %s794
      %p798 = pneg %p792
      %p799 = scmp.eq.s32.totalorder %s34, 2
      %p800 = por %p798, %p799
      %p801 = scmp.ne.s32.totalorder %s793, %s796
      %p802 = scmp.eq.s32.totalorder %s34, 0
      %p803 = por %p801, %p802
      %p804 = scmp.ne.s32.totalorder %s793, %s796
      %p805 = scmp.eq.s32.totalorder %s39, 2
      %p806 = por %p804, %p805
      %p807 = scmp.ne.s32.totalorder %s796, %s797
      %p808 = scmp.eq.s32.totalorder %s39, 0
      %p809 = por %p807, %p808
      %p810 = scmp.ne.s32.totalorder %s796, %s797
      %p811 = scmp.eq.s32.totalorder %s40, 2
      %p812 = por %p810, %p811
      %p814 = scmp.ne.s32.totalorder %s797, %s813
      %p815 = scmp.eq.s32.totalorder %s40, 0
      %p816 = por %p814, %p815
      %s817 = ssub.s32 %s34, 1
      %p818 = scmp.gt.s32.totalorder %s817, 0
      %s819 = scalar_select %p818, %s817, 0
      %s820 = ssub.s32 %s41, 1
      %p821 = scmp.gt.s32.totalorder %s820, 0
      %s822 = scalar_select %p821, %s820, 0
      %s823 = ssub.s32 %s819, %s822
      %p824 = scmp.eq.s32.totalorder %s823, 0
      %s826 = sadd.s32 %s825, 1
      %s827 = scalar_select %p824, %s825, %s826
      %p830 = pneg %p824
      %p831 = scmp.eq.s32.totalorder %s34, 2
      %p832 = por %p830, %p831
      %p833 = scmp.ne.s32.totalorder %s825, %s828
      %p834 = scmp.eq.s32.totalorder %s34, 0
      %p835 = por %p833, %p834
      %p836 = scmp.ne.s32.totalorder %s825, %s828
      %p837 = scmp.eq.s32.totalorder %s39, 2
      %p838 = por %p836, %p837
      %p839 = scmp.ne.s32.totalorder %s828, %s829
      %p840 = scmp.eq.s32.totalorder %s39, 0
      %p841 = por %p839, %p840
      %p842 = scmp.ne.s32.totalorder %s828, %s829
      %p843 = scmp.eq.s32.totalorder %s40, 2
      %p844 = por %p842, %p843
      %p846 = scmp.ne.s32.totalorder %s829, %s845
      %p847 = scmp.eq.s32.totalorder %s40, 0
      %p848 = por %p846, %p847
      %s850 = sadd.s32 %s849, 1
      %p853 = scmp.eq.s32.totalorder %s34, 2
      %p854 = scmp.ne.s32.totalorder %s849, %s851
      %p855 = scmp.eq.s32.totalorder %s34, 0
      %p856 = por %p854, %p855
      %p857 = scmp.ne.s32.totalorder %s849, %s851
      %p858 = scmp.eq.s32.totalorder %s39, 2
      %p859 = por %p857, %p858
      %p860 = scmp.ne.s32.totalorder %s851, %s852
      %p861 = scmp.eq.s32.totalorder %s39, 0
      %p862 = por %p860, %p861
      %p863 = scmp.ne.s32.totalorder %s851, %s852
      %p864 = scmp.eq.s32.totalorder %s40, 2
      %p865 = por %p863, %p864
      %p867 = scmp.ne.s32.totalorder %s852, %s866
      %p868 = scmp.eq.s32.totalorder %s40, 0
      %p869 = por %p867, %p868
      %p870 = scmp.le.s32.totalorder 1, %s34
      %p871 = scmp.lt.s32.totalorder %s34, 4
      %p872 = pnand %p870, %p871
      %p873 = pneg %p872
      // Predicated region
      $region9: #{_encoder_forward_impl.1} parent=5 // pred_check
        _
      $region10: #{_encoder_forward_impl.1} parent=5 // pred_check_branch
        %875 = sbr.rel (%p872) target = $region12
      $region11: #{_encoder_forward_impl.1} parent=5 // pred_region
        %s876 = ssub.s32 %s34, 1
        // Predicated region
        $region13: #{_encoder_forward_impl.1} parent=11 // pred_check
          %p877 = pneg %p55
        $region14: #{_encoder_forward_impl.1} parent=11 // pred_check_branch
          %879 = sbr.rel (%p877) target = $region16
        $region15: #{_encoder_forward_impl.1} parent=11 // pred_region
          _
        $region16: #{_encoder_forward_impl.1} parent=11 // pred_fallthru
          _
        // Predicated region
        $region17: #{_encoder_forward_impl.1} parent=11 // pred_check
          %p880 = pneg %p76
        $region18: #{_encoder_forward_impl.1} parent=11 // pred_check_branch
          %882 = sbr.rel (%p880) target = $region20
        $region19: #{_encoder_forward_impl.1} parent=11 // pred_region
          _
        $region20: #{_encoder_forward_impl.1} parent=11 // pred_fallthru
          _
        // Predicated region
        $region21: #{_encoder_forward_impl.1} parent=11 // pred_check
          %p883 = pneg %p97
        $region22: #{_encoder_forward_impl.1} parent=11 // pred_check_branch
          %885 = sbr.rel (%p883) target = $region24
        $region23: #{_encoder_forward_impl.1} parent=11 // pred_region
          _
        $region24: #{_encoder_forward_impl.1} parent=11 // pred_fallthru
          _
      $region12: #{_encoder_forward_impl.1} parent=5 // pred_fallthru
        _
      %p886 = scmp.lt.s32.totalorder %s34, 3
      // Predicated region
      $region25: #{_encoder_forward_impl.1} parent=5 // pred_check
        %p887 = pneg %p886
      $region26: #{_encoder_forward_impl.1} parent=5 // pred_check_branch
        %889 = sbr.rel (%p887) target = $region28
      $region27: #{_encoder_forward_impl.1} parent=5 // pred_region
        // Predicated region
        $region29: #{_encoder_forward_impl.1} parent=27 // pred_check
          %p890 = pneg %p121
        $region30: #{_encoder_forward_impl.1} parent=27 // pred_check_branch
          %892 = sbr.rel (%p890) target = $region32
        $region31: #{_encoder_forward_impl.1} parent=27 // pred_region
          %p893 = scmp.lt.s32.totalorder %s34, 1
          %s894 = scalar_select %p893, %s34, 1
          %s895 = smul.u32 2, %s894
          %p896 = scmp.lt.s32.totalorder %s895, 3
          %s897 = scalar_select %p896, %s895, 3
          %s898 = smul.addr %s897, 48
          %s899 = smul.addr %s898, 4
          %s900 = scalar_lea.vmem %s3, %s899
          %p901 = scmp.lt.s32.totalorder %s34, 1
          %s902 = scalar_select %p901, %s34, 1
          %s903 = smul.u32 2, %s902
        $region32: #{_encoder_forward_impl.1} parent=27 // pred_fallthru
          _
        // Predicated region
        $region33: #{_encoder_forward_impl.1} parent=27 // pred_check
          %p904 = pneg %p151
        $region34: #{_encoder_forward_impl.1} parent=27 // pred_check_branch
          %906 = sbr.rel (%p904) target = $region36
        $region35: #{_encoder_forward_impl.1} parent=27 // pred_region
          %p907 = scmp.lt.s32.totalorder %s34, 1
          %s908 = scalar_select %p907, %s34, 1
          %s909 = smul.u32 2, %s908
          %p910 = scmp.lt.s32.totalorder %s909, 3
          %s911 = scalar_select %p910, %s909, 3
          %s912 = smul.addr %s911, 4
          %s913 = smul.addr %s912, 4
          %s914 = scalar_lea.vmem %s4, %s913
          %p915 = scmp.lt.s32.totalorder %s34, 1
          %s916 = scalar_select %p915, %s34, 1
          %s917 = smul.u32 2, %s916
        $region36: #{_encoder_forward_impl.1} parent=27 // pred_fallthru
          _
        // Predicated region
        $region37: #{_encoder_forward_impl.1} parent=27 // pred_check
          %p918 = pneg %p181
        $region38: #{_encoder_forward_impl.1} parent=27 // pred_check_branch
          %920 = sbr.rel (%p918) target = $region40
        $region39: #{_encoder_forward_impl.1} parent=27 // pred_region
          %p921 = scmp.lt.s32.totalorder %s34, 1
          %s922 = scalar_select %p921, %s34, 1
          %s923 = smul.u32 2, %s922
          %p924 = scmp.lt.s32.totalorder %s923, 3
          %s925 = scalar_select %p924, %s923, 3
          %s926 = scalar_lea.vmem %s5, %s925
          %p927 = scmp.lt.s32.totalorder %s34, 1
          %s928 = scalar_select %p927, %s34, 1
          %s929 = smul.u32 2, %s928
        $region40: #{_encoder_forward_impl.1} parent=27 // pred_fallthru
          _
        // Predicated region
        $region41: #{_encoder_forward_impl.1} parent=27 // pred_check
          %p930 = pneg %p211
        $region42: #{_encoder_forward_impl.1} parent=27 // pred_check_branch
          %932 = sbr.rel (%p930) target = $region44
        $region43: #{_encoder_forward_impl.1} parent=27 // pred_region
          %p933 = scmp.lt.s32.totalorder %s34, 1
          %s934 = scalar_select %p933, %s34, 1
          %s935 = smul.u32 2, %s934
          %p936 = scmp.lt.s32.totalorder %s935, 3
          %s937 = scalar_select %p936, %s935, 3
          %s938 = scalar_lea.vmem %s6, %s937
          %p939 = scmp.lt.s32.totalorder %s34, 1
          %s940 = scalar_select %p939, %s34, 1
          %s941 = smul.u32 2, %s940
        $region44: #{_encoder_forward_impl.1} parent=27 // pred_fallthru
          _
        // Predicated region
        $region45: #{_encoder_forward_impl.1} parent=27 // pred_check
          %p942 = pneg %p241
        $region46: #{_encoder_forward_impl.1} parent=27 // pred_check_branch
          %944 = sbr.rel (%p942) target = $region48
        $region47: #{_encoder_forward_impl.1} parent=27 // pred_region
          %p945 = scmp.lt.s32.totalorder %s34, 1
          %s946 = scalar_select %p945, %s34, 1
          %s947 = smul.u32 2, %s946
          %p948 = scmp.lt.s32.totalorder %s947, 3
          %s949 = scalar_select %p948, %s947, 3
          %s950 = smul.addr %s949, 8
          %s951 = smul.addr %s950, 4
          %s952 = scalar_lea.vmem %s7, %s951
          %p953 = scmp.lt.s32.totalorder %s34, 1
          %s954 = scalar_select %p953, %s34, 1
          %s955 = smul.u32 2, %s954
        $region48: #{_encoder_forward_impl.1} parent=27 // pred_fallthru
          _
        // Predicated region
        $region49: #{_encoder_forward_impl.1} parent=27 // pred_check
          %p956 = pneg %p271
        $region50: #{_encoder_forward_impl.1} parent=27 // pred_check_branch
          %958 = sbr.rel (%p956) target = $region52
        $region51: #{_encoder_forward_impl.1} parent=27 // pred_region
          %p959 = scmp.lt.s32.totalorder %s34, 1
          %s960 = scalar_select %p959, %s34, 1
          %s961 = smul.u32 2, %s960
          %p962 = scmp.lt.s32.totalorder %s961, 3
          %s963 = scalar_select %p962, %s961, 3
          %s964 = scalar_lea.vmem %s8, %s963
          %p965 = scmp.lt.s32.totalorder %s34, 1
          %s966 = scalar_select %p965, %s34, 1
          %s967 = smul.u32 2, %s966
        $region52: #{_encoder_forward_impl.1} parent=27 // pred_fallthru
          _
        // Predicated region
        $region53: #{_encoder_forward_impl.1} parent=27 // pred_check
          %p968 = pneg %p301
        $region54: #{_encoder_forward_impl.1} parent=27 // pred_check_branch
          %970 = sbr.rel (%p968) target = $region56
        $region55: #{_encoder_forward_impl.1} parent=27 // pred_region
          %p971 = scmp.lt.s32.totalorder %s34, 1
          %s972 = scalar_select %p971, %s34, 1
          %s973 = smul.u32 2, %s972
          %p974 = scmp.lt.s32.totalorder %s973, 3
          %s975 = scalar_select %p974, %s973, 3
          %s976 = smul.addr %s975, 16
          %s977 = smul.addr %s976, 4
          %s978 = scalar_lea.vmem %s9, %s977
          %p979 = scmp.lt.s32.totalorder %s34, 1
          %s980 = scalar_select %p979, %s34, 1
          %s981 = smul.u32 2, %s980
        $region56: #{_encoder_forward_impl.1} parent=27 // pred_fallthru
          _
        // Predicated region
        $region57: #{_encoder_forward_impl.1} parent=27 // pred_check
          %p982 = pneg %p331
        $region58: #{_encoder_forward_impl.1} parent=27 // pred_check_branch
          %984 = sbr.rel (%p982) target = $region60
        $region59: #{_encoder_forward_impl.1} parent=27 // pred_region
          %p985 = scmp.lt.s32.totalorder %s34, 1
          %s986 = scalar_select %p985, %s34, 1
          %s987 = smul.u32 2, %s986
          %p988 = scmp.lt.s32.totalorder %s987, 3
          %s989 = scalar_select %p988, %s987, 3
          %s990 = scalar_lea.vmem %s10, %s989
          %p991 = scmp.lt.s32.totalorder %s34, 1
          %s992 = scalar_select %p991, %s34, 1
          %s993 = smul.u32 2, %s992
        $region60: #{_encoder_forward_impl.1} parent=27 // pred_fallthru
          _
        // Predicated region
        $region61: #{_encoder_forward_impl.1} parent=27 // pred_check
          %p994 = pneg %p361
        $region62: #{_encoder_forward_impl.1} parent=27 // pred_check_branch
          %996 = sbr.rel (%p994) target = $region64
        $region63: #{_encoder_forward_impl.1} parent=27 // pred_region
          %p997 = scmp.lt.s32.totalorder %s34, 1
          %s998 = scalar_select %p997, %s34, 1
          %s999 = smul.u32 2, %s998
          %p1000 = scmp.lt.s32.totalorder %s999, 3
          %s1001 = scalar_select %p1000, %s999, 3
          %s1002 = scalar_lea.vmem %s11, %s1001
          %p1003 = scmp.lt.s32.totalorder %s34, 1
          %s1004 = scalar_select %p1003, %s34, 1
          %s1005 = smul.u32 2, %s1004
        $region64: #{_encoder_forward_impl.1} parent=27 // pred_fallthru
          _
        // Predicated region
        $region65: #{_encoder_forward_impl.1} parent=27 // pred_check
          %p1006 = pneg %p391
        $region66: #{_encoder_forward_impl.1} parent=27 // pred_check_branch
          %1008 = sbr.rel (%p1006) target = $region68
        $region67: #{_encoder_forward_impl.1} parent=27 // pred_region
          %p1009 = scmp.lt.s32.totalorder %s34, 1
          %s1010 = scalar_select %p1009, %s34, 1
          %s1011 = smul.u32 2, %s1010
          %p1012 = scmp.lt.s32.totalorder %s1011, 3
          %s1013 = scalar_select %p1012, %s1011, 3
          %s1014 = scalar_lea.vmem %s12, %s1013
          %p1015 = scmp.lt.s32.totalorder %s34, 1
          %s1016 = scalar_select %p1015, %s34, 1
          %s1017 = smul.u32 2, %s1016
        $region68: #{_encoder_forward_impl.1} parent=27 // pred_fallthru
          _
        // Predicated region
        $region69: #{_encoder_forward_impl.1} parent=27 // pred_check
          %p1018 = pneg %p421
        $region70: #{_encoder_forward_impl.1} parent=27 // pred_check_branch
          %1020 = sbr.rel (%p1018) target = $region72
        $region71: #{_encoder_forward_impl.1} parent=27 // pred_region
          %p1021 = scmp.lt.s32.totalorder %s34, 1
          %s1022 = scalar_select %p1021, %s34, 1
          %s1023 = smul.u32 2, %s1022
          %p1024 = scmp.lt.s32.totalorder %s1023, 3
          %s1025 = scalar_select %p1024, %s1023, 3
          %s1026 = smul.addr %s1025, 8
          %s1027 = smul.addr %s1026, 4
          %s1028 = scalar_lea.vmem %s13, %s1027
          %p1029 = scmp.lt.s32.totalorder %s34, 1
          %s1030 = scalar_select %p1029, %s34, 1
          %s1031 = smul.u32 2, %s1030
        $region72: #{_encoder_forward_impl.1} parent=27 // pred_fallthru
          _
        // Predicated region
        $region73: #{_encoder_forward_impl.1} parent=27 // pred_check
          %p1032 = pneg %p451
        $region74: #{_encoder_forward_impl.1} parent=27 // pred_check_branch
          %1034 = sbr.rel (%p1032) target = $region76
        $region75: #{_encoder_forward_impl.1} parent=27 // pred_region
          %p1035 = scmp.lt.s32.totalorder %s34, 1
          %s1036 = scalar_select %p1035, %s34, 1
          %s1037 = smul.u32 2, %s1036
          %p1038 = scmp.lt.s32.totalorder %s1037, 3
          %s1039 = scalar_select %p1038, %s1037, 3
          %s1040 = scalar_lea.vmem %s14, %s1039
          %p1041 = scmp.lt.s32.totalorder %s34, 1
          %s1042 = scalar_select %p1041, %s34, 1
          %s1043 = smul.u32 2, %s1042
        $region76: #{_encoder_forward_impl.1} parent=27 // pred_fallthru
          _
        // Predicated region
        $region77: #{_encoder_forward_impl.1} parent=27 // pred_check
          %p1044 = pneg %p483
        $region78: #{_encoder_forward_impl.1} parent=27 // pred_check_branch
          %1046 = sbr.rel (%p1044) target = $region80
        $region79: #{_encoder_forward_impl.1} parent=27 // pred_region
          %s1047 = ssub.s32 %s34, 1
          %p1048 = scmp.gt.s32.totalorder %s1047, 0
          %s1049 = scalar_select %p1048, %s1047, 0
          %p1050 = scmp.lt.s32.totalorder %s1049, 1
          %s1051 = scalar_select %p1050, %s1049, 1
          %s1052 = smul.addr %s1051, 12
          %s1053 = smul.addr %s1052, 4
          %s1054 = scalar_lea.vmem %s15, %s1053
          %s1055 = ssub.s32 %s34, 1
          %p1056 = scmp.gt.s32.totalorder %s1055, 0
          %s1057 = scalar_select %p1056, %s1055, 0
        $region80: #{_encoder_forward_impl.1} parent=27 // pred_fallthru
          _
        // Predicated region
        $region81: #{_encoder_forward_impl.1} parent=27 // pred_check
          %p1058 = pneg %p515
        $region82: #{_encoder_forward_impl.1} parent=27 // pred_check_branch
          %1060 = sbr.rel (%p1058) target = $region84
        $region83: #{_encoder_forward_impl.1} parent=27 // pred_region
          %s1061 = ssub.s32 %s34, 1
          %p1062 = scmp.gt.s32.totalorder %s1061, 0
          %s1063 = scalar_select %p1062, %s1061, 0
          %p1064 = scmp.lt.s32.totalorder %s1063, 1
          %s1065 = scalar_select %p1064, %s1063, 1
          %s1066 = smul.addr %s1065, 48
          %s1067 = smul.addr %s1066, 4
          %s1068 = scalar_lea.vmem %s16, %s1067
          %s1069 = ssub.s32 %s34, 1
          %p1070 = scmp.gt.s32.totalorder %s1069, 0
          %s1071 = scalar_select %p1070, %s1069, 0
        $region84: #{_encoder_forward_impl.1} parent=27 // pred_fallthru
          _
        // Predicated region
        $region85: #{_encoder_forward_impl.1} parent=27 // pred_check
          %p1072 = pneg %p547
        $region86: #{_encoder_forward_impl.1} parent=27 // pred_check_branch
          %1074 = sbr.rel (%p1072) target = $region88
        $region87: #{_encoder_forward_impl.1} parent=27 // pred_region
          %s1075 = ssub.s32 %s34, 1
          %p1076 = scmp.gt.s32.totalorder %s1075, 0
          %s1077 = scalar_select %p1076, %s1075, 0
          %p1078 = scmp.lt.s32.totalorder %s1077, 1
          %s1079 = scalar_select %p1078, %s1077, 1
          %s1080 = smul.addr %s1079, 12
          %s1081 = smul.addr %s1080, 4
          %s1082 = scalar_lea.vmem %s17, %s1081
          %s1083 = ssub.s32 %s34, 1
          %p1084 = scmp.gt.s32.totalorder %s1083, 0
          %s1085 = scalar_select %p1084, %s1083, 0
        $region88: #{_encoder_forward_impl.1} parent=27 // pred_fallthru
          _
        // Predicated region
        $region89: #{_encoder_forward_impl.1} parent=27 // pred_check
          %p1086 = pneg %p579
        $region90: #{_encoder_forward_impl.1} parent=27 // pred_check_branch
          %1088 = sbr.rel (%p1086) target = $region92
        $region91: #{_encoder_forward_impl.1} parent=27 // pred_region
          %s1089 = ssub.s32 %s34, 1
          %p1090 = scmp.gt.s32.totalorder %s1089, 0
          %s1091 = scalar_select %p1090, %s1089, 0
          %p1092 = scmp.lt.s32.totalorder %s1091, 1
          %s1093 = scalar_select %p1092, %s1091, 1
          %s1094 = smul.addr %s1093, 4
          %s1095 = smul.addr %s1094, 4
          %s1096 = scalar_lea.vmem %s18, %s1095
          %s1097 = ssub.s32 %s34, 1
          %p1098 = scmp.gt.s32.totalorder %s1097, 0
          %s1099 = scalar_select %p1098, %s1097, 0
        $region92: #{_encoder_forward_impl.1} parent=27 // pred_fallthru
          _
        // Predicated region
        $region93: #{_encoder_forward_impl.1} parent=27 // pred_check
          %p1100 = pneg %p611
        $region94: #{_encoder_forward_impl.1} parent=27 // pred_check_branch
          %1102 = sbr.rel (%p1100) target = $region96
        $region95: #{_encoder_forward_impl.1} parent=27 // pred_region
          %s1103 = ssub.s32 %s34, 1
          %p1104 = scmp.gt.s32.totalorder %s1103, 0
          %s1105 = scalar_select %p1104, %s1103, 0
          %p1106 = scmp.lt.s32.totalorder %s1105, 1
          %s1107 = scalar_select %p1106, %s1105, 1
          %s1108 = scalar_lea.vmem %s19, %s1107
          %s1109 = ssub.s32 %s34, 1
          %p1110 = scmp.gt.s32.totalorder %s1109, 0
          %s1111 = scalar_select %p1110, %s1109, 0
        $region96: #{_encoder_forward_impl.1} parent=27 // pred_fallthru
          _
        // Predicated region
        $region97: #{_encoder_forward_impl.1} parent=27 // pred_check
          %p1112 = pneg %p643
        $region98: #{_encoder_forward_impl.1} parent=27 // pred_check_branch
          %1114 = sbr.rel (%p1112) target = $region100
        $region99: #{_encoder_forward_impl.1} parent=27 // pred_region
          %s1115 = ssub.s32 %s34, 1
          %p1116 = scmp.gt.s32.totalorder %s1115, 0
          %s1117 = scalar_select %p1116, %s1115, 0
          %p1118 = scmp.lt.s32.totalorder %s1117, 1
          %s1119 = scalar_select %p1118, %s1117, 1
          %s1120 = scalar_lea.vmem %s20, %s1119
          %s1121 = ssub.s32 %s34, 1
          %p1122 = scmp.gt.s32.totalorder %s1121, 0
          %s1123 = scalar_select %p1122, %s1121, 0
        $region100: #{_encoder_forward_impl.1} parent=27 // pred_fallthru
          _
        // Predicated region
        $region101: #{_encoder_forward_impl.1} parent=27 // pred_check
          %p1124 = pneg %p675
        $region102: #{_encoder_forward_impl.1} parent=27 // pred_check_branch
          %1126 = sbr.rel (%p1124) target = $region104
        $region103: #{_encoder_forward_impl.1} parent=27 // pred_region
          %s1127 = ssub.s32 %s34, 1
          %p1128 = scmp.gt.s32.totalorder %s1127, 0
          %s1129 = scalar_select %p1128, %s1127, 0
          %p1130 = scmp.lt.s32.totalorder %s1129, 1
          %s1131 = scalar_select %p1130, %s1129, 1
          %s1132 = smul.addr %s1131, 12
          %s1133 = smul.addr %s1132, 4
          %s1134 = scalar_lea.vmem %s21, %s1133
          %s1135 = ssub.s32 %s34, 1
          %p1136 = scmp.gt.s32.totalorder %s1135, 0
          %s1137 = scalar_select %p1136, %s1135, 0
        $region104: #{_encoder_forward_impl.1} parent=27 // pred_fallthru
          _
        // Predicated region
        $region105: #{_encoder_forward_impl.1} parent=27 // pred_check
          %p1138 = pneg %p707
        $region106: #{_encoder_forward_impl.1} parent=27 // pred_check_branch
          %1140 = sbr.rel (%p1138) target = $region108
        $region107: #{_encoder_forward_impl.1} parent=27 // pred_region
          %s1141 = ssub.s32 %s34, 1
          %p1142 = scmp.gt.s32.totalorder %s1141, 0
          %s1143 = scalar_select %p1142, %s1141, 0
          %p1144 = scmp.lt.s32.totalorder %s1143, 1
          %s1145 = scalar_select %p1144, %s1143, 1
          %s1146 = scalar_lea.vmem %s22, %s1145
          %s1147 = ssub.s32 %s34, 1
          %p1148 = scmp.gt.s32.totalorder %s1147, 0
          %s1149 = scalar_select %p1148, %s1147, 0
        $region108: #{_encoder_forward_impl.1} parent=27 // pred_fallthru
          _
        // Predicated region
        $region109: #{_encoder_forward_impl.1} parent=27 // pred_check
          %p1150 = pneg %p739
        $region110: #{_encoder_forward_impl.1} parent=27 // pred_check_branch
          %1152 = sbr.rel (%p1150) target = $region112
        $region111: #{_encoder_forward_impl.1} parent=27 // pred_region
          %s1153 = ssub.s32 %s34, 1
          %p1154 = scmp.gt.s32.totalorder %s1153, 0
          %s1155 = scalar_select %p1154, %s1153, 0
          %p1156 = scmp.lt.s32.totalorder %s1155, 1
          %s1157 = scalar_select %p1156, %s1155, 1
          %s1158 = smul.addr %s1157, 16
          %s1159 = smul.addr %s1158, 4
          %s1160 = scalar_lea.vmem %s23, %s1159
          %s1161 = ssub.s32 %s34, 1
          %p1162 = scmp.gt.s32.totalorder %s1161, 0
          %s1163 = scalar_select %p1162, %s1161, 0
        $region112: #{_encoder_forward_impl.1} parent=27 // pred_fallthru
          _
        // Predicated region
        $region113: #{_encoder_forward_impl.1} parent=27 // pred_check
          %p1164 = pneg %p771
        $region114: #{_encoder_forward_impl.1} parent=27 // pred_check_branch
          %1166 = sbr.rel (%p1164) target = $region116
        $region115: #{_encoder_forward_impl.1} parent=27 // pred_region
          %s1167 = ssub.s32 %s34, 1
          %p1168 = scmp.gt.s32.totalorder %s1167, 0
          %s1169 = scalar_select %p1168, %s1167, 0
          %p1170 = scmp.lt.s32.totalorder %s1169, 1
          %s1171 = scalar_select %p1170, %s1169, 1
          %s1172 = scalar_lea.vmem %s24, %s1171
          %s1173 = ssub.s32 %s34, 1
          %p1174 = scmp.gt.s32.totalorder %s1173, 0
          %s1175 = scalar_select %p1174, %s1173, 0
        $region116: #{_encoder_forward_impl.1} parent=27 // pred_fallthru
          _
        // Predicated region
        $region117: #{_encoder_forward_impl.1} parent=27 // pred_check
          %p1176 = pneg %p803
        $region118: #{_encoder_forward_impl.1} parent=27 // pred_check_branch
          %1178 = sbr.rel (%p1176) target = $region120
        $region119: #{_encoder_forward_impl.1} parent=27 // pred_region
          %s1179 = ssub.s32 %s34, 1
          %p1180 = scmp.gt.s32.totalorder %s1179, 0
          %s1181 = scalar_select %p1180, %s1179, 0
          %p1182 = scmp.lt.s32.totalorder %s1181, 1
          %s1183 = scalar_select %p1182, %s1181, 1
          %s1184 = scalar_lea.vmem %s25, %s1183
          %s1185 = ssub.s32 %s34, 1
          %p1186 = scmp.gt.s32.totalorder %s1185, 0
          %s1187 = scalar_select %p1186, %s1185, 0
        $region120: #{_encoder_forward_impl.1} parent=27 // pred_fallthru
          _
        // Predicated region
        $region121: #{_encoder_forward_impl.1} parent=27 // pred_check
          %p1188 = pneg %p835
        $region122: #{_encoder_forward_impl.1} parent=27 // pred_check_branch
          %1190 = sbr.rel (%p1188) target = $region124
        $region123: #{_encoder_forward_impl.1} parent=27 // pred_region
          %s1191 = ssub.s32 %s34, 1
          %p1192 = scmp.gt.s32.totalorder %s1191, 0
          %s1193 = scalar_select %p1192, %s1191, 0
          %p1194 = scmp.lt.s32.totalorder %s1193, 1
          %s1195 = scalar_select %p1194, %s1193, 1
          %s1196 = scalar_lea.vmem %s26, %s1195
          %s1197 = ssub.s32 %s34, 1
          %p1198 = scmp.gt.s32.totalorder %s1197, 0
          %s1199 = scalar_select %p1198, %s1197, 0
        $region124: #{_encoder_forward_impl.1} parent=27 // pred_fallthru
          _
      $region28: #{_encoder_forward_impl.1} parent=5 // pred_fallthru
        _
      %p1200 = scmp.le.s32.totalorder 1, %s34
      %p1201 = scmp.lt.s32.totalorder %s34, 4
      %p1202 = pnand %p1200, %p1201
      %p1203 = pneg %p1202
      // Predicated region
      $region125: #{_encoder_forward_impl.1} parent=5 // pred_check
        _
      $region126: #{_encoder_forward_impl.1} parent=5 // pred_check_branch
        %1205 = sbr.rel (%p1202) target = $region128
      $region127: #{_encoder_forward_impl.1} parent=5 // pred_region
        %s1206 = ssub.s32 %s34, 1
        %p1207 = pneg %p55
        %p1208 = pneg %p52
        %p1209 = pneg %p76
        %p1210 = pneg %p73
        %p1211 = pneg %p97
        %p1212 = pneg %p94
        %p1213 = scmp.lt.s32.totalorder %s39, 1
        %s1214 = scalar_select %p1213, %s39, 1
        %s1215 = smul.u32 2, %s1214
        %p1216 = scmp.lt.s32.totalorder %s1215, 3
        %s1217 = scalar_select %p1216, %s1215, 3
        %s1218 = smul.addr %s1217, 48
        %s1219 = smul.addr %s1218, 4
        %s1220 = scalar_lea.vmem %s3, %s1219
        %p1221 = pneg %p127
        %p1222 = pneg %p124
        %p1223 = scmp.lt.s32.totalorder %s39, 1
        %s1224 = scalar_select %p1223, %s39, 1
        %s1225 = smul.u32 2, %s1224
        %p1226 = scmp.lt.s32.totalorder %s1225, 3
        %s1227 = scalar_select %p1226, %s1225, 3
        %s1228 = smul.addr %s1227, 4
        %s1229 = smul.addr %s1228, 4
        %s1230 = scalar_lea.vmem %s4, %s1229
        %p1231 = pneg %p157
        %p1232 = pneg %p154
        %p1233 = scmp.lt.s32.totalorder %s39, 1
        %s1234 = scalar_select %p1233, %s39, 1
        %s1235 = smul.u32 2, %s1234
        %p1236 = scmp.lt.s32.totalorder %s1235, 3
        %s1237 = scalar_select %p1236, %s1235, 3
        %s1238 = scalar_lea.vmem %s5, %s1237
        %p1239 = pneg %p187
        %p1240 = pneg %p184
        %p1241 = scmp.lt.s32.totalorder %s39, 1
        %s1242 = scalar_select %p1241, %s39, 1
        %s1243 = smul.u32 2, %s1242
        %p1244 = scmp.lt.s32.totalorder %s1243, 3
        %s1245 = scalar_select %p1244, %s1243, 3
        %s1246 = scalar_lea.vmem %s6, %s1245
        %p1247 = pneg %p217
        %p1248 = pneg %p214
        %p1249 = scmp.lt.s32.totalorder %s39, 1
        %s1250 = scalar_select %p1249, %s39, 1
        %s1251 = smul.u32 2, %s1250
        %p1252 = scmp.lt.s32.totalorder %s1251, 3
        %s1253 = scalar_select %p1252, %s1251, 3
        %s1254 = smul.addr %s1253, 8
        %s1255 = smul.addr %s1254, 4
        %s1256 = scalar_lea.vmem %s7, %s1255
        %p1257 = pneg %p247
        %p1258 = pneg %p244
        %p1259 = scmp.lt.s32.totalorder %s39, 1
        %s1260 = scalar_select %p1259, %s39, 1
        %s1261 = smul.u32 2, %s1260
        %p1262 = scmp.lt.s32.totalorder %s1261, 3
        %s1263 = scalar_select %p1262, %s1261, 3
        %s1264 = scalar_lea.vmem %s8, %s1263
        %p1265 = pneg %p277
        %p1266 = pneg %p274
        %p1267 = scmp.lt.s32.totalorder %s39, 1
        %s1268 = scalar_select %p1267, %s39, 1
        %s1269 = smul.u32 2, %s1268
        %p1270 = scmp.lt.s32.totalorder %s1269, 3
        %s1271 = scalar_select %p1270, %s1269, 3
        %s1272 = smul.addr %s1271, 16
        %s1273 = smul.addr %s1272, 4
        %s1274 = scalar_lea.vmem %s9, %s1273
        %p1275 = pneg %p307
        %p1276 = pneg %p304
        %p1277 = scmp.lt.s32.totalorder %s39, 1
        %s1278 = scalar_select %p1277, %s39, 1
        %s1279 = smul.u32 2, %s1278
        %p1280 = scmp.lt.s32.totalorder %s1279, 3
        %s1281 = scalar_select %p1280, %s1279, 3
        %s1282 = scalar_lea.vmem %s10, %s1281
        %p1283 = pneg %p337
        %p1284 = pneg %p334
        %p1285 = scmp.lt.s32.totalorder %s39, 1
        %s1286 = scalar_select %p1285, %s39, 1
        %s1287 = smul.u32 2, %s1286
        %p1288 = scmp.lt.s32.totalorder %s1287, 3
        %s1289 = scalar_select %p1288, %s1287, 3
        %s1290 = scalar_lea.vmem %s11, %s1289
        %p1291 = pneg %p367
        %p1292 = pneg %p364
        %p1293 = scmp.lt.s32.totalorder %s39, 1
        %s1294 = scalar_select %p1293, %s39, 1
        %s1295 = smul.u32 2, %s1294
        %p1296 = scmp.lt.s32.totalorder %s1295, 3
        %s1297 = scalar_select %p1296, %s1295, 3
        %s1298 = scalar_lea.vmem %s12, %s1297
        %p1299 = pneg %p397
        %p1300 = pneg %p394
        %p1301 = scmp.lt.s32.totalorder %s39, 1
        %s1302 = scalar_select %p1301, %s39, 1
        %s1303 = smul.u32 2, %s1302
        %p1304 = scmp.lt.s32.totalorder %s1303, 3
        %s1305 = scalar_select %p1304, %s1303, 3
        %s1306 = smul.addr %s1305, 8
        %s1307 = smul.addr %s1306, 4
        %s1308 = scalar_lea.vmem %s13, %s1307
        %p1309 = pneg %p427
        %p1310 = pneg %p424
        %p1311 = scmp.lt.s32.totalorder %s39, 1
        %s1312 = scalar_select %p1311, %s39, 1
        %s1313 = smul.u32 2, %s1312
        %p1314 = scmp.lt.s32.totalorder %s1313, 3
        %s1315 = scalar_select %p1314, %s1313, 3
        %s1316 = scalar_lea.vmem %s14, %s1315
        %p1317 = pneg %p457
        %p1318 = pneg %p454
        %s1319 = ssub.s32 %s39, 1
        %p1320 = scmp.gt.s32.totalorder %s1319, 0
        %s1321 = scalar_select %p1320, %s1319, 0
        %p1322 = scmp.lt.s32.totalorder %s1321, 1
        %s1323 = scalar_select %p1322, %s1321, 1
        %s1324 = smul.addr %s1323, 12
        %s1325 = smul.addr %s1324, 4
        %s1326 = scalar_lea.vmem %s15, %s1325
        %p1327 = pneg %p489
        %p1328 = pneg %p486
        %s1329 = ssub.s32 %s39, 1
        %p1330 = scmp.gt.s32.totalorder %s1329, 0
        %s1331 = scalar_select %p1330, %s1329, 0
        %p1332 = scmp.lt.s32.totalorder %s1331, 1
        %s1333 = scalar_select %p1332, %s1331, 1
        %s1334 = smul.addr %s1333, 48
        %s1335 = smul.addr %s1334, 4
        %s1336 = scalar_lea.vmem %s16, %s1335
        %p1337 = pneg %p521
        %p1338 = pneg %p518
        %s1339 = ssub.s32 %s39, 1
        %p1340 = scmp.gt.s32.totalorder %s1339, 0
        %s1341 = scalar_select %p1340, %s1339, 0
        %p1342 = scmp.lt.s32.totalorder %s1341, 1
        %s1343 = scalar_select %p1342, %s1341, 1
        %s1344 = smul.addr %s1343, 12
        %s1345 = smul.addr %s1344, 4
        %s1346 = scalar_lea.vmem %s17, %s1345
        %p1347 = pneg %p553
        %p1348 = pneg %p550
        %s1349 = ssub.s32 %s39, 1
        %p1350 = scmp.gt.s32.totalorder %s1349, 0
        %s1351 = scalar_select %p1350, %s1349, 0
        %p1352 = scmp.lt.s32.totalorder %s1351, 1
        %s1353 = scalar_select %p1352, %s1351, 1
        %s1354 = smul.addr %s1353, 4
        %s1355 = smul.addr %s1354, 4
        %s1356 = scalar_lea.vmem %s18, %s1355
        %p1357 = pneg %p585
        %p1358 = pneg %p582
        %s1359 = ssub.s32 %s39, 1
        %p1360 = scmp.gt.s32.totalorder %s1359, 0
        %s1361 = scalar_select %p1360, %s1359, 0
        %p1362 = scmp.lt.s32.totalorder %s1361, 1
        %s1363 = scalar_select %p1362, %s1361, 1
        %s1364 = scalar_lea.vmem %s19, %s1363
        %p1365 = pneg %p617
        %p1366 = pneg %p614
        %s1367 = ssub.s32 %s39, 1
        %p1368 = scmp.gt.s32.totalorder %s1367, 0
        %s1369 = scalar_select %p1368, %s1367, 0
        %p1370 = scmp.lt.s32.totalorder %s1369, 1
        %s1371 = scalar_select %p1370, %s1369, 1
        %s1372 = scalar_lea.vmem %s20, %s1371
        %p1373 = pneg %p649
        %p1374 = pneg %p646
        %s1375 = ssub.s32 %s39, 1
        %p1376 = scmp.gt.s32.totalorder %s1375, 0
        %s1377 = scalar_select %p1376, %s1375, 0
        %p1378 = scmp.lt.s32.totalorder %s1377, 1
        %s1379 = scalar_select %p1378, %s1377, 1
        %s1380 = smul.addr %s1379, 12
        %s1381 = smul.addr %s1380, 4
        %s1382 = scalar_lea.vmem %s21, %s1381
        %p1383 = pneg %p681
        %p1384 = pneg %p678
        %s1385 = ssub.s32 %s39, 1
        %p1386 = scmp.gt.s32.totalorder %s1385, 0
        %s1387 = scalar_select %p1386, %s1385, 0
        %p1388 = scmp.lt.s32.totalorder %s1387, 1
        %s1389 = scalar_select %p1388, %s1387, 1
        %s1390 = scalar_lea.vmem %s22, %s1389
        %p1391 = pneg %p713
        %p1392 = pneg %p710
        %s1393 = ssub.s32 %s39, 1
        %p1394 = scmp.gt.s32.totalorder %s1393, 0
        %s1395 = scalar_select %p1394, %s1393, 0
        %p1396 = scmp.lt.s32.totalorder %s1395, 1
        %s1397 = scalar_select %p1396, %s1395, 1
        %s1398 = smul.addr %s1397, 16
        %s1399 = smul.addr %s1398, 4
        %s1400 = scalar_lea.vmem %s23, %s1399
        %p1401 = pneg %p745
        %p1402 = pneg %p742
        %s1403 = ssub.s32 %s39, 1
        %p1404 = scmp.gt.s32.totalorder %s1403, 0
        %s1405 = scalar_select %p1404, %s1403, 0
        %p1406 = scmp.lt.s32.totalorder %s1405, 1
        %s1407 = scalar_select %p1406, %s1405, 1
        %s1408 = scalar_lea.vmem %s24, %s1407
        %p1409 = pneg %p777
        %p1410 = pneg %p774
        %s1411 = ssub.s32 %s39, 1
        %p1412 = scmp.gt.s32.totalorder %s1411, 0
        %s1413 = scalar_select %p1412, %s1411, 0
        %p1414 = scmp.lt.s32.totalorder %s1413, 1
        %s1415 = scalar_select %p1414, %s1413, 1
        %s1416 = scalar_lea.vmem %s25, %s1415
        %p1417 = pneg %p809
        %p1418 = pneg %p806
        %s1419 = ssub.s32 %s39, 1
        %p1420 = scmp.gt.s32.totalorder %s1419, 0
        %s1421 = scalar_select %p1420, %s1419, 0
        %p1422 = scmp.lt.s32.totalorder %s1421, 1
        %s1423 = scalar_select %p1422, %s1421, 1
        %s1424 = scalar_lea.vmem %s26, %s1423
        %p1425 = pneg %p841
        %p1426 = pneg %p838
        %p1427 = pneg %p862
        %p1428 = pneg %p859
        %p1429 = scmp.lt.s32.totalorder %s39, 1
        %s1430 = scalar_select %p1429, %s39, 1
        %s1431 = smul.u32 2, %s1430
        %p1432 = scmp.lt.s32.totalorder %s1431, 3
        %s1433 = scalar_select %p1432, %s1431, 3
        %s1434 = smul.addr %s1433, 48
        %s1435 = smul.addr %s1434, 4
        %s1436 = scalar_lea.vmem %s3, %s1435
        %p1437 = scmp.lt.s32.totalorder %s39, 1
        %s1438 = scalar_select %p1437, %s39, 1
        %s1439 = smul.u32 2, %s1438
        %p1440 = scmp.lt.s32.totalorder %s39, 1
        %s1441 = scalar_select %p1440, %s39, 1
        %s1442 = smul.u32 2, %s1441
        %p1443 = scmp.lt.s32.totalorder %s1442, 3
        %s1444 = scalar_select %p1443, %s1442, 3
        %s1445 = smul.addr %s1444, 4
        %s1446 = smul.addr %s1445, 4
        %s1447 = scalar_lea.vmem %s4, %s1446
        %p1448 = scmp.lt.s32.totalorder %s39, 1
        %s1449 = scalar_select %p1448, %s39, 1
        %s1450 = smul.u32 2, %s1449
        %p1451 = scmp.lt.s32.totalorder %s39, 1
        %s1452 = scalar_select %p1451, %s39, 1
        %s1453 = smul.u32 2, %s1452
        %p1454 = scmp.lt.s32.totalorder %s1453, 3
        %s1455 = scalar_select %p1454, %s1453, 3
        %s1456 = scalar_lea.vmem %s5, %s1455
        %p1457 = scmp.lt.s32.totalorder %s39, 1
        %s1458 = scalar_select %p1457, %s39, 1
        %s1459 = smul.u32 2, %s1458
        %p1460 = scmp.lt.s32.totalorder %s39, 1
        %s1461 = scalar_select %p1460, %s39, 1
        %s1462 = smul.u32 2, %s1461
        %p1463 = scmp.lt.s32.totalorder %s1462, 3
        %s1464 = scalar_select %p1463, %s1462, 3
        %s1465 = scalar_lea.vmem %s6, %s1464
        %p1466 = scmp.lt.s32.totalorder %s39, 1
        %s1467 = scalar_select %p1466, %s39, 1
        %s1468 = smul.u32 2, %s1467
        %p1469 = scmp.lt.s32.totalorder %s39, 1
        %s1470 = scalar_select %p1469, %s39, 1
        %s1471 = smul.u32 2, %s1470
        %p1472 = scmp.lt.s32.totalorder %s1471, 3
        %s1473 = scalar_select %p1472, %s1471, 3
        %s1474 = smul.addr %s1473, 8
        %s1475 = smul.addr %s1474, 4
        %s1476 = scalar_lea.vmem %s7, %s1475
        %p1477 = scmp.lt.s32.totalorder %s39, 1
        %s1478 = scalar_select %p1477, %s39, 1
        %s1479 = smul.u32 2, %s1478
        %p1480 = scmp.lt.s32.totalorder %s39, 1
        %s1481 = scalar_select %p1480, %s39, 1
        %s1482 = smul.u32 2, %s1481
        %p1483 = scmp.lt.s32.totalorder %s1482, 3
        %s1484 = scalar_select %p1483, %s1482, 3
        %s1485 = scalar_lea.vmem %s8, %s1484
        %p1486 = scmp.lt.s32.totalorder %s39, 1
        %s1487 = scalar_select %p1486, %s39, 1
        %s1488 = smul.u32 2, %s1487
        %p1489 = scmp.lt.s32.totalorder %s39, 1
        %s1490 = scalar_select %p1489, %s39, 1
        %s1491 = smul.u32 2, %s1490
        %p1492 = scmp.lt.s32.totalorder %s1491, 3
        %s1493 = scalar_select %p1492, %s1491, 3
        %s1494 = smul.addr %s1493, 16
        %s1495 = smul.addr %s1494, 4
        %s1496 = scalar_lea.vmem %s9, %s1495
        %p1497 = scmp.lt.s32.totalorder %s39, 1
        %s1498 = scalar_select %p1497, %s39, 1
        %s1499 = smul.u32 2, %s1498
        %p1500 = scmp.lt.s32.totalorder %s39, 1
        %s1501 = scalar_select %p1500, %s39, 1
        %s1502 = smul.u32 2, %s1501
        %p1503 = scmp.lt.s32.totalorder %s1502, 3
        %s1504 = scalar_select %p1503, %s1502, 3
        %s1505 = scalar_lea.vmem %s10, %s1504
        %p1506 = scmp.lt.s32.totalorder %s39, 1
        %s1507 = scalar_select %p1506, %s39, 1
        %s1508 = smul.u32 2, %s1507
        %p1509 = scmp.lt.s32.totalorder %s39, 1
        %s1510 = scalar_select %p1509, %s39, 1
        %s1511 = smul.u32 2, %s1510
        %p1512 = scmp.lt.s32.totalorder %s1511, 3
        %s1513 = scalar_select %p1512, %s1511, 3
        %s1514 = scalar_lea.vmem %s11, %s1513
        %p1515 = scmp.lt.s32.totalorder %s39, 1
        %s1516 = scalar_select %p1515, %s39, 1
        %s1517 = smul.u32 2, %s1516
        %p1518 = scmp.lt.s32.totalorder %s39, 1
        %s1519 = scalar_select %p1518, %s39, 1
        %s1520 = smul.u32 2, %s1519
        %p1521 = scmp.lt.s32.totalorder %s1520, 3
        %s1522 = scalar_select %p1521, %s1520, 3
        %s1523 = scalar_lea.vmem %s12, %s1522
        %p1524 = scmp.lt.s32.totalorder %s39, 1
        %s1525 = scalar_select %p1524, %s39, 1
        %s1526 = smul.u32 2, %s1525
        %p1527 = scmp.lt.s32.totalorder %s39, 1
        %s1528 = scalar_select %p1527, %s39, 1
        %s1529 = smul.u32 2, %s1528
        %p1530 = scmp.lt.s32.totalorder %s1529, 3
        %s1531 = scalar_select %p1530, %s1529, 3
        %s1532 = smul.addr %s1531, 8
        %s1533 = smul.addr %s1532, 4
        %s1534 = scalar_lea.vmem %s13, %s1533
        %p1535 = scmp.lt.s32.totalorder %s39, 1
        %s1536 = scalar_select %p1535, %s39, 1
        %s1537 = smul.u32 2, %s1536
        %p1538 = scmp.lt.s32.totalorder %s39, 1
        %s1539 = scalar_select %p1538, %s39, 1
        %s1540 = smul.u32 2, %s1539
        %p1541 = scmp.lt.s32.totalorder %s1540, 3
        %s1542 = scalar_select %p1541, %s1540, 3
        %s1543 = scalar_lea.vmem %s14, %s1542
        %p1544 = scmp.lt.s32.totalorder %s39, 1
        %s1545 = scalar_select %p1544, %s39, 1
        %s1546 = smul.u32 2, %s1545
        %s1547 = ssub.s32 %s39, 1
        %p1548 = scmp.gt.s32.totalorder %s1547, 0
        %s1549 = scalar_select %p1548, %s1547, 0
        %p1550 = scmp.lt.s32.totalorder %s1549, 1
        %s1551 = scalar_select %p1550, %s1549, 1
        %s1552 = smul.addr %s1551, 12
        %s1553 = smul.addr %s1552, 4
        %s1554 = scalar_lea.vmem %s15, %s1553
        %s1555 = ssub.s32 %s39, 1
        %p1556 = scmp.gt.s32.totalorder %s1555, 0
        %s1557 = scalar_select %p1556, %s1555, 0
        %s1558 = ssub.s32 %s39, 1
        %p1559 = scmp.gt.s32.totalorder %s1558, 0
        %s1560 = scalar_select %p1559, %s1558, 0
        %p1561 = scmp.lt.s32.totalorder %s1560, 1
        %s1562 = scalar_select %p1561, %s1560, 1
        %s1563 = smul.addr %s1562, 48
        %s1564 = smul.addr %s1563, 4
        %s1565 = scalar_lea.vmem %s16, %s1564
        %s1566 = ssub.s32 %s39, 1
        %p1567 = scmp.gt.s32.totalorder %s1566, 0
        %s1568 = scalar_select %p1567, %s1566, 0
        %s1569 = ssub.s32 %s39, 1
        %p1570 = scmp.gt.s32.totalorder %s1569, 0
        %s1571 = scalar_select %p1570, %s1569, 0
        %p1572 = scmp.lt.s32.totalorder %s1571, 1
        %s1573 = scalar_select %p1572, %s1571, 1
        %s1574 = smul.addr %s1573, 12
        %s1575 = smul.addr %s1574, 4
        %s1576 = scalar_lea.vmem %s17, %s1575
        %s1577 = ssub.s32 %s39, 1
        %p1578 = scmp.gt.s32.totalorder %s1577, 0
        %s1579 = scalar_select %p1578, %s1577, 0
        %s1580 = ssub.s32 %s39, 1
        %p1581 = scmp.gt.s32.totalorder %s1580, 0
        %s1582 = scalar_select %p1581, %s1580, 0
        %p1583 = scmp.lt.s32.totalorder %s1582, 1
        %s1584 = scalar_select %p1583, %s1582, 1
        %s1585 = smul.addr %s1584, 4
        %s1586 = smul.addr %s1585, 4
        %s1587 = scalar_lea.vmem %s18, %s1586
        %s1588 = ssub.s32 %s39, 1
        %p1589 = scmp.gt.s32.totalorder %s1588, 0
        %s1590 = scalar_select %p1589, %s1588, 0
        %s1591 = ssub.s32 %s39, 1
        %p1592 = scmp.gt.s32.totalorder %s1591, 0
        %s1593 = scalar_select %p1592, %s1591, 0
        %p1594 = scmp.lt.s32.totalorder %s1593, 1
        %s1595 = scalar_select %p1594, %s1593, 1
        %s1596 = scalar_lea.vmem %s19, %s1595
        %s1597 = ssub.s32 %s39, 1
        %p1598 = scmp.gt.s32.totalorder %s1597, 0
        %s1599 = scalar_select %p1598, %s1597, 0
        %s1600 = ssub.s32 %s39, 1
        %p1601 = scmp.gt.s32.totalorder %s1600, 0
        %s1602 = scalar_select %p1601, %s1600, 0
        %p1603 = scmp.lt.s32.totalorder %s1602, 1
        %s1604 = scalar_select %p1603, %s1602, 1
        %s1605 = scalar_lea.vmem %s20, %s1604
        %s1606 = ssub.s32 %s39, 1
        %p1607 = scmp.gt.s32.totalorder %s1606, 0
        %s1608 = scalar_select %p1607, %s1606, 0
        %s1609 = ssub.s32 %s39, 1
        %p1610 = scmp.gt.s32.totalorder %s1609, 0
        %s1611 = scalar_select %p1610, %s1609, 0
        %p1612 = scmp.lt.s32.totalorder %s1611, 1
        %s1613 = scalar_select %p1612, %s1611, 1
        %s1614 = smul.addr %s1613, 12
        %s1615 = smul.addr %s1614, 4
        %s1616 = scalar_lea.vmem %s21, %s1615
        %s1617 = ssub.s32 %s39, 1
        %p1618 = scmp.gt.s32.totalorder %s1617, 0
        %s1619 = scalar_select %p1618, %s1617, 0
        %s1620 = ssub.s32 %s39, 1
        %p1621 = scmp.gt.s32.totalorder %s1620, 0
        %s1622 = scalar_select %p1621, %s1620, 0
        %p1623 = scmp.lt.s32.totalorder %s1622, 1
        %s1624 = scalar_select %p1623, %s1622, 1
        %s1625 = scalar_lea.vmem %s22, %s1624
        %s1626 = ssub.s32 %s39, 1
        %p1627 = scmp.gt.s32.totalorder %s1626, 0
        %s1628 = scalar_select %p1627, %s1626, 0
        %s1629 = ssub.s32 %s39, 1
        %p1630 = scmp.gt.s32.totalorder %s1629, 0
        %s1631 = scalar_select %p1630, %s1629, 0
        %p1632 = scmp.lt.s32.totalorder %s1631, 1
        %s1633 = scalar_select %p1632, %s1631, 1
        %s1634 = smul.addr %s1633, 16
        %s1635 = smul.addr %s1634, 4
        %s1636 = scalar_lea.vmem %s23, %s1635
        %s1637 = ssub.s32 %s39, 1
        %p1638 = scmp.gt.s32.totalorder %s1637, 0
        %s1639 = scalar_select %p1638, %s1637, 0
        %s1640 = ssub.s32 %s39, 1
        %p1641 = scmp.gt.s32.totalorder %s1640, 0
        %s1642 = scalar_select %p1641, %s1640, 0
        %p1643 = scmp.lt.s32.totalorder %s1642, 1
        %s1644 = scalar_select %p1643, %s1642, 1
        %s1645 = scalar_lea.vmem %s24, %s1644
        %s1646 = ssub.s32 %s39, 1
        %p1647 = scmp.gt.s32.totalorder %s1646, 0
        %s1648 = scalar_select %p1647, %s1646, 0
        %s1649 = ssub.s32 %s39, 1
        %p1650 = scmp.gt.s32.totalorder %s1649, 0
        %s1651 = scalar_select %p1650, %s1649, 0
        %p1652 = scmp.lt.s32.totalorder %s1651, 1
        %s1653 = scalar_select %p1652, %s1651, 1
        %s1654 = scalar_lea.vmem %s25, %s1653
        %s1655 = ssub.s32 %s39, 1
        %p1656 = scmp.gt.s32.totalorder %s1655, 0
        %s1657 = scalar_select %p1656, %s1655, 0
        %s1658 = ssub.s32 %s39, 1
        %p1659 = scmp.gt.s32.totalorder %s1658, 0
        %s1660 = scalar_select %p1659, %s1658, 0
        %p1661 = scmp.lt.s32.totalorder %s1660, 1
        %s1662 = scalar_select %p1661, %s1660, 1
        %s1663 = scalar_lea.vmem %s26, %s1662
        %s1664 = ssub.s32 %s39, 1
        %p1665 = scmp.gt.s32.totalorder %s1664, 0
        %s1666 = scalar_select %p1665, %s1664, 0
        %p1668 = scmp.eq.s32.totalorder %s39, 0
        // Predicated region
        $region129: #{_encoder_forward_impl.1} parent=127 // pred_check
          %p1669 = pneg %p1668
        $region130: #{_encoder_forward_impl.1} parent=127 // pred_check_branch
          %1671 = sbr.rel (%p1669) target = $region132
        $region131: #{_encoder_forward_impl.1} parent=127 // pred_region
          %v1672 = vld [vmem:[%s0] sm:$0xff]
          %v1673 = vld [vmem:[%s0 + $0x8] sm:$0xff]
          %vm1674 = vcmask 523264
          %1675 = vst.msk [vmem:[#allocation2] sm:$0xff] %vm1674, %v1672
          %1676 = vst.msk [vmem:[#allocation2 + $0x8] sm:$0xff] %vm1674, %v1673
          %v1677 = vld [vmem:[%s1] sm:$0xff]
          %v1678 = vld [vmem:[%s1 + $0x8] sm:$0xff]
          %1679 = vst.msk [vmem:[#allocation3] sm:$0xff] %vm1674, %v1677
          %1680 = vst.msk [vmem:[#allocation3 + $0x8] sm:$0xff] %vm1674, %v1678
          %v1681 = vld [vmem:[%s2] sm:$0xff]
          %v1682 = vld [vmem:[%s2 + $0x8] sm:$0xff]
          %1683 = vst.msk [vmem:[#allocation4] sm:$0xff] %vm1674, %v1681
          %1684 = vst.msk [vmem:[#allocation4 + $0x8] sm:$0xff] %vm1674, %v1682
        $region132: #{_encoder_forward_impl.1} parent=127 // pred_fallthru
          _
        %p1685 = scmp.gt.s32.totalorder %s39, 0
        // Predicated region
        $region133: #{_encoder_forward_impl.1} parent=127 // pred_check
          %p1686 = pneg %p1685
        $region134: #{_encoder_forward_impl.1} parent=127 // pred_check_branch
          %1688 = sbr.rel (%p1686) target = $region136
        $region135: #{_encoder_forward_impl.1} parent=127 // pred_region
          %v1689 = vld [vmem:[#allocation5] sm:$0xff]
          %v1690 = vld [vmem:[#allocation5 + $0x8] sm:$0xff]
          %v1691 = vld [vmem:[#allocation6] sm:$0xff]
          %v1692 = vld [vmem:[#allocation6 + $0x8] sm:$0xff]
          %v1693 = vld [vmem:[#allocation4] sm:$0xff]
          %v1694 = vld [vmem:[#allocation4 + $0x8] sm:$0xff]
          %1697 = vrot.lane.b32.xlu0 %v1693, 16
          %v1698 = vpop.permute.xlu0 %1697
          %1699 = vrot.lane.b32.xlu0 %v1694, 16
          %v1700 = vpop.permute.xlu0 %1699
          %1705 = vrot.lane.b32.xlu0 %v1691, 80
          %v1706 = vpop.permute.xlu0 %1705
          %1707 = vrot.lane.b32.xlu0 %v1692, 80
          %v1708 = vpop.permute.xlu0 %1707
          %vm1711 = vcmask 130048
          %v1712 = vsel %vm1711, %v1689, %v1698
          %v1713 = vsel %vm1711, %v1690, %v1700
          %vm1714 = vcmask 654336
          %v1715 = vsel %vm1714, %v1712, %v1706
          %v1716 = vsel %vm1714, %v1713, %v1708
          %v1717 = vpack.c.bf16 %v1690, %v1689
          %v1718 = vpack.c.bf16 %v1694, %v1693
          %v1719 = vpack.c.bf16 %v1692, %v1691
          %v1720 = vld [vmem:[%s1596] sm:$0x1]
          %v1721 = vld [vmem:[%s1605] sm:$0x1]
          %v1722 = vld [vmem:[%s1554] sm:$0xf]
          %v1723 = vld [vmem:[%s1554 + $0x4] sm:$0xf]
          %v1724 = vld [vmem:[%s1565] sm:$0xf]
          %v1725 = vld [vmem:[%s1565 + $0x4] sm:$0xf]
          %v1726 = vld [vmem:[%s1565 + $0x8] sm:$0xf]
          %v1727 = vld [vmem:[%s1565 + $0xc] sm:$0xf]
          %v1728 = vld [vmem:[%s1565 + $0x10] sm:$0xf]
          %v1729 = vld [vmem:[%s1565 + $0x14] sm:$0xf]
          %v1730 = vld [vmem:[%s1565 + $0x18] sm:$0xf]
          %v1731 = vld [vmem:[%s1565 + $0x1c] sm:$0xf]
          %v1740 = vunpack.c.l.b16 %v1724
          %v1741 = vunpack.c.l.b16 %v1725
          %v1742 = vunpack.c.l.b16 %v1726
          %v1743 = vunpack.c.l.b16 %v1727
          %v1744 = vunpack.c.l.b16 %v1728
          %v1745 = vunpack.c.l.b16 %v1729
          %v1746 = vunpack.c.l.b16 %v1730
          %v1747 = vunpack.c.l.b16 %v1731
          %v1748 = vpack.c.b16 %v1741, %v1740
          %v1749 = vpack.c.b16 %v1743, %v1742
          %v1750 = vpack.c.b16 %v1745, %v1744
          %v1751 = vpack.c.b16 %v1747, %v1746
          %vm1756 = vcmask 523264
          %v1758 = vsel %vm1756, %v1718, 0
          %1760 = vmatprep.subr.bf16.mxu0 0
          %1761 = vmatpush1.bf16.msra.mxu0 %v1748
          %1762 = vmatprep.subr.bf16.mxu0 0
          %1763 = vmatpush1.bf16.msra.mxu0 %v1749
          %1764 = vmatprep.subr.bf16.mxu0 0
          %1765 = vmatpush1.bf16.msra.mxu0 %v1750
          %1766 = vmatprep.subr.bf16.mxu0 0
          %1767 = vmatpush1.bf16.msra.mxu0 %v1751
          %1768 = vmatprep.subr.bf16.mxu0 0
          %1769 = vmatpush1.bf16.msra.mxu0 0
          %1770 = vmatprep.subr.bf16.mxu0 0
          %1771 = vmatpush1.bf16.msra.mxu0 0
          %1772 = vmatprep.subr.bf16.mxu0 0
          %1773 = vmatpush1.bf16.msra.mxu0 0
          %1774 = vmatprep.subr.bf16.mxu0 0
          %1775 = vmatpush1.bf16.msra.mxu0 0
          %1776 = vmatprep.subr.bf16.mxu0 0
          %1777 = vmatpush1.bf16.msra.mxu0 0
          %1778 = vmatprep.subr.bf16.mxu0 0
          %1779 = vmatpush1.bf16.msra.mxu0 0
          %1780 = vmatprep.subr.bf16.mxu0 0
          %1781 = vmatpush1.bf16.msra.mxu0 0
          %1782 = vmatprep.subr.bf16.mxu0 0
          %1783 = vmatpush1.bf16.msra.mxu0 0
          %1784 = vmatprep.subr.bf16.mxu0 0
          %1785 = vmatpush1.bf16.msra.mxu0 0
          %1786 = vmatprep.subr.bf16.mxu0 0
          %1787 = vmatpush1.bf16.msra.mxu0 0
          %1788 = vmatprep.subr.bf16.mxu0 0
          %1789 = vmatpush1.bf16.msra.mxu0 0
          %1790 = vmatprep.subr.bf16.mxu0 0
          %1791 = vmatpush1.bf16.msra.mxu0 0
          %1792 = vmatprep.mubr.bf16.mxu0 0
          %1793 = vmatmul.mubr.bf16.gmra.mrb[0].mxu0 %v1758
          %v1794 = vpop.f32.mrb[0].mxu0
          %v1795 = vadd.f32 0.0, %v1794
          %v1796 = vpop.f32.mrb[0].mxu0
          %v1797 = vpop.f32.mrb[0].mxu0
          %v1798 = vadd.f32 0.0, %v1797
          %v1799 = vpop.f32.mrb[0].mxu0
          %1800 = vdwg.mxu0
          %v1803 = vunpack.c.l.b16 %v1722
          %v1804 = vunpack.c.l.b16 %v1723
          %v1805 = vpack.c.b16 %v1804, %v1803
          %v1808 = vsel %vm1711, %v1717, 0
          %1810 = vmatprep.subr.bf16.mxu0 0
          %1811 = vmatpush1.bf16.msra.mxu0 %v1805
          %1812 = vmatprep.subr.bf16.mxu0 0
          %1813 = vmatpush1.bf16.msra.mxu0 0
          %1814 = vmatprep.subr.bf16.mxu0 0
          %1815 = vmatpush1.bf16.msra.mxu0 0
          %1816 = vmatprep.subr.bf16.mxu0 0
          %1817 = vmatpush1.bf16.msra.mxu0 0
          %1818 = vmatprep.subr.bf16.mxu0 0
          %1819 = vmatpush1.bf16.msra.mxu0 0
          %1820 = vmatprep.subr.bf16.mxu0 0
          %1821 = vmatpush1.bf16.msra.mxu0 0
          %1822 = vmatprep.subr.bf16.mxu0 0
          %1823 = vmatpush1.bf16.msra.mxu0 0
          %1824 = vmatprep.subr.bf16.mxu0 0
          %1825 = vmatpush1.bf16.msra.mxu0 0
          %1826 = vmatprep.subr.bf16.mxu0 0
          %1827 = vmatpush1.bf16.msra.mxu0 0
          %1828 = vmatprep.subr.bf16.mxu0 0
          %1829 = vmatpush1.bf16.msra.mxu0 0
          %1830 = vmatprep.subr.bf16.mxu0 0
          %1831 = vmatpush1.bf16.msra.mxu0 0
          %1832 = vmatprep.subr.bf16.mxu0 0
          %1833 = vmatpush1.bf16.msra.mxu0 0
          %1834 = vmatprep.subr.bf16.mxu0 0
          %1835 = vmatpush1.bf16.msra.mxu0 0
          %1836 = vmatprep.subr.bf16.mxu0 0
          %1837 = vmatpush1.bf16.msra.mxu0 0
          %1838 = vmatprep.subr.bf16.mxu0 0
          %1839 = vmatpush1.bf16.msra.mxu0 0
          %1840 = vmatprep.subr.bf16.mxu0 0
          %1841 = vmatpush1.bf16.msra.mxu0 0
          %1842 = vmatprep.mubr.bf16.mxu0 0
          %1843 = vmatmul.mubr.bf16.gmra.mrb[0].mxu0 %v1808
          %v1844 = vpop.f32.mrb[0].mxu0
          %v1845 = vadd.f32 %v1795, %v1844
          %v1846 = vpop.f32.mrb[0].mxu0
          %v1847 = vpop.f32.mrb[0].mxu0
          %v1848 = vadd.f32 %v1798, %v1847
          %v1849 = vpop.f32.mrb[0].mxu0
          %1850 = vdwg.mxu0
          %v1851 = vld [vmem:[%s1576] sm:$0xf]
          %v1852 = vld [vmem:[%s1576 + $0x4] sm:$0xf]
          %v1855 = vunpack.c.l.b16 %v1851
          %v1856 = vunpack.c.l.b16 %v1852
          %v1857 = vpack.c.b16 %v1856, %v1855
          %v1860 = vsel %vm1711, %v1719, 0
          %1862 = vmatprep.subr.bf16.mxu0 0
          %1863 = vmatpush1.bf16.msra.mxu0 %v1857
          %1864 = vmatprep.subr.bf16.mxu0 0
          %1865 = vmatpush1.bf16.msra.mxu0 0
          %1866 = vmatprep.subr.bf16.mxu0 0
          %1867 = vmatpush1.bf16.msra.mxu0 0
          %1868 = vmatprep.subr.bf16.mxu0 0
          %1869 = vmatpush1.bf16.msra.mxu0 0
          %1870 = vmatprep.subr.bf16.mxu0 0
          %1871 = vmatpush1.bf16.msra.mxu0 0
          %1872 = vmatprep.subr.bf16.mxu0 0
          %1873 = vmatpush1.bf16.msra.mxu0 0
          %1874 = vmatprep.subr.bf16.mxu0 0
          %1875 = vmatpush1.bf16.msra.mxu0 0
          %1876 = vmatprep.subr.bf16.mxu0 0
          %1877 = vmatpush1.bf16.msra.mxu0 0
          %1878 = vmatprep.subr.bf16.mxu0 0
          %1879 = vmatpush1.bf16.msra.mxu0 0
          %1880 = vmatprep.subr.bf16.mxu0 0
          %1881 = vmatpush1.bf16.msra.mxu0 0
          %1882 = vmatprep.subr.bf16.mxu0 0
          %1883 = vmatpush1.bf16.msra.mxu0 0
          %1884 = vmatprep.subr.bf16.mxu0 0
          %1885 = vmatpush1.bf16.msra.mxu0 0
          %1886 = vmatprep.subr.bf16.mxu0 0
          %1887 = vmatpush1.bf16.msra.mxu0 0
          %1888 = vmatprep.subr.bf16.mxu0 0
          %1889 = vmatpush1.bf16.msra.mxu0 0
          %1890 = vmatprep.subr.bf16.mxu0 0
          %1891 = vmatpush1.bf16.msra.mxu0 0
          %1892 = vmatprep.subr.bf16.mxu0 0
          %1893 = vmatpush1.bf16.msra.mxu0 0
          %1894 = vmatprep.mubr.bf16.mxu0 0
          %1895 = vmatmul.mubr.bf16.gmra.mrb[0].mxu0 %v1860
          %v1896 = vpop.f32.mrb[0].mxu0
          %v1897 = vadd.f32 0.0, %v1896
          %v1898 = vpop.f32.mrb[0].mxu0
          %v1899 = vpop.f32.mrb[0].mxu0
          %v1900 = vadd.f32 0.0, %v1899
          %v1901 = vpop.f32.mrb[0].mxu0
          %1902 = vdwg.mxu0
          %v1903 = vadd.f32 %v1845, %v1897
          %v1904 = vadd.f32 %v1848, %v1900
          %s1905 = scalar_lea.vmem %s1554, 16
          %v1906 = vld [vmem:[%s1905] sm:$0xf]
          %v1907 = vld [vmem:[%s1905 + $0x4] sm:$0xf]
          %s1908 = scalar_lea.vmem %s1565, 64
          %v1909 = vld [vmem:[%s1908] sm:$0xf]
          %v1910 = vld [vmem:[%s1908 + $0x4] sm:$0xf]
          %v1911 = vld [vmem:[%s1908 + $0x8] sm:$0xf]
          %v1912 = vld [vmem:[%s1908 + $0xc] sm:$0xf]
          %v1913 = vld [vmem:[%s1908 + $0x10] sm:$0xf]
          %v1914 = vld [vmem:[%s1908 + $0x14] sm:$0xf]
          %v1915 = vld [vmem:[%s1908 + $0x18] sm:$0xf]
          %v1916 = vld [vmem:[%s1908 + $0x1c] sm:$0xf]
          %v1925 = vunpack.c.l.b16 %v1909
          %v1926 = vunpack.c.l.b16 %v1910
          %v1927 = vunpack.c.l.b16 %v1911
          %v1928 = vunpack.c.l.b16 %v1912
          %v1929 = vunpack.c.l.b16 %v1913
          %v1930 = vunpack.c.l.b16 %v1914
          %v1931 = vunpack.c.l.b16 %v1915
          %v1932 = vunpack.c.l.b16 %v1916
          %v1933 = vpack.c.b16 %v1926, %v1925
          %v1934 = vpack.c.b16 %v1928, %v1927
          %v1935 = vpack.c.b16 %v1930, %v1929
          %v1936 = vpack.c.b16 %v1932, %v1931
          %1941 = vmatprep.subr.bf16.mxu0 0
          %1942 = vmatpush1.bf16.msra.mxu0 %v1933
          %1943 = vmatprep.subr.bf16.mxu0 0
          %1944 = vmatpush1.bf16.msra.mxu0 %v1934
          %1945 = vmatprep.subr.bf16.mxu0 0
          %1946 = vmatpush1.bf16.msra.mxu0 %v1935
          %1947 = vmatprep.subr.bf16.mxu0 0
          %1948 = vmatpush1.bf16.msra.mxu0 %v1936
          %1949 = vmatprep.subr.bf16.mxu0 0
          %1950 = vmatpush1.bf16.msra.mxu0 0
          %1951 = vmatprep.subr.bf16.mxu0 0
          %1952 = vmatpush1.bf16.msra.mxu0 0
          %1953 = vmatprep.subr.bf16.mxu0 0
          %1954 = vmatpush1.bf16.msra.mxu0 0
          %1955 = vmatprep.subr.bf16.mxu0 0
          %1956 = vmatpush1.bf16.msra.mxu0 0
          %1957 = vmatprep.subr.bf16.mxu0 0
          %1958 = vmatpush1.bf16.msra.mxu0 0
          %1959 = vmatprep.subr.bf16.mxu0 0
          %1960 = vmatpush1.bf16.msra.mxu0 0
          %1961 = vmatprep.subr.bf16.mxu0 0
          %1962 = vmatpush1.bf16.msra.mxu0 0
          %1963 = vmatprep.subr.bf16.mxu0 0
          %1964 = vmatpush1.bf16.msra.mxu0 0
          %1965 = vmatprep.subr.bf16.mxu0 0
          %1966 = vmatpush1.bf16.msra.mxu0 0
          %1967 = vmatprep.subr.bf16.mxu0 0
          %1968 = vmatpush1.bf16.msra.mxu0 0
          %1969 = vmatprep.subr.bf16.mxu0 0
          %1970 = vmatpush1.bf16.msra.mxu0 0
          %1971 = vmatprep.subr.bf16.mxu0 0
          %1972 = vmatpush1.bf16.msra.mxu0 0
          %1973 = vmatprep.mubr.bf16.mxu0 0
          %1974 = vmatmul.mubr.bf16.gmra.mrb[0].mxu0 %v1758
          %v1975 = vpop.f32.mrb[0].mxu0
          %v1976 = vadd.f32 0.0, %v1975
          %v1977 = vpop.f32.mrb[0].mxu0
          %v1978 = vpop.f32.mrb[0].mxu0
          %v1979 = vadd.f32 0.0, %v1978
          %v1980 = vpop.f32.mrb[0].mxu0
          %1981 = vdwg.mxu0
          %v1984 = vunpack.c.l.b16 %v1906
          %v1985 = vunpack.c.l.b16 %v1907
          %v1986 = vpack.c.b16 %v1985, %v1984
          %1988 = vmatprep.subr.bf16.mxu0 0
          %1989 = vmatpush1.bf16.msra.mxu0 %v1986
          %1990 = vmatprep.subr.bf16.mxu0 0
          %1991 = vmatpush1.bf16.msra.mxu0 0
          %1992 = vmatprep.subr.bf16.mxu0 0
          %1993 = vmatpush1.bf16.msra.mxu0 0
          %1994 = vmatprep.subr.bf16.mxu0 0
          %1995 = vmatpush1.bf16.msra.mxu0 0
          %1996 = vmatprep.subr.bf16.mxu0 0
          %1997 = vmatpush1.bf16.msra.mxu0 0
          %1998 = vmatprep.subr.bf16.mxu0 0
          %1999 = vmatpush1.bf16.msra.mxu0 0
          %2000 = vmatprep.subr.bf16.mxu0 0
          %2001 = vmatpush1.bf16.msra.mxu0 0
          %2002 = vmatprep.subr.bf16.mxu0 0
          %2003 = vmatpush1.bf16.msra.mxu0 0
          %2004 = vmatprep.subr.bf16.mxu0 0
          %2005 = vmatpush1.bf16.msra.mxu0 0
          %2006 = vmatprep.subr.bf16.mxu0 0
          %2007 = vmatpush1.bf16.msra.mxu0 0
          %2008 = vmatprep.subr.bf16.mxu0 0
          %2009 = vmatpush1.bf16.msra.mxu0 0
          %2010 = vmatprep.subr.bf16.mxu0 0
          %2011 = vmatpush1.bf16.msra.mxu0 0
          %2012 = vmatprep.subr.bf16.mxu0 0
          %2013 = vmatpush1.bf16.msra.mxu0 0
          %2014 = vmatprep.subr.bf16.mxu0 0
          %2015 = vmatpush1.bf16.msra.mxu0 0
          %2016 = vmatprep.subr.bf16.mxu0 0
          %2017 = vmatpush1.bf16.msra.mxu0 0
          %2018 = vmatprep.subr.bf16.mxu0 0
          %2019 = vmatpush1.bf16.msra.mxu0 0
          %2020 = vmatprep.mubr.bf16.mxu0 0
          %2021 = vmatmul.mubr.bf16.gmra.mrb[0].mxu0 %v1808
          %v2022 = vpop.f32.mrb[0].mxu0
          %v2023 = vadd.f32 %v1976, %v2022
          %v2024 = vpop.f32.mrb[0].mxu0
          %v2025 = vpop.f32.mrb[0].mxu0
          %v2026 = vadd.f32 %v1979, %v2025
          %v2027 = vpop.f32.mrb[0].mxu0
          %2028 = vdwg.mxu0
          %s2029 = scalar_lea.vmem %s1576, 16
          %v2030 = vld [vmem:[%s2029] sm:$0xf]
          %v2031 = vld [vmem:[%s2029 + $0x4] sm:$0xf]
          %v2034 = vunpack.c.l.b16 %v2030
          %v2035 = vunpack.c.l.b16 %v2031
          %v2036 = vpack.c.b16 %v2035, %v2034
          %2038 = vmatprep.subr.bf16.mxu0 0
          %2039 = vmatpush1.bf16.msra.mxu0 %v2036
          %2040 = vmatprep.subr.bf16.mxu0 0
          %2041 = vmatpush1.bf16.msra.mxu0 0
          %2042 = vmatprep.subr.bf16.mxu0 0
          %2043 = vmatpush1.bf16.msra.mxu0 0
          %2044 = vmatprep.subr.bf16.mxu0 0
          %2045 = vmatpush1.bf16.msra.mxu0 0
          %2046 = vmatprep.subr.bf16.mxu0 0
          %2047 = vmatpush1.bf16.msra.mxu0 0
          %2048 = vmatprep.subr.bf16.mxu0 0
          %2049 = vmatpush1.bf16.msra.mxu0 0
          %2050 = vmatprep.subr.bf16.mxu0 0
          %2051 = vmatpush1.bf16.msra.mxu0 0
          %2052 = vmatprep.subr.bf16.mxu0 0
          %2053 = vmatpush1.bf16.msra.mxu0 0
          %2054 = vmatprep.subr.bf16.mxu0 0
          %2055 = vmatpush1.bf16.msra.mxu0 0
          %2056 = vmatprep.subr.bf16.mxu0 0
          %2057 = vmatpush1.bf16.msra.mxu0 0
          %2058 = vmatprep.subr.bf16.mxu0 0
          %2059 = vmatpush1.bf16.msra.mxu0 0
          %2060 = vmatprep.subr.bf16.mxu0 0
          %2061 = vmatpush1.bf16.msra.mxu0 0
          %2062 = vmatprep.subr.bf16.mxu0 0
          %2063 = vmatpush1.bf16.msra.mxu0 0
          %2064 = vmatprep.subr.bf16.mxu0 0
          %2065 = vmatpush1.bf16.msra.mxu0 0
          %2066 = vmatprep.subr.bf16.mxu0 0
          %2067 = vmatpush1.bf16.msra.mxu0 0
          %2068 = vmatprep.subr.bf16.mxu0 0
          %2069 = vmatpush1.bf16.msra.mxu0 0
          %2070 = vmatprep.mubr.bf16.mxu0 0
          %2071 = vmatmul.mubr.bf16.gmra.mrb[0].mxu0 %v1860
          %v2072 = vpop.f32.mrb[0].mxu0
          %v2073 = vadd.f32 0.0, %v2072
          %v2074 = vpop.f32.mrb[0].mxu0
          %v2075 = vpop.f32.mrb[0].mxu0
          %v2076 = vadd.f32 0.0, %v2075
          %v2077 = vpop.f32.mrb[0].mxu0
          %2078 = vdwg.mxu0
          %v2079 = vadd.f32 %v2023, %v2073
          %v2080 = vadd.f32 %v2026, %v2076
          %s2081 = scalar_lea.vmem %s1554, 32
          %v2082 = vld [vmem:[%s2081] sm:$0xf]
          %v2083 = vld [vmem:[%s2081 + $0x4] sm:$0xf]
          %s2084 = scalar_lea.vmem %s1565, 128
          %v2085 = vld [vmem:[%s2084] sm:$0xf]
          %v2086 = vld [vmem:[%s2084 + $0x4] sm:$0xf]
          %v2087 = vld [vmem:[%s2084 + $0x8] sm:$0xf]
          %v2088 = vld [vmem:[%s2084 + $0xc] sm:$0xf]
          %v2089 = vld [vmem:[%s2084 + $0x10] sm:$0xf]
          %v2090 = vld [vmem:[%s2084 + $0x14] sm:$0xf]
          %v2091 = vld [vmem:[%s2084 + $0x18] sm:$0xf]
          %v2092 = vld [vmem:[%s2084 + $0x1c] sm:$0xf]
          %v2101 = vunpack.c.l.b16 %v2085
          %v2102 = vunpack.c.l.b16 %v2086
          %v2103 = vunpack.c.l.b16 %v2087
          %v2104 = vunpack.c.l.b16 %v2088
          %v2105 = vunpack.c.l.b16 %v2089
          %v2106 = vunpack.c.l.b16 %v2090
          %v2107 = vunpack.c.l.b16 %v2091
          %v2108 = vunpack.c.l.b16 %v2092
          %v2109 = vpack.c.b16 %v2102, %v2101
          %v2110 = vpack.c.b16 %v2104, %v2103
          %v2111 = vpack.c.b16 %v2106, %v2105
          %v2112 = vpack.c.b16 %v2108, %v2107
          %2117 = vmatprep.subr.bf16.mxu0 0
          %2118 = vmatpush1.bf16.msra.mxu0 %v2109
          %2119 = vmatprep.subr.bf16.mxu0 0
          %2120 = vmatpush1.bf16.msra.mxu0 %v2110
          %2121 = vmatprep.subr.bf16.mxu0 0
          %2122 = vmatpush1.bf16.msra.mxu0 %v2111
          %2123 = vmatprep.subr.bf16.mxu0 0
          %2124 = vmatpush1.bf16.msra.mxu0 %v2112
          %2125 = vmatprep.subr.bf16.mxu0 0
          %2126 = vmatpush1.bf16.msra.mxu0 0
          %2127 = vmatprep.subr.bf16.mxu0 0
          %2128 = vmatpush1.bf16.msra.mxu0 0
          %2129 = vmatprep.subr.bf16.mxu0 0
          %2130 = vmatpush1.bf16.msra.mxu0 0
          %2131 = vmatprep.subr.bf16.mxu0 0
          %2132 = vmatpush1.bf16.msra.mxu0 0
          %2133 = vmatprep.subr.bf16.mxu0 0
          %2134 = vmatpush1.bf16.msra.mxu0 0
          %2135 = vmatprep.subr.bf16.mxu0 0
          %2136 = vmatpush1.bf16.msra.mxu0 0
          %2137 = vmatprep.subr.bf16.mxu0 0
          %2138 = vmatpush1.bf16.msra.mxu0 0
          %2139 = vmatprep.subr.bf16.mxu0 0
          %2140 = vmatpush1.bf16.msra.mxu0 0
          %2141 = vmatprep.subr.bf16.mxu0 0
          %2142 = vmatpush1.bf16.msra.mxu0 0
          %2143 = vmatprep.subr.bf16.mxu0 0
          %2144 = vmatpush1.bf16.msra.mxu0 0
          %2145 = vmatprep.subr.bf16.mxu0 0
          %2146 = vmatpush1.bf16.msra.mxu0 0
          %2147 = vmatprep.subr.bf16.mxu0 0
          %2148 = vmatpush1.bf16.msra.mxu0 0
          %2149 = vmatprep.mubr.bf16.mxu0 0
          %2150 = vmatmul.mubr.bf16.gmra.mrb[0].mxu0 %v1758
          %v2151 = vpop.f32.mrb[0].mxu0
          %v2152 = vadd.f32 0.0, %v2151
          %v2153 = vpop.f32.mrb[0].mxu0
          %v2154 = vpop.f32.mrb[0].mxu0
          %v2155 = vadd.f32 0.0, %v2154
          %v2156 = vpop.f32.mrb[0].mxu0
          %2157 = vdwg.mxu0
          %v2160 = vunpack.c.l.b16 %v2082
          %v2161 = vunpack.c.l.b16 %v2083
          %v2162 = vpack.c.b16 %v2161, %v2160
          %2164 = vmatprep.subr.bf16.mxu0 0
          %2165 = vmatpush1.bf16.msra.mxu0 %v2162
          %2166 = vmatprep.subr.bf16.mxu0 0
          %2167 = vmatpush1.bf16.msra.mxu0 0
          %2168 = vmatprep.subr.bf16.mxu0 0
          %2169 = vmatpush1.bf16.msra.mxu0 0
          %2170 = vmatprep.subr.bf16.mxu0 0
          %2171 = vmatpush1.bf16.msra.mxu0 0
          %2172 = vmatprep.subr.bf16.mxu0 0
          %2173 = vmatpush1.bf16.msra.mxu0 0
          %2174 = vmatprep.subr.bf16.mxu0 0
          %2175 = vmatpush1.bf16.msra.mxu0 0
          %2176 = vmatprep.subr.bf16.mxu0 0
          %2177 = vmatpush1.bf16.msra.mxu0 0
          %2178 = vmatprep.subr.bf16.mxu0 0
          %2179 = vmatpush1.bf16.msra.mxu0 0
          %2180 = vmatprep.subr.bf16.mxu0 0
          %2181 = vmatpush1.bf16.msra.mxu0 0
          %2182 = vmatprep.subr.bf16.mxu0 0
          %2183 = vmatpush1.bf16.msra.mxu0 0
          %2184 = vmatprep.subr.bf16.mxu0 0
          %2185 = vmatpush1.bf16.msra.mxu0 0
          %2186 = vmatprep.subr.bf16.mxu0 0
          %2187 = vmatpush1.bf16.msra.mxu0 0
          %2188 = vmatprep.subr.bf16.mxu0 0
          %2189 = vmatpush1.bf16.msra.mxu0 0
          %2190 = vmatprep.subr.bf16.mxu0 0
          %2191 = vmatpush1.bf16.msra.mxu0 0
          %2192 = vmatprep.subr.bf16.mxu0 0
          %2193 = vmatpush1.bf16.msra.mxu0 0
          %2194 = vmatprep.subr.bf16.mxu0 0
          %2195 = vmatpush1.bf16.msra.mxu0 0
          %2196 = vmatprep.mubr.bf16.mxu0 0
          %2197 = vmatmul.mubr.bf16.gmra.mrb[0].mxu0 %v1808
          %v2198 = vpop.f32.mrb[0].mxu0
          %v2199 = vadd.f32 %v2152, %v2198
          %v2200 = vpop.f32.mrb[0].mxu0
          %v2201 = vpop.f32.mrb[0].mxu0
          %v2202 = vadd.f32 %v2155, %v2201
          %v2203 = vpop.f32.mrb[0].mxu0
          %2204 = vdwg.mxu0
          %s2205 = scalar_lea.vmem %s1576, 32
          %v2206 = vld [vmem:[%s2205] sm:$0xf]
          %v2207 = vld [vmem:[%s2205 + $0x4] sm:$0xf]
          %v2210 = vunpack.c.l.b16 %v2206
          %v2211 = vunpack.c.l.b16 %v2207
          %v2212 = vpack.c.b16 %v2211, %v2210
          %2214 = vmatprep.subr.bf16.mxu0 0
          %2215 = vmatpush1.bf16.msra.mxu0 %v2212
          %2216 = vmatprep.subr.bf16.mxu0 0
          %2217 = vmatpush1.bf16.msra.mxu0 0
          %2218 = vmatprep.subr.bf16.mxu0 0
          %2219 = vmatpush1.bf16.msra.mxu0 0
          %2220 = vmatprep.subr.bf16.mxu0 0
          %2221 = vmatpush1.bf16.msra.mxu0 0
          %2222 = vmatprep.subr.bf16.mxu0 0
          %2223 = vmatpush1.bf16.msra.mxu0 0
          %2224 = vmatprep.subr.bf16.mxu0 0
          %2225 = vmatpush1.bf16.msra.mxu0 0
          %2226 = vmatprep.subr.bf16.mxu0 0
          %2227 = vmatpush1.bf16.msra.mxu0 0
          %2228 = vmatprep.subr.bf16.mxu0 0
          %2229 = vmatpush1.bf16.msra.mxu0 0
          %2230 = vmatprep.subr.bf16.mxu0 0
          %2231 = vmatpush1.bf16.msra.mxu0 0
          %2232 = vmatprep.subr.bf16.mxu0 0
          %2233 = vmatpush1.bf16.msra.mxu0 0
          %2234 = vmatprep.subr.bf16.mxu0 0
          %2235 = vmatpush1.bf16.msra.mxu0 0
          %2236 = vmatprep.subr.bf16.mxu0 0
          %2237 = vmatpush1.bf16.msra.mxu0 0
          %2238 = vmatprep.subr.bf16.mxu0 0
          %2239 = vmatpush1.bf16.msra.mxu0 0
          %2240 = vmatprep.subr.bf16.mxu0 0
          %2241 = vmatpush1.bf16.msra.mxu0 0
          %2242 = vmatprep.subr.bf16.mxu0 0
          %2243 = vmatpush1.bf16.msra.mxu0 0
          %2244 = vmatprep.subr.bf16.mxu0 0
          %2245 = vmatpush1.bf16.msra.mxu0 0
          %2246 = vmatprep.mubr.bf16.mxu0 0
          %2247 = vmatmul.mubr.bf16.gmra.mrb[0].mxu0 %v1860
          %v2248 = vpop.f32.mrb[0].mxu0
          %v2249 = vadd.f32 0.0, %v2248
          %v2250 = vpop.f32.mrb[0].mxu0
          %v2251 = vpop.f32.mrb[0].mxu0
          %v2252 = vadd.f32 0.0, %v2251
          %v2253 = vpop.f32.mrb[0].mxu0
          %2254 = vdwg.mxu0
          %v2255 = vadd.f32 %v2199, %v2249
          %v2256 = vadd.f32 %v2202, %v2252
          %v2257 = vpack.c.bf16 %v1903, %v1903
          %v2258 = vpack.c.bf16 %v2079, %v2079
          %v2259 = vpack.c.bf16 %v2255, %v2255
          %v2261 = vsel %vm1711, %v2257, 0
          %v2264 = vsel %vm1711, %v2258, 0
          %2266 = vmatprep.subr.bf16.mxu0 0
          %2267 = vmatpush1.bf16.xpose.msra.mxu0 %v2264
          %2268 = vmatprep.subr.bf16.mxu0 0
          %2269 = vmatpush1.bf16.xpose.msra.mxu0 0
          %2270 = vmatprep.subr.bf16.mxu0 0
          %2271 = vmatpush1.bf16.xpose.msra.mxu0 0
          %2272 = vmatprep.subr.bf16.mxu0 0
          %2273 = vmatpush1.bf16.xpose.msra.mxu0 0
          %2274 = vmatprep.subr.bf16.mxu0 0
          %2275 = vmatpush1.bf16.xpose.msra.mxu0 0
          %2276 = vmatprep.subr.bf16.mxu0 0
          %2277 = vmatpush1.bf16.xpose.msra.mxu0 0
          %2278 = vmatprep.subr.bf16.mxu0 0
          %2279 = vmatpush1.bf16.xpose.msra.mxu0 0
          %2280 = vmatprep.subr.bf16.mxu0 0
          %2281 = vmatpush1.bf16.xpose.msra.mxu0 0
          %2282 = vmatprep.subr.bf16.mxu0 0
          %2283 = vmatpush1.bf16.xpose.msra.mxu0 0
          %2284 = vmatprep.subr.bf16.mxu0 0
          %2285 = vmatpush1.bf16.xpose.msra.mxu0 0
          %2286 = vmatprep.subr.bf16.mxu0 0
          %2287 = vmatpush1.bf16.xpose.msra.mxu0 0
          %2288 = vmatprep.subr.bf16.mxu0 0
          %2289 = vmatpush1.bf16.xpose.msra.mxu0 0
          %2290 = vmatprep.subr.bf16.mxu0 0
          %2291 = vmatpush1.bf16.xpose.msra.mxu0 0
          %2292 = vmatprep.subr.bf16.mxu0 0
          %2293 = vmatpush1.bf16.xpose.msra.mxu0 0
          %2294 = vmatprep.subr.bf16.mxu0 0
          %2295 = vmatpush1.bf16.xpose.msra.mxu0 0
          %2296 = vmatprep.subr.bf16.mxu0 0
          %2297 = vmatpush1.bf16.xpose.msra.mxu0 0
          %2298 = vmatprep.mubr.bf16.mxu0 0
          %2299 = vmatmul.mubr.bf16.gmra.mrb[0].mxu0 %v2261
          %v2300 = vpop.f32.mrb[0].mxu0
          %v2301 = vadd.f32 0.0, %v2300
          %v2302 = vpop.f32.mrb[0].mxu0
          %v2303 = vpop.f32.mrb[0].mxu0
          %v2304 = vpop.f32.mrb[0].mxu0
          %2305 = vdwg.mxu0
          %vm2306 = vcmask 64512
          %v2307 = vsel %vm2306, %v2301, -inf
          %2308 = vmax.xlane.f32.xlu0 %v2307
          %v2309 = vpop.xlane.xlu0 %2308
          %v2310 = vsub.f32 %v2301, %v2309
          %v2311 = vmul.f32 %v2310, 1.442695
          %v2312 = vpow.pop %v2311
          %v2313 = vsel %vm2306, %v2312, 0.0
          %2314 = vadd.xlane.f32.xlu0 %v2313
          %v2315 = vpop.xlane.xlu0 %2314
          %v2316 = vrcp.pop %v2315
          %v2317 = vmul.f32 %v2312, %v2316
          %v2318 = vpack.c.bf16 %v2317, %v2317
          %v2320 = vsel %vm2306, %v2318, 0
          %vm2322 = vcmask 1043456
          %v2324 = vsel %vm2322, %v2259, 0
          %2326 = vmatprep.subr.bf16.mxu0 0
          %2327 = vmatpush1.bf16.msra.mxu0 %v2324
          %2328 = vmatprep.subr.bf16.mxu0 0
          %2329 = vmatpush1.bf16.msra.mxu0 0
          %2330 = vmatprep.subr.bf16.mxu0 0
          %2331 = vmatpush1.bf16.msra.mxu0 0
          %2332 = vmatprep.subr.bf16.mxu0 0
          %2333 = vmatpush1.bf16.msra.mxu0 0
          %2334 = vmatprep.subr.bf16.mxu0 0
          %2335 = vmatpush1.bf16.msra.mxu0 0
          %2336 = vmatprep.subr.bf16.mxu0 0
          %2337 = vmatpush1.bf16.msra.mxu0 0
          %2338 = vmatprep.subr.bf16.mxu0 0
          %2339 = vmatpush1.bf16.msra.mxu0 0
          %2340 = vmatprep.subr.bf16.mxu0 0
          %2341 = vmatpush1.bf16.msra.mxu0 0
          %2342 = vmatprep.subr.bf16.mxu0 0
          %2343 = vmatpush1.bf16.msra.mxu0 0
          %2344 = vmatprep.subr.bf16.mxu0 0
          %2345 = vmatpush1.bf16.msra.mxu0 0
          %2346 = vmatprep.subr.bf16.mxu0 0
          %2347 = vmatpush1.bf16.msra.mxu0 0
          %2348 = vmatprep.subr.bf16.mxu0 0
          %2349 = vmatpush1.bf16.msra.mxu0 0
          %2350 = vmatprep.subr.bf16.mxu0 0
          %2351 = vmatpush1.bf16.msra.mxu0 0
          %2352 = vmatprep.subr.bf16.mxu0 0
          %2353 = vmatpush1.bf16.msra.mxu0 0
          %2354 = vmatprep.subr.bf16.mxu0 0
          %2355 = vmatpush1.bf16.msra.mxu0 0
          %2356 = vmatprep.subr.bf16.mxu0 0
          %2357 = vmatpush1.bf16.msra.mxu0 0
          %2358 = vmatprep.mubr.bf16.mxu0 0
          %2359 = vmatmul.mubr.bf16.gmra.mrb[0].mxu0 %v2320
          %v2360 = vpop.f32.mrb[0].mxu0
          %v2361 = vadd.f32 0.0, %v2360
          %v2362 = vpop.f32.mrb[0].mxu0
          %v2363 = vpop.f32.mrb[0].mxu0
          %v2364 = vpop.f32.mrb[0].mxu0
          %2365 = vdwg.mxu0
          %v2366 = vpack.c.bf16 %v1904, %v1904
          %v2367 = vpack.c.bf16 %v2080, %v2080
          %v2368 = vpack.c.bf16 %v2256, %v2256
          %v2370 = vsel %vm1711, %v2366, 0
          %v2373 = vsel %vm1711, %v2367, 0
          %2375 = vmatprep.subr.bf16.mxu0 0
          %2376 = vmatpush1.bf16.xpose.msra.mxu0 %v2373
          %2377 = vmatprep.subr.bf16.mxu0 0
          %2378 = vmatpush1.bf16.xpose.msra.mxu0 0
          %2379 = vmatprep.subr.bf16.mxu0 0
          %2380 = vmatpush1.bf16.xpose.msra.mxu0 0
          %2381 = vmatprep.subr.bf16.mxu0 0
          %2382 = vmatpush1.bf16.xpose.msra.mxu0 0
          %2383 = vmatprep.subr.bf16.mxu0 0
          %2384 = vmatpush1.bf16.xpose.msra.mxu0 0
          %2385 = vmatprep.subr.bf16.mxu0 0
          %2386 = vmatpush1.bf16.xpose.msra.mxu0 0
          %2387 = vmatprep.subr.bf16.mxu0 0
          %2388 = vmatpush1.bf16.xpose.msra.mxu0 0
          %2389 = vmatprep.subr.bf16.mxu0 0
          %2390 = vmatpush1.bf16.xpose.msra.mxu0 0
          %2391 = vmatprep.subr.bf16.mxu0 0
          %2392 = vmatpush1.bf16.xpose.msra.mxu0 0
          %2393 = vmatprep.subr.bf16.mxu0 0
          %2394 = vmatpush1.bf16.xpose.msra.mxu0 0
          %2395 = vmatprep.subr.bf16.mxu0 0
          %2396 = vmatpush1.bf16.xpose.msra.mxu0 0
          %2397 = vmatprep.subr.bf16.mxu0 0
          %2398 = vmatpush1.bf16.xpose.msra.mxu0 0
          %2399 = vmatprep.subr.bf16.mxu0 0
          %2400 = vmatpush1.bf16.xpose.msra.mxu0 0
          %2401 = vmatprep.subr.bf16.mxu0 0
          %2402 = vmatpush1.bf16.xpose.msra.mxu0 0
          %2403 = vmatprep.subr.bf16.mxu0 0
          %2404 = vmatpush1.bf16.xpose.msra.mxu0 0
          %2405 = vmatprep.subr.bf16.mxu0 0
          %2406 = vmatpush1.bf16.xpose.msra.mxu0 0
          %2407 = vmatprep.mubr.bf16.mxu0 0
          %2408 = vmatmul.mubr.bf16.gmra.mrb[0].mxu0 %v2370
          %v2409 = vpop.f32.mrb[0].mxu0
          %v2410 = vadd.f32 0.0, %v2409
          %v2411 = vpop.f32.mrb[0].mxu0
          %v2412 = vpop.f32.mrb[0].mxu0
          %v2413 = vpop.f32.mrb[0].mxu0
          %2414 = vdwg.mxu0
          %v2415 = vsel %vm2306, %v2410, -inf
          %2416 = vmax.xlane.f32.xlu0 %v2415
          %v2417 = vpop.xlane.xlu0 %2416
          %v2418 = vsub.f32 %v2410, %v2417
          %v2419 = vmul.f32 %v2418, 1.442695
          %v2420 = vpow.pop %v2419
          %v2421 = vsel %vm2306, %v2420, 0.0
          %2422 = vadd.xlane.f32.xlu0 %v2421
          %v2423 = vpop.xlane.xlu0 %2422
          %v2424 = vrcp.pop %v2423
          %v2425 = vmul.f32 %v2420, %v2424
          %v2426 = vpack.c.bf16 %v2425, %v2425
          %v2428 = vsel %vm2306, %v2426, 0
          %v2431 = vsel %vm2322, %v2368, 0
          %2433 = vmatprep.subr.bf16.mxu0 0
          %2434 = vmatpush1.bf16.msra.mxu0 %v2431
          %2435 = vmatprep.subr.bf16.mxu0 0
          %2436 = vmatpush1.bf16.msra.mxu0 0
          %2437 = vmatprep.subr.bf16.mxu0 0
          %2438 = vmatpush1.bf16.msra.mxu0 0
          %2439 = vmatprep.subr.bf16.mxu0 0
          %2440 = vmatpush1.bf16.msra.mxu0 0
          %2441 = vmatprep.subr.bf16.mxu0 0
          %2442 = vmatpush1.bf16.msra.mxu0 0
          %2443 = vmatprep.subr.bf16.mxu0 0
          %2444 = vmatpush1.bf16.msra.mxu0 0
          %2445 = vmatprep.subr.bf16.mxu0 0
          %2446 = vmatpush1.bf16.msra.mxu0 0
          %2447 = vmatprep.subr.bf16.mxu0 0
          %2448 = vmatpush1.bf16.msra.mxu0 0
          %2449 = vmatprep.subr.bf16.mxu0 0
          %2450 = vmatpush1.bf16.msra.mxu0 0
          %2451 = vmatprep.subr.bf16.mxu0 0
          %2452 = vmatpush1.bf16.msra.mxu0 0
          %2453 = vmatprep.subr.bf16.mxu0 0
          %2454 = vmatpush1.bf16.msra.mxu0 0
          %2455 = vmatprep.subr.bf16.mxu0 0
          %2456 = vmatpush1.bf16.msra.mxu0 0
          %2457 = vmatprep.subr.bf16.mxu0 0
          %2458 = vmatpush1.bf16.msra.mxu0 0
          %2459 = vmatprep.subr.bf16.mxu0 0
          %2460 = vmatpush1.bf16.msra.mxu0 0
          %2461 = vmatprep.subr.bf16.mxu0 0
          %2462 = vmatpush1.bf16.msra.mxu0 0
          %2463 = vmatprep.subr.bf16.mxu0 0
          %2464 = vmatpush1.bf16.msra.mxu0 0
          %2465 = vmatprep.mubr.bf16.mxu0 0
          %2466 = vmatmul.mubr.bf16.gmra.mrb[0].mxu0 %v2428
          %v2467 = vpop.f32.mrb[0].mxu0
          %v2468 = vadd.f32 0.0, %v2467
          %v2469 = vpop.f32.mrb[0].mxu0
          %v2470 = vpop.f32.mrb[0].mxu0
          %v2471 = vpop.f32.mrb[0].mxu0
          %2472 = vdwg.mxu0
          %v2473 = vpack.c.bf16 %v2468, %v2361
          %v2474 = vld [vmem:[%s1587] sm:$0xf]
          %v2475 = vld [vmem:[%s1587 + $0x4] sm:$0xf]
          %s2476 = scalar_lea.vmem %s1554, 8
          %v2477 = vld [vmem:[%s2476] sm:$0xf]
          %v2478 = vld [vmem:[%s2476 + $0x4] sm:$0xf]
          %s2479 = scalar_lea.vmem %s1565, 32
          %v2480 = vld [vmem:[%s2479] sm:$0xf]
          %v2481 = vld [vmem:[%s2479 + $0x4] sm:$0xf]
          %v2482 = vld [vmem:[%s2479 + $0x8] sm:$0xf]
          %v2483 = vld [vmem:[%s2479 + $0xc] sm:$0xf]
          %v2484 = vld [vmem:[%s2479 + $0x10] sm:$0xf]
          %v2485 = vld [vmem:[%s2479 + $0x14] sm:$0xf]
          %v2486 = vld [vmem:[%s2479 + $0x18] sm:$0xf]
          %v2487 = vld [vmem:[%s2479 + $0x1c] sm:$0xf]
          %v2496 = vunpack.c.l.b16 %v2480
          %v2497 = vunpack.c.l.b16 %v2481
          %v2498 = vunpack.c.l.b16 %v2482
          %v2499 = vunpack.c.l.b16 %v2483
          %v2500 = vunpack.c.l.b16 %v2484
          %v2501 = vunpack.c.l.b16 %v2485
          %v2502 = vunpack.c.l.b16 %v2486
          %v2503 = vunpack.c.l.b16 %v2487
          %v2504 = vpack.c.b16 %v2497, %v2496
          %v2505 = vpack.c.b16 %v2499, %v2498
          %v2506 = vpack.c.b16 %v2501, %v2500
          %v2507 = vpack.c.b16 %v2503, %v2502
          %2512 = vmatprep.subr.bf16.mxu0 0
          %2513 = vmatpush1.bf16.msra.mxu0 %v2504
          %2514 = vmatprep.subr.bf16.mxu0 0
          %2515 = vmatpush1.bf16.msra.mxu0 %v2505
          %2516 = vmatprep.subr.bf16.mxu0 0
          %2517 = vmatpush1.bf16.msra.mxu0 %v2506
          %2518 = vmatprep.subr.bf16.mxu0 0
          %2519 = vmatpush1.bf16.msra.mxu0 %v2507
          %2520 = vmatprep.subr.bf16.mxu0 0
          %2521 = vmatpush1.bf16.msra.mxu0 0
          %2522 = vmatprep.subr.bf16.mxu0 0
          %2523 = vmatpush1.bf16.msra.mxu0 0
          %2524 = vmatprep.subr.bf16.mxu0 0
          %2525 = vmatpush1.bf16.msra.mxu0 0
          %2526 = vmatprep.subr.bf16.mxu0 0
          %2527 = vmatpush1.bf16.msra.mxu0 0
          %2528 = vmatprep.subr.bf16.mxu0 0
          %2529 = vmatpush1.bf16.msra.mxu0 0
          %2530 = vmatprep.subr.bf16.mxu0 0
          %2531 = vmatpush1.bf16.msra.mxu0 0
          %2532 = vmatprep.subr.bf16.mxu0 0
          %2533 = vmatpush1.bf16.msra.mxu0 0
          %2534 = vmatprep.subr.bf16.mxu0 0
          %2535 = vmatpush1.bf16.msra.mxu0 0
          %2536 = vmatprep.subr.bf16.mxu0 0
          %2537 = vmatpush1.bf16.msra.mxu0 0
          %2538 = vmatprep.subr.bf16.mxu0 0
          %2539 = vmatpush1.bf16.msra.mxu0 0
          %2540 = vmatprep.subr.bf16.mxu0 0
          %2541 = vmatpush1.bf16.msra.mxu0 0
          %2542 = vmatprep.subr.bf16.mxu0 0
          %2543 = vmatpush1.bf16.msra.mxu0 0
          %2544 = vmatprep.mubr.bf16.mxu0 0
          %2545 = vmatmul.mubr.bf16.gmra.mrb[0].mxu0 %v1758
          %v2546 = vpop.f32.mrb[0].mxu0
          %v2547 = vadd.f32 0.0, %v2546
          %v2548 = vpop.f32.mrb[0].mxu0
          %v2549 = vpop.f32.mrb[0].mxu0
          %v2550 = vadd.f32 0.0, %v2549
          %v2551 = vpop.f32.mrb[0].mxu0
          %2552 = vdwg.mxu0
          %v2555 = vunpack.c.l.b16 %v2477
          %v2556 = vunpack.c.l.b16 %v2478
          %v2557 = vpack.c.b16 %v2556, %v2555
          %2559 = vmatprep.subr.bf16.mxu0 0
          %2560 = vmatpush1.bf16.msra.mxu0 %v2557
          %2561 = vmatprep.subr.bf16.mxu0 0
          %2562 = vmatpush1.bf16.msra.mxu0 0
          %2563 = vmatprep.subr.bf16.mxu0 0
          %2564 = vmatpush1.bf16.msra.mxu0 0
          %2565 = vmatprep.subr.bf16.mxu0 0
          %2566 = vmatpush1.bf16.msra.mxu0 0
          %2567 = vmatprep.subr.bf16.mxu0 0
          %2568 = vmatpush1.bf16.msra.mxu0 0
          %2569 = vmatprep.subr.bf16.mxu0 0
          %2570 = vmatpush1.bf16.msra.mxu0 0
          %2571 = vmatprep.subr.bf16.mxu0 0
          %2572 = vmatpush1.bf16.msra.mxu0 0
          %2573 = vmatprep.subr.bf16.mxu0 0
          %2574 = vmatpush1.bf16.msra.mxu0 0
          %2575 = vmatprep.subr.bf16.mxu0 0
          %2576 = vmatpush1.bf16.msra.mxu0 0
          %2577 = vmatprep.subr.bf16.mxu0 0
          %2578 = vmatpush1.bf16.msra.mxu0 0
          %2579 = vmatprep.subr.bf16.mxu0 0
          %2580 = vmatpush1.bf16.msra.mxu0 0
          %2581 = vmatprep.subr.bf16.mxu0 0
          %2582 = vmatpush1.bf16.msra.mxu0 0
          %2583 = vmatprep.subr.bf16.mxu0 0
          %2584 = vmatpush1.bf16.msra.mxu0 0
          %2585 = vmatprep.subr.bf16.mxu0 0
          %2586 = vmatpush1.bf16.msra.mxu0 0
          %2587 = vmatprep.subr.bf16.mxu0 0
          %2588 = vmatpush1.bf16.msra.mxu0 0
          %2589 = vmatprep.subr.bf16.mxu0 0
          %2590 = vmatpush1.bf16.msra.mxu0 0
          %2591 = vmatprep.mubr.bf16.mxu0 0
          %2592 = vmatmul.mubr.bf16.gmra.mrb[0].mxu0 %v1808
          %v2593 = vpop.f32.mrb[0].mxu0
          %v2594 = vadd.f32 %v2547, %v2593
          %v2595 = vpop.f32.mrb[0].mxu0
          %v2596 = vpop.f32.mrb[0].mxu0
          %v2597 = vadd.f32 %v2550, %v2596
          %v2598 = vpop.f32.mrb[0].mxu0
          %2599 = vdwg.mxu0
          %s2600 = scalar_lea.vmem %s1576, 8
          %v2601 = vld [vmem:[%s2600] sm:$0xf]
          %v2602 = vld [vmem:[%s2600 + $0x4] sm:$0xf]
          %v2605 = vunpack.c.l.b16 %v2601
          %v2606 = vunpack.c.l.b16 %v2602
          %v2607 = vpack.c.b16 %v2606, %v2605
          %2609 = vmatprep.subr.bf16.mxu0 0
          %2610 = vmatpush1.bf16.msra.mxu0 %v2607
          %2611 = vmatprep.subr.bf16.mxu0 0
          %2612 = vmatpush1.bf16.msra.mxu0 0
          %2613 = vmatprep.subr.bf16.mxu0 0
          %2614 = vmatpush1.bf16.msra.mxu0 0
          %2615 = vmatprep.subr.bf16.mxu0 0
          %2616 = vmatpush1.bf16.msra.mxu0 0
          %2617 = vmatprep.subr.bf16.mxu0 0
          %2618 = vmatpush1.bf16.msra.mxu0 0
          %2619 = vmatprep.subr.bf16.mxu0 0
          %2620 = vmatpush1.bf16.msra.mxu0 0
          %2621 = vmatprep.subr.bf16.mxu0 0
          %2622 = vmatpush1.bf16.msra.mxu0 0
          %2623 = vmatprep.subr.bf16.mxu0 0
          %2624 = vmatpush1.bf16.msra.mxu0 0
          %2625 = vmatprep.subr.bf16.mxu0 0
          %2626 = vmatpush1.bf16.msra.mxu0 0
          %2627 = vmatprep.subr.bf16.mxu0 0
          %2628 = vmatpush1.bf16.msra.mxu0 0
          %2629 = vmatprep.subr.bf16.mxu0 0
          %2630 = vmatpush1.bf16.msra.mxu0 0
          %2631 = vmatprep.subr.bf16.mxu0 0
          %2632 = vmatpush1.bf16.msra.mxu0 0
          %2633 = vmatprep.subr.bf16.mxu0 0
          %2634 = vmatpush1.bf16.msra.mxu0 0
          %2635 = vmatprep.subr.bf16.mxu0 0
          %2636 = vmatpush1.bf16.msra.mxu0 0
          %2637 = vmatprep.subr.bf16.mxu0 0
          %2638 = vmatpush1.bf16.msra.mxu0 0
          %2639 = vmatprep.subr.bf16.mxu0 0
          %2640 = vmatpush1.bf16.msra.mxu0 0
          %2641 = vmatprep.mubr.bf16.mxu0 0
          %2642 = vmatmul.mubr.bf16.gmra.mrb[0].mxu0 %v1860
          %v2643 = vpop.f32.mrb[0].mxu0
          %v2644 = vadd.f32 0.0, %v2643
          %v2645 = vpop.f32.mrb[0].mxu0
          %v2646 = vpop.f32.mrb[0].mxu0
          %v2647 = vadd.f32 0.0, %v2646
          %v2648 = vpop.f32.mrb[0].mxu0
          %2649 = vdwg.mxu0
          %v2650 = vadd.f32 %v2594, %v2644
          %v2651 = vadd.f32 %v2597, %v2647
          %s2652 = scalar_lea.vmem %s1554, 24
          %v2653 = vld [vmem:[%s2652] sm:$0xf]
          %v2654 = vld [vmem:[%s2652 + $0x4] sm:$0xf]
          %s2655 = scalar_lea.vmem %s1565, 96
          %v2656 = vld [vmem:[%s2655] sm:$0xf]
          %v2657 = vld [vmem:[%s2655 + $0x4] sm:$0xf]
          %v2658 = vld [vmem:[%s2655 + $0x8] sm:$0xf]
          %v2659 = vld [vmem:[%s2655 + $0xc] sm:$0xf]
          %v2660 = vld [vmem:[%s2655 + $0x10] sm:$0xf]
          %v2661 = vld [vmem:[%s2655 + $0x14] sm:$0xf]
          %v2662 = vld [vmem:[%s2655 + $0x18] sm:$0xf]
          %v2663 = vld [vmem:[%s2655 + $0x1c] sm:$0xf]
          %v2672 = vunpack.c.l.b16 %v2656
          %v2673 = vunpack.c.l.b16 %v2657
          %v2674 = vunpack.c.l.b16 %v2658
          %v2675 = vunpack.c.l.b16 %v2659
          %v2676 = vunpack.c.l.b16 %v2660
          %v2677 = vunpack.c.l.b16 %v2661
          %v2678 = vunpack.c.l.b16 %v2662
          %v2679 = vunpack.c.l.b16 %v2663
          %v2680 = vpack.c.b16 %v2673, %v2672
          %v2681 = vpack.c.b16 %v2675, %v2674
          %v2682 = vpack.c.b16 %v2677, %v2676
          %v2683 = vpack.c.b16 %v2679, %v2678
          %2688 = vmatprep.subr.bf16.mxu0 0
          %2689 = vmatpush1.bf16.msra.mxu0 %v2680
          %2690 = vmatprep.subr.bf16.mxu0 0
          %2691 = vmatpush1.bf16.msra.mxu0 %v2681
          %2692 = vmatprep.subr.bf16.mxu0 0
          %2693 = vmatpush1.bf16.msra.mxu0 %v2682
          %2694 = vmatprep.subr.bf16.mxu0 0
          %2695 = vmatpush1.bf16.msra.mxu0 %v2683
          %2696 = vmatprep.subr.bf16.mxu0 0
          %2697 = vmatpush1.bf16.msra.mxu0 0
          %2698 = vmatprep.subr.bf16.mxu0 0
          %2699 = vmatpush1.bf16.msra.mxu0 0
          %2700 = vmatprep.subr.bf16.mxu0 0
          %2701 = vmatpush1.bf16.msra.mxu0 0
          %2702 = vmatprep.subr.bf16.mxu0 0
          %2703 = vmatpush1.bf16.msra.mxu0 0
          %2704 = vmatprep.subr.bf16.mxu0 0
          %2705 = vmatpush1.bf16.msra.mxu0 0
          %2706 = vmatprep.subr.bf16.mxu0 0
          %2707 = vmatpush1.bf16.msra.mxu0 0
          %2708 = vmatprep.subr.bf16.mxu0 0
          %2709 = vmatpush1.bf16.msra.mxu0 0
          %2710 = vmatprep.subr.bf16.mxu0 0
          %2711 = vmatpush1.bf16.msra.mxu0 0
          %2712 = vmatprep.subr.bf16.mxu0 0
          %2713 = vmatpush1.bf16.msra.mxu0 0
          %2714 = vmatprep.subr.bf16.mxu0 0
          %2715 = vmatpush1.bf16.msra.mxu0 0
          %2716 = vmatprep.subr.bf16.mxu0 0
          %2717 = vmatpush1.bf16.msra.mxu0 0
          %2718 = vmatprep.subr.bf16.mxu0 0
          %2719 = vmatpush1.bf16.msra.mxu0 0
          %2720 = vmatprep.mubr.bf16.mxu0 0
          %2721 = vmatmul.mubr.bf16.gmra.mrb[0].mxu0 %v1758
          %v2722 = vpop.f32.mrb[0].mxu0
          %v2723 = vadd.f32 0.0, %v2722
          %v2724 = vpop.f32.mrb[0].mxu0
          %v2725 = vpop.f32.mrb[0].mxu0
          %v2726 = vadd.f32 0.0, %v2725
          %v2727 = vpop.f32.mrb[0].mxu0
          %2728 = vdwg.mxu0
          %v2731 = vunpack.c.l.b16 %v2653
          %v2732 = vunpack.c.l.b16 %v2654
          %v2733 = vpack.c.b16 %v2732, %v2731
          %2735 = vmatprep.subr.bf16.mxu0 0
          %2736 = vmatpush1.bf16.msra.mxu0 %v2733
          %2737 = vmatprep.subr.bf16.mxu0 0
          %2738 = vmatpush1.bf16.msra.mxu0 0
          %2739 = vmatprep.subr.bf16.mxu0 0
          %2740 = vmatpush1.bf16.msra.mxu0 0
          %2741 = vmatprep.subr.bf16.mxu0 0
          %2742 = vmatpush1.bf16.msra.mxu0 0
          %2743 = vmatprep.subr.bf16.mxu0 0
          %2744 = vmatpush1.bf16.msra.mxu0 0
          %2745 = vmatprep.subr.bf16.mxu0 0
          %2746 = vmatpush1.bf16.msra.mxu0 0
          %2747 = vmatprep.subr.bf16.mxu0 0
          %2748 = vmatpush1.bf16.msra.mxu0 0
          %2749 = vmatprep.subr.bf16.mxu0 0
          %2750 = vmatpush1.bf16.msra.mxu0 0
          %2751 = vmatprep.subr.bf16.mxu0 0
          %2752 = vmatpush1.bf16.msra.mxu0 0
          %2753 = vmatprep.subr.bf16.mxu0 0
          %2754 = vmatpush1.bf16.msra.mxu0 0
          %2755 = vmatprep.subr.bf16.mxu0 0
          %2756 = vmatpush1.bf16.msra.mxu0 0
          %2757 = vmatprep.subr.bf16.mxu0 0
          %2758 = vmatpush1.bf16.msra.mxu0 0
          %2759 = vmatprep.subr.bf16.mxu0 0
          %2760 = vmatpush1.bf16.msra.mxu0 0
          %2761 = vmatprep.subr.bf16.mxu0 0
          %2762 = vmatpush1.bf16.msra.mxu0 0
          %2763 = vmatprep.subr.bf16.mxu0 0
          %2764 = vmatpush1.bf16.msra.mxu0 0
          %2765 = vmatprep.subr.bf16.mxu0 0
          %2766 = vmatpush1.bf16.msra.mxu0 0
          %2767 = vmatprep.mubr.bf16.mxu0 0
          %2768 = vmatmul.mubr.bf16.gmra.mrb[0].mxu0 %v1808
          %v2769 = vpop.f32.mrb[0].mxu0
          %v2770 = vadd.f32 %v2723, %v2769
          %v2771 = vpop.f32.mrb[0].mxu0
          %v2772 = vpop.f32.mrb[0].mxu0
          %v2773 = vadd.f32 %v2726, %v2772
          %v2774 = vpop.f32.mrb[0].mxu0
          %2775 = vdwg.mxu0
          %s2776 = scalar_lea.vmem %s1576, 24
          %v2777 = vld [vmem:[%s2776] sm:$0xf]
          %v2778 = vld [vmem:[%s2776 + $0x4] sm:$0xf]
          %v2781 = vunpack.c.l.b16 %v2777
          %v2782 = vunpack.c.l.b16 %v2778
          %v2783 = vpack.c.b16 %v2782, %v2781
          %2785 = vmatprep.subr.bf16.mxu0 0
          %2786 = vmatpush1.bf16.msra.mxu0 %v2783
          %2787 = vmatprep.subr.bf16.mxu0 0
          %2788 = vmatpush1.bf16.msra.mxu0 0
          %2789 = vmatprep.subr.bf16.mxu0 0
          %2790 = vmatpush1.bf16.msra.mxu0 0
          %2791 = vmatprep.subr.bf16.mxu0 0
          %2792 = vmatpush1.bf16.msra.mxu0 0
          %2793 = vmatprep.subr.bf16.mxu0 0
          %2794 = vmatpush1.bf16.msra.mxu0 0
          %2795 = vmatprep.subr.bf16.mxu0 0
          %2796 = vmatpush1.bf16.msra.mxu0 0
          %2797 = vmatprep.subr.bf16.mxu0 0
          %2798 = vmatpush1.bf16.msra.mxu0 0
          %2799 = vmatprep.subr.bf16.mxu0 0
          %2800 = vmatpush1.bf16.msra.mxu0 0
          %2801 = vmatprep.subr.bf16.mxu0 0
          %2802 = vmatpush1.bf16.msra.mxu0 0
          %2803 = vmatprep.subr.bf16.mxu0 0
          %2804 = vmatpush1.bf16.msra.mxu0 0
          %2805 = vmatprep.subr.bf16.mxu0 0
          %2806 = vmatpush1.bf16.msra.mxu0 0
          %2807 = vmatprep.subr.bf16.mxu0 0
          %2808 = vmatpush1.bf16.msra.mxu0 0
          %2809 = vmatprep.subr.bf16.mxu0 0
          %2810 = vmatpush1.bf16.msra.mxu0 0
          %2811 = vmatprep.subr.bf16.mxu0 0
          %2812 = vmatpush1.bf16.msra.mxu0 0
          %2813 = vmatprep.subr.bf16.mxu0 0
          %2814 = vmatpush1.bf16.msra.mxu0 0
          %2815 = vmatprep.subr.bf16.mxu0 0
          %2816 = vmatpush1.bf16.msra.mxu0 0
          %2817 = vmatprep.mubr.bf16.mxu0 0
          %2818 = vmatmul.mubr.bf16.gmra.mrb[0].mxu0 %v1860
          %v2819 = vpop.f32.mrb[0].mxu0
          %v2820 = vadd.f32 0.0, %v2819
          %v2821 = vpop.f32.mrb[0].mxu0
          %v2822 = vpop.f32.mrb[0].mxu0
          %v2823 = vadd.f32 0.0, %v2822
          %v2824 = vpop.f32.mrb[0].mxu0
          %2825 = vdwg.mxu0
          %v2826 = vadd.f32 %v2770, %v2820
          %v2827 = vadd.f32 %v2773, %v2823
          %s2828 = scalar_lea.vmem %s1554, 40
          %v2829 = vld [vmem:[%s2828] sm:$0xf]
          %v2830 = vld [vmem:[%s2828 + $0x4] sm:$0xf]
          %s2831 = scalar_lea.vmem %s1565, 160
          %v2832 = vld [vmem:[%s2831] sm:$0xf]
          %v2833 = vld [vmem:[%s2831 + $0x4] sm:$0xf]
          %v2834 = vld [vmem:[%s2831 + $0x8] sm:$0xf]
          %v2835 = vld [vmem:[%s2831 + $0xc] sm:$0xf]
          %v2836 = vld [vmem:[%s2831 + $0x10] sm:$0xf]
          %v2837 = vld [vmem:[%s2831 + $0x14] sm:$0xf]
          %v2838 = vld [vmem:[%s2831 + $0x18] sm:$0xf]
          %v2839 = vld [vmem:[%s2831 + $0x1c] sm:$0xf]
          %v2848 = vunpack.c.l.b16 %v2832
          %v2849 = vunpack.c.l.b16 %v2833
          %v2850 = vunpack.c.l.b16 %v2834
          %v2851 = vunpack.c.l.b16 %v2835
          %v2852 = vunpack.c.l.b16 %v2836
          %v2853 = vunpack.c.l.b16 %v2837
          %v2854 = vunpack.c.l.b16 %v2838
          %v2855 = vunpack.c.l.b16 %v2839
          %v2856 = vpack.c.b16 %v2849, %v2848
          %v2857 = vpack.c.b16 %v2851, %v2850
          %v2858 = vpack.c.b16 %v2853, %v2852
          %v2859 = vpack.c.b16 %v2855, %v2854
          %2864 = vmatprep.subr.bf16.mxu0 0
          %2865 = vmatpush1.bf16.msra.mxu0 %v2856
          %2866 = vmatprep.subr.bf16.mxu0 0
          %2867 = vmatpush1.bf16.msra.mxu0 %v2857
          %2868 = vmatprep.subr.bf16.mxu0 0
          %2869 = vmatpush1.bf16.msra.mxu0 %v2858
          %2870 = vmatprep.subr.bf16.mxu0 0
          %2871 = vmatpush1.bf16.msra.mxu0 %v2859
          %2872 = vmatprep.subr.bf16.mxu0 0
          %2873 = vmatpush1.bf16.msra.mxu0 0
          %2874 = vmatprep.subr.bf16.mxu0 0
          %2875 = vmatpush1.bf16.msra.mxu0 0
          %2876 = vmatprep.subr.bf16.mxu0 0
          %2877 = vmatpush1.bf16.msra.mxu0 0
          %2878 = vmatprep.subr.bf16.mxu0 0
          %2879 = vmatpush1.bf16.msra.mxu0 0
          %2880 = vmatprep.subr.bf16.mxu0 0
          %2881 = vmatpush1.bf16.msra.mxu0 0
          %2882 = vmatprep.subr.bf16.mxu0 0
          %2883 = vmatpush1.bf16.msra.mxu0 0
          %2884 = vmatprep.subr.bf16.mxu0 0
          %2885 = vmatpush1.bf16.msra.mxu0 0
          %2886 = vmatprep.subr.bf16.mxu0 0
          %2887 = vmatpush1.bf16.msra.mxu0 0
          %2888 = vmatprep.subr.bf16.mxu0 0
          %2889 = vmatpush1.bf16.msra.mxu0 0
          %2890 = vmatprep.subr.bf16.mxu0 0
          %2891 = vmatpush1.bf16.msra.mxu0 0
          %2892 = vmatprep.subr.bf16.mxu0 0
          %2893 = vmatpush1.bf16.msra.mxu0 0
          %2894 = vmatprep.subr.bf16.mxu0 0
          %2895 = vmatpush1.bf16.msra.mxu0 0
          %2896 = vmatprep.mubr.bf16.mxu0 0
          %2897 = vmatmul.mubr.bf16.gmra.mrb[0].mxu0 %v1758
          %v2898 = vpop.f32.mrb[0].mxu0
          %v2899 = vadd.f32 0.0, %v2898
          %v2900 = vpop.f32.mrb[0].mxu0
          %v2901 = vpop.f32.mrb[0].mxu0
          %v2902 = vadd.f32 0.0, %v2901
          %v2903 = vpop.f32.mrb[0].mxu0
          %2904 = vdwg.mxu0
          %v2907 = vunpack.c.l.b16 %v2829
          %v2908 = vunpack.c.l.b16 %v2830
          %v2909 = vpack.c.b16 %v2908, %v2907
          %2911 = vmatprep.subr.bf16.mxu0 0
          %2912 = vmatpush1.bf16.msra.mxu0 %v2909
          %2913 = vmatprep.subr.bf16.mxu0 0
          %2914 = vmatpush1.bf16.msra.mxu0 0
          %2915 = vmatprep.subr.bf16.mxu0 0
          %2916 = vmatpush1.bf16.msra.mxu0 0
          %2917 = vmatprep.subr.bf16.mxu0 0
          %2918 = vmatpush1.bf16.msra.mxu0 0
          %2919 = vmatprep.subr.bf16.mxu0 0
          %2920 = vmatpush1.bf16.msra.mxu0 0
          %2921 = vmatprep.subr.bf16.mxu0 0
          %2922 = vmatpush1.bf16.msra.mxu0 0
          %2923 = vmatprep.subr.bf16.mxu0 0
          %2924 = vmatpush1.bf16.msra.mxu0 0
          %2925 = vmatprep.subr.bf16.mxu0 0
          %2926 = vmatpush1.bf16.msra.mxu0 0
          %2927 = vmatprep.subr.bf16.mxu0 0
          %2928 = vmatpush1.bf16.msra.mxu0 0
          %2929 = vmatprep.subr.bf16.mxu0 0
          %2930 = vmatpush1.bf16.msra.mxu0 0
          %2931 = vmatprep.subr.bf16.mxu0 0
          %2932 = vmatpush1.bf16.msra.mxu0 0
          %2933 = vmatprep.subr.bf16.mxu0 0
          %2934 = vmatpush1.bf16.msra.mxu0 0
          %2935 = vmatprep.subr.bf16.mxu0 0
          %2936 = vmatpush1.bf16.msra.mxu0 0
          %2937 = vmatprep.subr.bf16.mxu0 0
          %2938 = vmatpush1.bf16.msra.mxu0 0
          %2939 = vmatprep.subr.bf16.mxu0 0
          %2940 = vmatpush1.bf16.msra.mxu0 0
          %2941 = vmatprep.subr.bf16.mxu0 0
          %2942 = vmatpush1.bf16.msra.mxu0 0
          %2943 = vmatprep.mubr.bf16.mxu0 0
          %2944 = vmatmul.mubr.bf16.gmra.mrb[0].mxu0 %v1808
          %v2945 = vpop.f32.mrb[0].mxu0
          %v2946 = vadd.f32 %v2899, %v2945
          %v2947 = vpop.f32.mrb[0].mxu0
          %v2948 = vpop.f32.mrb[0].mxu0
          %v2949 = vadd.f32 %v2902, %v2948
          %v2950 = vpop.f32.mrb[0].mxu0
          %2951 = vdwg.mxu0
          %s2952 = scalar_lea.vmem %s1576, 40
          %v2953 = vld [vmem:[%s2952] sm:$0xf]
          %v2954 = vld [vmem:[%s2952 + $0x4] sm:$0xf]
          %v2957 = vunpack.c.l.b16 %v2953
          %v2958 = vunpack.c.l.b16 %v2954
          %v2959 = vpack.c.b16 %v2958, %v2957
          %2961 = vmatprep.subr.bf16.mxu0 0
          %2962 = vmatpush1.bf16.msra.mxu0 %v2959
          %2963 = vmatprep.subr.bf16.mxu0 0
          %2964 = vmatpush1.bf16.msra.mxu0 0
          %2965 = vmatprep.subr.bf16.mxu0 0
          %2966 = vmatpush1.bf16.msra.mxu0 0
          %2967 = vmatprep.subr.bf16.mxu0 0
          %2968 = vmatpush1.bf16.msra.mxu0 0
          %2969 = vmatprep.subr.bf16.mxu0 0
          %2970 = vmatpush1.bf16.msra.mxu0 0
          %2971 = vmatprep.subr.bf16.mxu0 0
          %2972 = vmatpush1.bf16.msra.mxu0 0
          %2973 = vmatprep.subr.bf16.mxu0 0
          %2974 = vmatpush1.bf16.msra.mxu0 0
          %2975 = vmatprep.subr.bf16.mxu0 0
          %2976 = vmatpush1.bf16.msra.mxu0 0
          %2977 = vmatprep.subr.bf16.mxu0 0
          %2978 = vmatpush1.bf16.msra.mxu0 0
          %2979 = vmatprep.subr.bf16.mxu0 0
          %2980 = vmatpush1.bf16.msra.mxu0 0
          %2981 = vmatprep.subr.bf16.mxu0 0
          %2982 = vmatpush1.bf16.msra.mxu0 0
          %2983 = vmatprep.subr.bf16.mxu0 0
          %2984 = vmatpush1.bf16.msra.mxu0 0
          %2985 = vmatprep.subr.bf16.mxu0 0
          %2986 = vmatpush1.bf16.msra.mxu0 0
          %2987 = vmatprep.subr.bf16.mxu0 0
          %2988 = vmatpush1.bf16.msra.mxu0 0
          %2989 = vmatprep.subr.bf16.mxu0 0
          %2990 = vmatpush1.bf16.msra.mxu0 0
          %2991 = vmatprep.subr.bf16.mxu0 0
          %2992 = vmatpush1.bf16.msra.mxu0 0
          %2993 = vmatprep.mubr.bf16.mxu0 0
          %2994 = vmatmul.mubr.bf16.gmra.mrb[0].mxu0 %v1860
          %v2995 = vpop.f32.mrb[0].mxu0
          %v2996 = vadd.f32 0.0, %v2995
          %v2997 = vpop.f32.mrb[0].mxu0
          %v2998 = vpop.f32.mrb[0].mxu0
          %v2999 = vadd.f32 0.0, %v2998
          %v3000 = vpop.f32.mrb[0].mxu0
          %3001 = vdwg.mxu0
          %v3002 = vadd.f32 %v2946, %v2996
          %v3003 = vadd.f32 %v2949, %v2999
          %v3004 = vpack.c.bf16 %v2650, %v2650
          %v3005 = vpack.c.bf16 %v2826, %v2826
          %v3006 = vpack.c.bf16 %v3002, %v3002
          %v3008 = vsel %vm1711, %v3004, 0
          %v3011 = vsel %vm1711, %v3005, 0
          %3013 = vmatprep.subr.bf16.mxu0 0
          %3014 = vmatpush1.bf16.xpose.msra.mxu0 %v3011
          %3015 = vmatprep.subr.bf16.mxu0 0
          %3016 = vmatpush1.bf16.xpose.msra.mxu0 0
          %3017 = vmatprep.subr.bf16.mxu0 0
          %3018 = vmatpush1.bf16.xpose.msra.mxu0 0
          %3019 = vmatprep.subr.bf16.mxu0 0
          %3020 = vmatpush1.bf16.xpose.msra.mxu0 0
          %3021 = vmatprep.subr.bf16.mxu0 0
          %3022 = vmatpush1.bf16.xpose.msra.mxu0 0
          %3023 = vmatprep.subr.bf16.mxu0 0
          %3024 = vmatpush1.bf16.xpose.msra.mxu0 0
          %3025 = vmatprep.subr.bf16.mxu0 0
          %3026 = vmatpush1.bf16.xpose.msra.mxu0 0
          %3027 = vmatprep.subr.bf16.mxu0 0
          %3028 = vmatpush1.bf16.xpose.msra.mxu0 0
          %3029 = vmatprep.subr.bf16.mxu0 0
          %3030 = vmatpush1.bf16.xpose.msra.mxu0 0
          %3031 = vmatprep.subr.bf16.mxu0 0
          %3032 = vmatpush1.bf16.xpose.msra.mxu0 0
          %3033 = vmatprep.subr.bf16.mxu0 0
          %3034 = vmatpush1.bf16.xpose.msra.mxu0 0
          %3035 = vmatprep.subr.bf16.mxu0 0
          %3036 = vmatpush1.bf16.xpose.msra.mxu0 0
          %3037 = vmatprep.subr.bf16.mxu0 0
          %3038 = vmatpush1.bf16.xpose.msra.mxu0 0
          %3039 = vmatprep.subr.bf16.mxu0 0
          %3040 = vmatpush1.bf16.xpose.msra.mxu0 0
          %3041 = vmatprep.subr.bf16.mxu0 0
          %3042 = vmatpush1.bf16.xpose.msra.mxu0 0
          %3043 = vmatprep.subr.bf16.mxu0 0
          %3044 = vmatpush1.bf16.xpose.msra.mxu0 0
          %3045 = vmatprep.mubr.bf16.mxu0 0
          %3046 = vmatmul.mubr.bf16.gmra.mrb[0].mxu0 %v3008
          %v3047 = vpop.f32.mrb[0].mxu0
          %v3048 = vadd.f32 0.0, %v3047
          %v3049 = vpop.f32.mrb[0].mxu0
          %v3050 = vpop.f32.mrb[0].mxu0
          %v3051 = vpop.f32.mrb[0].mxu0
          %3052 = vdwg.mxu0
          %v3053 = vsel %vm2306, %v3048, -inf
          %3054 = vmax.xlane.f32.xlu0 %v3053
          %v3055 = vpop.xlane.xlu0 %3054
          %v3056 = vsub.f32 %v3048, %v3055
          %v3057 = vmul.f32 %v3056, 1.442695
          %v3058 = vpow.pop %v3057
          %v3059 = vsel %vm2306, %v3058, 0.0
          %3060 = vadd.xlane.f32.xlu0 %v3059
          %v3061 = vpop.xlane.xlu0 %3060
          %v3062 = vrcp.pop %v3061
          %v3063 = vmul.f32 %v3058, %v3062
          %v3064 = vpack.c.bf16 %v3063, %v3063
          %v3066 = vsel %vm2306, %v3064, 0
          %v3069 = vsel %vm2322, %v3006, 0
          %3071 = vmatprep.subr.bf16.mxu0 0
          %3072 = vmatpush1.bf16.msra.mxu0 %v3069
          %3073 = vmatprep.subr.bf16.mxu0 0
          %3074 = vmatpush1.bf16.msra.mxu0 0
          %3075 = vmatprep.subr.bf16.mxu0 0
          %3076 = vmatpush1.bf16.msra.mxu0 0
          %3077 = vmatprep.subr.bf16.mxu0 0
          %3078 = vmatpush1.bf16.msra.mxu0 0
          %3079 = vmatprep.subr.bf16.mxu0 0
          %3080 = vmatpush1.bf16.msra.mxu0 0
          %3081 = vmatprep.subr.bf16.mxu0 0
          %3082 = vmatpush1.bf16.msra.mxu0 0
          %3083 = vmatprep.subr.bf16.mxu0 0
          %3084 = vmatpush1.bf16.msra.mxu0 0
          %3085 = vmatprep.subr.bf16.mxu0 0
          %3086 = vmatpush1.bf16.msra.mxu0 0
          %3087 = vmatprep.subr.bf16.mxu0 0
          %3088 = vmatpush1.bf16.msra.mxu0 0
          %3089 = vmatprep.subr.bf16.mxu0 0
          %3090 = vmatpush1.bf16.msra.mxu0 0
          %3091 = vmatprep.subr.bf16.mxu0 0
          %3092 = vmatpush1.bf16.msra.mxu0 0
          %3093 = vmatprep.subr.bf16.mxu0 0
          %3094 = vmatpush1.bf16.msra.mxu0 0
          %3095 = vmatprep.subr.bf16.mxu0 0
          %3096 = vmatpush1.bf16.msra.mxu0 0
          %3097 = vmatprep.subr.bf16.mxu0 0
          %3098 = vmatpush1.bf16.msra.mxu0 0
          %3099 = vmatprep.subr.bf16.mxu0 0
          %3100 = vmatpush1.bf16.msra.mxu0 0
          %3101 = vmatprep.subr.bf16.mxu0 0
          %3102 = vmatpush1.bf16.msra.mxu0 0
          %3103 = vmatprep.mubr.bf16.mxu0 0
          %3104 = vmatmul.mubr.bf16.gmra.mrb[0].mxu0 %v3066
          %v3105 = vpop.f32.mrb[0].mxu0
          %v3106 = vadd.f32 0.0, %v3105
          %v3107 = vpop.f32.mrb[0].mxu0
          %v3108 = vpop.f32.mrb[0].mxu0
          %v3109 = vpop.f32.mrb[0].mxu0
          %3110 = vdwg.mxu0
          %v3111 = vpack.c.bf16 %v2651, %v2651
          %v3112 = vpack.c.bf16 %v2827, %v2827
          %v3113 = vpack.c.bf16 %v3003, %v3003
          %v3115 = vsel %vm1711, %v3111, 0
          %v3118 = vsel %vm1711, %v3112, 0
          %3120 = vmatprep.subr.bf16.mxu0 0
          %3121 = vmatpush1.bf16.xpose.msra.mxu0 %v3118
          %3122 = vmatprep.subr.bf16.mxu0 0
          %3123 = vmatpush1.bf16.xpose.msra.mxu0 0
          %3124 = vmatprep.subr.bf16.mxu0 0
          %3125 = vmatpush1.bf16.xpose.msra.mxu0 0
          %3126 = vmatprep.subr.bf16.mxu0 0
          %3127 = vmatpush1.bf16.xpose.msra.mxu0 0
          %3128 = vmatprep.subr.bf16.mxu0 0
          %3129 = vmatpush1.bf16.xpose.msra.mxu0 0
          %3130 = vmatprep.subr.bf16.mxu0 0
          %3131 = vmatpush1.bf16.xpose.msra.mxu0 0
          %3132 = vmatprep.subr.bf16.mxu0 0
          %3133 = vmatpush1.bf16.xpose.msra.mxu0 0
          %3134 = vmatprep.subr.bf16.mxu0 0
          %3135 = vmatpush1.bf16.xpose.msra.mxu0 0
          %3136 = vmatprep.subr.bf16.mxu0 0
          %3137 = vmatpush1.bf16.xpose.msra.mxu0 0
          %3138 = vmatprep.subr.bf16.mxu0 0
          %3139 = vmatpush1.bf16.xpose.msra.mxu0 0
          %3140 = vmatprep.subr.bf16.mxu0 0
          %3141 = vmatpush1.bf16.xpose.msra.mxu0 0
          %3142 = vmatprep.subr.bf16.mxu0 0
          %3143 = vmatpush1.bf16.xpose.msra.mxu0 0
          %3144 = vmatprep.subr.bf16.mxu0 0
          %3145 = vmatpush1.bf16.xpose.msra.mxu0 0
          %3146 = vmatprep.subr.bf16.mxu0 0
          %3147 = vmatpush1.bf16.xpose.msra.mxu0 0
          %3148 = vmatprep.subr.bf16.mxu0 0
          %3149 = vmatpush1.bf16.xpose.msra.mxu0 0
          %3150 = vmatprep.subr.bf16.mxu0 0
          %3151 = vmatpush1.bf16.xpose.msra.mxu0 0
          %3152 = vmatprep.mubr.bf16.mxu0 0
          %3153 = vmatmul.mubr.bf16.gmra.mrb[0].mxu0 %v3115
          %v3154 = vpop.f32.mrb[0].mxu0
          %v3155 = vadd.f32 0.0, %v3154
          %v3156 = vpop.f32.mrb[0].mxu0
          %v3157 = vpop.f32.mrb[0].mxu0
          %v3158 = vpop.f32.mrb[0].mxu0
          %3159 = vdwg.mxu0
          %v3160 = vsel %vm2306, %v3155, -inf
          %3161 = vmax.xlane.f32.xlu0 %v3160
          %v3162 = vpop.xlane.xlu0 %3161
          %v3163 = vsub.f32 %v3155, %v3162
          %v3164 = vmul.f32 %v3163, 1.442695
          %v3165 = vpow.pop %v3164
          %v3166 = vsel %vm2306, %v3165, 0.0
          %3167 = vadd.xlane.f32.xlu0 %v3166
          %v3168 = vpop.xlane.xlu0 %3167
          %v3169 = vrcp.pop %v3168
          %v3170 = vmul.f32 %v3165, %v3169
          %v3171 = vpack.c.bf16 %v3170, %v3170
          %v3173 = vsel %vm2306, %v3171, 0
          %v3176 = vsel %vm2322, %v3113, 0
          %3178 = vmatprep.subr.bf16.mxu0 0
          %3179 = vmatpush1.bf16.msra.mxu0 %v3176
          %3180 = vmatprep.subr.bf16.mxu0 0
          %3181 = vmatpush1.bf16.msra.mxu0 0
          %3182 = vmatprep.subr.bf16.mxu0 0
          %3183 = vmatpush1.bf16.msra.mxu0 0
          %3184 = vmatprep.subr.bf16.mxu0 0
          %3185 = vmatpush1.bf16.msra.mxu0 0
          %3186 = vmatprep.subr.bf16.mxu0 0
          %3187 = vmatpush1.bf16.msra.mxu0 0
          %3188 = vmatprep.subr.bf16.mxu0 0
          %3189 = vmatpush1.bf16.msra.mxu0 0
          %3190 = vmatprep.subr.bf16.mxu0 0
          %3191 = vmatpush1.bf16.msra.mxu0 0
          %3192 = vmatprep.subr.bf16.mxu0 0
          %3193 = vmatpush1.bf16.msra.mxu0 0
          %3194 = vmatprep.subr.bf16.mxu0 0
          %3195 = vmatpush1.bf16.msra.mxu0 0
          %3196 = vmatprep.subr.bf16.mxu0 0
          %3197 = vmatpush1.bf16.msra.mxu0 0
          %3198 = vmatprep.subr.bf16.mxu0 0
          %3199 = vmatpush1.bf16.msra.mxu0 0
          %3200 = vmatprep.subr.bf16.mxu0 0
          %3201 = vmatpush1.bf16.msra.mxu0 0
          %3202 = vmatprep.subr.bf16.mxu0 0
          %3203 = vmatpush1.bf16.msra.mxu0 0
          %3204 = vmatprep.subr.bf16.mxu0 0
          %3205 = vmatpush1.bf16.msra.mxu0 0
          %3206 = vmatprep.subr.bf16.mxu0 0
          %3207 = vmatpush1.bf16.msra.mxu0 0
          %3208 = vmatprep.subr.bf16.mxu0 0
          %3209 = vmatpush1.bf16.msra.mxu0 0
          %3210 = vmatprep.mubr.bf16.mxu0 0
          %3211 = vmatmul.mubr.bf16.gmra.mrb[0].mxu0 %v3173
          %v3212 = vpop.f32.mrb[0].mxu0
          %v3213 = vadd.f32 0.0, %v3212
          %v3214 = vpop.f32.mrb[0].mxu0
          %v3215 = vpop.f32.mrb[0].mxu0
          %v3216 = vpop.f32.mrb[0].mxu0
          %3217 = vdwg.mxu0
          %v3218 = vpack.c.bf16 %v3213, %v3106
          %s3219 = scalar_lea.vmem %s1587, 8
          %v3220 = vld [vmem:[%s3219] sm:$0xf]
          %v3221 = vld [vmem:[%s3219 + $0x4] sm:$0xf]
          %v3224 = vunpack.c.l.b16 %v3220
          %v3225 = vunpack.c.l.b16 %v3221
          %v3226 = vpack.c.b16 %v3225, %v3224
          %v3229 = vsel %vm1711, %v3218, 0
          %3231 = vmatprep.subr.bf16.mxu0 0
          %3232 = vmatpush1.bf16.msra.mxu0 %v3226
          %3233 = vmatprep.subr.bf16.mxu0 0
          %3234 = vmatpush1.bf16.msra.mxu0 0
          %3235 = vmatprep.subr.bf16.mxu0 0
          %3236 = vmatpush1.bf16.msra.mxu0 0
          %3237 = vmatprep.subr.bf16.mxu0 0
          %3238 = vmatpush1.bf16.msra.mxu0 0
          %3239 = vmatprep.subr.bf16.mxu0 0
          %3240 = vmatpush1.bf16.msra.mxu0 0
          %3241 = vmatprep.subr.bf16.mxu0 0
          %3242 = vmatpush1.bf16.msra.mxu0 0
          %3243 = vmatprep.subr.bf16.mxu0 0
          %3244 = vmatpush1.bf16.msra.mxu0 0
          %3245 = vmatprep.subr.bf16.mxu0 0
          %3246 = vmatpush1.bf16.msra.mxu0 0
          %3247 = vmatprep.subr.bf16.mxu0 0
          %3248 = vmatpush1.bf16.msra.mxu0 0
          %3249 = vmatprep.subr.bf16.mxu0 0
          %3250 = vmatpush1.bf16.msra.mxu0 0
          %3251 = vmatprep.subr.bf16.mxu0 0
          %3252 = vmatpush1.bf16.msra.mxu0 0
          %3253 = vmatprep.subr.bf16.mxu0 0
          %3254 = vmatpush1.bf16.msra.mxu0 0
          %3255 = vmatprep.subr.bf16.mxu0 0
          %3256 = vmatpush1.bf16.msra.mxu0 0
          %3257 = vmatprep.subr.bf16.mxu0 0
          %3258 = vmatpush1.bf16.msra.mxu0 0
          %3259 = vmatprep.subr.bf16.mxu0 0
          %3260 = vmatpush1.bf16.msra.mxu0 0
          %3261 = vmatprep.subr.bf16.mxu0 0
          %3262 = vmatpush1.bf16.msra.mxu0 0
          %3263 = vmatprep.mubr.bf16.mxu0 0
          %3264 = vmatmul.mubr.bf16.gmra.mrb[0].mxu0 %v3229
          %v3265 = vpop.f32.mrb[0].mxu0
          %v3266 = vadd.f32 0.0, %v3265
          %v3267 = vpop.f32.mrb[0].mxu0
          %v3268 = vpop.f32.mrb[0].mxu0
          %v3269 = vadd.f32 0.0, %v3268
          %v3270 = vpop.f32.mrb[0].mxu0
          %3271 = vdwg.mxu0
          %v3274 = vunpack.c.l.b16 %v2474
          %v3275 = vunpack.c.l.b16 %v2475
          %v3276 = vpack.c.b16 %v3275, %v3274
          %v3279 = vsel %vm1711, %v2473, 0
          %3281 = vmatprep.subr.bf16.mxu0 0
          %3282 = vmatpush1.bf16.msra.mxu0 %v3276
          %3283 = vmatprep.subr.bf16.mxu0 0
          %3284 = vmatpush1.bf16.msra.mxu0 0
          %3285 = vmatprep.subr.bf16.mxu0 0
          %3286 = vmatpush1.bf16.msra.mxu0 0
          %3287 = vmatprep.subr.bf16.mxu0 0
          %3288 = vmatpush1.bf16.msra.mxu0 0
          %3289 = vmatprep.subr.bf16.mxu0 0
          %3290 = vmatpush1.bf16.msra.mxu0 0
          %3291 = vmatprep.subr.bf16.mxu0 0
          %3292 = vmatpush1.bf16.msra.mxu0 0
          %3293 = vmatprep.subr.bf16.mxu0 0
          %3294 = vmatpush1.bf16.msra.mxu0 0
          %3295 = vmatprep.subr.bf16.mxu0 0
          %3296 = vmatpush1.bf16.msra.mxu0 0
          %3297 = vmatprep.subr.bf16.mxu0 0
          %3298 = vmatpush1.bf16.msra.mxu0 0
          %3299 = vmatprep.subr.bf16.mxu0 0
          %3300 = vmatpush1.bf16.msra.mxu0 0
          %3301 = vmatprep.subr.bf16.mxu0 0
          %3302 = vmatpush1.bf16.msra.mxu0 0
          %3303 = vmatprep.subr.bf16.mxu0 0
          %3304 = vmatpush1.bf16.msra.mxu0 0
          %3305 = vmatprep.subr.bf16.mxu0 0
          %3306 = vmatpush1.bf16.msra.mxu0 0
          %3307 = vmatprep.subr.bf16.mxu0 0
          %3308 = vmatpush1.bf16.msra.mxu0 0
          %3309 = vmatprep.subr.bf16.mxu0 0
          %3310 = vmatpush1.bf16.msra.mxu0 0
          %3311 = vmatprep.subr.bf16.mxu0 0
          %3312 = vmatpush1.bf16.msra.mxu0 0
          %3313 = vmatprep.mubr.bf16.mxu0 0
          %3314 = vmatmul.mubr.bf16.gmra.mrb[0].mxu0 %v3279
          %v3315 = vpop.f32.mrb[0].mxu0
          %v3316 = vadd.f32 %v3266, %v3315
          %v3317 = vpop.f32.mrb[0].mxu0
          %v3318 = vpop.f32.mrb[0].mxu0
          %v3319 = vadd.f32 %v3269, %v3318
          %v3320 = vpop.f32.mrb[0].mxu0
          %3321 = vdwg.mxu0
          %v3322 = vadd.f32 %v1715, %v3316
          %v3323 = vadd.f32 %v1716, %v3319
          %vm3324 = vcmask 785408
          %v3325 = vsel %vm3324, %v3322, 0.0
          %3326 = vadd.xlane.f32.xlu0 %v3325
          %v3327 = vpop.xlane.xlu0 %3326
          %v3328 = vsel %vm3324, %v3323, 0.0
          %3329 = vadd.xlane.f32.xlu0 %v3328
          %v3330 = vpop.xlane.xlu0 %3329
          %v3331 = vrcp.pop 96.0
          %v3332 = vmul.f32 %v3327, %v3331
          %v3333 = vmul.f32 %v3330, %v3331
          %v3334 = vsub.f32 %v3322, %v3332
          %v3335 = vsub.f32 %v3323, %v3333
          %v3336 = vmul.f32 %v3334, %v3334
          %v3337 = vmul.f32 %v3335, %v3335
          %v3338 = vsel %vm3324, %v3336, 0.0
          %3339 = vadd.xlane.f32.xlu0 %v3338
          %v3340 = vpop.xlane.xlu0 %3339
          %v3341 = vsel %vm3324, %v3337, 0.0
          %3342 = vadd.xlane.f32.xlu0 %v3341
          %v3343 = vpop.xlane.xlu0 %3342
          %v3344 = vmul.f32 %v3340, %v3331
          %v3345 = vmul.f32 %v3343, %v3331
          %v3346 = vadd.f32 %v3344, 1e-05
          %v3347 = vadd.f32 %v3345, 1e-05
          %v3348 = vrsqrt.pop %v3346
          %v3349 = vrsqrt.pop %v3347
          %v3350 = vmul.f32 %v3334, %v3348
          %v3351 = vmul.f32 %v3335, %v3349
          %v3353 = vlaneseq
          %v3354 = vshrl.u32 %v3353, 7
          %v3355 = vsub.s32 0, %v3354
          %v3356 = vrot.slane %v1720, %v3355
          %v3358 = vmul.f32 %v3350, %v3356
          %v3359 = vmul.f32 %v3351, %v3356
          %v3361 = vlaneseq
          %v3362 = vshrl.u32 %v3361, 7
          %v3363 = vsub.s32 0, %v3362
          %v3364 = vrot.slane %v1721, %v3363
          %v3366 = vadd.f32 %v3358, %v3364
          %v3367 = vadd.f32 %v3359, %v3364
          %v3368 = vld [vmem:[%s1616] sm:$0xf]
          %v3369 = vld [vmem:[%s1616 + $0x4] sm:$0xf]
          %v3370 = vld [vmem:[%s1616 + $0x8] sm:$0xf]
          %v3371 = vld [vmem:[%s1616 + $0xc] sm:$0xf]
          %v3372 = vld [vmem:[%s1616 + $0x10] sm:$0xf]
          %v3373 = vld [vmem:[%s1616 + $0x14] sm:$0xf]
          %v3374 = vld [vmem:[%s1616 + $0x18] sm:$0xf]
          %v3375 = vld [vmem:[%s1616 + $0x1c] sm:$0xf]
          %v3376 = vld [vmem:[%s1616 + $0x20] sm:$0xf]
          %v3377 = vld [vmem:[%s1616 + $0x24] sm:$0xf]
          %v3378 = vld [vmem:[%s1616 + $0x28] sm:$0xf]
          %v3379 = vld [vmem:[%s1616 + $0x2c] sm:$0xf]
          %v3380 = vld [vmem:[%s1625] sm:$0x1]
          %v3381 = vld [vmem:[%s1636] sm:$0xf]
          %v3382 = vld [vmem:[%s1636 + $0x4] sm:$0xf]
          %v3383 = vld [vmem:[%s1636 + $0x8] sm:$0xf]
          %v3384 = vld [vmem:[%s1636 + $0xc] sm:$0xf]
          %v3385 = vld [vmem:[%s1636 + $0x10] sm:$0xf]
          %v3386 = vld [vmem:[%s1636 + $0x14] sm:$0xf]
          %v3387 = vld [vmem:[%s1636 + $0x18] sm:$0xf]
          %v3388 = vld [vmem:[%s1636 + $0x1c] sm:$0xf]
          %v3389 = vld [vmem:[%s1636 + $0x20] sm:$0xf]
          %v3390 = vld [vmem:[%s1636 + $0x24] sm:$0xf]
          %v3391 = vld [vmem:[%s1636 + $0x28] sm:$0xf]
          %v3392 = vld [vmem:[%s1636 + $0x2c] sm:$0xf]
          %v3393 = vld [vmem:[%s1636 + $0x30] sm:$0xf]
          %v3394 = vld [vmem:[%s1636 + $0x34] sm:$0xf]
          %v3395 = vld [vmem:[%s1636 + $0x38] sm:$0xf]
          %v3396 = vld [vmem:[%s1636 + $0x3c] sm:$0xf]
          %v3397 = vld [vmem:[%s1645] sm:$0x1]
          %v3398 = vld [vmem:[%s1654] sm:$0x1]
          %v3399 = vld [vmem:[%s1663] sm:$0x1]
          %v3400 = vpack.c.bf16 %v3367, %v3366
          %v3402 = vlaneseq
          %v3403 = vshrl.u32 %v3402, 7
          %v3404 = vsub.s32 0, %v3403
          %v3405 = vrot.slane %v3380, %v3404
          %v3419 = vunpack.c.l.b16 %v3368
          %v3420 = vunpack.c.l.b16 %v3369
          %v3421 = vunpack.c.l.b16 %v3370
          %v3422 = vunpack.c.l.b16 %v3371
          %v3423 = vunpack.c.l.b16 %v3372
          %v3424 = vunpack.c.l.b16 %v3373
          %v3425 = vunpack.c.l.b16 %v3374
          %v3426 = vunpack.c.l.b16 %v3375
          %v3427 = vunpack.c.l.b16 %v3376
          %v3428 = vunpack.c.l.b16 %v3377
          %v3429 = vunpack.c.l.b16 %v3378
          %v3430 = vunpack.c.l.b16 %v3379
          %v3431 = vpack.c.b16 %v3420, %v3419
          %v3432 = vpack.c.b16 %v3422, %v3421
          %v3433 = vpack.c.b16 %v3424, %v3423
          %v3434 = vpack.c.b16 %v3426, %v3425
          %v3435 = vpack.c.b16 %v3428, %v3427
          %v3436 = vpack.c.b16 %v3430, %v3429
          %v3444 = vsel %vm3324, %v3400, 0
          %3446 = vmatprep.subr.bf16.mxu0 0
          %3447 = vmatpush1.bf16.msra.mxu0 %v3431
          %3448 = vmatprep.subr.bf16.mxu0 0
          %3449 = vmatpush1.bf16.msra.mxu0 %v3432
          %3450 = vmatprep.subr.bf16.mxu0 0
          %3451 = vmatpush1.bf16.msra.mxu0 %v3433
          %3452 = vmatprep.subr.bf16.mxu0 0
          %3453 = vmatpush1.bf16.msra.mxu0 %v3434
          %3454 = vmatprep.subr.bf16.mxu0 0
          %3455 = vmatpush1.bf16.msra.mxu0 %v3435
          %3456 = vmatprep.subr.bf16.mxu0 0
          %3457 = vmatpush1.bf16.msra.mxu0 %v3436
          %3458 = vmatprep.subr.bf16.mxu0 0
          %3459 = vmatpush1.bf16.msra.mxu0 0
          %3460 = vmatprep.subr.bf16.mxu0 0
          %3461 = vmatpush1.bf16.msra.mxu0 0
          %3462 = vmatprep.subr.bf16.mxu0 0
          %3463 = vmatpush1.bf16.msra.mxu0 0
          %3464 = vmatprep.subr.bf16.mxu0 0
          %3465 = vmatpush1.bf16.msra.mxu0 0
          %3466 = vmatprep.subr.bf16.mxu0 0
          %3467 = vmatpush1.bf16.msra.mxu0 0
          %3468 = vmatprep.subr.bf16.mxu0 0
          %3469 = vmatpush1.bf16.msra.mxu0 0
          %3470 = vmatprep.subr.bf16.mxu0 0
          %3471 = vmatpush1.bf16.msra.mxu0 0
          %3472 = vmatprep.subr.bf16.mxu0 0
          %3473 = vmatpush1.bf16.msra.mxu0 0
          %3474 = vmatprep.subr.bf16.mxu0 0
          %3475 = vmatpush1.bf16.msra.mxu0 0
          %3476 = vmatprep.subr.bf16.mxu0 0
          %3477 = vmatpush1.bf16.msra.mxu0 0
          %3478 = vmatprep.mubr.bf16.mxu0 0
          %3479 = vmatmul.mubr.bf16.gmra.mrb[0].mxu0 %v3444
          %v3480 = vpop.f32.mrb[0].mxu0
          %v3481 = vadd.f32 %v3405, %v3480
          %v3482 = vpop.f32.mrb[0].mxu0
          %v3483 = vpop.f32.mrb[0].mxu0
          %v3484 = vadd.f32 %v3405, %v3483
          %v3485 = vpop.f32.mrb[0].mxu0
          %3486 = vdwg.mxu0
          %v3487 = vmax.f32 %v3481, 0.0
          %v3488 = vmax.f32 %v3484, 0.0
          %v3489 = vpack.c.bf16 %v3488, %v3487
          %v3491 = vlaneseq
          %v3492 = vshrl.u32 %v3491, 7
          %v3493 = vsub.s32 0, %v3492
          %v3494 = vrot.slane %v3397, %v3493
          %v3512 = vunpack.c.l.b16 %v3381
          %v3513 = vunpack.c.l.b16 %v3382
          %v3514 = vunpack.c.l.b16 %v3383
          %v3515 = vunpack.c.l.b16 %v3384
          %v3516 = vunpack.c.l.b16 %v3385
          %v3517 = vunpack.c.l.b16 %v3386
          %v3518 = vunpack.c.l.b16 %v3387
          %v3519 = vunpack.c.l.b16 %v3388
          %v3520 = vunpack.c.l.b16 %v3389
          %v3521 = vunpack.c.l.b16 %v3390
          %v3522 = vunpack.c.l.b16 %v3391
          %v3523 = vunpack.c.l.b16 %v3392
          %v3524 = vunpack.c.l.b16 %v3393
          %v3525 = vunpack.c.l.b16 %v3394
          %v3526 = vunpack.c.l.b16 %v3395
          %v3527 = vunpack.c.l.b16 %v3396
          %v3528 = vpack.c.b16 %v3513, %v3512
          %v3529 = vpack.c.b16 %v3515, %v3514
          %v3530 = vpack.c.b16 %v3517, %v3516
          %v3531 = vpack.c.b16 %v3519, %v3518
          %v3532 = vpack.c.b16 %v3521, %v3520
          %v3533 = vpack.c.b16 %v3523, %v3522
          %v3534 = vpack.c.b16 %v3525, %v3524
          %v3535 = vpack.c.b16 %v3527, %v3526
          %3544 = vmatprep.subr.bf16.mxu0 0
          %3545 = vmatpush1.bf16.msra.mxu0 %v3528
          %3546 = vmatprep.subr.bf16.mxu0 0
          %3547 = vmatpush1.bf16.msra.mxu0 %v3529
          %3548 = vmatprep.subr.bf16.mxu0 0
          %3549 = vmatpush1.bf16.msra.mxu0 %v3530
          %3550 = vmatprep.subr.bf16.mxu0 0
          %3551 = vmatpush1.bf16.msra.mxu0 %v3531
          %3552 = vmatprep.subr.bf16.mxu0 0
          %3553 = vmatpush1.bf16.msra.mxu0 %v3532
          %3554 = vmatprep.subr.bf16.mxu0 0
          %3555 = vmatpush1.bf16.msra.mxu0 %v3533
          %3556 = vmatprep.subr.bf16.mxu0 0
          %3557 = vmatpush1.bf16.msra.mxu0 %v3534
          %3558 = vmatprep.subr.bf16.mxu0 0
          %3559 = vmatpush1.bf16.msra.mxu0 %v3535
          %3560 = vmatprep.subr.bf16.mxu0 0
          %3561 = vmatpush1.bf16.msra.mxu0 0
          %3562 = vmatprep.subr.bf16.mxu0 0
          %3563 = vmatpush1.bf16.msra.mxu0 0
          %3564 = vmatprep.subr.bf16.mxu0 0
          %3565 = vmatpush1.bf16.msra.mxu0 0
          %3566 = vmatprep.subr.bf16.mxu0 0
          %3567 = vmatpush1.bf16.msra.mxu0 0
          %3568 = vmatprep.subr.bf16.mxu0 0
          %3569 = vmatpush1.bf16.msra.mxu0 0
          %3570 = vmatprep.subr.bf16.mxu0 0
          %3571 = vmatpush1.bf16.msra.mxu0 0
          %3572 = vmatprep.subr.bf16.mxu0 0
          %3573 = vmatpush1.bf16.msra.mxu0 0
          %3574 = vmatprep.subr.bf16.mxu0 0
          %3575 = vmatpush1.bf16.msra.mxu0 0
          %3576 = vmatprep.mubr.bf16.mxu0 0
          %3577 = vmatmul.mubr.bf16.gmra.mrb[0].mxu0 %v3489
          %v3578 = vpop.f32.mrb[0].mxu0
          %v3579 = vadd.f32 %v3494, %v3578
          %v3580 = vpop.f32.mrb[0].mxu0
          %v3581 = vpop.f32.mrb[0].mxu0
          %v3582 = vadd.f32 %v3494, %v3581
          %v3583 = vpop.f32.mrb[0].mxu0
          %3584 = vdwg.mxu0
          %3587 = vrot.lane.b32.xlu0 %v3366, 112
          %v3588 = vpop.permute.xlu0 %3587
          %3589 = vrot.lane.b32.xlu0 %v3367, 112
          %v3590 = vpop.permute.xlu0 %3589
          %v3593 = vadd.f32 %v3579, %v3588
          %v3594 = vadd.f32 %v3582, %v3590
          %v3595 = vsel %vm1756, %v3593, 0.0
          %3596 = vadd.xlane.f32.xlu0 %v3595
          %v3597 = vpop.xlane.xlu0 %3596
          %v3598 = vsel %vm1756, %v3594, 0.0
          %3599 = vadd.xlane.f32.xlu0 %v3598
          %v3600 = vpop.xlane.xlu0 %3599
          %v3601 = vrcp.pop 64.0
          %v3602 = vmul.f32 %v3597, %v3601
          %v3603 = vmul.f32 %v3600, %v3601
          %v3604 = vsub.f32 %v3593, %v3602
          %v3605 = vsub.f32 %v3594, %v3603
          %v3606 = vmul.f32 %v3604, %v3604
          %v3607 = vmul.f32 %v3605, %v3605
          %v3608 = vsel %vm1756, %v3606, 0.0
          %3609 = vadd.xlane.f32.xlu0 %v3608
          %v3610 = vpop.xlane.xlu0 %3609
          %v3611 = vsel %vm1756, %v3607, 0.0
          %3612 = vadd.xlane.f32.xlu0 %v3611
          %v3613 = vpop.xlane.xlu0 %3612
          %v3614 = vmul.f32 %v3610, %v3601
          %v3615 = vmul.f32 %v3613, %v3601
          %v3616 = vadd.f32 %v3614, 1e-05
          %v3617 = vadd.f32 %v3615, 1e-05
          %v3618 = vrsqrt.pop %v3616
          %v3619 = vrsqrt.pop %v3617
          %v3620 = vmul.f32 %v3604, %v3618
          %v3621 = vmul.f32 %v3605, %v3619
          %v3623 = vlaneseq
          %v3624 = vshrl.u32 %v3623, 7
          %v3625 = vsub.s32 0, %v3624
          %v3626 = vrot.slane %v3398, %v3625
          %v3628 = vmul.f32 %v3620, %v3626
          %v3629 = vmul.f32 %v3621, %v3626
          %v3631 = vlaneseq
          %v3632 = vshrl.u32 %v3631, 7
          %v3633 = vsub.s32 0, %v3632
          %v3634 = vrot.slane %v3399, %v3633
          %v3636 = vadd.f32 %v3628, %v3634
          %v3637 = vadd.f32 %v3629, %v3634
          %3638 = vst.msk [vmem:[#allocation4] sm:$0xff] %vm1756, %v3636
          %3639 = vst.msk [vmem:[#allocation4 + $0x8] sm:$0xff] %vm1756, %v3637
        $region136: #{_encoder_forward_impl.1} parent=127 // pred_fallthru
          _
        %p3640 = scmp.lt.s32.totalorder %s39, 2
        // Predicated region
        $region137: #{_encoder_forward_impl.1} parent=127 // pred_check
          %p3641 = pneg %p3640
        $region138: #{_encoder_forward_impl.1} parent=127 // pred_check_branch
          %3643 = sbr.rel (%p3641) target = $region140
        $region139: #{_encoder_forward_impl.1} parent=127 // pred_region
          %v3644 = vld [vmem:[#allocation2] sm:$0xff]
          %v3645 = vld [vmem:[#allocation2 + $0x8] sm:$0xff]
          %v3646 = vpack.c.bf16 %v3645, %v3644
          %v3647 = vld [vmem:[%s1456] sm:$0x1]
          %v3648 = vld [vmem:[%s1465] sm:$0x1]
          %v3649 = vld [vmem:[%s1436] sm:$0xf]
          %v3650 = vld [vmem:[%s1436 + $0x4] sm:$0xf]
          %v3651 = vld [vmem:[%s1436 + $0x8] sm:$0xf]
          %v3652 = vld [vmem:[%s1436 + $0xc] sm:$0xf]
          %v3653 = vld [vmem:[%s1436 + $0x10] sm:$0xf]
          %v3654 = vld [vmem:[%s1436 + $0x14] sm:$0xf]
          %v3655 = vld [vmem:[%s1436 + $0x18] sm:$0xf]
          %v3656 = vld [vmem:[%s1436 + $0x1c] sm:$0xf]
          %v3665 = vunpack.c.l.b16 %v3649
          %v3666 = vunpack.c.l.b16 %v3650
          %v3667 = vunpack.c.l.b16 %v3651
          %v3668 = vunpack.c.l.b16 %v3652
          %v3669 = vunpack.c.l.b16 %v3653
          %v3670 = vunpack.c.l.b16 %v3654
          %v3671 = vunpack.c.l.b16 %v3655
          %v3672 = vunpack.c.l.b16 %v3656
          %v3673 = vpack.c.b16 %v3666, %v3665
          %v3674 = vpack.c.b16 %v3668, %v3667
          %v3675 = vpack.c.b16 %v3670, %v3669
          %v3676 = vpack.c.b16 %v3672, %v3671
          %vm3681 = vcmask 523264
          %v3683 = vsel %vm3681, %v3646, 0
          %3685 = vmatprep.subr.bf16.mxu0 0
          %3686 = vmatpush1.bf16.msra.mxu0 %v3673
          %3687 = vmatprep.subr.bf16.mxu0 0
          %3688 = vmatpush1.bf16.msra.mxu0 %v3674
          %3689 = vmatprep.subr.bf16.mxu0 0
          %3690 = vmatpush1.bf16.msra.mxu0 %v3675
          %3691 = vmatprep.subr.bf16.mxu0 0
          %3692 = vmatpush1.bf16.msra.mxu0 %v3676
          %3693 = vmatprep.subr.bf16.mxu0 0
          %3694 = vmatpush1.bf16.msra.mxu0 0
          %3695 = vmatprep.subr.bf16.mxu0 0
          %3696 = vmatpush1.bf16.msra.mxu0 0
          %3697 = vmatprep.subr.bf16.mxu0 0
          %3698 = vmatpush1.bf16.msra.mxu0 0
          %3699 = vmatprep.subr.bf16.mxu0 0
          %3700 = vmatpush1.bf16.msra.mxu0 0
          %3701 = vmatprep.subr.bf16.mxu0 0
          %3702 = vmatpush1.bf16.msra.mxu0 0
          %3703 = vmatprep.subr.bf16.mxu0 0
          %3704 = vmatpush1.bf16.msra.mxu0 0
          %3705 = vmatprep.subr.bf16.mxu0 0
          %3706 = vmatpush1.bf16.msra.mxu0 0
          %3707 = vmatprep.subr.bf16.mxu0 0
          %3708 = vmatpush1.bf16.msra.mxu0 0
          %3709 = vmatprep.subr.bf16.mxu0 0
          %3710 = vmatpush1.bf16.msra.mxu0 0
          %3711 = vmatprep.subr.bf16.mxu0 0
          %3712 = vmatpush1.bf16.msra.mxu0 0
          %3713 = vmatprep.subr.bf16.mxu0 0
          %3714 = vmatpush1.bf16.msra.mxu0 0
          %3715 = vmatprep.subr.bf16.mxu0 0
          %3716 = vmatpush1.bf16.msra.mxu0 0
          %3717 = vmatprep.mubr.bf16.mxu0 0
          %3718 = vmatmul.mubr.bf16.gmra.mrb[0].mxu0 %v3683
          %v3719 = vpop.f32.mrb[0].mxu0
          %v3720 = vadd.f32 0.0, %v3719
          %v3721 = vpop.f32.mrb[0].mxu0
          %v3722 = vpop.f32.mrb[0].mxu0
          %v3723 = vadd.f32 0.0, %v3722
          %v3724 = vpop.f32.mrb[0].mxu0
          %3725 = vdwg.mxu0
          %s3726 = scalar_lea.vmem %s1436, 64
          %v3727 = vld [vmem:[%s3726] sm:$0xf]
          %v3728 = vld [vmem:[%s3726 + $0x4] sm:$0xf]
          %v3729 = vld [vmem:[%s3726 + $0x8] sm:$0xf]
          %v3730 = vld [vmem:[%s3726 + $0xc] sm:$0xf]
          %v3731 = vld [vmem:[%s3726 + $0x10] sm:$0xf]
          %v3732 = vld [vmem:[%s3726 + $0x14] sm:$0xf]
          %v3733 = vld [vmem:[%s3726 + $0x18] sm:$0xf]
          %v3734 = vld [vmem:[%s3726 + $0x1c] sm:$0xf]
          %v3743 = vunpack.c.l.b16 %v3727
          %v3744 = vunpack.c.l.b16 %v3728
          %v3745 = vunpack.c.l.b16 %v3729
          %v3746 = vunpack.c.l.b16 %v3730
          %v3747 = vunpack.c.l.b16 %v3731
          %v3748 = vunpack.c.l.b16 %v3732
          %v3749 = vunpack.c.l.b16 %v3733
          %v3750 = vunpack.c.l.b16 %v3734
          %v3751 = vpack.c.b16 %v3744, %v3743
          %v3752 = vpack.c.b16 %v3746, %v3745
          %v3753 = vpack.c.b16 %v3748, %v3747
          %v3754 = vpack.c.b16 %v3750, %v3749
          %3759 = vmatprep.subr.bf16.mxu0 0
          %3760 = vmatpush1.bf16.msra.mxu0 %v3751
          %3761 = vmatprep.subr.bf16.mxu0 0
          %3762 = vmatpush1.bf16.msra.mxu0 %v3752
          %3763 = vmatprep.subr.bf16.mxu0 0
          %3764 = vmatpush1.bf16.msra.mxu0 %v3753
          %3765 = vmatprep.subr.bf16.mxu0 0
          %3766 = vmatpush1.bf16.msra.mxu0 %v3754
          %3767 = vmatprep.subr.bf16.mxu0 0
          %3768 = vmatpush1.bf16.msra.mxu0 0
          %3769 = vmatprep.subr.bf16.mxu0 0
          %3770 = vmatpush1.bf16.msra.mxu0 0
          %3771 = vmatprep.subr.bf16.mxu0 0
          %3772 = vmatpush1.bf16.msra.mxu0 0
          %3773 = vmatprep.subr.bf16.mxu0 0
          %3774 = vmatpush1.bf16.msra.mxu0 0
          %3775 = vmatprep.subr.bf16.mxu0 0
          %3776 = vmatpush1.bf16.msra.mxu0 0
          %3777 = vmatprep.subr.bf16.mxu0 0
          %3778 = vmatpush1.bf16.msra.mxu0 0
          %3779 = vmatprep.subr.bf16.mxu0 0
          %3780 = vmatpush1.bf16.msra.mxu0 0
          %3781 = vmatprep.subr.bf16.mxu0 0
          %3782 = vmatpush1.bf16.msra.mxu0 0
          %3783 = vmatprep.subr.bf16.mxu0 0
          %3784 = vmatpush1.bf16.msra.mxu0 0
          %3785 = vmatprep.subr.bf16.mxu0 0
          %3786 = vmatpush1.bf16.msra.mxu0 0
          %3787 = vmatprep.subr.bf16.mxu0 0
          %3788 = vmatpush1.bf16.msra.mxu0 0
          %3789 = vmatprep.subr.bf16.mxu0 0
          %3790 = vmatpush1.bf16.msra.mxu0 0
          %3791 = vmatprep.mubr.bf16.mxu0 0
          %3792 = vmatmul.mubr.bf16.gmra.mrb[0].mxu0 %v3683
          %v3793 = vpop.f32.mrb[0].mxu0
          %v3794 = vadd.f32 0.0, %v3793
          %v3795 = vpop.f32.mrb[0].mxu0
          %v3796 = vpop.f32.mrb[0].mxu0
          %v3797 = vadd.f32 0.0, %v3796
          %v3798 = vpop.f32.mrb[0].mxu0
          %3799 = vdwg.mxu0
          %s3800 = scalar_lea.vmem %s1436, 128
          %v3801 = vld [vmem:[%s3800] sm:$0xf]
          %v3802 = vld [vmem:[%s3800 + $0x4] sm:$0xf]
          %v3803 = vld [vmem:[%s3800 + $0x8] sm:$0xf]
          %v3804 = vld [vmem:[%s3800 + $0xc] sm:$0xf]
          %v3805 = vld [vmem:[%s3800 + $0x10] sm:$0xf]
          %v3806 = vld [vmem:[%s3800 + $0x14] sm:$0xf]
          %v3807 = vld [vmem:[%s3800 + $0x18] sm:$0xf]
          %v3808 = vld [vmem:[%s3800 + $0x1c] sm:$0xf]
          %v3817 = vunpack.c.l.b16 %v3801
          %v3818 = vunpack.c.l.b16 %v3802
          %v3819 = vunpack.c.l.b16 %v3803
          %v3820 = vunpack.c.l.b16 %v3804
          %v3821 = vunpack.c.l.b16 %v3805
          %v3822 = vunpack.c.l.b16 %v3806
          %v3823 = vunpack.c.l.b16 %v3807
          %v3824 = vunpack.c.l.b16 %v3808
          %v3825 = vpack.c.b16 %v3818, %v3817
          %v3826 = vpack.c.b16 %v3820, %v3819
          %v3827 = vpack.c.b16 %v3822, %v3821
          %v3828 = vpack.c.b16 %v3824, %v3823
          %3833 = vmatprep.subr.bf16.mxu0 0
          %3834 = vmatpush1.bf16.msra.mxu0 %v3825
          %3835 = vmatprep.subr.bf16.mxu0 0
          %3836 = vmatpush1.bf16.msra.mxu0 %v3826
          %3837 = vmatprep.subr.bf16.mxu0 0
          %3838 = vmatpush1.bf16.msra.mxu0 %v3827
          %3839 = vmatprep.subr.bf16.mxu0 0
          %3840 = vmatpush1.bf16.msra.mxu0 %v3828
          %3841 = vmatprep.subr.bf16.mxu0 0
          %3842 = vmatpush1.bf16.msra.mxu0 0
          %3843 = vmatprep.subr.bf16.mxu0 0
          %3844 = vmatpush1.bf16.msra.mxu0 0
          %3845 = vmatprep.subr.bf16.mxu0 0
          %3846 = vmatpush1.bf16.msra.mxu0 0
          %3847 = vmatprep.subr.bf16.mxu0 0
          %3848 = vmatpush1.bf16.msra.mxu0 0
          %3849 = vmatprep.subr.bf16.mxu0 0
          %3850 = vmatpush1.bf16.msra.mxu0 0
          %3851 = vmatprep.subr.bf16.mxu0 0
          %3852 = vmatpush1.bf16.msra.mxu0 0
          %3853 = vmatprep.subr.bf16.mxu0 0
          %3854 = vmatpush1.bf16.msra.mxu0 0
          %3855 = vmatprep.subr.bf16.mxu0 0
          %3856 = vmatpush1.bf16.msra.mxu0 0
          %3857 = vmatprep.subr.bf16.mxu0 0
          %3858 = vmatpush1.bf16.msra.mxu0 0
          %3859 = vmatprep.subr.bf16.mxu0 0
          %3860 = vmatpush1.bf16.msra.mxu0 0
          %3861 = vmatprep.subr.bf16.mxu0 0
          %3862 = vmatpush1.bf16.msra.mxu0 0
          %3863 = vmatprep.subr.bf16.mxu0 0
          %3864 = vmatpush1.bf16.msra.mxu0 0
          %3865 = vmatprep.mubr.bf16.mxu0 0
          %3866 = vmatmul.mubr.bf16.gmra.mrb[0].mxu0 %v3683
          %v3867 = vpop.f32.mrb[0].mxu0
          %v3868 = vadd.f32 0.0, %v3867
          %v3869 = vpop.f32.mrb[0].mxu0
          %v3870 = vpop.f32.mrb[0].mxu0
          %v3871 = vadd.f32 0.0, %v3870
          %v3872 = vpop.f32.mrb[0].mxu0
          %3873 = vdwg.mxu0
          %v3874 = vpack.c.bf16 %v3720, %v3720
          %v3875 = vpack.c.bf16 %v3794, %v3794
          %v3876 = vpack.c.bf16 %v3868, %v3868
          %vm3877 = vcmask 130048
          %v3879 = vsel %vm3877, %v3874, 0
          %v3882 = vsel %vm3877, %v3875, 0
          %3884 = vmatprep.subr.bf16.mxu0 0
          %3885 = vmatpush1.bf16.xpose.msra.mxu0 %v3882
          %3886 = vmatprep.subr.bf16.mxu0 0
          %3887 = vmatpush1.bf16.xpose.msra.mxu0 0
          %3888 = vmatprep.subr.bf16.mxu0 0
          %3889 = vmatpush1.bf16.xpose.msra.mxu0 0
          %3890 = vmatprep.subr.bf16.mxu0 0
          %3891 = vmatpush1.bf16.xpose.msra.mxu0 0
          %3892 = vmatprep.subr.bf16.mxu0 0
          %3893 = vmatpush1.bf16.xpose.msra.mxu0 0
          %3894 = vmatprep.subr.bf16.mxu0 0
          %3895 = vmatpush1.bf16.xpose.msra.mxu0 0
          %3896 = vmatprep.subr.bf16.mxu0 0
          %3897 = vmatpush1.bf16.xpose.msra.mxu0 0
          %3898 = vmatprep.subr.bf16.mxu0 0
          %3899 = vmatpush1.bf16.xpose.msra.mxu0 0
          %3900 = vmatprep.subr.bf16.mxu0 0
          %3901 = vmatpush1.bf16.xpose.msra.mxu0 0
          %3902 = vmatprep.subr.bf16.mxu0 0
          %3903 = vmatpush1.bf16.xpose.msra.mxu0 0
          %3904 = vmatprep.subr.bf16.mxu0 0
          %3905 = vmatpush1.bf16.xpose.msra.mxu0 0
          %3906 = vmatprep.subr.bf16.mxu0 0
          %3907 = vmatpush1.bf16.xpose.msra.mxu0 0
          %3908 = vmatprep.subr.bf16.mxu0 0
          %3909 = vmatpush1.bf16.xpose.msra.mxu0 0
          %3910 = vmatprep.subr.bf16.mxu0 0
          %3911 = vmatpush1.bf16.xpose.msra.mxu0 0
          %3912 = vmatprep.subr.bf16.mxu0 0
          %3913 = vmatpush1.bf16.xpose.msra.mxu0 0
          %3914 = vmatprep.subr.bf16.mxu0 0
          %3915 = vmatpush1.bf16.xpose.msra.mxu0 0
          %3916 = vmatprep.mubr.bf16.mxu0 0
          %3917 = vmatmul.mubr.bf16.gmra.mrb[0].mxu0 %v3879
          %v3918 = vpop.f32.mrb[0].mxu0
          %v3919 = vadd.f32 0.0, %v3918
          %v3920 = vpop.f32.mrb[0].mxu0
          %v3921 = vpop.f32.mrb[0].mxu0
          %v3922 = vpop.f32.mrb[0].mxu0
          %3923 = vdwg.mxu0
          %vm3924 = vcmask 64512
          %v3925 = vsel %vm3924, %v3919, -inf
          %3926 = vmax.xlane.f32.xlu0 %v3925
          %v3927 = vpop.xlane.xlu0 %3926
          %v3928 = vsub.f32 %v3919, %v3927
          %v3929 = vmul.f32 %v3928, 1.442695
          %v3930 = vpow.pop %v3929
          %v3931 = vsel %vm3924, %v3930, 0.0
          %3932 = vadd.xlane.f32.xlu0 %v3931
          %v3933 = vpop.xlane.xlu0 %3932
          %v3934 = vrcp.pop %v3933
          %v3935 = vmul.f32 %v3930, %v3934
          %v3936 = vpack.c.bf16 %v3935, %v3935
          %v3938 = vsel %vm3924, %v3936, 0
          %vm3940 = vcmask 1043456
          %v3942 = vsel %vm3940, %v3876, 0
          %3944 = vmatprep.subr.bf16.mxu0 0
          %3945 = vmatpush1.bf16.msra.mxu0 %v3942
          %3946 = vmatprep.subr.bf16.mxu0 0
          %3947 = vmatpush1.bf16.msra.mxu0 0
          %3948 = vmatprep.subr.bf16.mxu0 0
          %3949 = vmatpush1.bf16.msra.mxu0 0
          %3950 = vmatprep.subr.bf16.mxu0 0
          %3951 = vmatpush1.bf16.msra.mxu0 0
          %3952 = vmatprep.subr.bf16.mxu0 0
          %3953 = vmatpush1.bf16.msra.mxu0 0
          %3954 = vmatprep.subr.bf16.mxu0 0
          %3955 = vmatpush1.bf16.msra.mxu0 0
          %3956 = vmatprep.subr.bf16.mxu0 0
          %3957 = vmatpush1.bf16.msra.mxu0 0
          %3958 = vmatprep.subr.bf16.mxu0 0
          %3959 = vmatpush1.bf16.msra.mxu0 0
          %3960 = vmatprep.subr.bf16.mxu0 0
          %3961 = vmatpush1.bf16.msra.mxu0 0
          %3962 = vmatprep.subr.bf16.mxu0 0
          %3963 = vmatpush1.bf16.msra.mxu0 0
          %3964 = vmatprep.subr.bf16.mxu0 0
          %3965 = vmatpush1.bf16.msra.mxu0 0
          %3966 = vmatprep.subr.bf16.mxu0 0
          %3967 = vmatpush1.bf16.msra.mxu0 0
          %3968 = vmatprep.subr.bf16.mxu0 0
          %3969 = vmatpush1.bf16.msra.mxu0 0
          %3970 = vmatprep.subr.bf16.mxu0 0
          %3971 = vmatpush1.bf16.msra.mxu0 0
          %3972 = vmatprep.subr.bf16.mxu0 0
          %3973 = vmatpush1.bf16.msra.mxu0 0
          %3974 = vmatprep.subr.bf16.mxu0 0
          %3975 = vmatpush1.bf16.msra.mxu0 0
          %3976 = vmatprep.mubr.bf16.mxu0 0
          %3977 = vmatmul.mubr.bf16.gmra.mrb[0].mxu0 %v3938
          %v3978 = vpop.f32.mrb[0].mxu0
          %v3979 = vadd.f32 0.0, %v3978
          %v3980 = vpop.f32.mrb[0].mxu0
          %v3981 = vpop.f32.mrb[0].mxu0
          %v3982 = vpop.f32.mrb[0].mxu0
          %3983 = vdwg.mxu0
          %v3984 = vpack.c.bf16 %v3723, %v3723
          %v3985 = vpack.c.bf16 %v3797, %v3797
          %v3986 = vpack.c.bf16 %v3871, %v3871
          %v3988 = vsel %vm3877, %v3984, 0
          %v3991 = vsel %vm3877, %v3985, 0
          %3993 = vmatprep.subr.bf16.mxu0 0
          %3994 = vmatpush1.bf16.xpose.msra.mxu0 %v3991
          %3995 = vmatprep.subr.bf16.mxu0 0
          %3996 = vmatpush1.bf16.xpose.msra.mxu0 0
          %3997 = vmatprep.subr.bf16.mxu0 0
          %3998 = vmatpush1.bf16.xpose.msra.mxu0 0
          %3999 = vmatprep.subr.bf16.mxu0 0
          %4000 = vmatpush1.bf16.xpose.msra.mxu0 0
          %4001 = vmatprep.subr.bf16.mxu0 0
          %4002 = vmatpush1.bf16.xpose.msra.mxu0 0
          %4003 = vmatprep.subr.bf16.mxu0 0
          %4004 = vmatpush1.bf16.xpose.msra.mxu0 0
          %4005 = vmatprep.subr.bf16.mxu0 0
          %4006 = vmatpush1.bf16.xpose.msra.mxu0 0
          %4007 = vmatprep.subr.bf16.mxu0 0
          %4008 = vmatpush1.bf16.xpose.msra.mxu0 0
          %4009 = vmatprep.subr.bf16.mxu0 0
          %4010 = vmatpush1.bf16.xpose.msra.mxu0 0
          %4011 = vmatprep.subr.bf16.mxu0 0
          %4012 = vmatpush1.bf16.xpose.msra.mxu0 0
          %4013 = vmatprep.subr.bf16.mxu0 0
          %4014 = vmatpush1.bf16.xpose.msra.mxu0 0
          %4015 = vmatprep.subr.bf16.mxu0 0
          %4016 = vmatpush1.bf16.xpose.msra.mxu0 0
          %4017 = vmatprep.subr.bf16.mxu0 0
          %4018 = vmatpush1.bf16.xpose.msra.mxu0 0
          %4019 = vmatprep.subr.bf16.mxu0 0
          %4020 = vmatpush1.bf16.xpose.msra.mxu0 0
          %4021 = vmatprep.subr.bf16.mxu0 0
          %4022 = vmatpush1.bf16.xpose.msra.mxu0 0
          %4023 = vmatprep.subr.bf16.mxu0 0
          %4024 = vmatpush1.bf16.xpose.msra.mxu0 0
          %4025 = vmatprep.mubr.bf16.mxu0 0
          %4026 = vmatmul.mubr.bf16.gmra.mrb[0].mxu0 %v3988
          %v4027 = vpop.f32.mrb[0].mxu0
          %v4028 = vadd.f32 0.0, %v4027
          %v4029 = vpop.f32.mrb[0].mxu0
          %v4030 = vpop.f32.mrb[0].mxu0
          %v4031 = vpop.f32.mrb[0].mxu0
          %4032 = vdwg.mxu0
          %v4033 = vsel %vm3924, %v4028, -inf
          %4034 = vmax.xlane.f32.xlu0 %v4033
          %v4035 = vpop.xlane.xlu0 %4034
          %v4036 = vsub.f32 %v4028, %v4035
          %v4037 = vmul.f32 %v4036, 1.442695
          %v4038 = vpow.pop %v4037
          %v4039 = vsel %vm3924, %v4038, 0.0
          %4040 = vadd.xlane.f32.xlu0 %v4039
          %v4041 = vpop.xlane.xlu0 %4040
          %v4042 = vrcp.pop %v4041
          %v4043 = vmul.f32 %v4038, %v4042
          %v4044 = vpack.c.bf16 %v4043, %v4043
          %v4046 = vsel %vm3924, %v4044, 0
          %v4049 = vsel %vm3940, %v3986, 0
          %4051 = vmatprep.subr.bf16.mxu0 0
          %4052 = vmatpush1.bf16.msra.mxu0 %v4049
          %4053 = vmatprep.subr.bf16.mxu0 0
          %4054 = vmatpush1.bf16.msra.mxu0 0
          %4055 = vmatprep.subr.bf16.mxu0 0
          %4056 = vmatpush1.bf16.msra.mxu0 0
          %4057 = vmatprep.subr.bf16.mxu0 0
          %4058 = vmatpush1.bf16.msra.mxu0 0
          %4059 = vmatprep.subr.bf16.mxu0 0
          %4060 = vmatpush1.bf16.msra.mxu0 0
          %4061 = vmatprep.subr.bf16.mxu0 0
          %4062 = vmatpush1.bf16.msra.mxu0 0
          %4063 = vmatprep.subr.bf16.mxu0 0
          %4064 = vmatpush1.bf16.msra.mxu0 0
          %4065 = vmatprep.subr.bf16.mxu0 0
          %4066 = vmatpush1.bf16.msra.mxu0 0
          %4067 = vmatprep.subr.bf16.mxu0 0
          %4068 = vmatpush1.bf16.msra.mxu0 0
          %4069 = vmatprep.subr.bf16.mxu0 0
          %4070 = vmatpush1.bf16.msra.mxu0 0
          %4071 = vmatprep.subr.bf16.mxu0 0
          %4072 = vmatpush1.bf16.msra.mxu0 0
          %4073 = vmatprep.subr.bf16.mxu0 0
          %4074 = vmatpush1.bf16.msra.mxu0 0
          %4075 = vmatprep.subr.bf16.mxu0 0
          %4076 = vmatpush1.bf16.msra.mxu0 0
          %4077 = vmatprep.subr.bf16.mxu0 0
          %4078 = vmatpush1.bf16.msra.mxu0 0
          %4079 = vmatprep.subr.bf16.mxu0 0
          %4080 = vmatpush1.bf16.msra.mxu0 0
          %4081 = vmatprep.subr.bf16.mxu0 0
          %4082 = vmatpush1.bf16.msra.mxu0 0
          %4083 = vmatprep.mubr.bf16.mxu0 0
          %4084 = vmatmul.mubr.bf16.gmra.mrb[0].mxu0 %v4046
          %v4085 = vpop.f32.mrb[0].mxu0
          %v4086 = vadd.f32 0.0, %v4085
          %v4087 = vpop.f32.mrb[0].mxu0
          %v4088 = vpop.f32.mrb[0].mxu0
          %v4089 = vpop.f32.mrb[0].mxu0
          %4090 = vdwg.mxu0
          %v4091 = vpack.c.bf16 %v4086, %v3979
          %v4092 = vld [vmem:[%s1447] sm:$0xf]
          %v4093 = vld [vmem:[%s1447 + $0x4] sm:$0xf]
          %s4094 = scalar_lea.vmem %s1436, 32
          %v4095 = vld [vmem:[%s4094] sm:$0xf]
          %v4096 = vld [vmem:[%s4094 + $0x4] sm:$0xf]
          %v4097 = vld [vmem:[%s4094 + $0x8] sm:$0xf]
          %v4098 = vld [vmem:[%s4094 + $0xc] sm:$0xf]
          %v4099 = vld [vmem:[%s4094 + $0x10] sm:$0xf]
          %v4100 = vld [vmem:[%s4094 + $0x14] sm:$0xf]
          %v4101 = vld [vmem:[%s4094 + $0x18] sm:$0xf]
          %v4102 = vld [vmem:[%s4094 + $0x1c] sm:$0xf]
          %v4111 = vunpack.c.l.b16 %v4095
          %v4112 = vunpack.c.l.b16 %v4096
          %v4113 = vunpack.c.l.b16 %v4097
          %v4114 = vunpack.c.l.b16 %v4098
          %v4115 = vunpack.c.l.b16 %v4099
          %v4116 = vunpack.c.l.b16 %v4100
          %v4117 = vunpack.c.l.b16 %v4101
          %v4118 = vunpack.c.l.b16 %v4102
          %v4119 = vpack.c.b16 %v4112, %v4111
          %v4120 = vpack.c.b16 %v4114, %v4113
          %v4121 = vpack.c.b16 %v4116, %v4115
          %v4122 = vpack.c.b16 %v4118, %v4117
          %4127 = vmatprep.subr.bf16.mxu0 0
          %4128 = vmatpush1.bf16.msra.mxu0 %v4119
          %4129 = vmatprep.subr.bf16.mxu0 0
          %4130 = vmatpush1.bf16.msra.mxu0 %v4120
          %4131 = vmatprep.subr.bf16.mxu0 0
          %4132 = vmatpush1.bf16.msra.mxu0 %v4121
          %4133 = vmatprep.subr.bf16.mxu0 0
          %4134 = vmatpush1.bf16.msra.mxu0 %v4122
          %4135 = vmatprep.subr.bf16.mxu0 0
          %4136 = vmatpush1.bf16.msra.mxu0 0
          %4137 = vmatprep.subr.bf16.mxu0 0
          %4138 = vmatpush1.bf16.msra.mxu0 0
          %4139 = vmatprep.subr.bf16.mxu0 0
          %4140 = vmatpush1.bf16.msra.mxu0 0
          %4141 = vmatprep.subr.bf16.mxu0 0
          %4142 = vmatpush1.bf16.msra.mxu0 0
          %4143 = vmatprep.subr.bf16.mxu0 0
          %4144 = vmatpush1.bf16.msra.mxu0 0
          %4145 = vmatprep.subr.bf16.mxu0 0
          %4146 = vmatpush1.bf16.msra.mxu0 0
          %4147 = vmatprep.subr.bf16.mxu0 0
          %4148 = vmatpush1.bf16.msra.mxu0 0
          %4149 = vmatprep.subr.bf16.mxu0 0
          %4150 = vmatpush1.bf16.msra.mxu0 0
          %4151 = vmatprep.subr.bf16.mxu0 0
          %4152 = vmatpush1.bf16.msra.mxu0 0
          %4153 = vmatprep.subr.bf16.mxu0 0
          %4154 = vmatpush1.bf16.msra.mxu0 0
          %4155 = vmatprep.subr.bf16.mxu0 0
          %4156 = vmatpush1.bf16.msra.mxu0 0
          %4157 = vmatprep.subr.bf16.mxu0 0
          %4158 = vmatpush1.bf16.msra.mxu0 0
          %4159 = vmatprep.mubr.bf16.mxu0 0
          %4160 = vmatmul.mubr.bf16.gmra.mrb[0].mxu0 %v3683
          %v4161 = vpop.f32.mrb[0].mxu0
          %v4162 = vadd.f32 0.0, %v4161
          %v4163 = vpop.f32.mrb[0].mxu0
          %v4164 = vpop.f32.mrb[0].mxu0
          %v4165 = vadd.f32 0.0, %v4164
          %v4166 = vpop.f32.mrb[0].mxu0
          %4167 = vdwg.mxu0
          %s4168 = scalar_lea.vmem %s1436, 96
          %v4169 = vld [vmem:[%s4168] sm:$0xf]
          %v4170 = vld [vmem:[%s4168 + $0x4] sm:$0xf]
          %v4171 = vld [vmem:[%s4168 + $0x8] sm:$0xf]
          %v4172 = vld [vmem:[%s4168 + $0xc] sm:$0xf]
          %v4173 = vld [vmem:[%s4168 + $0x10] sm:$0xf]
          %v4174 = vld [vmem:[%s4168 + $0x14] sm:$0xf]
          %v4175 = vld [vmem:[%s4168 + $0x18] sm:$0xf]
          %v4176 = vld [vmem:[%s4168 + $0x1c] sm:$0xf]
          %v4185 = vunpack.c.l.b16 %v4169
          %v4186 = vunpack.c.l.b16 %v4170
          %v4187 = vunpack.c.l.b16 %v4171
          %v4188 = vunpack.c.l.b16 %v4172
          %v4189 = vunpack.c.l.b16 %v4173
          %v4190 = vunpack.c.l.b16 %v4174
          %v4191 = vunpack.c.l.b16 %v4175
          %v4192 = vunpack.c.l.b16 %v4176
          %v4193 = vpack.c.b16 %v4186, %v4185
          %v4194 = vpack.c.b16 %v4188, %v4187
          %v4195 = vpack.c.b16 %v4190, %v4189
          %v4196 = vpack.c.b16 %v4192, %v4191
          %4201 = vmatprep.subr.bf16.mxu0 0
          %4202 = vmatpush1.bf16.msra.mxu0 %v4193
          %4203 = vmatprep.subr.bf16.mxu0 0
          %4204 = vmatpush1.bf16.msra.mxu0 %v4194
          %4205 = vmatprep.subr.bf16.mxu0 0
          %4206 = vmatpush1.bf16.msra.mxu0 %v4195
          %4207 = vmatprep.subr.bf16.mxu0 0
          %4208 = vmatpush1.bf16.msra.mxu0 %v4196
          %4209 = vmatprep.subr.bf16.mxu0 0
          %4210 = vmatpush1.bf16.msra.mxu0 0
          %4211 = vmatprep.subr.bf16.mxu0 0
          %4212 = vmatpush1.bf16.msra.mxu0 0
          %4213 = vmatprep.subr.bf16.mxu0 0
          %4214 = vmatpush1.bf16.msra.mxu0 0
          %4215 = vmatprep.subr.bf16.mxu0 0
          %4216 = vmatpush1.bf16.msra.mxu0 0
          %4217 = vmatprep.subr.bf16.mxu0 0
          %4218 = vmatpush1.bf16.msra.mxu0 0
          %4219 = vmatprep.subr.bf16.mxu0 0
          %4220 = vmatpush1.bf16.msra.mxu0 0
          %4221 = vmatprep.subr.bf16.mxu0 0
          %4222 = vmatpush1.bf16.msra.mxu0 0
          %4223 = vmatprep.subr.bf16.mxu0 0
          %4224 = vmatpush1.bf16.msra.mxu0 0
          %4225 = vmatprep.subr.bf16.mxu0 0
          %4226 = vmatpush1.bf16.msra.mxu0 0
          %4227 = vmatprep.subr.bf16.mxu0 0
          %4228 = vmatpush1.bf16.msra.mxu0 0
          %4229 = vmatprep.subr.bf16.mxu0 0
          %4230 = vmatpush1.bf16.msra.mxu0 0
          %4231 = vmatprep.subr.bf16.mxu0 0
          %4232 = vmatpush1.bf16.msra.mxu0 0
          %4233 = vmatprep.mubr.bf16.mxu0 0
          %4234 = vmatmul.mubr.bf16.gmra.mrb[0].mxu0 %v3683
          %v4235 = vpop.f32.mrb[0].mxu0
          %v4236 = vadd.f32 0.0, %v4235
          %v4237 = vpop.f32.mrb[0].mxu0
          %v4238 = vpop.f32.mrb[0].mxu0
          %v4239 = vadd.f32 0.0, %v4238
          %v4240 = vpop.f32.mrb[0].mxu0
          %4241 = vdwg.mxu0
          %s4242 = scalar_lea.vmem %s1436, 160
          %v4243 = vld [vmem:[%s4242] sm:$0xf]
          %v4244 = vld [vmem:[%s4242 + $0x4] sm:$0xf]
          %v4245 = vld [vmem:[%s4242 + $0x8] sm:$0xf]
          %v4246 = vld [vmem:[%s4242 + $0xc] sm:$0xf]
          %v4247 = vld [vmem:[%s4242 + $0x10] sm:$0xf]
          %v4248 = vld [vmem:[%s4242 + $0x14] sm:$0xf]
          %v4249 = vld [vmem:[%s4242 + $0x18] sm:$0xf]
          %v4250 = vld [vmem:[%s4242 + $0x1c] sm:$0xf]
          %v4259 = vunpack.c.l.b16 %v4243
          %v4260 = vunpack.c.l.b16 %v4244
          %v4261 = vunpack.c.l.b16 %v4245
          %v4262 = vunpack.c.l.b16 %v4246
          %v4263 = vunpack.c.l.b16 %v4247
          %v4264 = vunpack.c.l.b16 %v4248
          %v4265 = vunpack.c.l.b16 %v4249
          %v4266 = vunpack.c.l.b16 %v4250
          %v4267 = vpack.c.b16 %v4260, %v4259
          %v4268 = vpack.c.b16 %v4262, %v4261
          %v4269 = vpack.c.b16 %v4264, %v4263
          %v4270 = vpack.c.b16 %v4266, %v4265
          %4275 = vmatprep.subr.bf16.mxu0 0
          %4276 = vmatpush1.bf16.msra.mxu0 %v4267
          %4277 = vmatprep.subr.bf16.mxu0 0
          %4278 = vmatpush1.bf16.msra.mxu0 %v4268
          %4279 = vmatprep.subr.bf16.mxu0 0
          %4280 = vmatpush1.bf16.msra.mxu0 %v4269
          %4281 = vmatprep.subr.bf16.mxu0 0
          %4282 = vmatpush1.bf16.msra.mxu0 %v4270
          %4283 = vmatprep.subr.bf16.mxu0 0
          %4284 = vmatpush1.bf16.msra.mxu0 0
          %4285 = vmatprep.subr.bf16.mxu0 0
          %4286 = vmatpush1.bf16.msra.mxu0 0
          %4287 = vmatprep.subr.bf16.mxu0 0
          %4288 = vmatpush1.bf16.msra.mxu0 0
          %4289 = vmatprep.subr.bf16.mxu0 0
          %4290 = vmatpush1.bf16.msra.mxu0 0
          %4291 = vmatprep.subr.bf16.mxu0 0
          %4292 = vmatpush1.bf16.msra.mxu0 0
          %4293 = vmatprep.subr.bf16.mxu0 0
          %4294 = vmatpush1.bf16.msra.mxu0 0
          %4295 = vmatprep.subr.bf16.mxu0 0
          %4296 = vmatpush1.bf16.msra.mxu0 0
          %4297 = vmatprep.subr.bf16.mxu0 0
          %4298 = vmatpush1.bf16.msra.mxu0 0
          %4299 = vmatprep.subr.bf16.mxu0 0
          %4300 = vmatpush1.bf16.msra.mxu0 0
          %4301 = vmatprep.subr.bf16.mxu0 0
          %4302 = vmatpush1.bf16.msra.mxu0 0
          %4303 = vmatprep.subr.bf16.mxu0 0
          %4304 = vmatpush1.bf16.msra.mxu0 0
          %4305 = vmatprep.subr.bf16.mxu0 0
          %4306 = vmatpush1.bf16.msra.mxu0 0
          %4307 = vmatprep.mubr.bf16.mxu0 0
          %4308 = vmatmul.mubr.bf16.gmra.mrb[0].mxu0 %v3683
          %v4309 = vpop.f32.mrb[0].mxu0
          %v4310 = vadd.f32 0.0, %v4309
          %v4311 = vpop.f32.mrb[0].mxu0
          %v4312 = vpop.f32.mrb[0].mxu0
          %v4313 = vadd.f32 0.0, %v4312
          %v4314 = vpop.f32.mrb[0].mxu0
          %4315 = vdwg.mxu0
          %v4316 = vpack.c.bf16 %v4162, %v4162
          %v4317 = vpack.c.bf16 %v4236, %v4236
          %v4318 = vpack.c.bf16 %v4310, %v4310
          %v4320 = vsel %vm3877, %v4316, 0
          %v4323 = vsel %vm3877, %v4317, 0
          %4325 = vmatprep.subr.bf16.mxu0 0
          %4326 = vmatpush1.bf16.xpose.msra.mxu0 %v4323
          %4327 = vmatprep.subr.bf16.mxu0 0
          %4328 = vmatpush1.bf16.xpose.msra.mxu0 0
          %4329 = vmatprep.subr.bf16.mxu0 0
          %4330 = vmatpush1.bf16.xpose.msra.mxu0 0
          %4331 = vmatprep.subr.bf16.mxu0 0
          %4332 = vmatpush1.bf16.xpose.msra.mxu0 0
          %4333 = vmatprep.subr.bf16.mxu0 0
          %4334 = vmatpush1.bf16.xpose.msra.mxu0 0
          %4335 = vmatprep.subr.bf16.mxu0 0
          %4336 = vmatpush1.bf16.xpose.msra.mxu0 0
          %4337 = vmatprep.subr.bf16.mxu0 0
          %4338 = vmatpush1.bf16.xpose.msra.mxu0 0
          %4339 = vmatprep.subr.bf16.mxu0 0
          %4340 = vmatpush1.bf16.xpose.msra.mxu0 0
          %4341 = vmatprep.subr.bf16.mxu0 0
          %4342 = vmatpush1.bf16.xpose.msra.mxu0 0
          %4343 = vmatprep.subr.bf16.mxu0 0
          %4344 = vmatpush1.bf16.xpose.msra.mxu0 0
          %4345 = vmatprep.subr.bf16.mxu0 0
          %4346 = vmatpush1.bf16.xpose.msra.mxu0 0
          %4347 = vmatprep.subr.bf16.mxu0 0
          %4348 = vmatpush1.bf16.xpose.msra.mxu0 0
          %4349 = vmatprep.subr.bf16.mxu0 0
          %4350 = vmatpush1.bf16.xpose.msra.mxu0 0
          %4351 = vmatprep.subr.bf16.mxu0 0
          %4352 = vmatpush1.bf16.xpose.msra.mxu0 0
          %4353 = vmatprep.subr.bf16.mxu0 0
          %4354 = vmatpush1.bf16.xpose.msra.mxu0 0
          %4355 = vmatprep.subr.bf16.mxu0 0
          %4356 = vmatpush1.bf16.xpose.msra.mxu0 0
          %4357 = vmatprep.mubr.bf16.mxu0 0
          %4358 = vmatmul.mubr.bf16.gmra.mrb[0].mxu0 %v4320
          %v4359 = vpop.f32.mrb[0].mxu0
          %v4360 = vadd.f32 0.0, %v4359
          %v4361 = vpop.f32.mrb[0].mxu0
          %v4362 = vpop.f32.mrb[0].mxu0
          %v4363 = vpop.f32.mrb[0].mxu0
          %4364 = vdwg.mxu0
          %v4365 = vsel %vm3924, %v4360, -inf
          %4366 = vmax.xlane.f32.xlu0 %v4365
          %v4367 = vpop.xlane.xlu0 %4366
          %v4368 = vsub.f32 %v4360, %v4367
          %v4369 = vmul.f32 %v4368, 1.442695
          %v4370 = vpow.pop %v4369
          %v4371 = vsel %vm3924, %v4370, 0.0
          %4372 = vadd.xlane.f32.xlu0 %v4371
          %v4373 = vpop.xlane.xlu0 %4372
          %v4374 = vrcp.pop %v4373
          %v4375 = vmul.f32 %v4370, %v4374
          %v4376 = vpack.c.bf16 %v4375, %v4375
          %v4378 = vsel %vm3924, %v4376, 0
          %v4381 = vsel %vm3940, %v4318, 0
          %4383 = vmatprep.subr.bf16.mxu0 0
          %4384 = vmatpush1.bf16.msra.mxu0 %v4381
          %4385 = vmatprep.subr.bf16.mxu0 0
          %4386 = vmatpush1.bf16.msra.mxu0 0
          %4387 = vmatprep.subr.bf16.mxu0 0
          %4388 = vmatpush1.bf16.msra.mxu0 0
          %4389 = vmatprep.subr.bf16.mxu0 0
          %4390 = vmatpush1.bf16.msra.mxu0 0
          %4391 = vmatprep.subr.bf16.mxu0 0
          %4392 = vmatpush1.bf16.msra.mxu0 0
          %4393 = vmatprep.subr.bf16.mxu0 0
          %4394 = vmatpush1.bf16.msra.mxu0 0
          %4395 = vmatprep.subr.bf16.mxu0 0
          %4396 = vmatpush1.bf16.msra.mxu0 0
          %4397 = vmatprep.subr.bf16.mxu0 0
          %4398 = vmatpush1.bf16.msra.mxu0 0
          %4399 = vmatprep.subr.bf16.mxu0 0
          %4400 = vmatpush1.bf16.msra.mxu0 0
          %4401 = vmatprep.subr.bf16.mxu0 0
          %4402 = vmatpush1.bf16.msra.mxu0 0
          %4403 = vmatprep.subr.bf16.mxu0 0
          %4404 = vmatpush1.bf16.msra.mxu0 0
          %4405 = vmatprep.subr.bf16.mxu0 0
          %4406 = vmatpush1.bf16.msra.mxu0 0
          %4407 = vmatprep.subr.bf16.mxu0 0
          %4408 = vmatpush1.bf16.msra.mxu0 0
          %4409 = vmatprep.subr.bf16.mxu0 0
          %4410 = vmatpush1.bf16.msra.mxu0 0
          %4411 = vmatprep.subr.bf16.mxu0 0
          %4412 = vmatpush1.bf16.msra.mxu0 0
          %4413 = vmatprep.subr.bf16.mxu0 0
          %4414 = vmatpush1.bf16.msra.mxu0 0
          %4415 = vmatprep.mubr.bf16.mxu0 0
          %4416 = vmatmul.mubr.bf16.gmra.mrb[0].mxu0 %v4378
          %v4417 = vpop.f32.mrb[0].mxu0
          %v4418 = vadd.f32 0.0, %v4417
          %v4419 = vpop.f32.mrb[0].mxu0
          %v4420 = vpop.f32.mrb[0].mxu0
          %v4421 = vpop.f32.mrb[0].mxu0
          %4422 = vdwg.mxu0
          %v4423 = vpack.c.bf16 %v4165, %v4165
          %v4424 = vpack.c.bf16 %v4239, %v4239
          %v4425 = vpack.c.bf16 %v4313, %v4313
          %v4427 = vsel %vm3877, %v4423, 0
          %v4430 = vsel %vm3877, %v4424, 0
          %4432 = vmatprep.subr.bf16.mxu0 0
          %4433 = vmatpush1.bf16.xpose.msra.mxu0 %v4430
          %4434 = vmatprep.subr.bf16.mxu0 0
          %4435 = vmatpush1.bf16.xpose.msra.mxu0 0
          %4436 = vmatprep.subr.bf16.mxu0 0
          %4437 = vmatpush1.bf16.xpose.msra.mxu0 0
          %4438 = vmatprep.subr.bf16.mxu0 0
          %4439 = vmatpush1.bf16.xpose.msra.mxu0 0
          %4440 = vmatprep.subr.bf16.mxu0 0
          %4441 = vmatpush1.bf16.xpose.msra.mxu0 0
          %4442 = vmatprep.subr.bf16.mxu0 0
          %4443 = vmatpush1.bf16.xpose.msra.mxu0 0
          %4444 = vmatprep.subr.bf16.mxu0 0
          %4445 = vmatpush1.bf16.xpose.msra.mxu0 0
          %4446 = vmatprep.subr.bf16.mxu0 0
          %4447 = vmatpush1.bf16.xpose.msra.mxu0 0
          %4448 = vmatprep.subr.bf16.mxu0 0
          %4449 = vmatpush1.bf16.xpose.msra.mxu0 0
          %4450 = vmatprep.subr.bf16.mxu0 0
          %4451 = vmatpush1.bf16.xpose.msra.mxu0 0
          %4452 = vmatprep.subr.bf16.mxu0 0
          %4453 = vmatpush1.bf16.xpose.msra.mxu0 0
          %4454 = vmatprep.subr.bf16.mxu0 0
          %4455 = vmatpush1.bf16.xpose.msra.mxu0 0
          %4456 = vmatprep.subr.bf16.mxu0 0
          %4457 = vmatpush1.bf16.xpose.msra.mxu0 0
          %4458 = vmatprep.subr.bf16.mxu0 0
          %4459 = vmatpush1.bf16.xpose.msra.mxu0 0
          %4460 = vmatprep.subr.bf16.mxu0 0
          %4461 = vmatpush1.bf16.xpose.msra.mxu0 0
          %4462 = vmatprep.subr.bf16.mxu0 0
          %4463 = vmatpush1.bf16.xpose.msra.mxu0 0
          %4464 = vmatprep.mubr.bf16.mxu0 0
          %4465 = vmatmul.mubr.bf16.gmra.mrb[0].mxu0 %v4427
          %v4466 = vpop.f32.mrb[0].mxu0
          %v4467 = vadd.f32 0.0, %v4466
          %v4468 = vpop.f32.mrb[0].mxu0
          %v4469 = vpop.f32.mrb[0].mxu0
          %v4470 = vpop.f32.mrb[0].mxu0
          %4471 = vdwg.mxu0
          %v4472 = vsel %vm3924, %v4467, -inf
          %4473 = vmax.xlane.f32.xlu0 %v4472
          %v4474 = vpop.xlane.xlu0 %4473
          %v4475 = vsub.f32 %v4467, %v4474
          %v4476 = vmul.f32 %v4475, 1.442695
          %v4477 = vpow.pop %v4476
          %v4478 = vsel %vm3924, %v4477, 0.0
          %4479 = vadd.xlane.f32.xlu0 %v4478
          %v4480 = vpop.xlane.xlu0 %4479
          %v4481 = vrcp.pop %v4480
          %v4482 = vmul.f32 %v4477, %v4481
          %v4483 = vpack.c.bf16 %v4482, %v4482
          %v4485 = vsel %vm3924, %v4483, 0
          %v4488 = vsel %vm3940, %v4425, 0
          %4490 = vmatprep.subr.bf16.mxu0 0
          %4491 = vmatpush1.bf16.msra.mxu0 %v4488
          %4492 = vmatprep.subr.bf16.mxu0 0
          %4493 = vmatpush1.bf16.msra.mxu0 0
          %4494 = vmatprep.subr.bf16.mxu0 0
          %4495 = vmatpush1.bf16.msra.mxu0 0
          %4496 = vmatprep.subr.bf16.mxu0 0
          %4497 = vmatpush1.bf16.msra.mxu0 0
          %4498 = vmatprep.subr.bf16.mxu0 0
          %4499 = vmatpush1.bf16.msra.mxu0 0
          %4500 = vmatprep.subr.bf16.mxu0 0
          %4501 = vmatpush1.bf16.msra.mxu0 0
          %4502 = vmatprep.subr.bf16.mxu0 0
          %4503 = vmatpush1.bf16.msra.mxu0 0
          %4504 = vmatprep.subr.bf16.mxu0 0
          %4505 = vmatpush1.bf16.msra.mxu0 0
          %4506 = vmatprep.subr.bf16.mxu0 0
          %4507 = vmatpush1.bf16.msra.mxu0 0
          %4508 = vmatprep.subr.bf16.mxu0 0
          %4509 = vmatpush1.bf16.msra.mxu0 0
          %4510 = vmatprep.subr.bf16.mxu0 0
          %4511 = vmatpush1.bf16.msra.mxu0 0
          %4512 = vmatprep.subr.bf16.mxu0 0
          %4513 = vmatpush1.bf16.msra.mxu0 0
          %4514 = vmatprep.subr.bf16.mxu0 0
          %4515 = vmatpush1.bf16.msra.mxu0 0
          %4516 = vmatprep.subr.bf16.mxu0 0
          %4517 = vmatpush1.bf16.msra.mxu0 0
          %4518 = vmatprep.subr.bf16.mxu0 0
          %4519 = vmatpush1.bf16.msra.mxu0 0
          %4520 = vmatprep.subr.bf16.mxu0 0
          %4521 = vmatpush1.bf16.msra.mxu0 0
          %4522 = vmatprep.mubr.bf16.mxu0 0
          %4523 = vmatmul.mubr.bf16.gmra.mrb[0].mxu0 %v4485
          %v4524 = vpop.f32.mrb[0].mxu0
          %v4525 = vadd.f32 0.0, %v4524
          %v4526 = vpop.f32.mrb[0].mxu0
          %v4527 = vpop.f32.mrb[0].mxu0
          %v4528 = vpop.f32.mrb[0].mxu0
          %4529 = vdwg.mxu0
          %v4530 = vpack.c.bf16 %v4525, %v4418
          %s4531 = scalar_lea.vmem %s1447, 8
          %v4532 = vld [vmem:[%s4531] sm:$0xf]
          %v4533 = vld [vmem:[%s4531 + $0x4] sm:$0xf]
          %v4536 = vunpack.c.l.b16 %v4532
          %v4537 = vunpack.c.l.b16 %v4533
          %v4538 = vpack.c.b16 %v4537, %v4536
          %v4541 = vsel %vm3877, %v4530, 0
          %4543 = vmatprep.subr.bf16.mxu0 0
          %4544 = vmatpush1.bf16.msra.mxu0 %v4538
          %4545 = vmatprep.subr.bf16.mxu0 0
          %4546 = vmatpush1.bf16.msra.mxu0 0
          %4547 = vmatprep.subr.bf16.mxu0 0
          %4548 = vmatpush1.bf16.msra.mxu0 0
          %4549 = vmatprep.subr.bf16.mxu0 0
          %4550 = vmatpush1.bf16.msra.mxu0 0
          %4551 = vmatprep.subr.bf16.mxu0 0
          %4552 = vmatpush1.bf16.msra.mxu0 0
          %4553 = vmatprep.subr.bf16.mxu0 0
          %4554 = vmatpush1.bf16.msra.mxu0 0
          %4555 = vmatprep.subr.bf16.mxu0 0
          %4556 = vmatpush1.bf16.msra.mxu0 0
          %4557 = vmatprep.subr.bf16.mxu0 0
          %4558 = vmatpush1.bf16.msra.mxu0 0
          %4559 = vmatprep.subr.bf16.mxu0 0
          %4560 = vmatpush1.bf16.msra.mxu0 0
          %4561 = vmatprep.subr.bf16.mxu0 0
          %4562 = vmatpush1.bf16.msra.mxu0 0
          %4563 = vmatprep.subr.bf16.mxu0 0
          %4564 = vmatpush1.bf16.msra.mxu0 0
          %4565 = vmatprep.subr.bf16.mxu0 0
          %4566 = vmatpush1.bf16.msra.mxu0 0
          %4567 = vmatprep.subr.bf16.mxu0 0
          %4568 = vmatpush1.bf16.msra.mxu0 0
          %4569 = vmatprep.subr.bf16.mxu0 0
          %4570 = vmatpush1.bf16.msra.mxu0 0
          %4571 = vmatprep.subr.bf16.mxu0 0
          %4572 = vmatpush1.bf16.msra.mxu0 0
          %4573 = vmatprep.subr.bf16.mxu0 0
          %4574 = vmatpush1.bf16.msra.mxu0 0
          %4575 = vmatprep.mubr.bf16.mxu0 0
          %4576 = vmatmul.mubr.bf16.gmra.mrb[0].mxu0 %v4541
          %v4577 = vpop.f32.mrb[0].mxu0
          %v4578 = vadd.f32 0.0, %v4577
          %v4579 = vpop.f32.mrb[0].mxu0
          %v4580 = vpop.f32.mrb[0].mxu0
          %v4581 = vadd.f32 0.0, %v4580
          %v4582 = vpop.f32.mrb[0].mxu0
          %4583 = vdwg.mxu0
          %v4586 = vunpack.c.l.b16 %v4092
          %v4587 = vunpack.c.l.b16 %v4093
          %v4588 = vpack.c.b16 %v4587, %v4586
          %v4591 = vsel %vm3877, %v4091, 0
          %4593 = vmatprep.subr.bf16.mxu0 0
          %4594 = vmatpush1.bf16.msra.mxu0 %v4588
          %4595 = vmatprep.subr.bf16.mxu0 0
          %4596 = vmatpush1.bf16.msra.mxu0 0
          %4597 = vmatprep.subr.bf16.mxu0 0
          %4598 = vmatpush1.bf16.msra.mxu0 0
          %4599 = vmatprep.subr.bf16.mxu0 0
          %4600 = vmatpush1.bf16.msra.mxu0 0
          %4601 = vmatprep.subr.bf16.mxu0 0
          %4602 = vmatpush1.bf16.msra.mxu0 0
          %4603 = vmatprep.subr.bf16.mxu0 0
          %4604 = vmatpush1.bf16.msra.mxu0 0
          %4605 = vmatprep.subr.bf16.mxu0 0
          %4606 = vmatpush1.bf16.msra.mxu0 0
          %4607 = vmatprep.subr.bf16.mxu0 0
          %4608 = vmatpush1.bf16.msra.mxu0 0
          %4609 = vmatprep.subr.bf16.mxu0 0
          %4610 = vmatpush1.bf16.msra.mxu0 0
          %4611 = vmatprep.subr.bf16.mxu0 0
          %4612 = vmatpush1.bf16.msra.mxu0 0
          %4613 = vmatprep.subr.bf16.mxu0 0
          %4614 = vmatpush1.bf16.msra.mxu0 0
          %4615 = vmatprep.subr.bf16.mxu0 0
          %4616 = vmatpush1.bf16.msra.mxu0 0
          %4617 = vmatprep.subr.bf16.mxu0 0
          %4618 = vmatpush1.bf16.msra.mxu0 0
          %4619 = vmatprep.subr.bf16.mxu0 0
          %4620 = vmatpush1.bf16.msra.mxu0 0
          %4621 = vmatprep.subr.bf16.mxu0 0
          %4622 = vmatpush1.bf16.msra.mxu0 0
          %4623 = vmatprep.subr.bf16.mxu0 0
          %4624 = vmatpush1.bf16.msra.mxu0 0
          %4625 = vmatprep.mubr.bf16.mxu0 0
          %4626 = vmatmul.mubr.bf16.gmra.mrb[0].mxu0 %v4591
          %v4627 = vpop.f32.mrb[0].mxu0
          %v4628 = vadd.f32 %v4578, %v4627
          %v4629 = vpop.f32.mrb[0].mxu0
          %v4630 = vpop.f32.mrb[0].mxu0
          %v4631 = vadd.f32 %v4581, %v4630
          %v4632 = vpop.f32.mrb[0].mxu0
          %4633 = vdwg.mxu0
          %v4634 = vadd.f32 %v3644, %v4628
          %v4635 = vadd.f32 %v3645, %v4631
          %v4636 = vsel %vm3681, %v4634, 0.0
          %4637 = vadd.xlane.f32.xlu0 %v4636
          %v4638 = vpop.xlane.xlu0 %4637
          %v4639 = vsel %vm3681, %v4635, 0.0
          %4640 = vadd.xlane.f32.xlu0 %v4639
          %v4641 = vpop.xlane.xlu0 %4640
          %v4642 = vrcp.pop 64.0
          %v4643 = vmul.f32 %v4638, %v4642
          %v4644 = vmul.f32 %v4641, %v4642
          %v4645 = vsub.f32 %v4634, %v4643
          %v4646 = vsub.f32 %v4635, %v4644
          %v4647 = vmul.f32 %v4645, %v4645
          %v4648 = vmul.f32 %v4646, %v4646
          %v4649 = vsel %vm3681, %v4647, 0.0
          %4650 = vadd.xlane.f32.xlu0 %v4649
          %v4651 = vpop.xlane.xlu0 %4650
          %v4652 = vsel %vm3681, %v4648, 0.0
          %4653 = vadd.xlane.f32.xlu0 %v4652
          %v4654 = vpop.xlane.xlu0 %4653
          %v4655 = vmul.f32 %v4651, %v4642
          %v4656 = vmul.f32 %v4654, %v4642
          %v4657 = vadd.f32 %v4655, 1e-05
          %v4658 = vadd.f32 %v4656, 1e-05
          %v4659 = vrsqrt.pop %v4657
          %v4660 = vrsqrt.pop %v4658
          %v4661 = vmul.f32 %v4645, %v4659
          %v4662 = vmul.f32 %v4646, %v4660
          %v4664 = vlaneseq
          %v4665 = vshrl.u32 %v4664, 7
          %v4666 = vsub.s32 0, %v4665
          %v4667 = vrot.slane %v3647, %v4666
          %v4669 = vmul.f32 %v4661, %v4667
          %v4670 = vmul.f32 %v4662, %v4667
          %v4672 = vlaneseq
          %v4673 = vshrl.u32 %v4672, 7
          %v4674 = vsub.s32 0, %v4673
          %v4675 = vrot.slane %v3648, %v4674
          %v4677 = vadd.f32 %v4669, %v4675
          %v4678 = vadd.f32 %v4670, %v4675
          %v4679 = vld [vmem:[%s1476] sm:$0xf]
          %v4680 = vld [vmem:[%s1476 + $0x4] sm:$0xf]
          %v4681 = vld [vmem:[%s1476 + $0x8] sm:$0xf]
          %v4682 = vld [vmem:[%s1476 + $0xc] sm:$0xf]
          %v4683 = vld [vmem:[%s1476 + $0x10] sm:$0xf]
          %v4684 = vld [vmem:[%s1476 + $0x14] sm:$0xf]
          %v4685 = vld [vmem:[%s1476 + $0x18] sm:$0xf]
          %v4686 = vld [vmem:[%s1476 + $0x1c] sm:$0xf]
          %v4687 = vld [vmem:[%s1485] sm:$0x1]
          %v4688 = vld [vmem:[%s1496] sm:$0xf]
          %v4689 = vld [vmem:[%s1496 + $0x4] sm:$0xf]
          %v4690 = vld [vmem:[%s1496 + $0x8] sm:$0xf]
          %v4691 = vld [vmem:[%s1496 + $0xc] sm:$0xf]
          %v4692 = vld [vmem:[%s1496 + $0x10] sm:$0xf]
          %v4693 = vld [vmem:[%s1496 + $0x14] sm:$0xf]
          %v4694 = vld [vmem:[%s1496 + $0x18] sm:$0xf]
          %v4695 = vld [vmem:[%s1496 + $0x1c] sm:$0xf]
          %v4696 = vld [vmem:[%s1496 + $0x20] sm:$0xf]
          %v4697 = vld [vmem:[%s1496 + $0x24] sm:$0xf]
          %v4698 = vld [vmem:[%s1496 + $0x28] sm:$0xf]
          %v4699 = vld [vmem:[%s1496 + $0x2c] sm:$0xf]
          %v4700 = vld [vmem:[%s1496 + $0x30] sm:$0xf]
          %v4701 = vld [vmem:[%s1496 + $0x34] sm:$0xf]
          %v4702 = vld [vmem:[%s1496 + $0x38] sm:$0xf]
          %v4703 = vld [vmem:[%s1496 + $0x3c] sm:$0xf]
          %v4704 = vld [vmem:[%s1505] sm:$0x1]
          %v4705 = vld [vmem:[%s1514] sm:$0x1]
          %v4706 = vld [vmem:[%s1523] sm:$0x1]
          %v4707 = vpack.c.bf16 %v4678, %v4677
          %v4709 = vlaneseq
          %v4710 = vshrl.u32 %v4709, 7
          %v4711 = vsub.s32 0, %v4710
          %v4712 = vrot.slane %v4687, %v4711
          %v4722 = vunpack.c.l.b16 %v4679
          %v4723 = vunpack.c.l.b16 %v4680
          %v4724 = vunpack.c.l.b16 %v4681
          %v4725 = vunpack.c.l.b16 %v4682
          %v4726 = vunpack.c.l.b16 %v4683
          %v4727 = vunpack.c.l.b16 %v4684
          %v4728 = vunpack.c.l.b16 %v4685
          %v4729 = vunpack.c.l.b16 %v4686
          %v4730 = vpack.c.b16 %v4723, %v4722
          %v4731 = vpack.c.b16 %v4725, %v4724
          %v4732 = vpack.c.b16 %v4727, %v4726
          %v4733 = vpack.c.b16 %v4729, %v4728
          %v4739 = vsel %vm3681, %v4707, 0
          %4741 = vmatprep.subr.bf16.mxu0 0
          %4742 = vmatpush1.bf16.msra.mxu0 %v4730
          %4743 = vmatprep.subr.bf16.mxu0 0
          %4744 = vmatpush1.bf16.msra.mxu0 %v4731
          %4745 = vmatprep.subr.bf16.mxu0 0
          %4746 = vmatpush1.bf16.msra.mxu0 %v4732
          %4747 = vmatprep.subr.bf16.mxu0 0
          %4748 = vmatpush1.bf16.msra.mxu0 %v4733
          %4749 = vmatprep.subr.bf16.mxu0 0
          %4750 = vmatpush1.bf16.msra.mxu0 0
          %4751 = vmatprep.subr.bf16.mxu0 0
          %4752 = vmatpush1.bf16.msra.mxu0 0
          %4753 = vmatprep.subr.bf16.mxu0 0
          %4754 = vmatpush1.bf16.msra.mxu0 0
          %4755 = vmatprep.subr.bf16.mxu0 0
          %4756 = vmatpush1.bf16.msra.mxu0 0
          %4757 = vmatprep.subr.bf16.mxu0 0
          %4758 = vmatpush1.bf16.msra.mxu0 0
          %4759 = vmatprep.subr.bf16.mxu0 0
          %4760 = vmatpush1.bf16.msra.mxu0 0
          %4761 = vmatprep.subr.bf16.mxu0 0
          %4762 = vmatpush1.bf16.msra.mxu0 0
          %4763 = vmatprep.subr.bf16.mxu0 0
          %4764 = vmatpush1.bf16.msra.mxu0 0
          %4765 = vmatprep.subr.bf16.mxu0 0
          %4766 = vmatpush1.bf16.msra.mxu0 0
          %4767 = vmatprep.subr.bf16.mxu0 0
          %4768 = vmatpush1.bf16.msra.mxu0 0
          %4769 = vmatprep.subr.bf16.mxu0 0
          %4770 = vmatpush1.bf16.msra.mxu0 0
          %4771 = vmatprep.subr.bf16.mxu0 0
          %4772 = vmatpush1.bf16.msra.mxu0 0
          %4773 = vmatprep.mubr.bf16.mxu0 0
          %4774 = vmatmul.mubr.bf16.gmra.mrb[0].mxu0 %v4739
          %v4775 = vpop.f32.mrb[0].mxu0
          %v4776 = vadd.f32 %v4712, %v4775
          %v4777 = vpop.f32.mrb[0].mxu0
          %v4778 = vpop.f32.mrb[0].mxu0
          %v4779 = vadd.f32 %v4712, %v4778
          %v4780 = vpop.f32.mrb[0].mxu0
          %4781 = vdwg.mxu0
          %v4782 = vmax.f32 %v4776, 0.0
          %v4783 = vmax.f32 %v4779, 0.0
          %v4784 = vpack.c.bf16 %v4783, %v4782
          %v4786 = vlaneseq
          %v4787 = vshrl.u32 %v4786, 7
          %v4788 = vsub.s32 0, %v4787
          %v4789 = vrot.slane %v4704, %v4788
          %v4807 = vunpack.c.l.b16 %v4688
          %v4808 = vunpack.c.l.b16 %v4689
          %v4809 = vunpack.c.l.b16 %v4690
          %v4810 = vunpack.c.l.b16 %v4691
          %v4811 = vunpack.c.l.b16 %v4692
          %v4812 = vunpack.c.l.b16 %v4693
          %v4813 = vunpack.c.l.b16 %v4694
          %v4814 = vunpack.c.l.b16 %v4695
          %v4815 = vunpack.c.l.b16 %v4696
          %v4816 = vunpack.c.l.b16 %v4697
          %v4817 = vunpack.c.l.b16 %v4698
          %v4818 = vunpack.c.l.b16 %v4699
          %v4819 = vunpack.c.l.b16 %v4700
          %v4820 = vunpack.c.l.b16 %v4701
          %v4821 = vunpack.c.l.b16 %v4702
          %v4822 = vunpack.c.l.b16 %v4703
          %v4823 = vpack.c.b16 %v4808, %v4807
          %v4824 = vpack.c.b16 %v4810, %v4809
          %v4825 = vpack.c.b16 %v4812, %v4811
          %v4826 = vpack.c.b16 %v4814, %v4813
          %v4827 = vpack.c.b16 %v4816, %v4815
          %v4828 = vpack.c.b16 %v4818, %v4817
          %v4829 = vpack.c.b16 %v4820, %v4819
          %v4830 = vpack.c.b16 %v4822, %v4821
          %4839 = vmatprep.subr.bf16.mxu0 0
          %4840 = vmatpush1.bf16.msra.mxu0 %v4823
          %4841 = vmatprep.subr.bf16.mxu0 0
          %4842 = vmatpush1.bf16.msra.mxu0 %v4824
          %4843 = vmatprep.subr.bf16.mxu0 0
          %4844 = vmatpush1.bf16.msra.mxu0 %v4825
          %4845 = vmatprep.subr.bf16.mxu0 0
          %4846 = vmatpush1.bf16.msra.mxu0 %v4826
          %4847 = vmatprep.subr.bf16.mxu0 0
          %4848 = vmatpush1.bf16.msra.mxu0 %v4827
          %4849 = vmatprep.subr.bf16.mxu0 0
          %4850 = vmatpush1.bf16.msra.mxu0 %v4828
          %4851 = vmatprep.subr.bf16.mxu0 0
          %4852 = vmatpush1.bf16.msra.mxu0 %v4829
          %4853 = vmatprep.subr.bf16.mxu0 0
          %4854 = vmatpush1.bf16.msra.mxu0 %v4830
          %4855 = vmatprep.subr.bf16.mxu0 0
          %4856 = vmatpush1.bf16.msra.mxu0 0
          %4857 = vmatprep.subr.bf16.mxu0 0
          %4858 = vmatpush1.bf16.msra.mxu0 0
          %4859 = vmatprep.subr.bf16.mxu0 0
          %4860 = vmatpush1.bf16.msra.mxu0 0
          %4861 = vmatprep.subr.bf16.mxu0 0
          %4862 = vmatpush1.bf16.msra.mxu0 0
          %4863 = vmatprep.subr.bf16.mxu0 0
          %4864 = vmatpush1.bf16.msra.mxu0 0
          %4865 = vmatprep.subr.bf16.mxu0 0
          %4866 = vmatpush1.bf16.msra.mxu0 0
          %4867 = vmatprep.subr.bf16.mxu0 0
          %4868 = vmatpush1.bf16.msra.mxu0 0
          %4869 = vmatprep.subr.bf16.mxu0 0
          %4870 = vmatpush1.bf16.msra.mxu0 0
          %4871 = vmatprep.mubr.bf16.mxu0 0
          %4872 = vmatmul.mubr.bf16.gmra.mrb[0].mxu0 %v4784
          %v4873 = vpop.f32.mrb[0].mxu0
          %v4874 = vadd.f32 %v4789, %v4873
          %v4875 = vpop.f32.mrb[0].mxu0
          %v4876 = vpop.f32.mrb[0].mxu0
          %v4877 = vadd.f32 %v4789, %v4876
          %v4878 = vpop.f32.mrb[0].mxu0
          %4879 = vdwg.mxu0
          %v4880 = vadd.f32 %v4874, %v4677
          %v4881 = vadd.f32 %v4877, %v4678
          %v4882 = vsel %vm3681, %v4880, 0.0
          %4883 = vadd.xlane.f32.xlu0 %v4882
          %v4884 = vpop.xlane.xlu0 %4883
          %v4885 = vsel %vm3681, %v4881, 0.0
          %4886 = vadd.xlane.f32.xlu0 %v4885
          %v4887 = vpop.xlane.xlu0 %4886
          %v4888 = vmul.f32 %v4884, %v4642
          %v4889 = vmul.f32 %v4887, %v4642
          %v4890 = vsub.f32 %v4880, %v4888
          %v4891 = vsub.f32 %v4881, %v4889
          %v4892 = vmul.f32 %v4890, %v4890
          %v4893 = vmul.f32 %v4891, %v4891
          %v4894 = vsel %vm3681, %v4892, 0.0
          %4895 = vadd.xlane.f32.xlu0 %v4894
          %v4896 = vpop.xlane.xlu0 %4895
          %v4897 = vsel %vm3681, %v4893, 0.0
          %4898 = vadd.xlane.f32.xlu0 %v4897
          %v4899 = vpop.xlane.xlu0 %4898
          %v4900 = vmul.f32 %v4896, %v4642
          %v4901 = vmul.f32 %v4899, %v4642
          %v4902 = vadd.f32 %v4900, 1e-05
          %v4903 = vadd.f32 %v4901, 1e-05
          %v4904 = vrsqrt.pop %v4902
          %v4905 = vrsqrt.pop %v4903
          %v4906 = vmul.f32 %v4890, %v4904
          %v4907 = vmul.f32 %v4891, %v4905
          %v4909 = vlaneseq
          %v4910 = vshrl.u32 %v4909, 7
          %v4911 = vsub.s32 0, %v4910
          %v4912 = vrot.slane %v4705, %v4911
          %v4914 = vmul.f32 %v4906, %v4912
          %v4915 = vmul.f32 %v4907, %v4912
          %v4917 = vlaneseq
          %v4918 = vshrl.u32 %v4917, 7
          %v4919 = vsub.s32 0, %v4918
          %v4920 = vrot.slane %v4706, %v4919
          %v4922 = vadd.f32 %v4914, %v4920
          %v4923 = vadd.f32 %v4915, %v4920
          %v4924 = vpack.c.bf16 %v4923, %v4922
          %v4925 = vld [vmem:[%s1534] sm:$0xf]
          %v4926 = vld [vmem:[%s1534 + $0x4] sm:$0xf]
          %v4927 = vld [vmem:[%s1534 + $0x8] sm:$0xf]
          %v4928 = vld [vmem:[%s1534 + $0xc] sm:$0xf]
          %v4929 = vld [vmem:[%s1534 + $0x10] sm:$0xf]
          %v4930 = vld [vmem:[%s1534 + $0x14] sm:$0xf]
          %v4931 = vld [vmem:[%s1534 + $0x18] sm:$0xf]
          %v4932 = vld [vmem:[%s1534 + $0x1c] sm:$0xf]
          %v4933 = vld [vmem:[%s1543] sm:$0x1]
          %v4935 = vlaneseq
          %v4936 = vshrl.u32 %v4935, 7
          %v4937 = vsub.s32 0, %v4936
          %v4938 = vrot.slane %v4933, %v4937
          %v4948 = vunpack.c.l.b16 %v4925
          %v4949 = vunpack.c.l.b16 %v4926
          %v4950 = vunpack.c.l.b16 %v4927
          %v4951 = vunpack.c.l.b16 %v4928
          %v4952 = vunpack.c.l.b16 %v4929
          %v4953 = vunpack.c.l.b16 %v4930
          %v4954 = vunpack.c.l.b16 %v4931
          %v4955 = vunpack.c.l.b16 %v4932
          %v4956 = vpack.c.b16 %v4949, %v4948
          %v4957 = vpack.c.b16 %v4951, %v4950
          %v4958 = vpack.c.b16 %v4953, %v4952
          %v4959 = vpack.c.b16 %v4955, %v4954
          %v4965 = vsel %vm3681, %v4924, 0
          %4967 = vmatprep.subr.bf16.mxu0 0
          %4968 = vmatpush1.bf16.msra.mxu0 %v4956
          %4969 = vmatprep.subr.bf16.mxu0 0
          %4970 = vmatpush1.bf16.msra.mxu0 %v4957
          %4971 = vmatprep.subr.bf16.mxu0 0
          %4972 = vmatpush1.bf16.msra.mxu0 %v4958
          %4973 = vmatprep.subr.bf16.mxu0 0
          %4974 = vmatpush1.bf16.msra.mxu0 %v4959
          %4975 = vmatprep.subr.bf16.mxu0 0
          %4976 = vmatpush1.bf16.msra.mxu0 0
          %4977 = vmatprep.subr.bf16.mxu0 0
          %4978 = vmatpush1.bf16.msra.mxu0 0
          %4979 = vmatprep.subr.bf16.mxu0 0
          %4980 = vmatpush1.bf16.msra.mxu0 0
          %4981 = vmatprep.subr.bf16.mxu0 0
          %4982 = vmatpush1.bf16.msra.mxu0 0
          %4983 = vmatprep.subr.bf16.mxu0 0
          %4984 = vmatpush1.bf16.msra.mxu0 0
          %4985 = vmatprep.subr.bf16.mxu0 0
          %4986 = vmatpush1.bf16.msra.mxu0 0
          %4987 = vmatprep.subr.bf16.mxu0 0
          %4988 = vmatpush1.bf16.msra.mxu0 0
          %4989 = vmatprep.subr.bf16.mxu0 0
          %4990 = vmatpush1.bf16.msra.mxu0 0
          %4991 = vmatprep.subr.bf16.mxu0 0
          %4992 = vmatpush1.bf16.msra.mxu0 0
          %4993 = vmatprep.subr.bf16.mxu0 0
          %4994 = vmatpush1.bf16.msra.mxu0 0
          %4995 = vmatprep.subr.bf16.mxu0 0
          %4996 = vmatpush1.bf16.msra.mxu0 0
          %4997 = vmatprep.subr.bf16.mxu0 0
          %4998 = vmatpush1.bf16.msra.mxu0 0
          %4999 = vmatprep.mubr.bf16.mxu0 0
          %5000 = vmatmul.mubr.bf16.gmra.mrb[0].mxu0 %v4965
          %v5001 = vpop.f32.mrb[0].mxu0
          %v5002 = vadd.f32 %v4938, %v5001
          %v5003 = vpop.f32.mrb[0].mxu0
          %v5004 = vpop.f32.mrb[0].mxu0
          %v5005 = vadd.f32 %v4938, %v5004
          %v5006 = vpop.f32.mrb[0].mxu0
          %5007 = vdwg.mxu0
          %5008 = vst.msk [vmem:[#allocation2] sm:$0xff] %vm3681, %v4922
          %5009 = vst.msk [vmem:[#allocation2 + $0x8] sm:$0xff] %vm3681, %v4923
          %5010 = vst.msk [vmem:[#allocation5] sm:$0xff] %vm3877, %v5002
          %5011 = vst.msk [vmem:[#allocation5 + $0x8] sm:$0xff] %vm3877, %v5005
          %v5012 = vld [vmem:[#allocation3] sm:$0xff]
          %v5013 = vld [vmem:[#allocation3 + $0x8] sm:$0xff]
          %v5014 = vpack.c.bf16 %v5013, %v5012
          %s5015 = scalar_lea.vmem %s1456, 1
          %v5016 = vld [vmem:[%s5015] sm:$0x1]
          %s5017 = scalar_lea.vmem %s1465, 1
          %v5018 = vld [vmem:[%s5017] sm:$0x1]
          %s5019 = scalar_lea.vmem %s1436, 192
          %v5020 = vld [vmem:[%s5019] sm:$0xf]
          %v5021 = vld [vmem:[%s5019 + $0x4] sm:$0xf]
          %v5022 = vld [vmem:[%s5019 + $0x8] sm:$0xf]
          %v5023 = vld [vmem:[%s5019 + $0xc] sm:$0xf]
          %v5024 = vld [vmem:[%s5019 + $0x10] sm:$0xf]
          %v5025 = vld [vmem:[%s5019 + $0x14] sm:$0xf]
          %v5026 = vld [vmem:[%s5019 + $0x18] sm:$0xf]
          %v5027 = vld [vmem:[%s5019 + $0x1c] sm:$0xf]
          %v5036 = vunpack.c.l.b16 %v5020
          %v5037 = vunpack.c.l.b16 %v5021
          %v5038 = vunpack.c.l.b16 %v5022
          %v5039 = vunpack.c.l.b16 %v5023
          %v5040 = vunpack.c.l.b16 %v5024
          %v5041 = vunpack.c.l.b16 %v5025
          %v5042 = vunpack.c.l.b16 %v5026
          %v5043 = vunpack.c.l.b16 %v5027
          %v5044 = vpack.c.b16 %v5037, %v5036
          %v5045 = vpack.c.b16 %v5039, %v5038
          %v5046 = vpack.c.b16 %v5041, %v5040
          %v5047 = vpack.c.b16 %v5043, %v5042
          %v5053 = vsel %vm3681, %v5014, 0
          %5055 = vmatprep.subr.bf16.mxu0 0
          %5056 = vmatpush1.bf16.msra.mxu0 %v5044
          %5057 = vmatprep.subr.bf16.mxu0 0
          %5058 = vmatpush1.bf16.msra.mxu0 %v5045
          %5059 = vmatprep.subr.bf16.mxu0 0
          %5060 = vmatpush1.bf16.msra.mxu0 %v5046
          %5061 = vmatprep.subr.bf16.mxu0 0
          %5062 = vmatpush1.bf16.msra.mxu0 %v5047
          %5063 = vmatprep.subr.bf16.mxu0 0
          %5064 = vmatpush1.bf16.msra.mxu0 0
          %5065 = vmatprep.subr.bf16.mxu0 0
          %5066 = vmatpush1.bf16.msra.mxu0 0
          %5067 = vmatprep.subr.bf16.mxu0 0
          %5068 = vmatpush1.bf16.msra.mxu0 0
          %5069 = vmatprep.subr.bf16.mxu0 0
          %5070 = vmatpush1.bf16.msra.mxu0 0
          %5071 = vmatprep.subr.bf16.mxu0 0
          %5072 = vmatpush1.bf16.msra.mxu0 0
          %5073 = vmatprep.subr.bf16.mxu0 0
          %5074 = vmatpush1.bf16.msra.mxu0 0
          %5075 = vmatprep.subr.bf16.mxu0 0
          %5076 = vmatpush1.bf16.msra.mxu0 0
          %5077 = vmatprep.subr.bf16.mxu0 0
          %5078 = vmatpush1.bf16.msra.mxu0 0
          %5079 = vmatprep.subr.bf16.mxu0 0
          %5080 = vmatpush1.bf16.msra.mxu0 0
          %5081 = vmatprep.subr.bf16.mxu0 0
          %5082 = vmatpush1.bf16.msra.mxu0 0
          %5083 = vmatprep.subr.bf16.mxu0 0
          %5084 = vmatpush1.bf16.msra.mxu0 0
          %5085 = vmatprep.subr.bf16.mxu0 0
          %5086 = vmatpush1.bf16.msra.mxu0 0
          %5087 = vmatprep.mubr.bf16.mxu0 0
          %5088 = vmatmul.mubr.bf16.gmra.mrb[0].mxu0 %v5053
          %v5089 = vpop.f32.mrb[0].mxu0
          %v5090 = vadd.f32 0.0, %v5089
          %v5091 = vpop.f32.mrb[0].mxu0
          %v5092 = vpop.f32.mrb[0].mxu0
          %v5093 = vadd.f32 0.0, %v5092
          %v5094 = vpop.f32.mrb[0].mxu0
          %5095 = vdwg.mxu0
          %s5096 = scalar_lea.vmem %s1436, 256
          %v5097 = vld [vmem:[%s5096] sm:$0xf]
          %v5098 = vld [vmem:[%s5096 + $0x4] sm:$0xf]
          %v5099 = vld [vmem:[%s5096 + $0x8] sm:$0xf]
          %v5100 = vld [vmem:[%s5096 + $0xc] sm:$0xf]
          %v5101 = vld [vmem:[%s5096 + $0x10] sm:$0xf]
          %v5102 = vld [vmem:[%s5096 + $0x14] sm:$0xf]
          %v5103 = vld [vmem:[%s5096 + $0x18] sm:$0xf]
          %v5104 = vld [vmem:[%s5096 + $0x1c] sm:$0xf]
          %v5113 = vunpack.c.l.b16 %v5097
          %v5114 = vunpack.c.l.b16 %v5098
          %v5115 = vunpack.c.l.b16 %v5099
          %v5116 = vunpack.c.l.b16 %v5100
          %v5117 = vunpack.c.l.b16 %v5101
          %v5118 = vunpack.c.l.b16 %v5102
          %v5119 = vunpack.c.l.b16 %v5103
          %v5120 = vunpack.c.l.b16 %v5104
          %v5121 = vpack.c.b16 %v5114, %v5113
          %v5122 = vpack.c.b16 %v5116, %v5115
          %v5123 = vpack.c.b16 %v5118, %v5117
          %v5124 = vpack.c.b16 %v5120, %v5119
          %5129 = vmatprep.subr.bf16.mxu0 0
          %5130 = vmatpush1.bf16.msra.mxu0 %v5121
          %5131 = vmatprep.subr.bf16.mxu0 0
          %5132 = vmatpush1.bf16.msra.mxu0 %v5122
          %5133 = vmatprep.subr.bf16.mxu0 0
          %5134 = vmatpush1.bf16.msra.mxu0 %v5123
          %5135 = vmatprep.subr.bf16.mxu0 0
          %5136 = vmatpush1.bf16.msra.mxu0 %v5124
          %5137 = vmatprep.subr.bf16.mxu0 0
          %5138 = vmatpush1.bf16.msra.mxu0 0
          %5139 = vmatprep.subr.bf16.mxu0 0
          %5140 = vmatpush1.bf16.msra.mxu0 0
          %5141 = vmatprep.subr.bf16.mxu0 0
          %5142 = vmatpush1.bf16.msra.mxu0 0
          %5143 = vmatprep.subr.bf16.mxu0 0
          %5144 = vmatpush1.bf16.msra.mxu0 0
          %5145 = vmatprep.subr.bf16.mxu0 0
          %5146 = vmatpush1.bf16.msra.mxu0 0
          %5147 = vmatprep.subr.bf16.mxu0 0
          %5148 = vmatpush1.bf16.msra.mxu0 0
          %5149 = vmatprep.subr.bf16.mxu0 0
          %5150 = vmatpush1.bf16.msra.mxu0 0
          %5151 = vmatprep.subr.bf16.mxu0 0
          %5152 = vmatpush1.bf16.msra.mxu0 0
          %5153 = vmatprep.subr.bf16.mxu0 0
          %5154 = vmatpush1.bf16.msra.mxu0 0
          %5155 = vmatprep.subr.bf16.mxu0 0
          %5156 = vmatpush1.bf16.msra.mxu0 0
          %5157 = vmatprep.subr.bf16.mxu0 0
          %5158 = vmatpush1.bf16.msra.mxu0 0
          %5159 = vmatprep.subr.bf16.mxu0 0
          %5160 = vmatpush1.bf16.msra.mxu0 0
          %5161 = vmatprep.mubr.bf16.mxu0 0
          %5162 = vmatmul.mubr.bf16.gmra.mrb[0].mxu0 %v5053
          %v5163 = vpop.f32.mrb[0].mxu0
          %v5164 = vadd.f32 0.0, %v5163
          %v5165 = vpop.f32.mrb[0].mxu0
          %v5166 = vpop.f32.mrb[0].mxu0
          %v5167 = vadd.f32 0.0, %v5166
          %v5168 = vpop.f32.mrb[0].mxu0
          %5169 = vdwg.mxu0
          %s5170 = scalar_lea.vmem %s1436, 320
          %v5171 = vld [vmem:[%s5170] sm:$0xf]
          %v5172 = vld [vmem:[%s5170 + $0x4] sm:$0xf]
          %v5173 = vld [vmem:[%s5170 + $0x8] sm:$0xf]
          %v5174 = vld [vmem:[%s5170 + $0xc] sm:$0xf]
          %v5175 = vld [vmem:[%s5170 + $0x10] sm:$0xf]
          %v5176 = vld [vmem:[%s5170 + $0x14] sm:$0xf]
          %v5177 = vld [vmem:[%s5170 + $0x18] sm:$0xf]
          %v5178 = vld [vmem:[%s5170 + $0x1c] sm:$0xf]
          %v5187 = vunpack.c.l.b16 %v5171
          %v5188 = vunpack.c.l.b16 %v5172
          %v5189 = vunpack.c.l.b16 %v5173
          %v5190 = vunpack.c.l.b16 %v5174
          %v5191 = vunpack.c.l.b16 %v5175
          %v5192 = vunpack.c.l.b16 %v5176
          %v5193 = vunpack.c.l.b16 %v5177
          %v5194 = vunpack.c.l.b16 %v5178
          %v5195 = vpack.c.b16 %v5188, %v5187
          %v5196 = vpack.c.b16 %v5190, %v5189
          %v5197 = vpack.c.b16 %v5192, %v5191
          %v5198 = vpack.c.b16 %v5194, %v5193
          %5203 = vmatprep.subr.bf16.mxu0 0
          %5204 = vmatpush1.bf16.msra.mxu0 %v5195
          %5205 = vmatprep.subr.bf16.mxu0 0
          %5206 = vmatpush1.bf16.msra.mxu0 %v5196
          %5207 = vmatprep.subr.bf16.mxu0 0
          %5208 = vmatpush1.bf16.msra.mxu0 %v5197
          %5209 = vmatprep.subr.bf16.mxu0 0
          %5210 = vmatpush1.bf16.msra.mxu0 %v5198
          %5211 = vmatprep.subr.bf16.mxu0 0
          %5212 = vmatpush1.bf16.msra.mxu0 0
          %5213 = vmatprep.subr.bf16.mxu0 0
          %5214 = vmatpush1.bf16.msra.mxu0 0
          %5215 = vmatprep.subr.bf16.mxu0 0
          %5216 = vmatpush1.bf16.msra.mxu0 0
          %5217 = vmatprep.subr.bf16.mxu0 0
          %5218 = vmatpush1.bf16.msra.mxu0 0
          %5219 = vmatprep.subr.bf16.mxu0 0
          %5220 = vmatpush1.bf16.msra.mxu0 0
          %5221 = vmatprep.subr.bf16.mxu0 0
          %5222 = vmatpush1.bf16.msra.mxu0 0
          %5223 = vmatprep.subr.bf16.mxu0 0
          %5224 = vmatpush1.bf16.msra.mxu0 0
          %5225 = vmatprep.subr.bf16.mxu0 0
          %5226 = vmatpush1.bf16.msra.mxu0 0
          %5227 = vmatprep.subr.bf16.mxu0 0
          %5228 = vmatpush1.bf16.msra.mxu0 0
          %5229 = vmatprep.subr.bf16.mxu0 0
          %5230 = vmatpush1.bf16.msra.mxu0 0
          %5231 = vmatprep.subr.bf16.mxu0 0
          %5232 = vmatpush1.bf16.msra.mxu0 0
          %5233 = vmatprep.subr.bf16.mxu0 0
          %5234 = vmatpush1.bf16.msra.mxu0 0
          %5235 = vmatprep.mubr.bf16.mxu0 0
          %5236 = vmatmul.mubr.bf16.gmra.mrb[0].mxu0 %v5053
          %v5237 = vpop.f32.mrb[0].mxu0
          %v5238 = vadd.f32 0.0, %v5237
          %v5239 = vpop.f32.mrb[0].mxu0
          %v5240 = vpop.f32.mrb[0].mxu0
          %v5241 = vadd.f32 0.0, %v5240
          %v5242 = vpop.f32.mrb[0].mxu0
          %5243 = vdwg.mxu0
          %v5244 = vpack.c.bf16 %v5090, %v5090
          %v5245 = vpack.c.bf16 %v5164, %v5164
          %v5246 = vpack.c.bf16 %v5238, %v5238
          %v5248 = vsel %vm3877, %v5244, 0
          %v5251 = vsel %vm3877, %v5245, 0
          %5253 = vmatprep.subr.bf16.mxu0 0
          %5254 = vmatpush1.bf16.xpose.msra.mxu0 %v5251
          %5255 = vmatprep.subr.bf16.mxu0 0
          %5256 = vmatpush1.bf16.xpose.msra.mxu0 0
          %5257 = vmatprep.subr.bf16.mxu0 0
          %5258 = vmatpush1.bf16.xpose.msra.mxu0 0
          %5259 = vmatprep.subr.bf16.mxu0 0
          %5260 = vmatpush1.bf16.xpose.msra.mxu0 0
          %5261 = vmatprep.subr.bf16.mxu0 0
          %5262 = vmatpush1.bf16.xpose.msra.mxu0 0
          %5263 = vmatprep.subr.bf16.mxu0 0
          %5264 = vmatpush1.bf16.xpose.msra.mxu0 0
          %5265 = vmatprep.subr.bf16.mxu0 0
          %5266 = vmatpush1.bf16.xpose.msra.mxu0 0
          %5267 = vmatprep.subr.bf16.mxu0 0
          %5268 = vmatpush1.bf16.xpose.msra.mxu0 0
          %5269 = vmatprep.subr.bf16.mxu0 0
          %5270 = vmatpush1.bf16.xpose.msra.mxu0 0
          %5271 = vmatprep.subr.bf16.mxu0 0
          %5272 = vmatpush1.bf16.xpose.msra.mxu0 0
          %5273 = vmatprep.subr.bf16.mxu0 0
          %5274 = vmatpush1.bf16.xpose.msra.mxu0 0
          %5275 = vmatprep.subr.bf16.mxu0 0
          %5276 = vmatpush1.bf16.xpose.msra.mxu0 0
          %5277 = vmatprep.subr.bf16.mxu0 0
          %5278 = vmatpush1.bf16.xpose.msra.mxu0 0
          %5279 = vmatprep.subr.bf16.mxu0 0
          %5280 = vmatpush1.bf16.xpose.msra.mxu0 0
          %5281 = vmatprep.subr.bf16.mxu0 0
          %5282 = vmatpush1.bf16.xpose.msra.mxu0 0
          %5283 = vmatprep.subr.bf16.mxu0 0
          %5284 = vmatpush1.bf16.xpose.msra.mxu0 0
          %5285 = vmatprep.mubr.bf16.mxu0 0
          %5286 = vmatmul.mubr.bf16.gmra.mrb[0].mxu0 %v5248
          %v5287 = vpop.f32.mrb[0].mxu0
          %v5288 = vadd.f32 0.0, %v5287
          %v5289 = vpop.f32.mrb[0].mxu0
          %v5290 = vpop.f32.mrb[0].mxu0
          %v5291 = vpop.f32.mrb[0].mxu0
          %5292 = vdwg.mxu0
          %v5293 = vsel %vm3924, %v5288, -inf
          %5294 = vmax.xlane.f32.xlu0 %v5293
          %v5295 = vpop.xlane.xlu0 %5294
          %v5296 = vsub.f32 %v5288, %v5295
          %v5297 = vmul.f32 %v5296, 1.442695
          %v5298 = vpow.pop %v5297
          %v5299 = vsel %vm3924, %v5298, 0.0
          %5300 = vadd.xlane.f32.xlu0 %v5299
          %v5301 = vpop.xlane.xlu0 %5300
          %v5302 = vrcp.pop %v5301
          %v5303 = vmul.f32 %v5298, %v5302
          %v5304 = vpack.c.bf16 %v5303, %v5303
          %v5306 = vsel %vm3924, %v5304, 0
          %v5309 = vsel %vm3940, %v5246, 0
          %5311 = vmatprep.subr.bf16.mxu0 0
          %5312 = vmatpush1.bf16.msra.mxu0 %v5309
          %5313 = vmatprep.subr.bf16.mxu0 0
          %5314 = vmatpush1.bf16.msra.mxu0 0
          %5315 = vmatprep.subr.bf16.mxu0 0
          %5316 = vmatpush1.bf16.msra.mxu0 0
          %5317 = vmatprep.subr.bf16.mxu0 0
          %5318 = vmatpush1.bf16.msra.mxu0 0
          %5319 = vmatprep.subr.bf16.mxu0 0
          %5320 = vmatpush1.bf16.msra.mxu0 0
          %5321 = vmatprep.subr.bf16.mxu0 0
          %5322 = vmatpush1.bf16.msra.mxu0 0
          %5323 = vmatprep.subr.bf16.mxu0 0
          %5324 = vmatpush1.bf16.msra.mxu0 0
          %5325 = vmatprep.subr.bf16.mxu0 0
          %5326 = vmatpush1.bf16.msra.mxu0 0
          %5327 = vmatprep.subr.bf16.mxu0 0
          %5328 = vmatpush1.bf16.msra.mxu0 0
          %5329 = vmatprep.subr.bf16.mxu0 0
          %5330 = vmatpush1.bf16.msra.mxu0 0
          %5331 = vmatprep.subr.bf16.mxu0 0
          %5332 = vmatpush1.bf16.msra.mxu0 0
          %5333 = vmatprep.subr.bf16.mxu0 0
          %5334 = vmatpush1.bf16.msra.mxu0 0
          %5335 = vmatprep.subr.bf16.mxu0 0
          %5336 = vmatpush1.bf16.msra.mxu0 0
          %5337 = vmatprep.subr.bf16.mxu0 0
          %5338 = vmatpush1.bf16.msra.mxu0 0
          %5339 = vmatprep.subr.bf16.mxu0 0
          %5340 = vmatpush1.bf16.msra.mxu0 0
          %5341 = vmatprep.subr.bf16.mxu0 0
          %5342 = vmatpush1.bf16.msra.mxu0 0
          %5343 = vmatprep.mubr.bf16.mxu0 0
          %5344 = vmatmul.mubr.bf16.gmra.mrb[0].mxu0 %v5306
          %v5345 = vpop.f32.mrb[0].mxu0
          %v5346 = vadd.f32 0.0, %v5345
          %v5347 = vpop.f32.mrb[0].mxu0
          %v5348 = vpop.f32.mrb[0].mxu0
          %v5349 = vpop.f32.mrb[0].mxu0
          %5350 = vdwg.mxu0
          %v5351 = vpack.c.bf16 %v5093, %v5093
          %v5352 = vpack.c.bf16 %v5167, %v5167
          %v5353 = vpack.c.bf16 %v5241, %v5241
          %v5355 = vsel %vm3877, %v5351, 0
          %v5358 = vsel %vm3877, %v5352, 0
          %5360 = vmatprep.subr.bf16.mxu0 0
          %5361 = vmatpush1.bf16.xpose.msra.mxu0 %v5358
          %5362 = vmatprep.subr.bf16.mxu0 0
          %5363 = vmatpush1.bf16.xpose.msra.mxu0 0
          %5364 = vmatprep.subr.bf16.mxu0 0
          %5365 = vmatpush1.bf16.xpose.msra.mxu0 0
          %5366 = vmatprep.subr.bf16.mxu0 0
          %5367 = vmatpush1.bf16.xpose.msra.mxu0 0
          %5368 = vmatprep.subr.bf16.mxu0 0
          %5369 = vmatpush1.bf16.xpose.msra.mxu0 0
          %5370 = vmatprep.subr.bf16.mxu0 0
          %5371 = vmatpush1.bf16.xpose.msra.mxu0 0
          %5372 = vmatprep.subr.bf16.mxu0 0
          %5373 = vmatpush1.bf16.xpose.msra.mxu0 0
          %5374 = vmatprep.subr.bf16.mxu0 0
          %5375 = vmatpush1.bf16.xpose.msra.mxu0 0
          %5376 = vmatprep.subr.bf16.mxu0 0
          %5377 = vmatpush1.bf16.xpose.msra.mxu0 0
          %5378 = vmatprep.subr.bf16.mxu0 0
          %5379 = vmatpush1.bf16.xpose.msra.mxu0 0
          %5380 = vmatprep.subr.bf16.mxu0 0
          %5381 = vmatpush1.bf16.xpose.msra.mxu0 0
          %5382 = vmatprep.subr.bf16.mxu0 0
          %5383 = vmatpush1.bf16.xpose.msra.mxu0 0
          %5384 = vmatprep.subr.bf16.mxu0 0
          %5385 = vmatpush1.bf16.xpose.msra.mxu0 0
          %5386 = vmatprep.subr.bf16.mxu0 0
          %5387 = vmatpush1.bf16.xpose.msra.mxu0 0
          %5388 = vmatprep.subr.bf16.mxu0 0
          %5389 = vmatpush1.bf16.xpose.msra.mxu0 0
          %5390 = vmatprep.subr.bf16.mxu0 0
          %5391 = vmatpush1.bf16.xpose.msra.mxu0 0
          %5392 = vmatprep.mubr.bf16.mxu0 0
          %5393 = vmatmul.mubr.bf16.gmra.mrb[0].mxu0 %v5355
          %v5394 = vpop.f32.mrb[0].mxu0
          %v5395 = vadd.f32 0.0, %v5394
          %v5396 = vpop.f32.mrb[0].mxu0
          %v5397 = vpop.f32.mrb[0].mxu0
          %v5398 = vpop.f32.mrb[0].mxu0
          %5399 = vdwg.mxu0
          %v5400 = vsel %vm3924, %v5395, -inf
          %5401 = vmax.xlane.f32.xlu0 %v5400
          %v5402 = vpop.xlane.xlu0 %5401
          %v5403 = vsub.f32 %v5395, %v5402
          %v5404 = vmul.f32 %v5403, 1.442695
          %v5405 = vpow.pop %v5404
          %v5406 = vsel %vm3924, %v5405, 0.0
          %5407 = vadd.xlane.f32.xlu0 %v5406
          %v5408 = vpop.xlane.xlu0 %5407
          %v5409 = vrcp.pop %v5408
          %v5410 = vmul.f32 %v5405, %v5409
          %v5411 = vpack.c.bf16 %v5410, %v5410
          %v5413 = vsel %vm3924, %v5411, 0
          %v5416 = vsel %vm3940, %v5353, 0
          %5418 = vmatprep.subr.bf16.mxu0 0
          %5419 = vmatpush1.bf16.msra.mxu0 %v5416
          %5420 = vmatprep.subr.bf16.mxu0 0
          %5421 = vmatpush1.bf16.msra.mxu0 0
          %5422 = vmatprep.subr.bf16.mxu0 0
          %5423 = vmatpush1.bf16.msra.mxu0 0
          %5424 = vmatprep.subr.bf16.mxu0 0
          %5425 = vmatpush1.bf16.msra.mxu0 0
          %5426 = vmatprep.subr.bf16.mxu0 0
          %5427 = vmatpush1.bf16.msra.mxu0 0
          %5428 = vmatprep.subr.bf16.mxu0 0
          %5429 = vmatpush1.bf16.msra.mxu0 0
          %5430 = vmatprep.subr.bf16.mxu0 0
          %5431 = vmatpush1.bf16.msra.mxu0 0
          %5432 = vmatprep.subr.bf16.mxu0 0
          %5433 = vmatpush1.bf16.msra.mxu0 0
          %5434 = vmatprep.subr.bf16.mxu0 0
          %5435 = vmatpush1.bf16.msra.mxu0 0
          %5436 = vmatprep.subr.bf16.mxu0 0
          %5437 = vmatpush1.bf16.msra.mxu0 0
          %5438 = vmatprep.subr.bf16.mxu0 0
          %5439 = vmatpush1.bf16.msra.mxu0 0
          %5440 = vmatprep.subr.bf16.mxu0 0
          %5441 = vmatpush1.bf16.msra.mxu0 0
          %5442 = vmatprep.subr.bf16.mxu0 0
          %5443 = vmatpush1.bf16.msra.mxu0 0
          %5444 = vmatprep.subr.bf16.mxu0 0
          %5445 = vmatpush1.bf16.msra.mxu0 0
          %5446 = vmatprep.subr.bf16.mxu0 0
          %5447 = vmatpush1.bf16.msra.mxu0 0
          %5448 = vmatprep.subr.bf16.mxu0 0
          %5449 = vmatpush1.bf16.msra.mxu0 0
          %5450 = vmatprep.mubr.bf16.mxu0 0
          %5451 = vmatmul.mubr.bf16.gmra.mrb[0].mxu0 %v5413
          %v5452 = vpop.f32.mrb[0].mxu0
          %v5453 = vadd.f32 0.0, %v5452
          %v5454 = vpop.f32.mrb[0].mxu0
          %v5455 = vpop.f32.mrb[0].mxu0
          %v5456 = vpop.f32.mrb[0].mxu0
          %5457 = vdwg.mxu0
          %v5458 = vpack.c.bf16 %v5453, %v5346
          %s5459 = scalar_lea.vmem %s1447, 16
          %v5460 = vld [vmem:[%s5459] sm:$0xf]
          %v5461 = vld [vmem:[%s5459 + $0x4] sm:$0xf]
          %s5462 = scalar_lea.vmem %s1436, 224
          %v5463 = vld [vmem:[%s5462] sm:$0xf]
          %v5464 = vld [vmem:[%s5462 + $0x4] sm:$0xf]
          %v5465 = vld [vmem:[%s5462 + $0x8] sm:$0xf]
          %v5466 = vld [vmem:[%s5462 + $0xc] sm:$0xf]
          %v5467 = vld [vmem:[%s5462 + $0x10] sm:$0xf]
          %v5468 = vld [vmem:[%s5462 + $0x14] sm:$0xf]
          %v5469 = vld [vmem:[%s5462 + $0x18] sm:$0xf]
          %v5470 = vld [vmem:[%s5462 + $0x1c] sm:$0xf]
          %v5479 = vunpack.c.l.b16 %v5463
          %v5480 = vunpack.c.l.b16 %v5464
          %v5481 = vunpack.c.l.b16 %v5465
          %v5482 = vunpack.c.l.b16 %v5466
          %v5483 = vunpack.c.l.b16 %v5467
          %v5484 = vunpack.c.l.b16 %v5468
          %v5485 = vunpack.c.l.b16 %v5469
          %v5486 = vunpack.c.l.b16 %v5470
          %v5487 = vpack.c.b16 %v5480, %v5479
          %v5488 = vpack.c.b16 %v5482, %v5481
          %v5489 = vpack.c.b16 %v5484, %v5483
          %v5490 = vpack.c.b16 %v5486, %v5485
          %5495 = vmatprep.subr.bf16.mxu0 0
          %5496 = vmatpush1.bf16.msra.mxu0 %v5487
          %5497 = vmatprep.subr.bf16.mxu0 0
          %5498 = vmatpush1.bf16.msra.mxu0 %v5488
          %5499 = vmatprep.subr.bf16.mxu0 0
          %5500 = vmatpush1.bf16.msra.mxu0 %v5489
          %5501 = vmatprep.subr.bf16.mxu0 0
          %5502 = vmatpush1.bf16.msra.mxu0 %v5490
          %5503 = vmatprep.subr.bf16.mxu0 0
          %5504 = vmatpush1.bf16.msra.mxu0 0
          %5505 = vmatprep.subr.bf16.mxu0 0
          %5506 = vmatpush1.bf16.msra.mxu0 0
          %5507 = vmatprep.subr.bf16.mxu0 0
          %5508 = vmatpush1.bf16.msra.mxu0 0
          %5509 = vmatprep.subr.bf16.mxu0 0
          %5510 = vmatpush1.bf16.msra.mxu0 0
          %5511 = vmatprep.subr.bf16.mxu0 0
          %5512 = vmatpush1.bf16.msra.mxu0 0
          %5513 = vmatprep.subr.bf16.mxu0 0
          %5514 = vmatpush1.bf16.msra.mxu0 0
          %5515 = vmatprep.subr.bf16.mxu0 0
          %5516 = vmatpush1.bf16.msra.mxu0 0
          %5517 = vmatprep.subr.bf16.mxu0 0
          %5518 = vmatpush1.bf16.msra.mxu0 0
          %5519 = vmatprep.subr.bf16.mxu0 0
          %5520 = vmatpush1.bf16.msra.mxu0 0
          %5521 = vmatprep.subr.bf16.mxu0 0
          %5522 = vmatpush1.bf16.msra.mxu0 0
          %5523 = vmatprep.subr.bf16.mxu0 0
          %5524 = vmatpush1.bf16.msra.mxu0 0
          %5525 = vmatprep.subr.bf16.mxu0 0
          %5526 = vmatpush1.bf16.msra.mxu0 0
          %5527 = vmatprep.mubr.bf16.mxu0 0
          %5528 = vmatmul.mubr.bf16.gmra.mrb[0].mxu0 %v5053
          %v5529 = vpop.f32.mrb[0].mxu0
          %v5530 = vadd.f32 0.0, %v5529
          %v5531 = vpop.f32.mrb[0].mxu0
          %v5532 = vpop.f32.mrb[0].mxu0
          %v5533 = vadd.f32 0.0, %v5532
          %v5534 = vpop.f32.mrb[0].mxu0
          %5535 = vdwg.mxu0
          %s5536 = scalar_lea.vmem %s1436, 288
          %v5537 = vld [vmem:[%s5536] sm:$0xf]
          %v5538 = vld [vmem:[%s5536 + $0x4] sm:$0xf]
          %v5539 = vld [vmem:[%s5536 + $0x8] sm:$0xf]
          %v5540 = vld [vmem:[%s5536 + $0xc] sm:$0xf]
          %v5541 = vld [vmem:[%s5536 + $0x10] sm:$0xf]
          %v5542 = vld [vmem:[%s5536 + $0x14] sm:$0xf]
          %v5543 = vld [vmem:[%s5536 + $0x18] sm:$0xf]
          %v5544 = vld [vmem:[%s5536 + $0x1c] sm:$0xf]
          %v5553 = vunpack.c.l.b16 %v5537
          %v5554 = vunpack.c.l.b16 %v5538
          %v5555 = vunpack.c.l.b16 %v5539
          %v5556 = vunpack.c.l.b16 %v5540
          %v5557 = vunpack.c.l.b16 %v5541
          %v5558 = vunpack.c.l.b16 %v5542
          %v5559 = vunpack.c.l.b16 %v5543
          %v5560 = vunpack.c.l.b16 %v5544
          %v5561 = vpack.c.b16 %v5554, %v5553
          %v5562 = vpack.c.b16 %v5556, %v5555
          %v5563 = vpack.c.b16 %v5558, %v5557
          %v5564 = vpack.c.b16 %v5560, %v5559
          %5569 = vmatprep.subr.bf16.mxu0 0
          %5570 = vmatpush1.bf16.msra.mxu0 %v5561
          %5571 = vmatprep.subr.bf16.mxu0 0
          %5572 = vmatpush1.bf16.msra.mxu0 %v5562
          %5573 = vmatprep.subr.bf16.mxu0 0
          %5574 = vmatpush1.bf16.msra.mxu0 %v5563
          %5575 = vmatprep.subr.bf16.mxu0 0
          %5576 = vmatpush1.bf16.msra.mxu0 %v5564
          %5577 = vmatprep.subr.bf16.mxu0 0
          %5578 = vmatpush1.bf16.msra.mxu0 0
          %5579 = vmatprep.subr.bf16.mxu0 0
          %5580 = vmatpush1.bf16.msra.mxu0 0
          %5581 = vmatprep.subr.bf16.mxu0 0
          %5582 = vmatpush1.bf16.msra.mxu0 0
          %5583 = vmatprep.subr.bf16.mxu0 0
          %5584 = vmatpush1.bf16.msra.mxu0 0
          %5585 = vmatprep.subr.bf16.mxu0 0
          %5586 = vmatpush1.bf16.msra.mxu0 0
          %5587 = vmatprep.subr.bf16.mxu0 0
          %5588 = vmatpush1.bf16.msra.mxu0 0
          %5589 = vmatprep.subr.bf16.mxu0 0
          %5590 = vmatpush1.bf16.msra.mxu0 0
          %5591 = vmatprep.subr.bf16.mxu0 0
          %5592 = vmatpush1.bf16.msra.mxu0 0
          %5593 = vmatprep.subr.bf16.mxu0 0
          %5594 = vmatpush1.bf16.msra.mxu0 0
          %5595 = vmatprep.subr.bf16.mxu0 0
          %5596 = vmatpush1.bf16.msra.mxu0 0
          %5597 = vmatprep.subr.bf16.mxu0 0
          %5598 = vmatpush1.bf16.msra.mxu0 0
          %5599 = vmatprep.subr.bf16.mxu0 0
          %5600 = vmatpush1.bf16.msra.mxu0 0
          %5601 = vmatprep.mubr.bf16.mxu0 0
          %5602 = vmatmul.mubr.bf16.gmra.mrb[0].mxu0 %v5053
          %v5603 = vpop.f32.mrb[0].mxu0
          %v5604 = vadd.f32 0.0, %v5603
          %v5605 = vpop.f32.mrb[0].mxu0
          %v5606 = vpop.f32.mrb[0].mxu0
          %v5607 = vadd.f32 0.0, %v5606
          %v5608 = vpop.f32.mrb[0].mxu0
          %5609 = vdwg.mxu0
          %s5610 = scalar_lea.vmem %s1436, 352
          %v5611 = vld [vmem:[%s5610] sm:$0xf]
          %v5612 = vld [vmem:[%s5610 + $0x4] sm:$0xf]
          %v5613 = vld [vmem:[%s5610 + $0x8] sm:$0xf]
          %v5614 = vld [vmem:[%s5610 + $0xc] sm:$0xf]
          %v5615 = vld [vmem:[%s5610 + $0x10] sm:$0xf]
          %v5616 = vld [vmem:[%s5610 + $0x14] sm:$0xf]
          %v5617 = vld [vmem:[%s5610 + $0x18] sm:$0xf]
          %v5618 = vld [vmem:[%s5610 + $0x1c] sm:$0xf]
          %v5627 = vunpack.c.l.b16 %v5611
          %v5628 = vunpack.c.l.b16 %v5612
          %v5629 = vunpack.c.l.b16 %v5613
          %v5630 = vunpack.c.l.b16 %v5614
          %v5631 = vunpack.c.l.b16 %v5615
          %v5632 = vunpack.c.l.b16 %v5616
          %v5633 = vunpack.c.l.b16 %v5617
          %v5634 = vunpack.c.l.b16 %v5618
          %v5635 = vpack.c.b16 %v5628, %v5627
          %v5636 = vpack.c.b16 %v5630, %v5629
          %v5637 = vpack.c.b16 %v5632, %v5631
          %v5638 = vpack.c.b16 %v5634, %v5633
          %5643 = vmatprep.subr.bf16.mxu0 0
          %5644 = vmatpush1.bf16.msra.mxu0 %v5635
          %5645 = vmatprep.subr.bf16.mxu0 0
          %5646 = vmatpush1.bf16.msra.mxu0 %v5636
          %5647 = vmatprep.subr.bf16.mxu0 0
          %5648 = vmatpush1.bf16.msra.mxu0 %v5637
          %5649 = vmatprep.subr.bf16.mxu0 0
          %5650 = vmatpush1.bf16.msra.mxu0 %v5638
          %5651 = vmatprep.subr.bf16.mxu0 0
          %5652 = vmatpush1.bf16.msra.mxu0 0
          %5653 = vmatprep.subr.bf16.mxu0 0
          %5654 = vmatpush1.bf16.msra.mxu0 0
          %5655 = vmatprep.subr.bf16.mxu0 0
          %5656 = vmatpush1.bf16.msra.mxu0 0
          %5657 = vmatprep.subr.bf16.mxu0 0
          %5658 = vmatpush1.bf16.msra.mxu0 0
          %5659 = vmatprep.subr.bf16.mxu0 0
          %5660 = vmatpush1.bf16.msra.mxu0 0
          %5661 = vmatprep.subr.bf16.mxu0 0
          %5662 = vmatpush1.bf16.msra.mxu0 0
          %5663 = vmatprep.subr.bf16.mxu0 0
          %5664 = vmatpush1.bf16.msra.mxu0 0
          %5665 = vmatprep.subr.bf16.mxu0 0
          %5666 = vmatpush1.bf16.msra.mxu0 0
          %5667 = vmatprep.subr.bf16.mxu0 0
          %5668 = vmatpush1.bf16.msra.mxu0 0
          %5669 = vmatprep.subr.bf16.mxu0 0
          %5670 = vmatpush1.bf16.msra.mxu0 0
          %5671 = vmatprep.subr.bf16.mxu0 0
          %5672 = vmatpush1.bf16.msra.mxu0 0
          %5673 = vmatprep.subr.bf16.mxu0 0
          %5674 = vmatpush1.bf16.msra.mxu0 0
          %5675 = vmatprep.mubr.bf16.mxu0 0
          %5676 = vmatmul.mubr.bf16.gmra.mrb[0].mxu0 %v5053
          %v5677 = vpop.f32.mrb[0].mxu0
          %v5678 = vadd.f32 0.0, %v5677
          %v5679 = vpop.f32.mrb[0].mxu0
          %v5680 = vpop.f32.mrb[0].mxu0
          %v5681 = vadd.f32 0.0, %v5680
          %v5682 = vpop.f32.mrb[0].mxu0
          %5683 = vdwg.mxu0
          %v5684 = vpack.c.bf16 %v5530, %v5530
          %v5685 = vpack.c.bf16 %v5604, %v5604
          %v5686 = vpack.c.bf16 %v5678, %v5678
          %v5688 = vsel %vm3877, %v5684, 0
          %v5691 = vsel %vm3877, %v5685, 0
          %5693 = vmatprep.subr.bf16.mxu0 0
          %5694 = vmatpush1.bf16.xpose.msra.mxu0 %v5691
          %5695 = vmatprep.subr.bf16.mxu0 0
          %5696 = vmatpush1.bf16.xpose.msra.mxu0 0
          %5697 = vmatprep.subr.bf16.mxu0 0
          %5698 = vmatpush1.bf16.xpose.msra.mxu0 0
          %5699 = vmatprep.subr.bf16.mxu0 0
          %5700 = vmatpush1.bf16.xpose.msra.mxu0 0
          %5701 = vmatprep.subr.bf16.mxu0 0
          %5702 = vmatpush1.bf16.xpose.msra.mxu0 0
          %5703 = vmatprep.subr.bf16.mxu0 0
          %5704 = vmatpush1.bf16.xpose.msra.mxu0 0
          %5705 = vmatprep.subr.bf16.mxu0 0
          %5706 = vmatpush1.bf16.xpose.msra.mxu0 0
          %5707 = vmatprep.subr.bf16.mxu0 0
          %5708 = vmatpush1.bf16.xpose.msra.mxu0 0
          %5709 = vmatprep.subr.bf16.mxu0 0
          %5710 = vmatpush1.bf16.xpose.msra.mxu0 0
          %5711 = vmatprep.subr.bf16.mxu0 0
          %5712 = vmatpush1.bf16.xpose.msra.mxu0 0
          %5713 = vmatprep.subr.bf16.mxu0 0
          %5714 = vmatpush1.bf16.xpose.msra.mxu0 0
          %5715 = vmatprep.subr.bf16.mxu0 0
          %5716 = vmatpush1.bf16.xpose.msra.mxu0 0
          %5717 = vmatprep.subr.bf16.mxu0 0
          %5718 = vmatpush1.bf16.xpose.msra.mxu0 0
          %5719 = vmatprep.subr.bf16.mxu0 0
          %5720 = vmatpush1.bf16.xpose.msra.mxu0 0
          %5721 = vmatprep.subr.bf16.mxu0 0
          %5722 = vmatpush1.bf16.xpose.msra.mxu0 0
          %5723 = vmatprep.subr.bf16.mxu0 0
          %5724 = vmatpush1.bf16.xpose.msra.mxu0 0
          %5725 = vmatprep.mubr.bf16.mxu0 0
          %5726 = vmatmul.mubr.bf16.gmra.mrb[0].mxu0 %v5688
          %v5727 = vpop.f32.mrb[0].mxu0
          %v5728 = vadd.f32 0.0, %v5727
          %v5729 = vpop.f32.mrb[0].mxu0
          %v5730 = vpop.f32.mrb[0].mxu0
          %v5731 = vpop.f32.mrb[0].mxu0
          %5732 = vdwg.mxu0
          %v5733 = vsel %vm3924, %v5728, -inf
          %5734 = vmax.xlane.f32.xlu0 %v5733
          %v5735 = vpop.xlane.xlu0 %5734
          %v5736 = vsub.f32 %v5728, %v5735
          %v5737 = vmul.f32 %v5736, 1.442695
          %v5738 = vpow.pop %v5737
          %v5739 = vsel %vm3924, %v5738, 0.0
          %5740 = vadd.xlane.f32.xlu0 %v5739
          %v5741 = vpop.xlane.xlu0 %5740
          %v5742 = vrcp.pop %v5741
          %v5743 = vmul.f32 %v5738, %v5742
          %v5744 = vpack.c.bf16 %v5743, %v5743
          %v5746 = vsel %vm3924, %v5744, 0
          %v5749 = vsel %vm3940, %v5686, 0
          %5751 = vmatprep.subr.bf16.mxu0 0
          %5752 = vmatpush1.bf16.msra.mxu0 %v5749
          %5753 = vmatprep.subr.bf16.mxu0 0
          %5754 = vmatpush1.bf16.msra.mxu0 0
          %5755 = vmatprep.subr.bf16.mxu0 0
          %5756 = vmatpush1.bf16.msra.mxu0 0
          %5757 = vmatprep.subr.bf16.mxu0 0
          %5758 = vmatpush1.bf16.msra.mxu0 0
          %5759 = vmatprep.subr.bf16.mxu0 0
          %5760 = vmatpush1.bf16.msra.mxu0 0
          %5761 = vmatprep.subr.bf16.mxu0 0
          %5762 = vmatpush1.bf16.msra.mxu0 0
          %5763 = vmatprep.subr.bf16.mxu0 0
          %5764 = vmatpush1.bf16.msra.mxu0 0
          %5765 = vmatprep.subr.bf16.mxu0 0
          %5766 = vmatpush1.bf16.msra.mxu0 0
          %5767 = vmatprep.subr.bf16.mxu0 0
          %5768 = vmatpush1.bf16.msra.mxu0 0
          %5769 = vmatprep.subr.bf16.mxu0 0
          %5770 = vmatpush1.bf16.msra.mxu0 0
          %5771 = vmatprep.subr.bf16.mxu0 0
          %5772 = vmatpush1.bf16.msra.mxu0 0
          %5773 = vmatprep.subr.bf16.mxu0 0
          %5774 = vmatpush1.bf16.msra.mxu0 0
          %5775 = vmatprep.subr.bf16.mxu0 0
          %5776 = vmatpush1.bf16.msra.mxu0 0
          %5777 = vmatprep.subr.bf16.mxu0 0
          %5778 = vmatpush1.bf16.msra.mxu0 0
          %5779 = vmatprep.subr.bf16.mxu0 0
          %5780 = vmatpush1.bf16.msra.mxu0 0
          %5781 = vmatprep.subr.bf16.mxu0 0
          %5782 = vmatpush1.bf16.msra.mxu0 0
          %5783 = vmatprep.mubr.bf16.mxu0 0
          %5784 = vmatmul.mubr.bf16.gmra.mrb[0].mxu0 %v5746
          %v5785 = vpop.f32.mrb[0].mxu0
          %v5786 = vadd.f32 0.0, %v5785
          %v5787 = vpop.f32.mrb[0].mxu0
          %v5788 = vpop.f32.mrb[0].mxu0
          %v5789 = vpop.f32.mrb[0].mxu0
          %5790 = vdwg.mxu0
          %v5791 = vpack.c.bf16 %v5533, %v5533
          %v5792 = vpack.c.bf16 %v5607, %v5607
          %v5793 = vpack.c.bf16 %v5681, %v5681
          %v5795 = vsel %vm3877, %v5791, 0
          %v5798 = vsel %vm3877, %v5792, 0
          %5800 = vmatprep.subr.bf16.mxu0 0
          %5801 = vmatpush1.bf16.xpose.msra.mxu0 %v5798
          %5802 = vmatprep.subr.bf16.mxu0 0
          %5803 = vmatpush1.bf16.xpose.msra.mxu0 0
          %5804 = vmatprep.subr.bf16.mxu0 0
          %5805 = vmatpush1.bf16.xpose.msra.mxu0 0
          %5806 = vmatprep.subr.bf16.mxu0 0
          %5807 = vmatpush1.bf16.xpose.msra.mxu0 0
          %5808 = vmatprep.subr.bf16.mxu0 0
          %5809 = vmatpush1.bf16.xpose.msra.mxu0 0
          %5810 = vmatprep.subr.bf16.mxu0 0
          %5811 = vmatpush1.bf16.xpose.msra.mxu0 0
          %5812 = vmatprep.subr.bf16.mxu0 0
          %5813 = vmatpush1.bf16.xpose.msra.mxu0 0
          %5814 = vmatprep.subr.bf16.mxu0 0
          %5815 = vmatpush1.bf16.xpose.msra.mxu0 0
          %5816 = vmatprep.subr.bf16.mxu0 0
          %5817 = vmatpush1.bf16.xpose.msra.mxu0 0
          %5818 = vmatprep.subr.bf16.mxu0 0
          %5819 = vmatpush1.bf16.xpose.msra.mxu0 0
          %5820 = vmatprep.subr.bf16.mxu0 0
          %5821 = vmatpush1.bf16.xpose.msra.mxu0 0
          %5822 = vmatprep.subr.bf16.mxu0 0
          %5823 = vmatpush1.bf16.xpose.msra.mxu0 0
          %5824 = vmatprep.subr.bf16.mxu0 0
          %5825 = vmatpush1.bf16.xpose.msra.mxu0 0
          %5826 = vmatprep.subr.bf16.mxu0 0
          %5827 = vmatpush1.bf16.xpose.msra.mxu0 0
          %5828 = vmatprep.subr.bf16.mxu0 0
          %5829 = vmatpush1.bf16.xpose.msra.mxu0 0
          %5830 = vmatprep.subr.bf16.mxu0 0
          %5831 = vmatpush1.bf16.xpose.msra.mxu0 0
          %5832 = vmatprep.mubr.bf16.mxu0 0
          %5833 = vmatmul.mubr.bf16.gmra.mrb[0].mxu0 %v5795
          %v5834 = vpop.f32.mrb[0].mxu0
          %v5835 = vadd.f32 0.0, %v5834
          %v5836 = vpop.f32.mrb[0].mxu0
          %v5837 = vpop.f32.mrb[0].mxu0
          %v5838 = vpop.f32.mrb[0].mxu0
          %5839 = vdwg.mxu0
          %v5840 = vsel %vm3924, %v5835, -inf
          %5841 = vmax.xlane.f32.xlu0 %v5840
          %v5842 = vpop.xlane.xlu0 %5841
          %v5843 = vsub.f32 %v5835, %v5842
          %v5844 = vmul.f32 %v5843, 1.442695
          %v5845 = vpow.pop %v5844
          %v5846 = vsel %vm3924, %v5845, 0.0
          %5847 = vadd.xlane.f32.xlu0 %v5846
          %v5848 = vpop.xlane.xlu0 %5847
          %v5849 = vrcp.pop %v5848
          %v5850 = vmul.f32 %v5845, %v5849
          %v5851 = vpack.c.bf16 %v5850, %v5850
          %v5853 = vsel %vm3924, %v5851, 0
          %v5856 = vsel %vm3940, %v5793, 0
          %5858 = vmatprep.subr.bf16.mxu0 0
          %5859 = vmatpush1.bf16.msra.mxu0 %v5856
          %5860 = vmatprep.subr.bf16.mxu0 0
          %5861 = vmatpush1.bf16.msra.mxu0 0
          %5862 = vmatprep.subr.bf16.mxu0 0
          %5863 = vmatpush1.bf16.msra.mxu0 0
          %5864 = vmatprep.subr.bf16.mxu0 0
          %5865 = vmatpush1.bf16.msra.mxu0 0
          %5866 = vmatprep.subr.bf16.mxu0 0
          %5867 = vmatpush1.bf16.msra.mxu0 0
          %5868 = vmatprep.subr.bf16.mxu0 0
          %5869 = vmatpush1.bf16.msra.mxu0 0
          %5870 = vmatprep.subr.bf16.mxu0 0
          %5871 = vmatpush1.bf16.msra.mxu0 0
          %5872 = vmatprep.subr.bf16.mxu0 0
          %5873 = vmatpush1.bf16.msra.mxu0 0
          %5874 = vmatprep.subr.bf16.mxu0 0
          %5875 = vmatpush1.bf16.msra.mxu0 0
          %5876 = vmatprep.subr.bf16.mxu0 0
          %5877 = vmatpush1.bf16.msra.mxu0 0
          %5878 = vmatprep.subr.bf16.mxu0 0
          %5879 = vmatpush1.bf16.msra.mxu0 0
          %5880 = vmatprep.subr.bf16.mxu0 0
          %5881 = vmatpush1.bf16.msra.mxu0 0
          %5882 = vmatprep.subr.bf16.mxu0 0
          %5883 = vmatpush1.bf16.msra.mxu0 0
          %5884 = vmatprep.subr.bf16.mxu0 0
          %5885 = vmatpush1.bf16.msra.mxu0 0
          %5886 = vmatprep.subr.bf16.mxu0 0
          %5887 = vmatpush1.bf16.msra.mxu0 0
          %5888 = vmatprep.subr.bf16.mxu0 0
          %5889 = vmatpush1.bf16.msra.mxu0 0
          %5890 = vmatprep.mubr.bf16.mxu0 0
          %5891 = vmatmul.mubr.bf16.gmra.mrb[0].mxu0 %v5853
          %v5892 = vpop.f32.mrb[0].mxu0
          %v5893 = vadd.f32 0.0, %v5892
          %v5894 = vpop.f32.mrb[0].mxu0
          %v5895 = vpop.f32.mrb[0].mxu0
          %v5896 = vpop.f32.mrb[0].mxu0
          %5897 = vdwg.mxu0
          %v5898 = vpack.c.bf16 %v5893, %v5786
          %s5899 = scalar_lea.vmem %s1447, 24
          %v5900 = vld [vmem:[%s5899] sm:$0xf]
          %v5901 = vld [vmem:[%s5899 + $0x4] sm:$0xf]
          %v5904 = vunpack.c.l.b16 %v5900
          %v5905 = vunpack.c.l.b16 %v5901
          %v5906 = vpack.c.b16 %v5905, %v5904
          %v5909 = vsel %vm3877, %v5898, 0
          %5911 = vmatprep.subr.bf16.mxu0 0
          %5912 = vmatpush1.bf16.msra.mxu0 %v5906
          %5913 = vmatprep.subr.bf16.mxu0 0
          %5914 = vmatpush1.bf16.msra.mxu0 0
          %5915 = vmatprep.subr.bf16.mxu0 0
          %5916 = vmatpush1.bf16.msra.mxu0 0
          %5917 = vmatprep.subr.bf16.mxu0 0
          %5918 = vmatpush1.bf16.msra.mxu0 0
          %5919 = vmatprep.subr.bf16.mxu0 0
          %5920 = vmatpush1.bf16.msra.mxu0 0
          %5921 = vmatprep.subr.bf16.mxu0 0
          %5922 = vmatpush1.bf16.msra.mxu0 0
          %5923 = vmatprep.subr.bf16.mxu0 0
          %5924 = vmatpush1.bf16.msra.mxu0 0
          %5925 = vmatprep.subr.bf16.mxu0 0
          %5926 = vmatpush1.bf16.msra.mxu0 0
          %5927 = vmatprep.subr.bf16.mxu0 0
          %5928 = vmatpush1.bf16.msra.mxu0 0
          %5929 = vmatprep.subr.bf16.mxu0 0
          %5930 = vmatpush1.bf16.msra.mxu0 0
          %5931 = vmatprep.subr.bf16.mxu0 0
          %5932 = vmatpush1.bf16.msra.mxu0 0
          %5933 = vmatprep.subr.bf16.mxu0 0
          %5934 = vmatpush1.bf16.msra.mxu0 0
          %5935 = vmatprep.subr.bf16.mxu0 0
          %5936 = vmatpush1.bf16.msra.mxu0 0
          %5937 = vmatprep.subr.bf16.mxu0 0
          %5938 = vmatpush1.bf16.msra.mxu0 0
          %5939 = vmatprep.subr.bf16.mxu0 0
          %5940 = vmatpush1.bf16.msra.mxu0 0
          %5941 = vmatprep.subr.bf16.mxu0 0
          %5942 = vmatpush1.bf16.msra.mxu0 0
          %5943 = vmatprep.mubr.bf16.mxu0 0
          %5944 = vmatmul.mubr.bf16.gmra.mrb[0].mxu0 %v5909
          %v5945 = vpop.f32.mrb[0].mxu0
          %v5946 = vadd.f32 0.0, %v5945
          %v5947 = vpop.f32.mrb[0].mxu0
          %v5948 = vpop.f32.mrb[0].mxu0
          %v5949 = vadd.f32 0.0, %v5948
          %v5950 = vpop.f32.mrb[0].mxu0
          %5951 = vdwg.mxu0
          %v5954 = vunpack.c.l.b16 %v5460
          %v5955 = vunpack.c.l.b16 %v5461
          %v5956 = vpack.c.b16 %v5955, %v5954
          %v5959 = vsel %vm3877, %v5458, 0
          %5961 = vmatprep.subr.bf16.mxu0 0
          %5962 = vmatpush1.bf16.msra.mxu0 %v5956
          %5963 = vmatprep.subr.bf16.mxu0 0
          %5964 = vmatpush1.bf16.msra.mxu0 0
          %5965 = vmatprep.subr.bf16.mxu0 0
          %5966 = vmatpush1.bf16.msra.mxu0 0
          %5967 = vmatprep.subr.bf16.mxu0 0
          %5968 = vmatpush1.bf16.msra.mxu0 0
          %5969 = vmatprep.subr.bf16.mxu0 0
          %5970 = vmatpush1.bf16.msra.mxu0 0
          %5971 = vmatprep.subr.bf16.mxu0 0
          %5972 = vmatpush1.bf16.msra.mxu0 0
          %5973 = vmatprep.subr.bf16.mxu0 0
          %5974 = vmatpush1.bf16.msra.mxu0 0
          %5975 = vmatprep.subr.bf16.mxu0 0
          %5976 = vmatpush1.bf16.msra.mxu0 0
          %5977 = vmatprep.subr.bf16.mxu0 0
          %5978 = vmatpush1.bf16.msra.mxu0 0
          %5979 = vmatprep.subr.bf16.mxu0 0
          %5980 = vmatpush1.bf16.msra.mxu0 0
          %5981 = vmatprep.subr.bf16.mxu0 0
          %5982 = vmatpush1.bf16.msra.mxu0 0
          %5983 = vmatprep.subr.bf16.mxu0 0
          %5984 = vmatpush1.bf16.msra.mxu0 0
          %5985 = vmatprep.subr.bf16.mxu0 0
          %5986 = vmatpush1.bf16.msra.mxu0 0
          %5987 = vmatprep.subr.bf16.mxu0 0
          %5988 = vmatpush1.bf16.msra.mxu0 0
          %5989 = vmatprep.subr.bf16.mxu0 0
          %5990 = vmatpush1.bf16.msra.mxu0 0
          %5991 = vmatprep.subr.bf16.mxu0 0
          %5992 = vmatpush1.bf16.msra.mxu0 0
          %5993 = vmatprep.mubr.bf16.mxu0 0
          %5994 = vmatmul.mubr.bf16.gmra.mrb[0].mxu0 %v5959
          %v5995 = vpop.f32.mrb[0].mxu0
          %v5996 = vadd.f32 %v5946, %v5995
          %v5997 = vpop.f32.mrb[0].mxu0
          %v5998 = vpop.f32.mrb[0].mxu0
          %v5999 = vadd.f32 %v5949, %v5998
          %v6000 = vpop.f32.mrb[0].mxu0
          %6001 = vdwg.mxu0
          %v6002 = vadd.f32 %v5012, %v5996
          %v6003 = vadd.f32 %v5013, %v5999
          %v6004 = vsel %vm3681, %v6002, 0.0
          %6005 = vadd.xlane.f32.xlu0 %v6004
          %v6006 = vpop.xlane.xlu0 %6005
          %v6007 = vsel %vm3681, %v6003, 0.0
          %6008 = vadd.xlane.f32.xlu0 %v6007
          %v6009 = vpop.xlane.xlu0 %6008
          %v6010 = vmul.f32 %v6006, %v4642
          %v6011 = vmul.f32 %v6009, %v4642
          %v6012 = vsub.f32 %v6002, %v6010
          %v6013 = vsub.f32 %v6003, %v6011
          %v6014 = vmul.f32 %v6012, %v6012
          %v6015 = vmul.f32 %v6013, %v6013
          %v6016 = vsel %vm3681, %v6014, 0.0
          %6017 = vadd.xlane.f32.xlu0 %v6016
          %v6018 = vpop.xlane.xlu0 %6017
          %v6019 = vsel %vm3681, %v6015, 0.0
          %6020 = vadd.xlane.f32.xlu0 %v6019
          %v6021 = vpop.xlane.xlu0 %6020
          %v6022 = vmul.f32 %v6018, %v4642
          %v6023 = vmul.f32 %v6021, %v4642
          %v6024 = vadd.f32 %v6022, 1e-05
          %v6025 = vadd.f32 %v6023, 1e-05
          %v6026 = vrsqrt.pop %v6024
          %v6027 = vrsqrt.pop %v6025
          %v6028 = vmul.f32 %v6012, %v6026
          %v6029 = vmul.f32 %v6013, %v6027
          %v6031 = vlaneseq
          %v6032 = vshrl.u32 %v6031, 7
          %v6033 = vsub.s32 0, %v6032
          %v6034 = vrot.slane %v5016, %v6033
          %v6036 = vmul.f32 %v6028, %v6034
          %v6037 = vmul.f32 %v6029, %v6034
          %v6039 = vlaneseq
          %v6040 = vshrl.u32 %v6039, 7
          %v6041 = vsub.s32 0, %v6040
          %v6042 = vrot.slane %v5018, %v6041
          %v6044 = vadd.f32 %v6036, %v6042
          %v6045 = vadd.f32 %v6037, %v6042
          %s6046 = scalar_lea.vmem %s1476, 32
          %v6047 = vld [vmem:[%s6046] sm:$0xf]
          %v6048 = vld [vmem:[%s6046 + $0x4] sm:$0xf]
          %v6049 = vld [vmem:[%s6046 + $0x8] sm:$0xf]
          %v6050 = vld [vmem:[%s6046 + $0xc] sm:$0xf]
          %v6051 = vld [vmem:[%s6046 + $0x10] sm:$0xf]
          %v6052 = vld [vmem:[%s6046 + $0x14] sm:$0xf]
          %v6053 = vld [vmem:[%s6046 + $0x18] sm:$0xf]
          %v6054 = vld [vmem:[%s6046 + $0x1c] sm:$0xf]
          %s6055 = scalar_lea.vmem %s1485, 1
          %v6056 = vld [vmem:[%s6055] sm:$0x1]
          %s6057 = scalar_lea.vmem %s1496, 64
          %v6058 = vld [vmem:[%s6057] sm:$0xf]
          %v6059 = vld [vmem:[%s6057 + $0x4] sm:$0xf]
          %v6060 = vld [vmem:[%s6057 + $0x8] sm:$0xf]
          %v6061 = vld [vmem:[%s6057 + $0xc] sm:$0xf]
          %v6062 = vld [vmem:[%s6057 + $0x10] sm:$0xf]
          %v6063 = vld [vmem:[%s6057 + $0x14] sm:$0xf]
          %v6064 = vld [vmem:[%s6057 + $0x18] sm:$0xf]
          %v6065 = vld [vmem:[%s6057 + $0x1c] sm:$0xf]
          %v6066 = vld [vmem:[%s6057 + $0x20] sm:$0xf]
          %v6067 = vld [vmem:[%s6057 + $0x24] sm:$0xf]
          %v6068 = vld [vmem:[%s6057 + $0x28] sm:$0xf]
          %v6069 = vld [vmem:[%s6057 + $0x2c] sm:$0xf]
          %v6070 = vld [vmem:[%s6057 + $0x30] sm:$0xf]
          %v6071 = vld [vmem:[%s6057 + $0x34] sm:$0xf]
          %v6072 = vld [vmem:[%s6057 + $0x38] sm:$0xf]
          %v6073 = vld [vmem:[%s6057 + $0x3c] sm:$0xf]
          %s6074 = scalar_lea.vmem %s1505, 1
          %v6075 = vld [vmem:[%s6074] sm:$0x1]
          %s6076 = scalar_lea.vmem %s1514, 1
          %v6077 = vld [vmem:[%s6076] sm:$0x1]
          %s6078 = scalar_lea.vmem %s1523, 1
          %v6079 = vld [vmem:[%s6078] sm:$0x1]
          %v6080 = vpack.c.bf16 %v6045, %v6044
          %v6082 = vlaneseq
          %v6083 = vshrl.u32 %v6082, 7
          %v6084 = vsub.s32 0, %v6083
          %v6085 = vrot.slane %v6056, %v6084
          %v6095 = vunpack.c.l.b16 %v6047
          %v6096 = vunpack.c.l.b16 %v6048
          %v6097 = vunpack.c.l.b16 %v6049
          %v6098 = vunpack.c.l.b16 %v6050
          %v6099 = vunpack.c.l.b16 %v6051
          %v6100 = vunpack.c.l.b16 %v6052
          %v6101 = vunpack.c.l.b16 %v6053
          %v6102 = vunpack.c.l.b16 %v6054
          %v6103 = vpack.c.b16 %v6096, %v6095
          %v6104 = vpack.c.b16 %v6098, %v6097
          %v6105 = vpack.c.b16 %v6100, %v6099
          %v6106 = vpack.c.b16 %v6102, %v6101
          %v6112 = vsel %vm3681, %v6080, 0
          %6114 = vmatprep.subr.bf16.mxu0 0
          %6115 = vmatpush1.bf16.msra.mxu0 %v6103
          %6116 = vmatprep.subr.bf16.mxu0 0
          %6117 = vmatpush1.bf16.msra.mxu0 %v6104
          %6118 = vmatprep.subr.bf16.mxu0 0
          %6119 = vmatpush1.bf16.msra.mxu0 %v6105
          %6120 = vmatprep.subr.bf16.mxu0 0
          %6121 = vmatpush1.bf16.msra.mxu0 %v6106
          %6122 = vmatprep.subr.bf16.mxu0 0
          %6123 = vmatpush1.bf16.msra.mxu0 0
          %6124 = vmatprep.subr.bf16.mxu0 0
          %6125 = vmatpush1.bf16.msra.mxu0 0
          %6126 = vmatprep.subr.bf16.mxu0 0
          %6127 = vmatpush1.bf16.msra.mxu0 0
          %6128 = vmatprep.subr.bf16.mxu0 0
          %6129 = vmatpush1.bf16.msra.mxu0 0
          %6130 = vmatprep.subr.bf16.mxu0 0
          %6131 = vmatpush1.bf16.msra.mxu0 0
          %6132 = vmatprep.subr.bf16.mxu0 0
          %6133 = vmatpush1.bf16.msra.mxu0 0
          %6134 = vmatprep.subr.bf16.mxu0 0
          %6135 = vmatpush1.bf16.msra.mxu0 0
          %6136 = vmatprep.subr.bf16.mxu0 0
          %6137 = vmatpush1.bf16.msra.mxu0 0
          %6138 = vmatprep.subr.bf16.mxu0 0
          %6139 = vmatpush1.bf16.msra.mxu0 0
          %6140 = vmatprep.subr.bf16.mxu0 0
          %6141 = vmatpush1.bf16.msra.mxu0 0
          %6142 = vmatprep.subr.bf16.mxu0 0
          %6143 = vmatpush1.bf16.msra.mxu0 0
          %6144 = vmatprep.subr.bf16.mxu0 0
          %6145 = vmatpush1.bf16.msra.mxu0 0
          %6146 = vmatprep.mubr.bf16.mxu0 0
          %6147 = vmatmul.mubr.bf16.gmra.mrb[0].mxu0 %v6112
          %v6148 = vpop.f32.mrb[0].mxu0
          %v6149 = vadd.f32 %v6085, %v6148
          %v6150 = vpop.f32.mrb[0].mxu0
          %v6151 = vpop.f32.mrb[0].mxu0
          %v6152 = vadd.f32 %v6085, %v6151
          %v6153 = vpop.f32.mrb[0].mxu0
          %6154 = vdwg.mxu0
          %v6155 = vmax.f32 %v6149, 0.0
          %v6156 = vmax.f32 %v6152, 0.0
          %v6157 = vpack.c.bf16 %v6156, %v6155
          %v6159 = vlaneseq
          %v6160 = vshrl.u32 %v6159, 7
          %v6161 = vsub.s32 0, %v6160
          %v6162 = vrot.slane %v6075, %v6161
          %v6180 = vunpack.c.l.b16 %v6058
          %v6181 = vunpack.c.l.b16 %v6059
          %v6182 = vunpack.c.l.b16 %v6060
          %v6183 = vunpack.c.l.b16 %v6061
          %v6184 = vunpack.c.l.b16 %v6062
          %v6185 = vunpack.c.l.b16 %v6063
          %v6186 = vunpack.c.l.b16 %v6064
          %v6187 = vunpack.c.l.b16 %v6065
          %v6188 = vunpack.c.l.b16 %v6066
          %v6189 = vunpack.c.l.b16 %v6067
          %v6190 = vunpack.c.l.b16 %v6068
          %v6191 = vunpack.c.l.b16 %v6069
          %v6192 = vunpack.c.l.b16 %v6070
          %v6193 = vunpack.c.l.b16 %v6071
          %v6194 = vunpack.c.l.b16 %v6072
          %v6195 = vunpack.c.l.b16 %v6073
          %v6196 = vpack.c.b16 %v6181, %v6180
          %v6197 = vpack.c.b16 %v6183, %v6182
          %v6198 = vpack.c.b16 %v6185, %v6184
          %v6199 = vpack.c.b16 %v6187, %v6186
          %v6200 = vpack.c.b16 %v6189, %v6188
          %v6201 = vpack.c.b16 %v6191, %v6190
          %v6202 = vpack.c.b16 %v6193, %v6192
          %v6203 = vpack.c.b16 %v6195, %v6194
          %6212 = vmatprep.subr.bf16.mxu0 0
          %6213 = vmatpush1.bf16.msra.mxu0 %v6196
          %6214 = vmatprep.subr.bf16.mxu0 0
          %6215 = vmatpush1.bf16.msra.mxu0 %v6197
          %6216 = vmatprep.subr.bf16.mxu0 0
          %6217 = vmatpush1.bf16.msra.mxu0 %v6198
          %6218 = vmatprep.subr.bf16.mxu0 0
          %6219 = vmatpush1.bf16.msra.mxu0 %v6199
          %6220 = vmatprep.subr.bf16.mxu0 0
          %6221 = vmatpush1.bf16.msra.mxu0 %v6200
          %6222 = vmatprep.subr.bf16.mxu0 0
          %6223 = vmatpush1.bf16.msra.mxu0 %v6201
          %6224 = vmatprep.subr.bf16.mxu0 0
          %6225 = vmatpush1.bf16.msra.mxu0 %v6202
          %6226 = vmatprep.subr.bf16.mxu0 0
          %6227 = vmatpush1.bf16.msra.mxu0 %v6203
          %6228 = vmatprep.subr.bf16.mxu0 0
          %6229 = vmatpush1.bf16.msra.mxu0 0
          %6230 = vmatprep.subr.bf16.mxu0 0
          %6231 = vmatpush1.bf16.msra.mxu0 0
          %6232 = vmatprep.subr.bf16.mxu0 0
          %6233 = vmatpush1.bf16.msra.mxu0 0
          %6234 = vmatprep.subr.bf16.mxu0 0
          %6235 = vmatpush1.bf16.msra.mxu0 0
          %6236 = vmatprep.subr.bf16.mxu0 0
          %6237 = vmatpush1.bf16.msra.mxu0 0
          %6238 = vmatprep.subr.bf16.mxu0 0
          %6239 = vmatpush1.bf16.msra.mxu0 0
          %6240 = vmatprep.subr.bf16.mxu0 0
          %6241 = vmatpush1.bf16.msra.mxu0 0
          %6242 = vmatprep.subr.bf16.mxu0 0
          %6243 = vmatpush1.bf16.msra.mxu0 0
          %6244 = vmatprep.mubr.bf16.mxu0 0
          %6245 = vmatmul.mubr.bf16.gmra.mrb[0].mxu0 %v6157
          %v6246 = vpop.f32.mrb[0].mxu0
          %v6247 = vadd.f32 %v6162, %v6246
          %v6248 = vpop.f32.mrb[0].mxu0
          %v6249 = vpop.f32.mrb[0].mxu0
          %v6250 = vadd.f32 %v6162, %v6249
          %v6251 = vpop.f32.mrb[0].mxu0
          %6252 = vdwg.mxu0
          %v6253 = vadd.f32 %v6247, %v6044
          %v6254 = vadd.f32 %v6250, %v6045
          %v6255 = vsel %vm3681, %v6253, 0.0
          %6256 = vadd.xlane.f32.xlu0 %v6255
          %v6257 = vpop.xlane.xlu0 %6256
          %v6258 = vsel %vm3681, %v6254, 0.0
          %6259 = vadd.xlane.f32.xlu0 %v6258
          %v6260 = vpop.xlane.xlu0 %6259
          %v6261 = vmul.f32 %v6257, %v4642
          %v6262 = vmul.f32 %v6260, %v4642
          %v6263 = vsub.f32 %v6253, %v6261
          %v6264 = vsub.f32 %v6254, %v6262
          %v6265 = vmul.f32 %v6263, %v6263
          %v6266 = vmul.f32 %v6264, %v6264
          %v6267 = vsel %vm3681, %v6265, 0.0
          %6268 = vadd.xlane.f32.xlu0 %v6267
          %v6269 = vpop.xlane.xlu0 %6268
          %v6270 = vsel %vm3681, %v6266, 0.0
          %6271 = vadd.xlane.f32.xlu0 %v6270
          %v6272 = vpop.xlane.xlu0 %6271
          %v6273 = vmul.f32 %v6269, %v4642
          %v6274 = vmul.f32 %v6272, %v4642
          %v6275 = vadd.f32 %v6273, 1e-05
          %v6276 = vadd.f32 %v6274, 1e-05
          %v6277 = vrsqrt.pop %v6275
          %v6278 = vrsqrt.pop %v6276
          %v6279 = vmul.f32 %v6263, %v6277
          %v6280 = vmul.f32 %v6264, %v6278
          %v6282 = vlaneseq
          %v6283 = vshrl.u32 %v6282, 7
          %v6284 = vsub.s32 0, %v6283
          %v6285 = vrot.slane %v6077, %v6284
          %v6287 = vmul.f32 %v6279, %v6285
          %v6288 = vmul.f32 %v6280, %v6285
          %v6290 = vlaneseq
          %v6291 = vshrl.u32 %v6290, 7
          %v6292 = vsub.s32 0, %v6291
          %v6293 = vrot.slane %v6079, %v6292
          %v6295 = vadd.f32 %v6287, %v6293
          %v6296 = vadd.f32 %v6288, %v6293
          %v6297 = vpack.c.bf16 %v6296, %v6295
          %s6298 = scalar_lea.vmem %s1534, 32
          %v6299 = vld [vmem:[%s6298] sm:$0xf]
          %v6300 = vld [vmem:[%s6298 + $0x4] sm:$0xf]
          %v6301 = vld [vmem:[%s6298 + $0x8] sm:$0xf]
          %v6302 = vld [vmem:[%s6298 + $0xc] sm:$0xf]
          %v6303 = vld [vmem:[%s6298 + $0x10] sm:$0xf]
          %v6304 = vld [vmem:[%s6298 + $0x14] sm:$0xf]
          %v6305 = vld [vmem:[%s6298 + $0x18] sm:$0xf]
          %v6306 = vld [vmem:[%s6298 + $0x1c] sm:$0xf]
          %s6307 = scalar_lea.vmem %s1543, 1
          %v6308 = vld [vmem:[%s6307] sm:$0x1]
          %v6310 = vlaneseq
          %v6311 = vshrl.u32 %v6310, 7
          %v6312 = vsub.s32 0, %v6311
          %v6313 = vrot.slane %v6308, %v6312
          %v6323 = vunpack.c.l.b16 %v6299
          %v6324 = vunpack.c.l.b16 %v6300
          %v6325 = vunpack.c.l.b16 %v6301
          %v6326 = vunpack.c.l.b16 %v6302
          %v6327 = vunpack.c.l.b16 %v6303
          %v6328 = vunpack.c.l.b16 %v6304
          %v6329 = vunpack.c.l.b16 %v6305
          %v6330 = vunpack.c.l.b16 %v6306
          %v6331 = vpack.c.b16 %v6324, %v6323
          %v6332 = vpack.c.b16 %v6326, %v6325
          %v6333 = vpack.c.b16 %v6328, %v6327
          %v6334 = vpack.c.b16 %v6330, %v6329
          %v6340 = vsel %vm3681, %v6297, 0
          %6342 = vmatprep.subr.bf16.mxu0 0
          %6343 = vmatpush1.bf16.msra.mxu0 %v6331
          %6344 = vmatprep.subr.bf16.mxu0 0
          %6345 = vmatpush1.bf16.msra.mxu0 %v6332
          %6346 = vmatprep.subr.bf16.mxu0 0
          %6347 = vmatpush1.bf16.msra.mxu0 %v6333
          %6348 = vmatprep.subr.bf16.mxu0 0
          %6349 = vmatpush1.bf16.msra.mxu0 %v6334
          %6350 = vmatprep.subr.bf16.mxu0 0
          %6351 = vmatpush1.bf16.msra.mxu0 0
          %6352 = vmatprep.subr.bf16.mxu0 0
          %6353 = vmatpush1.bf16.msra.mxu0 0
          %6354 = vmatprep.subr.bf16.mxu0 0
          %6355 = vmatpush1.bf16.msra.mxu0 0
          %6356 = vmatprep.subr.bf16.mxu0 0
          %6357 = vmatpush1.bf16.msra.mxu0 0
          %6358 = vmatprep.subr.bf16.mxu0 0
          %6359 = vmatpush1.bf16.msra.mxu0 0
          %6360 = vmatprep.subr.bf16.mxu0 0
          %6361 = vmatpush1.bf16.msra.mxu0 0
          %6362 = vmatprep.subr.bf16.mxu0 0
          %6363 = vmatpush1.bf16.msra.mxu0 0
          %6364 = vmatprep.subr.bf16.mxu0 0
          %6365 = vmatpush1.bf16.msra.mxu0 0
          %6366 = vmatprep.subr.bf16.mxu0 0
          %6367 = vmatpush1.bf16.msra.mxu0 0
          %6368 = vmatprep.subr.bf16.mxu0 0
          %6369 = vmatpush1.bf16.msra.mxu0 0
          %6370 = vmatprep.subr.bf16.mxu0 0
          %6371 = vmatpush1.bf16.msra.mxu0 0
          %6372 = vmatprep.subr.bf16.mxu0 0
          %6373 = vmatpush1.bf16.msra.mxu0 0
          %6374 = vmatprep.mubr.bf16.mxu0 0
          %6375 = vmatmul.mubr.bf16.gmra.mrb[0].mxu0 %v6340
          %v6376 = vpop.f32.mrb[0].mxu0
          %v6377 = vadd.f32 %v6313, %v6376
          %v6378 = vpop.f32.mrb[0].mxu0
          %v6379 = vpop.f32.mrb[0].mxu0
          %v6380 = vadd.f32 %v6313, %v6379
          %v6381 = vpop.f32.mrb[0].mxu0
          %6382 = vdwg.mxu0
          %6383 = vst.msk [vmem:[#allocation3] sm:$0xff] %vm3681, %v6295
          %6384 = vst.msk [vmem:[#allocation3 + $0x8] sm:$0xff] %vm3681, %v6296
          %6385 = vst.msk [vmem:[#allocation6] sm:$0xff] %vm3877, %v6377
          %6386 = vst.msk [vmem:[#allocation6 + $0x8] sm:$0xff] %vm3877, %v6380
        $region140: #{_encoder_forward_impl.1} parent=127 // pred_fallthru
          _
        %p6387 = scmp.eq.s32.totalorder %s39, 2
        // Predicated region
        $region141: #{_encoder_forward_impl.1} parent=127 // pred_check
          %p6388 = pneg %p6387
        $region142: #{_encoder_forward_impl.1} parent=127 // pred_check_branch
          %6390 = sbr.rel (%p6388) target = $region144
        $region143: #{_encoder_forward_impl.1} parent=127 // pred_region
          %v6391 = vld [vmem:[#allocation4] sm:$0xff]
          %v6392 = vld [vmem:[#allocation4 + $0x8] sm:$0xff]
          %vm6393 = vcmask 523264
          %6394 = vst.msk [vmem:[#allocation7] sm:$0xff] %vm6393, %v6391
          %6395 = vst.msk [vmem:[#allocation7 + $0x8] sm:$0xff] %vm6393, %v6392
        $region144: #{_encoder_forward_impl.1} parent=127 // pred_fallthru
          _
        // Predicated region
        $region145: #{_encoder_forward_impl.1} parent=127 // pred_check
          %p6396 = pneg %p859
        $region146: #{_encoder_forward_impl.1} parent=127 // pred_check_branch
          %6398 = sbr.rel (%p6396) target = $region148
        $region147: #{_encoder_forward_impl.1} parent=127 // pred_region
          %s6400 = ssub.s32 256, 256
          %6401 = vsyncadd [#allocation8], %s6400
          %s6402 = sshll.u32 [#allocation7], 4
          %s6403 = int_to_ptr.vmem [resolvable:$true] %s6402
          %6408 = dma.vmem_to_hbm [thread:$0]  %s6403, 256, %s27, [#allocation8], 128, 128, 8
        $region148: #{_encoder_forward_impl.1} parent=127 // pred_fallthru
          _
        // Predicated region
        $region149: #{_encoder_forward_impl.1} parent=127 // pred_check
          %p6409 = pneg %p859
        $region150: #{_encoder_forward_impl.1} parent=127 // pred_check_branch
          %6411 = sbr.rel (%p6409) target = $region152
        $region151: #{_encoder_forward_impl.1} parent=127 // pred_region
          %6412 = dma.done [#allocation8], 256
        $region152: #{_encoder_forward_impl.1} parent=127 // pred_fallthru
          _
      $region128: #{_encoder_forward_impl.1} parent=5 // pred_fallthru
        _
      %p6413 = scmp.le.s32.totalorder 2, %s34
      // Predicated region
      $region153: #{_encoder_forward_impl.1} parent=5 // pred_check
        %p6414 = pneg %p6413
      $region154: #{_encoder_forward_impl.1} parent=5 // pred_check_branch
        %6416 = sbr.rel (%p6414) target = $region156
      $region155: #{_encoder_forward_impl.1} parent=5 // pred_region
        %s6417 = ssub.s32 %s34, 2
      $region156: #{_encoder_forward_impl.1} parent=5 // pred_fallthru
        _
    $region6: #{_encoder_forward_impl.1} parent=1 // loop_footer
      %s38 = sadd.s32 1, %s34
    $region7: #{_encoder_forward_impl.1} parent=1 // loop_footer_branch
      %33 = sbr.rel target = $region3
    $region8: #{_encoder_forward_impl.1} parent=1 // loop_exit
      _
    %6418 = vsyncpa [#allocation8], 1
    %s6419 = scalar_lea.sflag [#allocation8], 1
    %6420 = vsyncpa %s6419, 1

</llo_original>
